<compile_context>
chip_gen: v7x
topology: tpu7x:2x2x1
jax: 0.10.0
libtpu: 0.0.40
codegen_flags: <defaults>
</compile_context>

<pallas_src>
import functools

import jax
import jax.numpy as jnp
from jax.experimental import pallas as pl
from jax.experimental.pallas import tpu as pltpu


# ---------------------------------------------------------------------------
# Fused kernel: (Conv3x3 + BN + ReLU) -> (Conv3x3 + BN + ReLU)
# ---------------------------------------------------------------------------
def _fused_feature_extractor_kernel(x_ref, w1_ref, b1_ref, w2_ref, b2_ref,
                                    o_ref, xpad_ref, ypad_ref):
    # x_ref   : (N, H, W, Cin)        f32 input (one shot, whole batch)
    # w1_ref  : (9*Cin, Cout)         BN-scale-folded conv1 weights (matmul dtype)
    # b1_ref  : (1, Cout)             folded BN1 bias (f32)
    # w2_ref  : (9*Cout, Cout_pad)    BN-scale-folded conv2 weights, lane-padded
    # b2_ref  : (1, Cout_pad)         folded BN2 bias, lane-padded (f32)
    # o_ref   : (N, H, W, Cout_pad)   f32 output (lane-dense, Cout_pad % 128 == 0)
    # xpad_ref: (N, H+2, W+2, Cin)    f32 VMEM scratch ("same" padding, layer 1)
    # ypad_ref: (N, H+2, W+2, Cout)   f32 VMEM scratch ("same" padding, layer 2)
    N, Hp, Wp, Cin = xpad_ref.shape
    H, W = Hp - 2, Wp - 2
    Cout = w1_ref.shape[-1]
    cout_pad = w2_ref.shape[-1]
    M = N * H * W
    mat_dtype = w1_ref.dtype

    # ---- layer 1: in-VMEM "same" padding ----
    xpad_ref[...] = jnp.zeros(xpad_ref.shape, xpad_ref.dtype)
    xpad_ref[:, 1:H + 1, 1:W + 1, :] = x_ref[...]

    # ---- layer 1: im2col -> one MXU matmul (K = 9*Cin) ----
    cols1 = [xpad_ref[:, dy:dy + H, dx:dx + W, :].reshape(M, Cin)
             for dy in range(3) for dx in range(3)]
    patch1 = jnp.concatenate(cols1, axis=-1).astype(mat_dtype)      # (M, 9*Cin)
    acc1 = jnp.dot(patch1, w1_ref[...],
                   preferred_element_type=jnp.float32)              # (M, Cout)
    y1 = jnp.maximum(acc1 + b1_ref[...], 0.0)                       # f32 epilogue

    # ---- layer 2: in-VMEM "same" padding of the intermediate ----
    ypad_ref[...] = jnp.zeros(ypad_ref.shape, ypad_ref.dtype)
    ypad_ref[:, 1:H + 1, 1:W + 1, :] = y1.reshape(N, H, W, Cout)

    # ---- layer 2: im2col -> one MXU matmul (K = 9*Cout) ----
    cols2 = [ypad_ref[:, dy:dy + H, dx:dx + W, :].reshape(M, Cout)
             for dy in range(3) for dx in range(3)]
    patch2 = jnp.concatenate(cols2, axis=-1).astype(mat_dtype)      # (M, 9*Cout)
    acc2 = jnp.dot(patch2, w2_ref[...],
                   preferred_element_type=jnp.float32)              # (M, Cout_pad)
    y2 = jnp.maximum(acc2 + b2_ref[...], 0.0)                       # f32 epilogue

    # Lane-dense store: last dim Cout_pad is a multiple of 128 -> unmasked vst.
    o_ref[...] = y2.reshape(N, H, W, cout_pad).astype(o_ref.dtype)


def _fused_conv_blocks(x_nhwc, w1_folded, b1, w2_folded, b2,
                       matmul_dtype=jnp.bfloat16):
    """Both (Conv3x3 pad=1, no bias) + BN(eval) + ReLU blocks in one pallas_call.

    x_nhwc    : (N, H, W, Cin) f32
    w1_folded : (3, 3, Cin,  Cout) f32, already multiplied by BN1 scale
    w2_folded : (3, 3, Cout, Cout) f32, already multiplied by BN2 scale
    b1, b2    : (Cout,) folded BN biases
    returns   : (N, H, W, Cout) f32
    """
    N, H, W, Cin = x_nhwc.shape
    Cout = w1_folded.shape[-1]
    cout_pad = ((Cout + 127) // 128) * 128   # lane-dense output channels

    # Weight / bias prep (trace-time, runs once in XLA, not per kernel step).
    w1m = w1_folded.reshape(9 * Cin, Cout).astype(matmul_dtype)
    w2m = jnp.pad(w2_folded.reshape(9 * Cout, Cout),
                  ((0, 0), (0, cout_pad - Cout))).astype(matmul_dtype)
    b1m = b1.reshape(1, Cout).astype(jnp.float32)
    b2m = jnp.pad(b2.reshape(1, Cout),
                  ((0, 0), (0, cout_pad - Cout))).astype(jnp.float32)

    out = pl.pallas_call(
        _fused_feature_extractor_kernel,
        out_shape=jax.ShapeDtypeStruct((N, H, W, cout_pad), jnp.float32),
        grid_spec=pltpu.PrefetchScalarGridSpec(
            num_scalar_prefetch=0,
            grid=(1,),
            in_specs=[
                pl.BlockSpec((N, H, W, Cin), lambda i: (0, 0, 0, 0)),
                pl.BlockSpec((9 * Cin, Cout), lambda i: (0, 0)),
                pl.BlockSpec((1, Cout), lambda i: (0, 0)),
                pl.BlockSpec((9 * Cout, cout_pad), lambda i: (0, 0)),
                pl.BlockSpec((1, cout_pad), lambda i: (0, 0)),
            ],
            out_specs=pl.BlockSpec((N, H, W, cout_pad),
                                   lambda i: (0, 0, 0, 0)),
            scratch_shapes=[
                pltpu.VMEM((N, H + 2, W + 2, Cin), jnp.float32),
                pltpu.VMEM((N, H + 2, W + 2, Cout), jnp.float32),
            ],
        ),
        compiler_params=pltpu.CompilerParams(
            dimension_semantics=("arbitrary",)),
    )(x_nhwc, w1m, b1m, w2m, b2m)

    return out[..., :Cout]


# ---------------------------------------------------------------------------
# Module wrapper (PyTorch-style NCHW in/out)
# ---------------------------------------------------------------------------
def _fold_bn(gamma, beta, running_mean, running_var, eps=1e-5):
    scale = gamma / jnp.sqrt(running_var + eps)
    bias = beta - running_mean * scale
    return scale.astype(jnp.float32), bias.astype(jnp.float32)


def feature_extractor(x_nchw, params, matmul_dtype=jnp.bfloat16):
    """FeatureExtractor.forward. Input/output are NCHW like PyTorch."""
    x = jnp.transpose(x_nchw, (0, 2, 3, 1))            # NCHW -> NHWC
    s1, b1 = _fold_bn(*params["bn1"])
    s2, b2 = _fold_bn(*params["bn2"])
    w1f = params["w1"] * s1                            # fold BN scale into conv
    w2f = params["w2"] * s2
    y = _fused_conv_blocks(x, w1f, b1, w2f, b2, matmul_dtype)
    return jnp.transpose(y, (0, 3, 1, 2))              # NHWC -> NCHW


def init_params(key, in_channels, out_channels):
    k1, k2, k3, k4, k5, k6 = jax.random.split(key, 6)
    # Conv weights: PyTorch layout (Cout, Cin, 3, 3) -> HWIO (3, 3, Cin, Cout).
    w1_oihw = 0.1 * jax.random.normal(
        k1, (out_channels, in_channels, 3, 3), jnp.float32)
    w2_oihw = 0.1 * jax.random.normal(
        k2, (out_channels, out_channels, 3, 3), jnp.float32)
    w1 = jnp.transpose(w1_oihw, (2, 3, 1, 0))
    w2 = jnp.transpose(w2_oihw, (2, 3, 1, 0))
    # TODO(synk): BatchNorm is applied in eval mode (running statistics folded
    # into scale/bias); training-mode batch statistics are not computed.
    bn1 = (1.0 + 0.1 * jax.random.normal(k3, (out_channels,), jnp.float32),   # gamma
           0.1 * jax.random.normal(k4, (out_channels,), jnp.float32),         # beta
           0.05 * jnp.arange(out_channels, dtype=jnp.float32),                # running_mean
           1.0 + 0.02 * jnp.arange(out_channels, dtype=jnp.float32))          # running_var
    bn2 = (1.0 + 0.1 * jax.random.normal(k5, (out_channels,), jnp.float32),
           0.1 * jax.random.normal(k6, (out_channels,), jnp.float32),
           -0.03 * jnp.arange(out_channels, dtype=jnp.float32),
           1.0 + 0.01 * jnp.arange(out_channels, dtype=jnp.float32))
    return {"w1": w1, "w2": w2, "bn1": bn1, "bn2": bn2}


# ---------------------------------------------------------------------------
# Pure-JAX reference (same math / same matmul dtype) for a correctness check.
# ---------------------------------------------------------------------------
def _ref_block(x_nhwc, w_folded_hwio, bias, matmul_dtype):
    N, H, W, Cin = x_nhwc.shape
    Cout = w_folded_hwio.shape[-1]
    xp = jnp.pad(x_nhwc, ((0, 0), (1, 1), (1, 1), (0, 0)))
    cols = [xp[:, dy:dy + H, dx:dx + W, :].reshape(N * H * W, Cin)
            for dy in range(3) for dx in range(3)]
    patch = jnp.concatenate(cols, axis=-1).astype(matmul_dtype)
    w = w_folded_hwio.reshape(9 * Cin, Cout).astype(matmul_dtype)
    y = jnp.dot(patch, w, preferred_element_type=jnp.float32) + bias
    return jnp.maximum(y, 0.0).reshape(N, H, W, Cout)


def _reference_forward(x_nchw, params, matmul_dtype=jnp.bfloat16):
    x = jnp.transpose(x_nchw, (0, 2, 3, 1))
    s1, b1 = _fold_bn(*params["bn1"])
    s2, b2 = _fold_bn(*params["bn2"])
    y = _ref_block(x, params["w1"] * s1, b1, matmul_dtype)
    y = _ref_block(y, params["w2"] * s2, b2, matmul_dtype)
    return jnp.transpose(y, (0, 3, 1, 2))


if __name__ == "__main__":
    key = jax.random.PRNGKey(0)
    kx, kp = jax.random.split(key)

    N, Cin, H, W = 2, 4, 16, 16
    Cout = 8
    x = jax.random.normal(kx, (N, Cin, H, W), jnp.float32)  # NCHW like PyTorch
    params = init_params(kp, Cin, Cout)

    fwd = jax.jit(functools.partial(feature_extractor, params=params))
    out = jax.block_until_ready(fwd(x))

    assert out.shape == (N, Cout, H, W), out.shape
    assert bool(jnp.all(out >= 0.0))  # ReLU output is non-negative

    ref = jax.block_until_ready(_reference_forward(x, params))
    assert bool(jnp.allclose(out, ref, atol=2e-3, rtol=2e-3)), (
        float(jnp.max(jnp.abs(out - ref))))

    print("KERNEL_OK")
</pallas_src>

<mosaic_0001>
module attributes {stable_mosaic.version = 11 : i64} {
  func.func @_fused_feature_extractor_kernel(%arg0: i32, %arg1: memref<2x16x16x4xf32, #tpu.memory_space<vmem>>, %arg2: memref<36x8xbf16, #tpu.memory_space<vmem>>, %arg3: memref<1x8xf32, #tpu.memory_space<vmem>>, %arg4: memref<72x128xbf16, #tpu.memory_space<vmem>>, %arg5: memref<1x128xf32, #tpu.memory_space<vmem>>, %arg6: memref<2x16x16x128xf32, #tpu.memory_space<vmem>>, %arg7: memref<2x18x18x4xf32, #tpu.memory_space<vmem>>, %arg8: memref<2x18x18x8xf32, #tpu.memory_space<vmem>>) attributes {dimension_semantics = [#tpu.dimension_semantics<arbitrary>], iteration_bounds = array<i64: 1>, scalar_prefetch = 0 : i64, scratch_operands = 2 : i64, tpu.core_type = #tpu.core_type<tc>, window_params = [{pipeline_mode = #tpu.pipeline_mode<synchronous>, transform_indices = @transform_0, window_bounds = array<i64: 2, 16, 16, 4>}, {pipeline_mode = #tpu.pipeline_mode<synchronous>, transform_indices = @transform_1, window_bounds = array<i64: 36, 8>}, {pipeline_mode = #tpu.pipeline_mode<synchronous>, transform_indices = @transform_2, window_bounds = array<i64: 1, 8>}, {pipeline_mode = #tpu.pipeline_mode<synchronous>, transform_indices = @transform_3, window_bounds = array<i64: 72, 128>}, {pipeline_mode = #tpu.pipeline_mode<synchronous>, transform_indices = @transform_4, window_bounds = array<i64: 1, 128>}, {pipeline_mode = #tpu.pipeline_mode<synchronous>, transform_indices = @transform_5, window_bounds = array<i64: 2, 16, 16, 128>}]} {
    %cst = arith.constant 0.000000e+00 : f32
    %0 = vector.broadcast %cst : f32 to vector<2x18x18x4xf32>
    %c0 = arith.constant 0 : index
    %c0_0 = arith.constant 0 : index
    %c0_1 = arith.constant 0 : index
    %c0_2 = arith.constant 0 : index
    %1 = vector.load %arg7[%c0, %c0_0, %c0_1, %c0_2] : memref<2x18x18x4xf32, #tpu.memory_space<vmem>>, vector<2x18x18x4xf32>
    tpu.vector_store %arg7[%c0, %c0_0, %c0_1, %c0_2], %0 {strides = array<i32>} : memref<2x18x18x4xf32, #tpu.memory_space<vmem>>, vector<2x18x18x4xf32>,
    %c0_3 = arith.constant 0 : index
    %c0_4 = arith.constant 0 : index
    %c0_5 = arith.constant 0 : index
    %c0_6 = arith.constant 0 : index
    %2 = vector.load %arg1[%c0_3, %c0_4, %c0_5, %c0_6] : memref<2x16x16x4xf32, #tpu.memory_space<vmem>>, vector<2x16x16x4xf32>
    %c0_7 = arith.constant 0 : index
    %c1 = arith.constant 1 : index
    %c1_8 = arith.constant 1 : index
    %c0_9 = arith.constant 0 : index
    %3 = vector.load %arg7[%c0_7, %c1, %c1_8, %c0_9] : memref<2x18x18x4xf32, #tpu.memory_space<vmem>>, vector<2x16x16x4xf32>
    tpu.vector_store %arg7[%c0_7, %c1, %c1_8, %c0_9], %2 {strides = array<i32>} : memref<2x18x18x4xf32, #tpu.memory_space<vmem>>, vector<2x16x16x4xf32>,
    %c0_10 = arith.constant 0 : index
    %c0_11 = arith.constant 0 : index
    %c0_12 = arith.constant 0 : index
    %c0_13 = arith.constant 0 : index
    %4 = vector.load %arg7[%c0_10, %c0_11, %c0_12, %c0_13] : memref<2x18x18x4xf32, #tpu.memory_space<vmem>>, vector<2x16x16x4xf32>
    %5 = vector.shape_cast %4 : vector<2x16x16x4xf32> to vector<512x4xf32>
    %c0_14 = arith.constant 0 : index
    %c0_15 = arith.constant 0 : index
    %c1_16 = arith.constant 1 : index
    %c0_17 = arith.constant 0 : index
    %6 = vector.load %arg7[%c0_14, %c0_15, %c1_16, %c0_17] : memref<2x18x18x4xf32, #tpu.memory_space<vmem>>, vector<2x16x16x4xf32>
    %7 = vector.shape_cast %6 : vector<2x16x16x4xf32> to vector<512x4xf32>
    %c0_18 = arith.constant 0 : index
    %c0_19 = arith.constant 0 : index
    %c2 = arith.constant 2 : index
    %c0_20 = arith.constant 0 : index
    %8 = vector.load %arg7[%c0_18, %c0_19, %c2, %c0_20] : memref<2x18x18x4xf32, #tpu.memory_space<vmem>>, vector<2x16x16x4xf32>
    %9 = vector.shape_cast %8 : vector<2x16x16x4xf32> to vector<512x4xf32>
    %c0_21 = arith.constant 0 : index
    %c1_22 = arith.constant 1 : index
    %c0_23 = arith.constant 0 : index
    %c0_24 = arith.constant 0 : index
    %10 = vector.load %arg7[%c0_21, %c1_22, %c0_23, %c0_24] : memref<2x18x18x4xf32, #tpu.memory_space<vmem>>, vector<2x16x16x4xf32>
    %11 = vector.shape_cast %10 : vector<2x16x16x4xf32> to vector<512x4xf32>
    %c0_25 = arith.constant 0 : index
    %c1_26 = arith.constant 1 : index
    %c1_27 = arith.constant 1 : index
    %c0_28 = arith.constant 0 : index
    %12 = vector.load %arg7[%c0_25, %c1_26, %c1_27, %c0_28] : memref<2x18x18x4xf32, #tpu.memory_space<vmem>>, vector<2x16x16x4xf32>
    %13 = vector.shape_cast %12 : vector<2x16x16x4xf32> to vector<512x4xf32>
    %c0_29 = arith.constant 0 : index
    %c1_30 = arith.constant 1 : index
    %c2_31 = arith.constant 2 : index
    %c0_32 = arith.constant 0 : index
    %14 = vector.load %arg7[%c0_29, %c1_30, %c2_31, %c0_32] : memref<2x18x18x4xf32, #tpu.memory_space<vmem>>, vector<2x16x16x4xf32>
    %15 = vector.shape_cast %14 : vector<2x16x16x4xf32> to vector<512x4xf32>
    %c0_33 = arith.constant 0 : index
    %c2_34 = arith.constant 2 : index
    %c0_35 = arith.constant 0 : index
    %c0_36 = arith.constant 0 : index
    %16 = vector.load %arg7[%c0_33, %c2_34, %c0_35, %c0_36] : memref<2x18x18x4xf32, #tpu.memory_space<vmem>>, vector<2x16x16x4xf32>
    %17 = vector.shape_cast %16 : vector<2x16x16x4xf32> to vector<512x4xf32>
    %c0_37 = arith.constant 0 : index
    %c2_38 = arith.constant 2 : index
    %c1_39 = arith.constant 1 : index
    %c0_40 = arith.constant 0 : index
    %18 = vector.load %arg7[%c0_37, %c2_38, %c1_39, %c0_40] : memref<2x18x18x4xf32, #tpu.memory_space<vmem>>, vector<2x16x16x4xf32>
    %19 = vector.shape_cast %18 : vector<2x16x16x4xf32> to vector<512x4xf32>
    %c0_41 = arith.constant 0 : index
    %c2_42 = arith.constant 2 : index
    %c2_43 = arith.constant 2 : index
    %c0_44 = arith.constant 0 : index
    %20 = vector.load %arg7[%c0_41, %c2_42, %c2_43, %c0_44] : memref<2x18x18x4xf32, #tpu.memory_space<vmem>>, vector<2x16x16x4xf32>
    %21 = vector.shape_cast %20 : vector<2x16x16x4xf32> to vector<512x4xf32>
    %22 = tpu.concatenate %5, %7, %9, %11, %13, %15, %17, %19, %21 in 1 : vector<512x4xf32>, vector<512x4xf32>, vector<512x4xf32>, vector<512x4xf32>, vector<512x4xf32>, vector<512x4xf32>, vector<512x4xf32>, vector<512x4xf32>, vector<512x4xf32> -> vector<512x36xf32>
    %23 = arith.truncf %22 : vector<512x36xf32> to vector<512x36xbf16>
    %c0_45 = arith.constant 0 : index
    %c0_46 = arith.constant 0 : index
    %24 = vector.load %arg2[%c0_45, %c0_46] : memref<36x8xbf16, #tpu.memory_space<vmem>>, vector<36x8xbf16>
    %cst_47 = arith.constant dense<0.000000e+00> : vector<512x8xf32>
    %25 = tpu.matmul %23, %24, %cst_47 {dimension_numbers = #tpu.dot_dimension_numbers<[1], [0], [0], [1], [0, 0, 1, 1], [], []>} : vector<512x36xbf16>, vector<36x8xbf16>, vector<512x8xf32> -> vector<512x8xf32>
    %c0_48 = arith.constant 0 : index
    %c0_49 = arith.constant 0 : index
    %26 = vector.load %arg3[%c0_48, %c0_49] : memref<1x8xf32, #tpu.memory_space<vmem>>, vector<1x8xf32>
    %27 = vector.broadcast %26 : vector<1x8xf32> to vector<512x8xf32>
    %28 = arith.addf %25, %27 : vector<512x8xf32>
    %cst_50 = arith.constant 0.000000e+00 : f32
    %29 = vector.broadcast %cst_50 : f32 to vector<512x8xf32>
    %30 = arith.maximumf %28, %29 : vector<512x8xf32>
    %cst_51 = arith.constant 0.000000e+00 : f32
    %31 = vector.broadcast %cst_51 : f32 to vector<2x18x18x8xf32>
    %c0_52 = arith.constant 0 : index
    %c0_53 = arith.constant 0 : index
    %c0_54 = arith.constant 0 : index
    %c0_55 = arith.constant 0 : index
    %32 = vector.load %arg8[%c0_52, %c0_53, %c0_54, %c0_55] : memref<2x18x18x8xf32, #tpu.memory_space<vmem>>, vector<2x18x18x8xf32>
    tpu.vector_store %arg8[%c0_52, %c0_53, %c0_54, %c0_55], %31 {strides = array<i32>} : memref<2x18x18x8xf32, #tpu.memory_space<vmem>>, vector<2x18x18x8xf32>,
    %33 = vector.shape_cast %30 : vector<512x8xf32> to vector<2x16x16x8xf32>
    %c0_56 = arith.constant 0 : index
    %c1_57 = arith.constant 1 : index
    %c1_58 = arith.constant 1 : index
    %c0_59 = arith.constant 0 : index
    %34 = vector.load %arg8[%c0_56, %c1_57, %c1_58, %c0_59] : memref<2x18x18x8xf32, #tpu.memory_space<vmem>>, vector<2x16x16x8xf32>
    tpu.vector_store %arg8[%c0_56, %c1_57, %c1_58, %c0_59], %33 {strides = array<i32>} : memref<2x18x18x8xf32, #tpu.memory_space<vmem>>, vector<2x16x16x8xf32>,
    %c0_60 = arith.constant 0 : index
    %c0_61 = arith.constant 0 : index
    %c0_62 = arith.constant 0 : index
    %c0_63 = arith.constant 0 : index
    %35 = vector.load %arg8[%c0_60, %c0_61, %c0_62, %c0_63] : memref<2x18x18x8xf32, #tpu.memory_space<vmem>>, vector<2x16x16x8xf32>
    %36 = vector.shape_cast %35 : vector<2x16x16x8xf32> to vector<512x8xf32>
    %c0_64 = arith.constant 0 : index
    %c0_65 = arith.constant 0 : index
    %c1_66 = arith.constant 1 : index
    %c0_67 = arith.constant 0 : index
    %37 = vector.load %arg8[%c0_64, %c0_65, %c1_66, %c0_67] : memref<2x18x18x8xf32, #tpu.memory_space<vmem>>, vector<2x16x16x8xf32>
    %38 = vector.shape_cast %37 : vector<2x16x16x8xf32> to vector<512x8xf32>
    %c0_68 = arith.constant 0 : index
    %c0_69 = arith.constant 0 : index
    %c2_70 = arith.constant 2 : index
    %c0_71 = arith.constant 0 : index
    %39 = vector.load %arg8[%c0_68, %c0_69, %c2_70, %c0_71] : memref<2x18x18x8xf32, #tpu.memory_space<vmem>>, vector<2x16x16x8xf32>
    %40 = vector.shape_cast %39 : vector<2x16x16x8xf32> to vector<512x8xf32>
    %c0_72 = arith.constant 0 : index
    %c1_73 = arith.constant 1 : index
    %c0_74 = arith.constant 0 : index
    %c0_75 = arith.constant 0 : index
    %41 = vector.load %arg8[%c0_72, %c1_73, %c0_74, %c0_75] : memref<2x18x18x8xf32, #tpu.memory_space<vmem>>, vector<2x16x16x8xf32>
    %42 = vector.shape_cast %41 : vector<2x16x16x8xf32> to vector<512x8xf32>
    %c0_76 = arith.constant 0 : index
    %c1_77 = arith.constant 1 : index
    %c1_78 = arith.constant 1 : index
    %c0_79 = arith.constant 0 : index
    %43 = vector.load %arg8[%c0_76, %c1_77, %c1_78, %c0_79] : memref<2x18x18x8xf32, #tpu.memory_space<vmem>>, vector<2x16x16x8xf32>
    %44 = vector.shape_cast %43 : vector<2x16x16x8xf32> to vector<512x8xf32>
    %c0_80 = arith.constant 0 : index
    %c1_81 = arith.constant 1 : index
    %c2_82 = arith.constant 2 : index
    %c0_83 = arith.constant 0 : index
    %45 = vector.load %arg8[%c0_80, %c1_81, %c2_82, %c0_83] : memref<2x18x18x8xf32, #tpu.memory_space<vmem>>, vector<2x16x16x8xf32>
    %46 = vector.shape_cast %45 : vector<2x16x16x8xf32> to vector<512x8xf32>
    %c0_84 = arith.constant 0 : index
    %c2_85 = arith.constant 2 : index
    %c0_86 = arith.constant 0 : index
    %c0_87 = arith.constant 0 : index
    %47 = vector.load %arg8[%c0_84, %c2_85, %c0_86, %c0_87] : memref<2x18x18x8xf32, #tpu.memory_space<vmem>>, vector<2x16x16x8xf32>
    %48 = vector.shape_cast %47 : vector<2x16x16x8xf32> to vector<512x8xf32>
    %c0_88 = arith.constant 0 : index
    %c2_89 = arith.constant 2 : index
    %c1_90 = arith.constant 1 : index
    %c0_91 = arith.constant 0 : index
    %49 = vector.load %arg8[%c0_88, %c2_89, %c1_90, %c0_91] : memref<2x18x18x8xf32, #tpu.memory_space<vmem>>, vector<2x16x16x8xf32>
    %50 = vector.shape_cast %49 : vector<2x16x16x8xf32> to vector<512x8xf32>
    %c0_92 = arith.constant 0 : index
    %c2_93 = arith.constant 2 : index
    %c2_94 = arith.constant 2 : index
    %c0_95 = arith.constant 0 : index
    %51 = vector.load %arg8[%c0_92, %c2_93, %c2_94, %c0_95] : memref<2x18x18x8xf32, #tpu.memory_space<vmem>>, vector<2x16x16x8xf32>
    %52 = vector.shape_cast %51 : vector<2x16x16x8xf32> to vector<512x8xf32>
    %53 = tpu.concatenate %36, %38, %40, %42, %44, %46, %48, %50, %52 in 1 : vector<512x8xf32>, vector<512x8xf32>, vector<512x8xf32>, vector<512x8xf32>, vector<512x8xf32>, vector<512x8xf32>, vector<512x8xf32>, vector<512x8xf32>, vector<512x8xf32> -> vector<512x72xf32>
    %54 = arith.truncf %53 : vector<512x72xf32> to vector<512x72xbf16>
    %c0_96 = arith.constant 0 : index
    %c0_97 = arith.constant 0 : index
    %55 = vector.load %arg4[%c0_96, %c0_97] : memref<72x128xbf16, #tpu.memory_space<vmem>>, vector<72x128xbf16>
    %cst_98 = arith.constant dense<0.000000e+00> : vector<512x128xf32>
    %56 = tpu.matmul %54, %55, %cst_98 {dimension_numbers = #tpu.dot_dimension_numbers<[1], [0], [0], [1], [0, 0, 1, 1], [], []>} : vector<512x72xbf16>, vector<72x128xbf16>, vector<512x128xf32> -> vector<512x128xf32>
    %c0_99 = arith.constant 0 : index
    %c0_100 = arith.constant 0 : index
    %57 = vector.load %arg5[%c0_99, %c0_100] : memref<1x128xf32, #tpu.memory_space<vmem>>, vector<1x128xf32>
    %58 = vector.broadcast %57 : vector<1x128xf32> to vector<512x128xf32>
    %59 = arith.addf %56, %58 : vector<512x128xf32>
    %cst_101 = arith.constant 0.000000e+00 : f32
    %60 = vector.broadcast %cst_101 : f32 to vector<512x128xf32>
    %61 = arith.maximumf %59, %60 : vector<512x128xf32>
    %62 = vector.shape_cast %61 : vector<512x128xf32> to vector<2x16x16x128xf32>
    %c0_102 = arith.constant 0 : index
    %c0_103 = arith.constant 0 : index
    %c0_104 = arith.constant 0 : index
    %c0_105 = arith.constant 0 : index
    %63 = vector.load %arg6[%c0_102, %c0_103, %c0_104, %c0_105] : memref<2x16x16x128xf32, #tpu.memory_space<vmem>>, vector<2x16x16x128xf32>
    tpu.vector_store %arg6[%c0_102, %c0_103, %c0_104, %c0_105], %62 {strides = array<i32>} : memref<2x16x16x128xf32, #tpu.memory_space<vmem>>, vector<2x16x16x128xf32>,
    return
  }
  func.func @transform_0(%arg0: i32) -> (i32, i32, i32, i32) {
    %c0_i32 = arith.constant 0 : i32
    %c0_i32_0 = arith.constant 0 : i32
    %c0_i32_1 = arith.constant 0 : i32
    %c0_i32_2 = arith.constant 0 : i32
    %c0_i32_3 = arith.constant 0 : i32
    return %c0_i32, %c0_i32_0, %c0_i32_1, %c0_i32_2 : i32, i32, i32, i32
  }
  func.func @transform_1(%arg0: i32) -> (i32, i32) {
    %c0_i32 = arith.constant 0 : i32
    %c0_i32_0 = arith.constant 0 : i32
    %c0_i32_1 = arith.constant 0 : i32
    return %c0_i32, %c0_i32_0 : i32, i32
  }
  func.func @transform_2(%arg0: i32) -> (i32, i32) {
    %c0_i32 = arith.constant 0 : i32
    %c0_i32_0 = arith.constant 0 : i32
    %c0_i32_1 = arith.constant 0 : i32
    return %c0_i32, %c0_i32_0 : i32, i32
  }
  func.func @transform_3(%arg0: i32) -> (i32, i32) {
    %c0_i32 = arith.constant 0 : i32
    %c0_i32_0 = arith.constant 0 : i32
    %c0_i32_1 = arith.constant 0 : i32
    return %c0_i32, %c0_i32_0 : i32, i32
  }
  func.func @transform_4(%arg0: i32) -> (i32, i32) {
    %c0_i32 = arith.constant 0 : i32
    %c0_i32_0 = arith.constant 0 : i32
    %c0_i32_1 = arith.constant 0 : i32
    return %c0_i32, %c0_i32_0 : i32, i32
  }
  func.func @transform_5(%arg0: i32) -> (i32, i32, i32, i32) {
    %c0_i32 = arith.constant 0 : i32
    %c0_i32_0 = arith.constant 0 : i32
    %c0_i32_1 = arith.constant 0 : i32
    %c0_i32_2 = arith.constant 0 : i32
    %c0_i32_3 = arith.constant 0 : i32
    return %c0_i32, %c0_i32_0, %c0_i32_1, %c0_i32_2 : i32, i32, i32, i32
  }
}

</mosaic_0001>

<llo_original>
// kernel: feature_extractor.1
$region0: #{feature_extractor.1}
  #allocation0 [shape = 'u32[]', space=smem, size = 0x4, offset = 0x4, fixed_abs, tag = 'smem constant byte address 0x4 - core index']
  #allocation1 [shape = 'u32[144,128]{1,0:T(1,128)}', space=vmem, size = 0x12000, scoped, tag = 'internal scratch']
  #allocation2 [shape = 'f32[2,18,18,4]{3,2,1,0:T(8,128)}', space=vmem, size = 0x6c000, scoped, tag = 'scratch operand']
  #allocation3 [shape = 'f32[2,18,18,8]{3,2,1,0:T(8,128)}', space=vmem, size = 0x6c000, scoped, tag = 'scratch operand']
  %s0 = inlined_call_operand.vmem [shape: f32[2,16,16,4], index: 0, kind: input, shape index: {}]
  %s1 = inlined_call_operand.vmem [shape: bf16[36,8], index: 1, kind: input, shape index: {}]
  %s2 = inlined_call_operand.vmem [shape: f32[1,8], index: 2, kind: input, shape index: {}]
  %s3 = inlined_call_operand.vmem [shape: bf16[72,128], index: 3, kind: input, shape index: {}]
  %s4 = inlined_call_operand.vmem [shape: f32[1,128], index: 4, kind: input, shape index: {}]
  %s5 = inlined_call_operand.vmem [shape: f32[2,16,16,128], index: 5, kind: output, shape index: {}]
  %s6 = sld [smem:[#allocation0]]
  $region30: #{feature_extractor.1} parent=0
    _
  %s8 = ssub.s32 1, %s6
  %s9 = scalar_select 0, %s8, %s6
  // Predicated region
  $region2: #{feature_extractor.1} parent=0 // pred_check
    _
  $region3: #{feature_extractor.1} parent=0 // pred_check_branch
    %11 = sbr.rel (0) target = $region5
  $region4: #{feature_extractor.1} parent=0 // pred_region
    _
  $region5: #{feature_extractor.1} parent=0 // pred_fallthru
    _
  // Predicated region
  $region6: #{feature_extractor.1} parent=0 // pred_check
    _
  $region7: #{feature_extractor.1} parent=0 // pred_check_branch
    %13 = sbr.rel (0) target = $region9
  $region8: #{feature_extractor.1} parent=0 // pred_region
    _
  $region9: #{feature_extractor.1} parent=0 // pred_fallthru
    _
  // Predicated region
  $region10: #{feature_extractor.1} parent=0 // pred_check
    _
  $region11: #{feature_extractor.1} parent=0 // pred_check_branch
    %15 = sbr.rel (0) target = $region13
  $region12: #{feature_extractor.1} parent=0 // pred_region
    _
  $region13: #{feature_extractor.1} parent=0 // pred_fallthru
    _
  // Predicated region
  $region14: #{feature_extractor.1} parent=0 // pred_check
    _
  $region15: #{feature_extractor.1} parent=0 // pred_check_branch
    %17 = sbr.rel (0) target = $region17
  $region16: #{feature_extractor.1} parent=0 // pred_region
    _
  $region17: #{feature_extractor.1} parent=0 // pred_fallthru
    _
  // Predicated region
  $region18: #{feature_extractor.1} parent=0 // pred_check
    _
  $region19: #{feature_extractor.1} parent=0 // pred_check_branch
    %19 = sbr.rel (0) target = $region21
  $region20: #{feature_extractor.1} parent=0 // pred_region
    _
  $region21: #{feature_extractor.1} parent=0 // pred_fallthru
    _
  %vm21 = vcmask 31744
  %22 = vst.msk [vmem:[#allocation2] sm:$0xff] %vm21, 0.0
  %23 = vst.msk [vmem:[#allocation2 + $0x8] sm:$0xff] %vm21, 0.0
  %vm24 = vcmask 25600
  %25 = vst.msk [vmem:[#allocation2 + $0x10] sm:$0x3] %vm24, 0.0
  %26 = vst.msk [vmem:[#allocation2 + $0x18] sm:$0xff] %vm21, 0.0
  %27 = vst.msk [vmem:[#allocation2 + $0x20] sm:$0xff] %vm21, 0.0
  %28 = vst.msk [vmem:[#allocation2 + $0x28] sm:$0x3] %vm24, 0.0
  %29 = vst.msk [vmem:[#allocation2 + $0x30] sm:$0xff] %vm21, 0.0
  %30 = vst.msk [vmem:[#allocation2 + $0x38] sm:$0xff] %vm21, 0.0
  %31 = vst.msk [vmem:[#allocation2 + $0x40] sm:$0x3] %vm24, 0.0
  %32 = vst.msk [vmem:[#allocation2 + $0x48] sm:$0xff] %vm21, 0.0
  %33 = vst.msk [vmem:[#allocation2 + $0x50] sm:$0xff] %vm21, 0.0
  %34 = vst.msk [vmem:[#allocation2 + $0x58] sm:$0x3] %vm24, 0.0
  %35 = vst.msk [vmem:[#allocation2 + $0x60] sm:$0xff] %vm21, 0.0
  %36 = vst.msk [vmem:[#allocation2 + $0x68] sm:$0xff] %vm21, 0.0
  %37 = vst.msk [vmem:[#allocation2 + $0x70] sm:$0x3] %vm24, 0.0
  %38 = vst.msk [vmem:[#allocation2 + $0x78] sm:$0xff] %vm21, 0.0
  %39 = vst.msk [vmem:[#allocation2 + $0x80] sm:$0xff] %vm21, 0.0
  %40 = vst.msk [vmem:[#allocation2 + $0x88] sm:$0x3] %vm24, 0.0
  %41 = vst.msk [vmem:[#allocation2 + $0x90] sm:$0xff] %vm21, 0.0
  %42 = vst.msk [vmem:[#allocation2 + $0x98] sm:$0xff] %vm21, 0.0
  %43 = vst.msk [vmem:[#allocation2 + $0xa0] sm:$0x3] %vm24, 0.0
  %44 = vst.msk [vmem:[#allocation2 + $0xa8] sm:$0xff] %vm21, 0.0
  %45 = vst.msk [vmem:[#allocation2 + $0xb0] sm:$0xff] %vm21, 0.0
  %46 = vst.msk [vmem:[#allocation2 + $0xb8] sm:$0x3] %vm24, 0.0
  %47 = vst.msk [vmem:[#allocation2 + $0xc0] sm:$0xff] %vm21, 0.0
  %48 = vst.msk [vmem:[#allocation2 + $0xc8] sm:$0xff] %vm21, 0.0
  %49 = vst.msk [vmem:[#allocation2 + $0xd0] sm:$0x3] %vm24, 0.0
  %50 = vst.msk [vmem:[#allocation2 + $0xd8] sm:$0xff] %vm21, 0.0
  %51 = vst.msk [vmem:[#allocation2 + $0xe0] sm:$0xff] %vm21, 0.0
  %52 = vst.msk [vmem:[#allocation2 + $0xe8] sm:$0x3] %vm24, 0.0
  %53 = vst.msk [vmem:[#allocation2 + $0xf0] sm:$0xff] %vm21, 0.0
  %54 = vst.msk [vmem:[#allocation2 + $0xf8] sm:$0xff] %vm21, 0.0
  %55 = vst.msk [vmem:[#allocation2 + $0x100] sm:$0x3] %vm24, 0.0
  %56 = vst.msk [vmem:[#allocation2 + $0x108] sm:$0xff] %vm21, 0.0
  %57 = vst.msk [vmem:[#allocation2 + $0x110] sm:$0xff] %vm21, 0.0
  %58 = vst.msk [vmem:[#allocation2 + $0x118] sm:$0x3] %vm24, 0.0
  %59 = vst.msk [vmem:[#allocation2 + $0x120] sm:$0xff] %vm21, 0.0
  %60 = vst.msk [vmem:[#allocation2 + $0x128] sm:$0xff] %vm21, 0.0
  %61 = vst.msk [vmem:[#allocation2 + $0x130] sm:$0x3] %vm24, 0.0
  %62 = vst.msk [vmem:[#allocation2 + $0x138] sm:$0xff] %vm21, 0.0
  %63 = vst.msk [vmem:[#allocation2 + $0x140] sm:$0xff] %vm21, 0.0
  %64 = vst.msk [vmem:[#allocation2 + $0x148] sm:$0x3] %vm24, 0.0
  %65 = vst.msk [vmem:[#allocation2 + $0x150] sm:$0xff] %vm21, 0.0
  %66 = vst.msk [vmem:[#allocation2 + $0x158] sm:$0xff] %vm21, 0.0
  %67 = vst.msk [vmem:[#allocation2 + $0x160] sm:$0x3] %vm24, 0.0
  %68 = vst.msk [vmem:[#allocation2 + $0x168] sm:$0xff] %vm21, 0.0
  %69 = vst.msk [vmem:[#allocation2 + $0x170] sm:$0xff] %vm21, 0.0
  %70 = vst.msk [vmem:[#allocation2 + $0x178] sm:$0x3] %vm24, 0.0
  %71 = vst.msk [vmem:[#allocation2 + $0x180] sm:$0xff] %vm21, 0.0
  %72 = vst.msk [vmem:[#allocation2 + $0x188] sm:$0xff] %vm21, 0.0
  %73 = vst.msk [vmem:[#allocation2 + $0x190] sm:$0x3] %vm24, 0.0
  %74 = vst.msk [vmem:[#allocation2 + $0x198] sm:$0xff] %vm21, 0.0
  %75 = vst.msk [vmem:[#allocation2 + $0x1a0] sm:$0xff] %vm21, 0.0
  %76 = vst.msk [vmem:[#allocation2 + $0x1a8] sm:$0x3] %vm24, 0.0
  %77 = vst.msk [vmem:[#allocation2 + $0x1b0] sm:$0xff] %vm21, 0.0
  %78 = vst.msk [vmem:[#allocation2 + $0x1b8] sm:$0xff] %vm21, 0.0
  %79 = vst.msk [vmem:[#allocation2 + $0x1c0] sm:$0x3] %vm24, 0.0
  %80 = vst.msk [vmem:[#allocation2 + $0x1c8] sm:$0xff] %vm21, 0.0
  %81 = vst.msk [vmem:[#allocation2 + $0x1d0] sm:$0xff] %vm21, 0.0
  %82 = vst.msk [vmem:[#allocation2 + $0x1d8] sm:$0x3] %vm24, 0.0
  %83 = vst.msk [vmem:[#allocation2 + $0x1e0] sm:$0xff] %vm21, 0.0
  %84 = vst.msk [vmem:[#allocation2 + $0x1e8] sm:$0xff] %vm21, 0.0
  %85 = vst.msk [vmem:[#allocation2 + $0x1f0] sm:$0x3] %vm24, 0.0
  %86 = vst.msk [vmem:[#allocation2 + $0x1f8] sm:$0xff] %vm21, 0.0
  %87 = vst.msk [vmem:[#allocation2 + $0x200] sm:$0xff] %vm21, 0.0
  %88 = vst.msk [vmem:[#allocation2 + $0x208] sm:$0x3] %vm24, 0.0
  %89 = vst.msk [vmem:[#allocation2 + $0x210] sm:$0xff] %vm21, 0.0
  %90 = vst.msk [vmem:[#allocation2 + $0x218] sm:$0xff] %vm21, 0.0
  %91 = vst.msk [vmem:[#allocation2 + $0x220] sm:$0x3] %vm24, 0.0
  %92 = vst.msk [vmem:[#allocation2 + $0x228] sm:$0xff] %vm21, 0.0
  %93 = vst.msk [vmem:[#allocation2 + $0x230] sm:$0xff] %vm21, 0.0
  %94 = vst.msk [vmem:[#allocation2 + $0x238] sm:$0x3] %vm24, 0.0
  %95 = vst.msk [vmem:[#allocation2 + $0x240] sm:$0xff] %vm21, 0.0
  %96 = vst.msk [vmem:[#allocation2 + $0x248] sm:$0xff] %vm21, 0.0
  %97 = vst.msk [vmem:[#allocation2 + $0x250] sm:$0x3] %vm24, 0.0
  %98 = vst.msk [vmem:[#allocation2 + $0x258] sm:$0xff] %vm21, 0.0
  %99 = vst.msk [vmem:[#allocation2 + $0x260] sm:$0xff] %vm21, 0.0
  %100 = vst.msk [vmem:[#allocation2 + $0x268] sm:$0x3] %vm24, 0.0
  %101 = vst.msk [vmem:[#allocation2 + $0x270] sm:$0xff] %vm21, 0.0
  %102 = vst.msk [vmem:[#allocation2 + $0x278] sm:$0xff] %vm21, 0.0
  %103 = vst.msk [vmem:[#allocation2 + $0x280] sm:$0x3] %vm24, 0.0
  %104 = vst.msk [vmem:[#allocation2 + $0x288] sm:$0xff] %vm21, 0.0
  %105 = vst.msk [vmem:[#allocation2 + $0x290] sm:$0xff] %vm21, 0.0
  %106 = vst.msk [vmem:[#allocation2 + $0x298] sm:$0x3] %vm24, 0.0
  %107 = vst.msk [vmem:[#allocation2 + $0x2a0] sm:$0xff] %vm21, 0.0
  %108 = vst.msk [vmem:[#allocation2 + $0x2a8] sm:$0xff] %vm21, 0.0
  %109 = vst.msk [vmem:[#allocation2 + $0x2b0] sm:$0x3] %vm24, 0.0
  %110 = vst.msk [vmem:[#allocation2 + $0x2b8] sm:$0xff] %vm21, 0.0
  %111 = vst.msk [vmem:[#allocation2 + $0x2c0] sm:$0xff] %vm21, 0.0
  %112 = vst.msk [vmem:[#allocation2 + $0x2c8] sm:$0x3] %vm24, 0.0
  %113 = vst.msk [vmem:[#allocation2 + $0x2d0] sm:$0xff] %vm21, 0.0
  %114 = vst.msk [vmem:[#allocation2 + $0x2d8] sm:$0xff] %vm21, 0.0
  %115 = vst.msk [vmem:[#allocation2 + $0x2e0] sm:$0x3] %vm24, 0.0
  %116 = vst.msk [vmem:[#allocation2 + $0x2e8] sm:$0xff] %vm21, 0.0
  %117 = vst.msk [vmem:[#allocation2 + $0x2f0] sm:$0xff] %vm21, 0.0
  %118 = vst.msk [vmem:[#allocation2 + $0x2f8] sm:$0x3] %vm24, 0.0
  %119 = vst.msk [vmem:[#allocation2 + $0x300] sm:$0xff] %vm21, 0.0
  %120 = vst.msk [vmem:[#allocation2 + $0x308] sm:$0xff] %vm21, 0.0
  %121 = vst.msk [vmem:[#allocation2 + $0x310] sm:$0x3] %vm24, 0.0
  %122 = vst.msk [vmem:[#allocation2 + $0x318] sm:$0xff] %vm21, 0.0
  %123 = vst.msk [vmem:[#allocation2 + $0x320] sm:$0xff] %vm21, 0.0
  %124 = vst.msk [vmem:[#allocation2 + $0x328] sm:$0x3] %vm24, 0.0
  %125 = vst.msk [vmem:[#allocation2 + $0x330] sm:$0xff] %vm21, 0.0
  %126 = vst.msk [vmem:[#allocation2 + $0x338] sm:$0xff] %vm21, 0.0
  %127 = vst.msk [vmem:[#allocation2 + $0x340] sm:$0x3] %vm24, 0.0
  %128 = vst.msk [vmem:[#allocation2 + $0x348] sm:$0xff] %vm21, 0.0
  %129 = vst.msk [vmem:[#allocation2 + $0x350] sm:$0xff] %vm21, 0.0
  %130 = vst.msk [vmem:[#allocation2 + $0x358] sm:$0x3] %vm24, 0.0
  %v131 = vld [vmem:[%s0] sm:$0xff]
  %v132 = vld [vmem:[%s0 + $0x8] sm:$0xff]
  %v133 = vld [vmem:[%s0 + $0x10] sm:$0xff]
  %v134 = vld [vmem:[%s0 + $0x18] sm:$0xff]
  %v135 = vld [vmem:[%s0 + $0x20] sm:$0xff]
  %v136 = vld [vmem:[%s0 + $0x28] sm:$0xff]
  %v137 = vld [vmem:[%s0 + $0x30] sm:$0xff]
  %v138 = vld [vmem:[%s0 + $0x38] sm:$0xff]
  %v139 = vld [vmem:[%s0 + $0x40] sm:$0xff]
  %v140 = vld [vmem:[%s0 + $0x48] sm:$0xff]
  %v141 = vld [vmem:[%s0 + $0x50] sm:$0xff]
  %v142 = vld [vmem:[%s0 + $0x58] sm:$0xff]
  %v143 = vld [vmem:[%s0 + $0x60] sm:$0xff]
  %v144 = vld [vmem:[%s0 + $0x68] sm:$0xff]
  %v145 = vld [vmem:[%s0 + $0x70] sm:$0xff]
  %v146 = vld [vmem:[%s0 + $0x78] sm:$0xff]
  %v147 = vld [vmem:[%s0 + $0x80] sm:$0xff]
  %v148 = vld [vmem:[%s0 + $0x88] sm:$0xff]
  %v149 = vld [vmem:[%s0 + $0x90] sm:$0xff]
  %v150 = vld [vmem:[%s0 + $0x98] sm:$0xff]
  %v151 = vld [vmem:[%s0 + $0xa0] sm:$0xff]
  %v152 = vld [vmem:[%s0 + $0xa8] sm:$0xff]
  %v153 = vld [vmem:[%s0 + $0xb0] sm:$0xff]
  %v154 = vld [vmem:[%s0 + $0xb8] sm:$0xff]
  %v155 = vld [vmem:[%s0 + $0xc0] sm:$0xff]
  %v156 = vld [vmem:[%s0 + $0xc8] sm:$0xff]
  %v157 = vld [vmem:[%s0 + $0xd0] sm:$0xff]
  %v158 = vld [vmem:[%s0 + $0xd8] sm:$0xff]
  %v159 = vld [vmem:[%s0 + $0xe0] sm:$0xff]
  %v160 = vld [vmem:[%s0 + $0xe8] sm:$0xff]
  %v161 = vld [vmem:[%s0 + $0xf0] sm:$0xff]
  %v162 = vld [vmem:[%s0 + $0xf8] sm:$0xff]
  %v163 = vld [vmem:[%s0 + $0x100] sm:$0xff]
  %v164 = vld [vmem:[%s0 + $0x108] sm:$0xff]
  %v165 = vld [vmem:[%s0 + $0x110] sm:$0xff]
  %v166 = vld [vmem:[%s0 + $0x118] sm:$0xff]
  %v167 = vld [vmem:[%s0 + $0x120] sm:$0xff]
  %v168 = vld [vmem:[%s0 + $0x128] sm:$0xff]
  %v169 = vld [vmem:[%s0 + $0x130] sm:$0xff]
  %v170 = vld [vmem:[%s0 + $0x138] sm:$0xff]
  %v171 = vld [vmem:[%s0 + $0x140] sm:$0xff]
  %v172 = vld [vmem:[%s0 + $0x148] sm:$0xff]
  %v173 = vld [vmem:[%s0 + $0x150] sm:$0xff]
  %v174 = vld [vmem:[%s0 + $0x158] sm:$0xff]
  %v175 = vld [vmem:[%s0 + $0x160] sm:$0xff]
  %v176 = vld [vmem:[%s0 + $0x168] sm:$0xff]
  %v177 = vld [vmem:[%s0 + $0x170] sm:$0xff]
  %v178 = vld [vmem:[%s0 + $0x178] sm:$0xff]
  %v179 = vld [vmem:[%s0 + $0x180] sm:$0xff]
  %v180 = vld [vmem:[%s0 + $0x188] sm:$0xff]
  %v181 = vld [vmem:[%s0 + $0x190] sm:$0xff]
  %v182 = vld [vmem:[%s0 + $0x198] sm:$0xff]
  %v183 = vld [vmem:[%s0 + $0x1a0] sm:$0xff]
  %v184 = vld [vmem:[%s0 + $0x1a8] sm:$0xff]
  %v185 = vld [vmem:[%s0 + $0x1b0] sm:$0xff]
  %v186 = vld [vmem:[%s0 + $0x1b8] sm:$0xff]
  %v187 = vld [vmem:[%s0 + $0x1c0] sm:$0xff]
  %v188 = vld [vmem:[%s0 + $0x1c8] sm:$0xff]
  %v189 = vld [vmem:[%s0 + $0x1d0] sm:$0xff]
  %v190 = vld [vmem:[%s0 + $0x1d8] sm:$0xff]
  %v191 = vld [vmem:[%s0 + $0x1e0] sm:$0xff]
  %v192 = vld [vmem:[%s0 + $0x1e8] sm:$0xff]
  %v193 = vld [vmem:[%s0 + $0x1f0] sm:$0xff]
  %v194 = vld [vmem:[%s0 + $0x1f8] sm:$0xff]
  %s195 = scalar_lea.vmem [#allocation2], 24
  %196 = vst.msk [vmem:[%s195 + $0x1] sm:$0xff] %vm21, %v131
  %197 = vst.msk [vmem:[%s195 + $0x9] sm:$0xff] %vm21, %v132
  %198 = vst.msk [vmem:[%s195 + $0x19] sm:$0xff] %vm21, %v133
  %199 = vst.msk [vmem:[%s195 + $0x21] sm:$0xff] %vm21, %v134
  %200 = vst.msk [vmem:[%s195 + $0x31] sm:$0xff] %vm21, %v135
  %201 = vst.msk [vmem:[%s195 + $0x39] sm:$0xff] %vm21, %v136
  %202 = vst.msk [vmem:[%s195 + $0x49] sm:$0xff] %vm21, %v137
  %203 = vst.msk [vmem:[%s195 + $0x51] sm:$0xff] %vm21, %v138
  %204 = vst.msk [vmem:[%s195 + $0x61] sm:$0xff] %vm21, %v139
  %205 = vst.msk [vmem:[%s195 + $0x69] sm:$0xff] %vm21, %v140
  %206 = vst.msk [vmem:[%s195 + $0x79] sm:$0xff] %vm21, %v141
  %207 = vst.msk [vmem:[%s195 + $0x81] sm:$0xff] %vm21, %v142
  %208 = vst.msk [vmem:[%s195 + $0x91] sm:$0xff] %vm21, %v143
  %209 = vst.msk [vmem:[%s195 + $0x99] sm:$0xff] %vm21, %v144
  %210 = vst.msk [vmem:[%s195 + $0xa9] sm:$0xff] %vm21, %v145
  %211 = vst.msk [vmem:[%s195 + $0xb1] sm:$0xff] %vm21, %v146
  %212 = vst.msk [vmem:[%s195 + $0xc1] sm:$0xff] %vm21, %v147
  %213 = vst.msk [vmem:[%s195 + $0xc9] sm:$0xff] %vm21, %v148
  %214 = vst.msk [vmem:[%s195 + $0xd9] sm:$0xff] %vm21, %v149
  %215 = vst.msk [vmem:[%s195 + $0xe1] sm:$0xff] %vm21, %v150
  %216 = vst.msk [vmem:[%s195 + $0xf1] sm:$0xff] %vm21, %v151
  %217 = vst.msk [vmem:[%s195 + $0xf9] sm:$0xff] %vm21, %v152
  %218 = vst.msk [vmem:[%s195 + $0x109] sm:$0xff] %vm21, %v153
  %219 = vst.msk [vmem:[%s195 + $0x111] sm:$0xff] %vm21, %v154
  %220 = vst.msk [vmem:[%s195 + $0x121] sm:$0xff] %vm21, %v155
  %221 = vst.msk [vmem:[%s195 + $0x129] sm:$0xff] %vm21, %v156
  %222 = vst.msk [vmem:[%s195 + $0x139] sm:$0xff] %vm21, %v157
  %223 = vst.msk [vmem:[%s195 + $0x141] sm:$0xff] %vm21, %v158
  %224 = vst.msk [vmem:[%s195 + $0x151] sm:$0xff] %vm21, %v159
  %225 = vst.msk [vmem:[%s195 + $0x159] sm:$0xff] %vm21, %v160
  %226 = vst.msk [vmem:[%s195 + $0x169] sm:$0xff] %vm21, %v161
  %227 = vst.msk [vmem:[%s195 + $0x171] sm:$0xff] %vm21, %v162
  %228 = vst.msk [vmem:[%s195 + $0x1b1] sm:$0xff] %vm21, %v163
  %229 = vst.msk [vmem:[%s195 + $0x1b9] sm:$0xff] %vm21, %v164
  %230 = vst.msk [vmem:[%s195 + $0x1c9] sm:$0xff] %vm21, %v165
  %231 = vst.msk [vmem:[%s195 + $0x1d1] sm:$0xff] %vm21, %v166
  %232 = vst.msk [vmem:[%s195 + $0x1e1] sm:$0xff] %vm21, %v167
  %233 = vst.msk [vmem:[%s195 + $0x1e9] sm:$0xff] %vm21, %v168
  %234 = vst.msk [vmem:[%s195 + $0x1f9] sm:$0xff] %vm21, %v169
  %235 = vst.msk [vmem:[%s195 + $0x201] sm:$0xff] %vm21, %v170
  %236 = vst.msk [vmem:[%s195 + $0x211] sm:$0xff] %vm21, %v171
  %237 = vst.msk [vmem:[%s195 + $0x219] sm:$0xff] %vm21, %v172
  %238 = vst.msk [vmem:[%s195 + $0x229] sm:$0xff] %vm21, %v173
  %239 = vst.msk [vmem:[%s195 + $0x231] sm:$0xff] %vm21, %v174
  %240 = vst.msk [vmem:[%s195 + $0x241] sm:$0xff] %vm21, %v175
  %241 = vst.msk [vmem:[%s195 + $0x249] sm:$0xff] %vm21, %v176
  %242 = vst.msk [vmem:[%s195 + $0x259] sm:$0xff] %vm21, %v177
  %243 = vst.msk [vmem:[%s195 + $0x261] sm:$0xff] %vm21, %v178
  %244 = vst.msk [vmem:[%s195 + $0x271] sm:$0xff] %vm21, %v179
  %245 = vst.msk [vmem:[%s195 + $0x279] sm:$0xff] %vm21, %v180
  %246 = vst.msk [vmem:[%s195 + $0x289] sm:$0xff] %vm21, %v181
  %247 = vst.msk [vmem:[%s195 + $0x291] sm:$0xff] %vm21, %v182
  %248 = vst.msk [vmem:[%s195 + $0x2a1] sm:$0xff] %vm21, %v183
  %249 = vst.msk [vmem:[%s195 + $0x2a9] sm:$0xff] %vm21, %v184
  %250 = vst.msk [vmem:[%s195 + $0x2b9] sm:$0xff] %vm21, %v185
  %251 = vst.msk [vmem:[%s195 + $0x2c1] sm:$0xff] %vm21, %v186
  %252 = vst.msk [vmem:[%s195 + $0x2d1] sm:$0xff] %vm21, %v187
  %253 = vst.msk [vmem:[%s195 + $0x2d9] sm:$0xff] %vm21, %v188
  %254 = vst.msk [vmem:[%s195 + $0x2e9] sm:$0xff] %vm21, %v189
  %255 = vst.msk [vmem:[%s195 + $0x2f1] sm:$0xff] %vm21, %v190
  %256 = vst.msk [vmem:[%s195 + $0x301] sm:$0xff] %vm21, %v191
  %257 = vst.msk [vmem:[%s195 + $0x309] sm:$0xff] %vm21, %v192
  %258 = vst.msk [vmem:[%s195 + $0x319] sm:$0xff] %vm21, %v193
  %259 = vst.msk [vmem:[%s195 + $0x321] sm:$0xff] %vm21, %v194
  %v260 = vld [vmem:[#allocation2] sm:$0xff]
  %v261 = vld [vmem:[#allocation2 + $0x8] sm:$0xff]
  %v262 = vld [vmem:[#allocation2 + $0x18] sm:$0xff]
  %v263 = vld [vmem:[#allocation2 + $0x20] sm:$0xff]
  %v264 = vld [vmem:[#allocation2 + $0x30] sm:$0xff]
  %v265 = vld [vmem:[#allocation2 + $0x38] sm:$0xff]
  %v266 = vld [vmem:[#allocation2 + $0x48] sm:$0xff]
  %v267 = vld [vmem:[#allocation2 + $0x50] sm:$0xff]
  %v268 = vld [vmem:[#allocation2 + $0x60] sm:$0xff]
  %v269 = vld [vmem:[#allocation2 + $0x68] sm:$0xff]
  %v270 = vld [vmem:[#allocation2 + $0x78] sm:$0xff]
  %v271 = vld [vmem:[#allocation2 + $0x80] sm:$0xff]
  %v272 = vld [vmem:[#allocation2 + $0x90] sm:$0xff]
  %v273 = vld [vmem:[#allocation2 + $0x98] sm:$0xff]
  %v274 = vld [vmem:[#allocation2 + $0xa8] sm:$0xff]
  %v275 = vld [vmem:[#allocation2 + $0xb0] sm:$0xff]
  %v276 = vld [vmem:[#allocation2 + $0xc0] sm:$0xff]
  %v277 = vld [vmem:[#allocation2 + $0xc8] sm:$0xff]
  %v278 = vld [vmem:[#allocation2 + $0xd8] sm:$0xff]
  %v279 = vld [vmem:[#allocation2 + $0xe0] sm:$0xff]
  %v280 = vld [vmem:[#allocation2 + $0xf0] sm:$0xff]
  %v281 = vld [vmem:[#allocation2 + $0xf8] sm:$0xff]
  %v282 = vld [vmem:[#allocation2 + $0x108] sm:$0xff]
  %v283 = vld [vmem:[#allocation2 + $0x110] sm:$0xff]
  %v284 = vld [vmem:[#allocation2 + $0x120] sm:$0xff]
  %v285 = vld [vmem:[#allocation2 + $0x128] sm:$0xff]
  %v286 = vld [vmem:[#allocation2 + $0x138] sm:$0xff]
  %v287 = vld [vmem:[#allocation2 + $0x140] sm:$0xff]
  %v288 = vld [vmem:[#allocation2 + $0x150] sm:$0xff]
  %v289 = vld [vmem:[#allocation2 + $0x158] sm:$0xff]
  %v290 = vld [vmem:[#allocation2 + $0x168] sm:$0xff]
  %v291 = vld [vmem:[#allocation2 + $0x170] sm:$0xff]
  %v292 = vld [vmem:[#allocation2 + $0x1b0] sm:$0xff]
  %v293 = vld [vmem:[#allocation2 + $0x1b8] sm:$0xff]
  %v294 = vld [vmem:[#allocation2 + $0x1c8] sm:$0xff]
  %v295 = vld [vmem:[#allocation2 + $0x1d0] sm:$0xff]
  %v296 = vld [vmem:[#allocation2 + $0x1e0] sm:$0xff]
  %v297 = vld [vmem:[#allocation2 + $0x1e8] sm:$0xff]
  %v298 = vld [vmem:[#allocation2 + $0x1f8] sm:$0xff]
  %v299 = vld [vmem:[#allocation2 + $0x200] sm:$0xff]
  %v300 = vld [vmem:[#allocation2 + $0x210] sm:$0xff]
  %v301 = vld [vmem:[#allocation2 + $0x218] sm:$0xff]
  %v302 = vld [vmem:[#allocation2 + $0x228] sm:$0xff]
  %v303 = vld [vmem:[#allocation2 + $0x230] sm:$0xff]
  %v304 = vld [vmem:[#allocation2 + $0x240] sm:$0xff]
  %v305 = vld [vmem:[#allocation2 + $0x248] sm:$0xff]
  %v306 = vld [vmem:[#allocation2 + $0x258] sm:$0xff]
  %v307 = vld [vmem:[#allocation2 + $0x260] sm:$0xff]
  %v308 = vld [vmem:[#allocation2 + $0x270] sm:$0xff]
  %v309 = vld [vmem:[#allocation2 + $0x278] sm:$0xff]
  %v310 = vld [vmem:[#allocation2 + $0x288] sm:$0xff]
  %v311 = vld [vmem:[#allocation2 + $0x290] sm:$0xff]
  %v312 = vld [vmem:[#allocation2 + $0x2a0] sm:$0xff]
  %v313 = vld [vmem:[#allocation2 + $0x2a8] sm:$0xff]
  %v314 = vld [vmem:[#allocation2 + $0x2b8] sm:$0xff]
  %v315 = vld [vmem:[#allocation2 + $0x2c0] sm:$0xff]
  %v316 = vld [vmem:[#allocation2 + $0x2d0] sm:$0xff]
  %v317 = vld [vmem:[#allocation2 + $0x2d8] sm:$0xff]
  %v318 = vld [vmem:[#allocation2 + $0x2e8] sm:$0xff]
  %v319 = vld [vmem:[#allocation2 + $0x2f0] sm:$0xff]
  %v320 = vld [vmem:[#allocation2 + $0x300] sm:$0xff]
  %v321 = vld [vmem:[#allocation2 + $0x308] sm:$0xff]
  %v322 = vld [vmem:[#allocation2 + $0x318] sm:$0xff]
  %v323 = vld [vmem:[#allocation2 + $0x320] sm:$0xff]
  %v324 = vld [vmem:[#allocation2 + $0x1] sm:$0xff]
  %v325 = vld [vmem:[#allocation2 + $0x9] sm:$0xff]
  %v326 = vld [vmem:[#allocation2 + $0x19] sm:$0xff]
  %v327 = vld [vmem:[#allocation2 + $0x21] sm:$0xff]
  %v328 = vld [vmem:[#allocation2 + $0x31] sm:$0xff]
  %v329 = vld [vmem:[#allocation2 + $0x39] sm:$0xff]
  %v330 = vld [vmem:[#allocation2 + $0x49] sm:$0xff]
  %v331 = vld [vmem:[#allocation2 + $0x51] sm:$0xff]
  %v332 = vld [vmem:[#allocation2 + $0x61] sm:$0xff]
  %v333 = vld [vmem:[#allocation2 + $0x69] sm:$0xff]
  %v334 = vld [vmem:[#allocation2 + $0x79] sm:$0xff]
  %v335 = vld [vmem:[#allocation2 + $0x81] sm:$0xff]
  %v336 = vld [vmem:[#allocation2 + $0x91] sm:$0xff]
  %v337 = vld [vmem:[#allocation2 + $0x99] sm:$0xff]
  %v338 = vld [vmem:[#allocation2 + $0xa9] sm:$0xff]
  %v339 = vld [vmem:[#allocation2 + $0xb1] sm:$0xff]
  %v340 = vld [vmem:[#allocation2 + $0xc1] sm:$0xff]
  %v341 = vld [vmem:[#allocation2 + $0xc9] sm:$0xff]
  %v342 = vld [vmem:[#allocation2 + $0xd9] sm:$0xff]
  %v343 = vld [vmem:[#allocation2 + $0xe1] sm:$0xff]
  %v344 = vld [vmem:[#allocation2 + $0xf1] sm:$0xff]
  %v345 = vld [vmem:[#allocation2 + $0xf9] sm:$0xff]
  %v346 = vld [vmem:[#allocation2 + $0x109] sm:$0xff]
  %v347 = vld [vmem:[#allocation2 + $0x111] sm:$0xff]
  %v348 = vld [vmem:[#allocation2 + $0x121] sm:$0xff]
  %v349 = vld [vmem:[#allocation2 + $0x129] sm:$0xff]
  %v350 = vld [vmem:[#allocation2 + $0x139] sm:$0xff]
  %v351 = vld [vmem:[#allocation2 + $0x141] sm:$0xff]
  %v352 = vld [vmem:[#allocation2 + $0x151] sm:$0xff]
  %v353 = vld [vmem:[#allocation2 + $0x159] sm:$0xff]
  %v354 = vld [vmem:[#allocation2 + $0x169] sm:$0xff]
  %v355 = vld [vmem:[#allocation2 + $0x171] sm:$0xff]
  %v356 = vld [vmem:[#allocation2 + $0x1b1] sm:$0xff]
  %v357 = vld [vmem:[#allocation2 + $0x1b9] sm:$0xff]
  %v358 = vld [vmem:[#allocation2 + $0x1c9] sm:$0xff]
  %v359 = vld [vmem:[#allocation2 + $0x1d1] sm:$0xff]
  %v360 = vld [vmem:[#allocation2 + $0x1e1] sm:$0xff]
  %v361 = vld [vmem:[#allocation2 + $0x1e9] sm:$0xff]
  %v362 = vld [vmem:[#allocation2 + $0x1f9] sm:$0xff]
  %v363 = vld [vmem:[#allocation2 + $0x201] sm:$0xff]
  %v364 = vld [vmem:[#allocation2 + $0x211] sm:$0xff]
  %v365 = vld [vmem:[#allocation2 + $0x219] sm:$0xff]
  %v366 = vld [vmem:[#allocation2 + $0x229] sm:$0xff]
  %v367 = vld [vmem:[#allocation2 + $0x231] sm:$0xff]
  %v368 = vld [vmem:[#allocation2 + $0x241] sm:$0xff]
  %v369 = vld [vmem:[#allocation2 + $0x249] sm:$0xff]
  %v370 = vld [vmem:[#allocation2 + $0x259] sm:$0xff]
  %v371 = vld [vmem:[#allocation2 + $0x261] sm:$0xff]
  %v372 = vld [vmem:[#allocation2 + $0x271] sm:$0xff]
  %v373 = vld [vmem:[#allocation2 + $0x279] sm:$0xff]
  %v374 = vld [vmem:[#allocation2 + $0x289] sm:$0xff]
  %v375 = vld [vmem:[#allocation2 + $0x291] sm:$0xff]
  %v376 = vld [vmem:[#allocation2 + $0x2a1] sm:$0xff]
  %v377 = vld [vmem:[#allocation2 + $0x2a9] sm:$0xff]
  %v378 = vld [vmem:[#allocation2 + $0x2b9] sm:$0xff]
  %v379 = vld [vmem:[#allocation2 + $0x2c1] sm:$0xff]
  %v380 = vld [vmem:[#allocation2 + $0x2d1] sm:$0xff]
  %v381 = vld [vmem:[#allocation2 + $0x2d9] sm:$0xff]
  %v382 = vld [vmem:[#allocation2 + $0x2e9] sm:$0xff]
  %v383 = vld [vmem:[#allocation2 + $0x2f1] sm:$0xff]
  %v384 = vld [vmem:[#allocation2 + $0x301] sm:$0xff]
  %v385 = vld [vmem:[#allocation2 + $0x309] sm:$0xff]
  %v386 = vld [vmem:[#allocation2 + $0x319] sm:$0xff]
  %v387 = vld [vmem:[#allocation2 + $0x321] sm:$0xff]
  %v388 = vld [vmem:[#allocation2 + $0x2] sm:$0xff]
  %v389 = vld [vmem:[#allocation2 + $0xa] sm:$0xff]
  %v390 = vld [vmem:[#allocation2 + $0x1a] sm:$0xff]
  %v391 = vld [vmem:[#allocation2 + $0x22] sm:$0xff]
  %v392 = vld [vmem:[#allocation2 + $0x32] sm:$0xff]
  %v393 = vld [vmem:[#allocation2 + $0x3a] sm:$0xff]
  %v394 = vld [vmem:[#allocation2 + $0x4a] sm:$0xff]
  %v395 = vld [vmem:[#allocation2 + $0x52] sm:$0xff]
  %v396 = vld [vmem:[#allocation2 + $0x62] sm:$0xff]
  %v397 = vld [vmem:[#allocation2 + $0x6a] sm:$0xff]
  %v398 = vld [vmem:[#allocation2 + $0x7a] sm:$0xff]
  %v399 = vld [vmem:[#allocation2 + $0x82] sm:$0xff]
  %v400 = vld [vmem:[#allocation2 + $0x92] sm:$0xff]
  %v401 = vld [vmem:[#allocation2 + $0x9a] sm:$0xff]
  %v402 = vld [vmem:[#allocation2 + $0xaa] sm:$0xff]
  %v403 = vld [vmem:[#allocation2 + $0xb2] sm:$0xff]
  %v404 = vld [vmem:[#allocation2 + $0xc2] sm:$0xff]
  %v405 = vld [vmem:[#allocation2 + $0xca] sm:$0xff]
  %v406 = vld [vmem:[#allocation2 + $0xda] sm:$0xff]
  %v407 = vld [vmem:[#allocation2 + $0xe2] sm:$0xff]
  %v408 = vld [vmem:[#allocation2 + $0xf2] sm:$0xff]
  %v409 = vld [vmem:[#allocation2 + $0xfa] sm:$0xff]
  %v410 = vld [vmem:[#allocation2 + $0x10a] sm:$0xff]
  %v411 = vld [vmem:[#allocation2 + $0x112] sm:$0xff]
  %v412 = vld [vmem:[#allocation2 + $0x122] sm:$0xff]
  %v413 = vld [vmem:[#allocation2 + $0x12a] sm:$0xff]
  %v414 = vld [vmem:[#allocation2 + $0x13a] sm:$0xff]
  %v415 = vld [vmem:[#allocation2 + $0x142] sm:$0xff]
  %v416 = vld [vmem:[#allocation2 + $0x152] sm:$0xff]
  %v417 = vld [vmem:[#allocation2 + $0x15a] sm:$0xff]
  %v418 = vld [vmem:[#allocation2 + $0x16a] sm:$0xff]
  %v419 = vld [vmem:[#allocation2 + $0x172] sm:$0xff]
  %v420 = vld [vmem:[#allocation2 + $0x1b2] sm:$0xff]
  %v421 = vld [vmem:[#allocation2 + $0x1ba] sm:$0xff]
  %v422 = vld [vmem:[#allocation2 + $0x1ca] sm:$0xff]
  %v423 = vld [vmem:[#allocation2 + $0x1d2] sm:$0xff]
  %v424 = vld [vmem:[#allocation2 + $0x1e2] sm:$0xff]
  %v425 = vld [vmem:[#allocation2 + $0x1ea] sm:$0xff]
  %v426 = vld [vmem:[#allocation2 + $0x1fa] sm:$0xff]
  %v427 = vld [vmem:[#allocation2 + $0x202] sm:$0xff]
  %v428 = vld [vmem:[#allocation2 + $0x212] sm:$0xff]
  %v429 = vld [vmem:[#allocation2 + $0x21a] sm:$0xff]
  %v430 = vld [vmem:[#allocation2 + $0x22a] sm:$0xff]
  %v431 = vld [vmem:[#allocation2 + $0x232] sm:$0xff]
  %v432 = vld [vmem:[#allocation2 + $0x242] sm:$0xff]
  %v433 = vld [vmem:[#allocation2 + $0x24a] sm:$0xff]
  %v434 = vld [vmem:[#allocation2 + $0x25a] sm:$0xff]
  %v435 = vld [vmem:[#allocation2 + $0x262] sm:$0xff]
  %v436 = vld [vmem:[#allocation2 + $0x272] sm:$0xff]
  %v437 = vld [vmem:[#allocation2 + $0x27a] sm:$0xff]
  %v438 = vld [vmem:[#allocation2 + $0x28a] sm:$0xff]
  %v439 = vld [vmem:[#allocation2 + $0x292] sm:$0xff]
  %v440 = vld [vmem:[#allocation2 + $0x2a2] sm:$0xff]
  %v441 = vld [vmem:[#allocation2 + $0x2aa] sm:$0xff]
  %v442 = vld [vmem:[#allocation2 + $0x2ba] sm:$0xff]
  %v443 = vld [vmem:[#allocation2 + $0x2c2] sm:$0xff]
  %v444 = vld [vmem:[#allocation2 + $0x2d2] sm:$0xff]
  %v445 = vld [vmem:[#allocation2 + $0x2da] sm:$0xff]
  %v446 = vld [vmem:[#allocation2 + $0x2ea] sm:$0xff]
  %v447 = vld [vmem:[#allocation2 + $0x2f2] sm:$0xff]
  %v448 = vld [vmem:[#allocation2 + $0x302] sm:$0xff]
  %v449 = vld [vmem:[#allocation2 + $0x30a] sm:$0xff]
  %v450 = vld [vmem:[#allocation2 + $0x31a] sm:$0xff]
  %v451 = vld [vmem:[#allocation2 + $0x322] sm:$0xff]
  %v452 = vld [vmem:[%s195] sm:$0xff]
  %v453 = vld [vmem:[%s195 + $0x8] sm:$0xff]
  %v454 = vld [vmem:[%s195 + $0x18] sm:$0xff]
  %v455 = vld [vmem:[%s195 + $0x20] sm:$0xff]
  %v456 = vld [vmem:[%s195 + $0x30] sm:$0xff]
  %v457 = vld [vmem:[%s195 + $0x38] sm:$0xff]
  %v458 = vld [vmem:[%s195 + $0x48] sm:$0xff]
  %v459 = vld [vmem:[%s195 + $0x50] sm:$0xff]
  %v460 = vld [vmem:[%s195 + $0x60] sm:$0xff]
  %v461 = vld [vmem:[%s195 + $0x68] sm:$0xff]
  %v462 = vld [vmem:[%s195 + $0x78] sm:$0xff]
  %v463 = vld [vmem:[%s195 + $0x80] sm:$0xff]
  %v464 = vld [vmem:[%s195 + $0x90] sm:$0xff]
  %v465 = vld [vmem:[%s195 + $0x98] sm:$0xff]
  %v466 = vld [vmem:[%s195 + $0xa8] sm:$0xff]
  %v467 = vld [vmem:[%s195 + $0xb0] sm:$0xff]
  %v468 = vld [vmem:[%s195 + $0xc0] sm:$0xff]
  %v469 = vld [vmem:[%s195 + $0xc8] sm:$0xff]
  %v470 = vld [vmem:[%s195 + $0xd8] sm:$0xff]
  %v471 = vld [vmem:[%s195 + $0xe0] sm:$0xff]
  %v472 = vld [vmem:[%s195 + $0xf0] sm:$0xff]
  %v473 = vld [vmem:[%s195 + $0xf8] sm:$0xff]
  %v474 = vld [vmem:[%s195 + $0x108] sm:$0xff]
  %v475 = vld [vmem:[%s195 + $0x110] sm:$0xff]
  %v476 = vld [vmem:[%s195 + $0x120] sm:$0xff]
  %v477 = vld [vmem:[%s195 + $0x128] sm:$0xff]
  %v478 = vld [vmem:[%s195 + $0x138] sm:$0xff]
  %v479 = vld [vmem:[%s195 + $0x140] sm:$0xff]
  %v480 = vld [vmem:[%s195 + $0x150] sm:$0xff]
  %v481 = vld [vmem:[%s195 + $0x158] sm:$0xff]
  %v482 = vld [vmem:[%s195 + $0x168] sm:$0xff]
  %v483 = vld [vmem:[%s195 + $0x170] sm:$0xff]
  %v484 = vld [vmem:[%s195 + $0x1b0] sm:$0xff]
  %v485 = vld [vmem:[%s195 + $0x1b8] sm:$0xff]
  %v486 = vld [vmem:[%s195 + $0x1c8] sm:$0xff]
  %v487 = vld [vmem:[%s195 + $0x1d0] sm:$0xff]
  %v488 = vld [vmem:[%s195 + $0x1e0] sm:$0xff]
  %v489 = vld [vmem:[%s195 + $0x1e8] sm:$0xff]
  %v490 = vld [vmem:[%s195 + $0x1f8] sm:$0xff]
  %v491 = vld [vmem:[%s195 + $0x200] sm:$0xff]
  %v492 = vld [vmem:[%s195 + $0x210] sm:$0xff]
  %v493 = vld [vmem:[%s195 + $0x218] sm:$0xff]
  %v494 = vld [vmem:[%s195 + $0x228] sm:$0xff]
  %v495 = vld [vmem:[%s195 + $0x230] sm:$0xff]
  %v496 = vld [vmem:[%s195 + $0x240] sm:$0xff]
  %v497 = vld [vmem:[%s195 + $0x248] sm:$0xff]
  %v498 = vld [vmem:[%s195 + $0x258] sm:$0xff]
  %v499 = vld [vmem:[%s195 + $0x260] sm:$0xff]
  %v500 = vld [vmem:[%s195 + $0x270] sm:$0xff]
  %v501 = vld [vmem:[%s195 + $0x278] sm:$0xff]
  %v502 = vld [vmem:[%s195 + $0x288] sm:$0xff]
  %v503 = vld [vmem:[%s195 + $0x290] sm:$0xff]
  %v504 = vld [vmem:[%s195 + $0x2a0] sm:$0xff]
  %v505 = vld [vmem:[%s195 + $0x2a8] sm:$0xff]
  %v506 = vld [vmem:[%s195 + $0x2b8] sm:$0xff]
  %v507 = vld [vmem:[%s195 + $0x2c0] sm:$0xff]
  %v508 = vld [vmem:[%s195 + $0x2d0] sm:$0xff]
  %v509 = vld [vmem:[%s195 + $0x2d8] sm:$0xff]
  %v510 = vld [vmem:[%s195 + $0x2e8] sm:$0xff]
  %v511 = vld [vmem:[%s195 + $0x2f0] sm:$0xff]
  %v512 = vld [vmem:[%s195 + $0x300] sm:$0xff]
  %v513 = vld [vmem:[%s195 + $0x308] sm:$0xff]
  %v514 = vld [vmem:[%s195 + $0x318] sm:$0xff]
  %v515 = vld [vmem:[%s195 + $0x320] sm:$0xff]
  %v516 = vld [vmem:[%s195 + $0x1] sm:$0xff]
  %v517 = vld [vmem:[%s195 + $0x9] sm:$0xff]
  %v518 = vld [vmem:[%s195 + $0x19] sm:$0xff]
  %v519 = vld [vmem:[%s195 + $0x21] sm:$0xff]
  %v520 = vld [vmem:[%s195 + $0x31] sm:$0xff]
  %v521 = vld [vmem:[%s195 + $0x39] sm:$0xff]
  %v522 = vld [vmem:[%s195 + $0x49] sm:$0xff]
  %v523 = vld [vmem:[%s195 + $0x51] sm:$0xff]
  %v524 = vld [vmem:[%s195 + $0x61] sm:$0xff]
  %v525 = vld [vmem:[%s195 + $0x69] sm:$0xff]
  %v526 = vld [vmem:[%s195 + $0x79] sm:$0xff]
  %v527 = vld [vmem:[%s195 + $0x81] sm:$0xff]
  %v528 = vld [vmem:[%s195 + $0x91] sm:$0xff]
  %v529 = vld [vmem:[%s195 + $0x99] sm:$0xff]
  %v530 = vld [vmem:[%s195 + $0xa9] sm:$0xff]
  %v531 = vld [vmem:[%s195 + $0xb1] sm:$0xff]
  %v532 = vld [vmem:[%s195 + $0xc1] sm:$0xff]
  %v533 = vld [vmem:[%s195 + $0xc9] sm:$0xff]
  %v534 = vld [vmem:[%s195 + $0xd9] sm:$0xff]
  %v535 = vld [vmem:[%s195 + $0xe1] sm:$0xff]
  %v536 = vld [vmem:[%s195 + $0xf1] sm:$0xff]
  %v537 = vld [vmem:[%s195 + $0xf9] sm:$0xff]
  %v538 = vld [vmem:[%s195 + $0x109] sm:$0xff]
  %v539 = vld [vmem:[%s195 + $0x111] sm:$0xff]
  %v540 = vld [vmem:[%s195 + $0x121] sm:$0xff]
  %v541 = vld [vmem:[%s195 + $0x129] sm:$0xff]
  %v542 = vld [vmem:[%s195 + $0x139] sm:$0xff]
  %v543 = vld [vmem:[%s195 + $0x141] sm:$0xff]
  %v544 = vld [vmem:[%s195 + $0x151] sm:$0xff]
  %v545 = vld [vmem:[%s195 + $0x159] sm:$0xff]
  %v546 = vld [vmem:[%s195 + $0x169] sm:$0xff]
  %v547 = vld [vmem:[%s195 + $0x171] sm:$0xff]
  %v548 = vld [vmem:[%s195 + $0x1b1] sm:$0xff]
  %v549 = vld [vmem:[%s195 + $0x1b9] sm:$0xff]
  %v550 = vld [vmem:[%s195 + $0x1c9] sm:$0xff]
  %v551 = vld [vmem:[%s195 + $0x1d1] sm:$0xff]
  %v552 = vld [vmem:[%s195 + $0x1e1] sm:$0xff]
  %v553 = vld [vmem:[%s195 + $0x1e9] sm:$0xff]
  %v554 = vld [vmem:[%s195 + $0x1f9] sm:$0xff]
  %v555 = vld [vmem:[%s195 + $0x201] sm:$0xff]
  %v556 = vld [vmem:[%s195 + $0x211] sm:$0xff]
  %v557 = vld [vmem:[%s195 + $0x219] sm:$0xff]
  %v558 = vld [vmem:[%s195 + $0x229] sm:$0xff]
  %v559 = vld [vmem:[%s195 + $0x231] sm:$0xff]
  %v560 = vld [vmem:[%s195 + $0x241] sm:$0xff]
  %v561 = vld [vmem:[%s195 + $0x249] sm:$0xff]
  %v562 = vld [vmem:[%s195 + $0x259] sm:$0xff]
  %v563 = vld [vmem:[%s195 + $0x261] sm:$0xff]
  %v564 = vld [vmem:[%s195 + $0x271] sm:$0xff]
  %v565 = vld [vmem:[%s195 + $0x279] sm:$0xff]
  %v566 = vld [vmem:[%s195 + $0x289] sm:$0xff]
  %v567 = vld [vmem:[%s195 + $0x291] sm:$0xff]
  %v568 = vld [vmem:[%s195 + $0x2a1] sm:$0xff]
  %v569 = vld [vmem:[%s195 + $0x2a9] sm:$0xff]
  %v570 = vld [vmem:[%s195 + $0x2b9] sm:$0xff]
  %v571 = vld [vmem:[%s195 + $0x2c1] sm:$0xff]
  %v572 = vld [vmem:[%s195 + $0x2d1] sm:$0xff]
  %v573 = vld [vmem:[%s195 + $0x2d9] sm:$0xff]
  %v574 = vld [vmem:[%s195 + $0x2e9] sm:$0xff]
  %v575 = vld [vmem:[%s195 + $0x2f1] sm:$0xff]
  %v576 = vld [vmem:[%s195 + $0x301] sm:$0xff]
  %v577 = vld [vmem:[%s195 + $0x309] sm:$0xff]
  %v578 = vld [vmem:[%s195 + $0x319] sm:$0xff]
  %v579 = vld [vmem:[%s195 + $0x321] sm:$0xff]
  %v580 = vld [vmem:[%s195 + $0x2] sm:$0xff]
  %v581 = vld [vmem:[%s195 + $0xa] sm:$0xff]
  %v582 = vld [vmem:[%s195 + $0x1a] sm:$0xff]
  %v583 = vld [vmem:[%s195 + $0x22] sm:$0xff]
  %v584 = vld [vmem:[%s195 + $0x32] sm:$0xff]
  %v585 = vld [vmem:[%s195 + $0x3a] sm:$0xff]
  %v586 = vld [vmem:[%s195 + $0x4a] sm:$0xff]
  %v587 = vld [vmem:[%s195 + $0x52] sm:$0xff]
  %v588 = vld [vmem:[%s195 + $0x62] sm:$0xff]
  %v589 = vld [vmem:[%s195 + $0x6a] sm:$0xff]
  %v590 = vld [vmem:[%s195 + $0x7a] sm:$0xff]
  %v591 = vld [vmem:[%s195 + $0x82] sm:$0xff]
  %v592 = vld [vmem:[%s195 + $0x92] sm:$0xff]
  %v593 = vld [vmem:[%s195 + $0x9a] sm:$0xff]
  %v594 = vld [vmem:[%s195 + $0xaa] sm:$0xff]
  %v595 = vld [vmem:[%s195 + $0xb2] sm:$0xff]
  %v596 = vld [vmem:[%s195 + $0xc2] sm:$0xff]
  %v597 = vld [vmem:[%s195 + $0xca] sm:$0xff]
  %v598 = vld [vmem:[%s195 + $0xda] sm:$0xff]
  %v599 = vld [vmem:[%s195 + $0xe2] sm:$0xff]
  %v600 = vld [vmem:[%s195 + $0xf2] sm:$0xff]
  %v601 = vld [vmem:[%s195 + $0xfa] sm:$0xff]
  %v602 = vld [vmem:[%s195 + $0x10a] sm:$0xff]
  %v603 = vld [vmem:[%s195 + $0x112] sm:$0xff]
  %v604 = vld [vmem:[%s195 + $0x122] sm:$0xff]
  %v605 = vld [vmem:[%s195 + $0x12a] sm:$0xff]
  %v606 = vld [vmem:[%s195 + $0x13a] sm:$0xff]
  %v607 = vld [vmem:[%s195 + $0x142] sm:$0xff]
  %v608 = vld [vmem:[%s195 + $0x152] sm:$0xff]
  %v609 = vld [vmem:[%s195 + $0x15a] sm:$0xff]
  %v610 = vld [vmem:[%s195 + $0x16a] sm:$0xff]
  %v611 = vld [vmem:[%s195 + $0x172] sm:$0xff]
  %v612 = vld [vmem:[%s195 + $0x1b2] sm:$0xff]
  %v613 = vld [vmem:[%s195 + $0x1ba] sm:$0xff]
  %v614 = vld [vmem:[%s195 + $0x1ca] sm:$0xff]
  %v615 = vld [vmem:[%s195 + $0x1d2] sm:$0xff]
  %v616 = vld [vmem:[%s195 + $0x1e2] sm:$0xff]
  %v617 = vld [vmem:[%s195 + $0x1ea] sm:$0xff]
  %v618 = vld [vmem:[%s195 + $0x1fa] sm:$0xff]
  %v619 = vld [vmem:[%s195 + $0x202] sm:$0xff]
  %v620 = vld [vmem:[%s195 + $0x212] sm:$0xff]
  %v621 = vld [vmem:[%s195 + $0x21a] sm:$0xff]
  %v622 = vld [vmem:[%s195 + $0x22a] sm:$0xff]
  %v623 = vld [vmem:[%s195 + $0x232] sm:$0xff]
  %v624 = vld [vmem:[%s195 + $0x242] sm:$0xff]
  %v625 = vld [vmem:[%s195 + $0x24a] sm:$0xff]
  %v626 = vld [vmem:[%s195 + $0x25a] sm:$0xff]
  %v627 = vld [vmem:[%s195 + $0x262] sm:$0xff]
  %v628 = vld [vmem:[%s195 + $0x272] sm:$0xff]
  %v629 = vld [vmem:[%s195 + $0x27a] sm:$0xff]
  %v630 = vld [vmem:[%s195 + $0x28a] sm:$0xff]
  %v631 = vld [vmem:[%s195 + $0x292] sm:$0xff]
  %v632 = vld [vmem:[%s195 + $0x2a2] sm:$0xff]
  %v633 = vld [vmem:[%s195 + $0x2aa] sm:$0xff]
  %v634 = vld [vmem:[%s195 + $0x2ba] sm:$0xff]
  %v635 = vld [vmem:[%s195 + $0x2c2] sm:$0xff]
  %v636 = vld [vmem:[%s195 + $0x2d2] sm:$0xff]
  %v637 = vld [vmem:[%s195 + $0x2da] sm:$0xff]
  %v638 = vld [vmem:[%s195 + $0x2ea] sm:$0xff]
  %v639 = vld [vmem:[%s195 + $0x2f2] sm:$0xff]
  %v640 = vld [vmem:[%s195 + $0x302] sm:$0xff]
  %v641 = vld [vmem:[%s195 + $0x30a] sm:$0xff]
  %v642 = vld [vmem:[%s195 + $0x31a] sm:$0xff]
  %v643 = vld [vmem:[%s195 + $0x322] sm:$0xff]
  %s644 = scalar_lea.vmem [#allocation2], 48
  %v645 = vld [vmem:[%s644] sm:$0xff]
  %v646 = vld [vmem:[%s644 + $0x8] sm:$0xff]
  %v647 = vld [vmem:[%s644 + $0x18] sm:$0xff]
  %v648 = vld [vmem:[%s644 + $0x20] sm:$0xff]
  %v649 = vld [vmem:[%s644 + $0x30] sm:$0xff]
  %v650 = vld [vmem:[%s644 + $0x38] sm:$0xff]
  %v651 = vld [vmem:[%s644 + $0x48] sm:$0xff]
  %v652 = vld [vmem:[%s644 + $0x50] sm:$0xff]
  %v653 = vld [vmem:[%s644 + $0x60] sm:$0xff]
  %v654 = vld [vmem:[%s644 + $0x68] sm:$0xff]
  %v655 = vld [vmem:[%s644 + $0x78] sm:$0xff]
  %v656 = vld [vmem:[%s644 + $0x80] sm:$0xff]
  %v657 = vld [vmem:[%s644 + $0x90] sm:$0xff]
  %v658 = vld [vmem:[%s644 + $0x98] sm:$0xff]
  %v659 = vld [vmem:[%s644 + $0xa8] sm:$0xff]
  %v660 = vld [vmem:[%s644 + $0xb0] sm:$0xff]
  %v661 = vld [vmem:[%s644 + $0xc0] sm:$0xff]
  %v662 = vld [vmem:[%s644 + $0xc8] sm:$0xff]
  %v663 = vld [vmem:[%s644 + $0xd8] sm:$0xff]
  %v664 = vld [vmem:[%s644 + $0xe0] sm:$0xff]
  %v665 = vld [vmem:[%s644 + $0xf0] sm:$0xff]
  %v666 = vld [vmem:[%s644 + $0xf8] sm:$0xff]
  %v667 = vld [vmem:[%s644 + $0x108] sm:$0xff]
  %v668 = vld [vmem:[%s644 + $0x110] sm:$0xff]
  %v669 = vld [vmem:[%s644 + $0x120] sm:$0xff]
  %v670 = vld [vmem:[%s644 + $0x128] sm:$0xff]
  %v671 = vld [vmem:[%s644 + $0x138] sm:$0xff]
  %v672 = vld [vmem:[%s644 + $0x140] sm:$0xff]
  %v673 = vld [vmem:[%s644 + $0x150] sm:$0xff]
  %v674 = vld [vmem:[%s644 + $0x158] sm:$0xff]
  %v675 = vld [vmem:[%s644 + $0x168] sm:$0xff]
  %v676 = vld [vmem:[%s644 + $0x170] sm:$0xff]
  %v677 = vld [vmem:[%s644 + $0x1b0] sm:$0xff]
  %v678 = vld [vmem:[%s644 + $0x1b8] sm:$0xff]
  %v679 = vld [vmem:[%s644 + $0x1c8] sm:$0xff]
  %v680 = vld [vmem:[%s644 + $0x1d0] sm:$0xff]
  %v681 = vld [vmem:[%s644 + $0x1e0] sm:$0xff]
  %v682 = vld [vmem:[%s644 + $0x1e8] sm:$0xff]
  %v683 = vld [vmem:[%s644 + $0x1f8] sm:$0xff]
  %v684 = vld [vmem:[%s644 + $0x200] sm:$0xff]
  %v685 = vld [vmem:[%s644 + $0x210] sm:$0xff]
  %v686 = vld [vmem:[%s644 + $0x218] sm:$0xff]
  %v687 = vld [vmem:[%s644 + $0x228] sm:$0xff]
  %v688 = vld [vmem:[%s644 + $0x230] sm:$0xff]
  %v689 = vld [vmem:[%s644 + $0x240] sm:$0xff]
  %v690 = vld [vmem:[%s644 + $0x248] sm:$0xff]
  %v691 = vld [vmem:[%s644 + $0x258] sm:$0xff]
  %v692 = vld [vmem:[%s644 + $0x260] sm:$0xff]
  %v693 = vld [vmem:[%s644 + $0x270] sm:$0xff]
  %v694 = vld [vmem:[%s644 + $0x278] sm:$0xff]
  %v695 = vld [vmem:[%s644 + $0x288] sm:$0xff]
  %v696 = vld [vmem:[%s644 + $0x290] sm:$0xff]
  %v697 = vld [vmem:[%s644 + $0x2a0] sm:$0xff]
  %v698 = vld [vmem:[%s644 + $0x2a8] sm:$0xff]
  %v699 = vld [vmem:[%s644 + $0x2b8] sm:$0xff]
  %v700 = vld [vmem:[%s644 + $0x2c0] sm:$0xff]
  %v701 = vld [vmem:[%s644 + $0x2d0] sm:$0xff]
  %v702 = vld [vmem:[%s644 + $0x2d8] sm:$0xff]
  %v703 = vld [vmem:[%s644 + $0x2e8] sm:$0xff]
  %v704 = vld [vmem:[%s644 + $0x2f0] sm:$0xff]
  %v705 = vld [vmem:[%s644 + $0x300] sm:$0xff]
  %v706 = vld [vmem:[%s644 + $0x308] sm:$0xff]
  %v707 = vld [vmem:[%s644 + $0x318] sm:$0xff]
  %v708 = vld [vmem:[%s644 + $0x320] sm:$0xff]
  %v709 = vld [vmem:[%s644 + $0x1] sm:$0xff]
  %v710 = vld [vmem:[%s644 + $0x9] sm:$0xff]
  %v711 = vld [vmem:[%s644 + $0x19] sm:$0xff]
  %v712 = vld [vmem:[%s644 + $0x21] sm:$0xff]
  %v713 = vld [vmem:[%s644 + $0x31] sm:$0xff]
  %v714 = vld [vmem:[%s644 + $0x39] sm:$0xff]
  %v715 = vld [vmem:[%s644 + $0x49] sm:$0xff]
  %v716 = vld [vmem:[%s644 + $0x51] sm:$0xff]
  %v717 = vld [vmem:[%s644 + $0x61] sm:$0xff]
  %v718 = vld [vmem:[%s644 + $0x69] sm:$0xff]
  %v719 = vld [vmem:[%s644 + $0x79] sm:$0xff]
  %v720 = vld [vmem:[%s644 + $0x81] sm:$0xff]
  %v721 = vld [vmem:[%s644 + $0x91] sm:$0xff]
  %v722 = vld [vmem:[%s644 + $0x99] sm:$0xff]
  %v723 = vld [vmem:[%s644 + $0xa9] sm:$0xff]
  %v724 = vld [vmem:[%s644 + $0xb1] sm:$0xff]
  %v725 = vld [vmem:[%s644 + $0xc1] sm:$0xff]
  %v726 = vld [vmem:[%s644 + $0xc9] sm:$0xff]
  %v727 = vld [vmem:[%s644 + $0xd9] sm:$0xff]
  %v728 = vld [vmem:[%s644 + $0xe1] sm:$0xff]
  %v729 = vld [vmem:[%s644 + $0xf1] sm:$0xff]
  %v730 = vld [vmem:[%s644 + $0xf9] sm:$0xff]
  %v731 = vld [vmem:[%s644 + $0x109] sm:$0xff]
  %v732 = vld [vmem:[%s644 + $0x111] sm:$0xff]
  %v733 = vld [vmem:[%s644 + $0x121] sm:$0xff]
  %v734 = vld [vmem:[%s644 + $0x129] sm:$0xff]
  %v735 = vld [vmem:[%s644 + $0x139] sm:$0xff]
  %v736 = vld [vmem:[%s644 + $0x141] sm:$0xff]
  %v737 = vld [vmem:[%s644 + $0x151] sm:$0xff]
  %v738 = vld [vmem:[%s644 + $0x159] sm:$0xff]
  %v739 = vld [vmem:[%s644 + $0x169] sm:$0xff]
  %v740 = vld [vmem:[%s644 + $0x171] sm:$0xff]
  %v741 = vld [vmem:[%s644 + $0x1b1] sm:$0xff]
  %v742 = vld [vmem:[%s644 + $0x1b9] sm:$0xff]
  %v743 = vld [vmem:[%s644 + $0x1c9] sm:$0xff]
  %v744 = vld [vmem:[%s644 + $0x1d1] sm:$0xff]
  %v745 = vld [vmem:[%s644 + $0x1e1] sm:$0xff]
  %v746 = vld [vmem:[%s644 + $0x1e9] sm:$0xff]
  %v747 = vld [vmem:[%s644 + $0x1f9] sm:$0xff]
  %v748 = vld [vmem:[%s644 + $0x201] sm:$0xff]
  %v749 = vld [vmem:[%s644 + $0x211] sm:$0xff]
  %v750 = vld [vmem:[%s644 + $0x219] sm:$0xff]
  %v751 = vld [vmem:[%s644 + $0x229] sm:$0xff]
  %v752 = vld [vmem:[%s644 + $0x231] sm:$0xff]
  %v753 = vld [vmem:[%s644 + $0x241] sm:$0xff]
  %v754 = vld [vmem:[%s644 + $0x249] sm:$0xff]
  %v755 = vld [vmem:[%s644 + $0x259] sm:$0xff]
  %v756 = vld [vmem:[%s644 + $0x261] sm:$0xff]
  %v757 = vld [vmem:[%s644 + $0x271] sm:$0xff]
  %v758 = vld [vmem:[%s644 + $0x279] sm:$0xff]
  %v759 = vld [vmem:[%s644 + $0x289] sm:$0xff]
  %v760 = vld [vmem:[%s644 + $0x291] sm:$0xff]
  %v761 = vld [vmem:[%s644 + $0x2a1] sm:$0xff]
  %v762 = vld [vmem:[%s644 + $0x2a9] sm:$0xff]
  %v763 = vld [vmem:[%s644 + $0x2b9] sm:$0xff]
  %v764 = vld [vmem:[%s644 + $0x2c1] sm:$0xff]
  %v765 = vld [vmem:[%s644 + $0x2d1] sm:$0xff]
  %v766 = vld [vmem:[%s644 + $0x2d9] sm:$0xff]
  %v767 = vld [vmem:[%s644 + $0x2e9] sm:$0xff]
  %v768 = vld [vmem:[%s644 + $0x2f1] sm:$0xff]
  %v769 = vld [vmem:[%s644 + $0x301] sm:$0xff]
  %v770 = vld [vmem:[%s644 + $0x309] sm:$0xff]
  %v771 = vld [vmem:[%s644 + $0x319] sm:$0xff]
  %v772 = vld [vmem:[%s644 + $0x321] sm:$0xff]
  %v773 = vld [vmem:[%s644 + $0x2] sm:$0xff]
  %v774 = vld [vmem:[%s644 + $0xa] sm:$0xff]
  %v775 = vld [vmem:[%s644 + $0x1a] sm:$0xff]
  %v776 = vld [vmem:[%s644 + $0x22] sm:$0xff]
  %v777 = vld [vmem:[%s644 + $0x32] sm:$0xff]
  %v778 = vld [vmem:[%s644 + $0x3a] sm:$0xff]
  %v779 = vld [vmem:[%s644 + $0x4a] sm:$0xff]
  %v780 = vld [vmem:[%s644 + $0x52] sm:$0xff]
  %v781 = vld [vmem:[%s644 + $0x62] sm:$0xff]
  %v782 = vld [vmem:[%s644 + $0x6a] sm:$0xff]
  %v783 = vld [vmem:[%s644 + $0x7a] sm:$0xff]
  %v784 = vld [vmem:[%s644 + $0x82] sm:$0xff]
  %v785 = vld [vmem:[%s644 + $0x92] sm:$0xff]
  %v786 = vld [vmem:[%s644 + $0x9a] sm:$0xff]
  %v787 = vld [vmem:[%s644 + $0xaa] sm:$0xff]
  %v788 = vld [vmem:[%s644 + $0xb2] sm:$0xff]
  %v789 = vld [vmem:[%s644 + $0xc2] sm:$0xff]
  %v790 = vld [vmem:[%s644 + $0xca] sm:$0xff]
  %v791 = vld [vmem:[%s644 + $0xda] sm:$0xff]
  %v792 = vld [vmem:[%s644 + $0xe2] sm:$0xff]
  %v793 = vld [vmem:[%s644 + $0xf2] sm:$0xff]
  %v794 = vld [vmem:[%s644 + $0xfa] sm:$0xff]
  %v795 = vld [vmem:[%s644 + $0x10a] sm:$0xff]
  %v796 = vld [vmem:[%s644 + $0x112] sm:$0xff]
  %v797 = vld [vmem:[%s644 + $0x122] sm:$0xff]
  %v798 = vld [vmem:[%s644 + $0x12a] sm:$0xff]
  %v799 = vld [vmem:[%s644 + $0x13a] sm:$0xff]
  %v800 = vld [vmem:[%s644 + $0x142] sm:$0xff]
  %v801 = vld [vmem:[%s644 + $0x152] sm:$0xff]
  %v802 = vld [vmem:[%s644 + $0x15a] sm:$0xff]
  %v803 = vld [vmem:[%s644 + $0x16a] sm:$0xff]
  %v804 = vld [vmem:[%s644 + $0x172] sm:$0xff]
  %v805 = vld [vmem:[%s644 + $0x1b2] sm:$0xff]
  %v806 = vld [vmem:[%s644 + $0x1ba] sm:$0xff]
  %v807 = vld [vmem:[%s644 + $0x1ca] sm:$0xff]
  %v808 = vld [vmem:[%s644 + $0x1d2] sm:$0xff]
  %v809 = vld [vmem:[%s644 + $0x1e2] sm:$0xff]
  %v810 = vld [vmem:[%s644 + $0x1ea] sm:$0xff]
  %v811 = vld [vmem:[%s644 + $0x1fa] sm:$0xff]
  %v812 = vld [vmem:[%s644 + $0x202] sm:$0xff]
  %v813 = vld [vmem:[%s644 + $0x212] sm:$0xff]
  %v814 = vld [vmem:[%s644 + $0x21a] sm:$0xff]
  %v815 = vld [vmem:[%s644 + $0x22a] sm:$0xff]
  %v816 = vld [vmem:[%s644 + $0x232] sm:$0xff]
  %v817 = vld [vmem:[%s644 + $0x242] sm:$0xff]
  %v818 = vld [vmem:[%s644 + $0x24a] sm:$0xff]
  %v819 = vld [vmem:[%s644 + $0x25a] sm:$0xff]
  %v820 = vld [vmem:[%s644 + $0x262] sm:$0xff]
  %v821 = vld [vmem:[%s644 + $0x272] sm:$0xff]
  %v822 = vld [vmem:[%s644 + $0x27a] sm:$0xff]
  %v823 = vld [vmem:[%s644 + $0x28a] sm:$0xff]
  %v824 = vld [vmem:[%s644 + $0x292] sm:$0xff]
  %v825 = vld [vmem:[%s644 + $0x2a2] sm:$0xff]
  %v826 = vld [vmem:[%s644 + $0x2aa] sm:$0xff]
  %v827 = vld [vmem:[%s644 + $0x2ba] sm:$0xff]
  %v828 = vld [vmem:[%s644 + $0x2c2] sm:$0xff]
  %v829 = vld [vmem:[%s644 + $0x2d2] sm:$0xff]
  %v830 = vld [vmem:[%s644 + $0x2da] sm:$0xff]
  %v831 = vld [vmem:[%s644 + $0x2ea] sm:$0xff]
  %v832 = vld [vmem:[%s644 + $0x2f2] sm:$0xff]
  %v833 = vld [vmem:[%s644 + $0x302] sm:$0xff]
  %v834 = vld [vmem:[%s644 + $0x30a] sm:$0xff]
  %v835 = vld [vmem:[%s644 + $0x31a] sm:$0xff]
  %v836 = vld [vmem:[%s644 + $0x322] sm:$0xff]
  %901 = vrot.lane.b32.xlu0 %v324, 4
  %v902 = vpop.permute.xlu0 %901
  %903 = vrot.lane.b32.xlu0 %v325, 4
  %v904 = vpop.permute.xlu0 %903
  %905 = vrot.lane.b32.xlu0 %v326, 4
  %v906 = vpop.permute.xlu0 %905
  %907 = vrot.lane.b32.xlu0 %v327, 4
  %v908 = vpop.permute.xlu0 %907
  %909 = vrot.lane.b32.xlu0 %v328, 4
  %v910 = vpop.permute.xlu0 %909
  %911 = vrot.lane.b32.xlu0 %v329, 4
  %v912 = vpop.permute.xlu0 %911
  %913 = vrot.lane.b32.xlu0 %v330, 4
  %v914 = vpop.permute.xlu0 %913
  %915 = vrot.lane.b32.xlu0 %v331, 4
  %v916 = vpop.permute.xlu0 %915
  %917 = vrot.lane.b32.xlu0 %v332, 4
  %v918 = vpop.permute.xlu0 %917
  %919 = vrot.lane.b32.xlu0 %v333, 4
  %v920 = vpop.permute.xlu0 %919
  %921 = vrot.lane.b32.xlu0 %v334, 4
  %v922 = vpop.permute.xlu0 %921
  %923 = vrot.lane.b32.xlu0 %v335, 4
  %v924 = vpop.permute.xlu0 %923
  %925 = vrot.lane.b32.xlu0 %v336, 4
  %v926 = vpop.permute.xlu0 %925
  %927 = vrot.lane.b32.xlu0 %v337, 4
  %v928 = vpop.permute.xlu0 %927
  %929 = vrot.lane.b32.xlu0 %v338, 4
  %v930 = vpop.permute.xlu0 %929
  %931 = vrot.lane.b32.xlu0 %v339, 4
  %v932 = vpop.permute.xlu0 %931
  %933 = vrot.lane.b32.xlu0 %v340, 4
  %v934 = vpop.permute.xlu0 %933
  %935 = vrot.lane.b32.xlu0 %v341, 4
  %v936 = vpop.permute.xlu0 %935
  %937 = vrot.lane.b32.xlu0 %v342, 4
  %v938 = vpop.permute.xlu0 %937
  %939 = vrot.lane.b32.xlu0 %v343, 4
  %v940 = vpop.permute.xlu0 %939
  %941 = vrot.lane.b32.xlu0 %v344, 4
  %v942 = vpop.permute.xlu0 %941
  %943 = vrot.lane.b32.xlu0 %v345, 4
  %v944 = vpop.permute.xlu0 %943
  %945 = vrot.lane.b32.xlu0 %v346, 4
  %v946 = vpop.permute.xlu0 %945
  %947 = vrot.lane.b32.xlu0 %v347, 4
  %v948 = vpop.permute.xlu0 %947
  %949 = vrot.lane.b32.xlu0 %v348, 4
  %v950 = vpop.permute.xlu0 %949
  %951 = vrot.lane.b32.xlu0 %v349, 4
  %v952 = vpop.permute.xlu0 %951
  %953 = vrot.lane.b32.xlu0 %v350, 4
  %v954 = vpop.permute.xlu0 %953
  %955 = vrot.lane.b32.xlu0 %v351, 4
  %v956 = vpop.permute.xlu0 %955
  %957 = vrot.lane.b32.xlu0 %v352, 4
  %v958 = vpop.permute.xlu0 %957
  %959 = vrot.lane.b32.xlu0 %v353, 4
  %v960 = vpop.permute.xlu0 %959
  %961 = vrot.lane.b32.xlu0 %v354, 4
  %v962 = vpop.permute.xlu0 %961
  %963 = vrot.lane.b32.xlu0 %v355, 4
  %v964 = vpop.permute.xlu0 %963
  %965 = vrot.lane.b32.xlu0 %v356, 4
  %v966 = vpop.permute.xlu0 %965
  %967 = vrot.lane.b32.xlu0 %v357, 4
  %v968 = vpop.permute.xlu0 %967
  %969 = vrot.lane.b32.xlu0 %v358, 4
  %v970 = vpop.permute.xlu0 %969
  %971 = vrot.lane.b32.xlu0 %v359, 4
  %v972 = vpop.permute.xlu0 %971
  %973 = vrot.lane.b32.xlu0 %v360, 4
  %v974 = vpop.permute.xlu0 %973
  %975 = vrot.lane.b32.xlu0 %v361, 4
  %v976 = vpop.permute.xlu0 %975
  %977 = vrot.lane.b32.xlu0 %v362, 4
  %v978 = vpop.permute.xlu0 %977
  %979 = vrot.lane.b32.xlu0 %v363, 4
  %v980 = vpop.permute.xlu0 %979
  %981 = vrot.lane.b32.xlu0 %v364, 4
  %v982 = vpop.permute.xlu0 %981
  %983 = vrot.lane.b32.xlu0 %v365, 4
  %v984 = vpop.permute.xlu0 %983
  %985 = vrot.lane.b32.xlu0 %v366, 4
  %v986 = vpop.permute.xlu0 %985
  %987 = vrot.lane.b32.xlu0 %v367, 4
  %v988 = vpop.permute.xlu0 %987
  %989 = vrot.lane.b32.xlu0 %v368, 4
  %v990 = vpop.permute.xlu0 %989
  %991 = vrot.lane.b32.xlu0 %v369, 4
  %v992 = vpop.permute.xlu0 %991
  %993 = vrot.lane.b32.xlu0 %v370, 4
  %v994 = vpop.permute.xlu0 %993
  %995 = vrot.lane.b32.xlu0 %v371, 4
  %v996 = vpop.permute.xlu0 %995
  %997 = vrot.lane.b32.xlu0 %v372, 4
  %v998 = vpop.permute.xlu0 %997
  %999 = vrot.lane.b32.xlu0 %v373, 4
  %v1000 = vpop.permute.xlu0 %999
  %1001 = vrot.lane.b32.xlu0 %v374, 4
  %v1002 = vpop.permute.xlu0 %1001
  %1003 = vrot.lane.b32.xlu0 %v375, 4
  %v1004 = vpop.permute.xlu0 %1003
  %1005 = vrot.lane.b32.xlu0 %v376, 4
  %v1006 = vpop.permute.xlu0 %1005
  %1007 = vrot.lane.b32.xlu0 %v377, 4
  %v1008 = vpop.permute.xlu0 %1007
  %1009 = vrot.lane.b32.xlu0 %v378, 4
  %v1010 = vpop.permute.xlu0 %1009
  %1011 = vrot.lane.b32.xlu0 %v379, 4
  %v1012 = vpop.permute.xlu0 %1011
  %1013 = vrot.lane.b32.xlu0 %v380, 4
  %v1014 = vpop.permute.xlu0 %1013
  %1015 = vrot.lane.b32.xlu0 %v381, 4
  %v1016 = vpop.permute.xlu0 %1015
  %1017 = vrot.lane.b32.xlu0 %v382, 4
  %v1018 = vpop.permute.xlu0 %1017
  %1019 = vrot.lane.b32.xlu0 %v383, 4
  %v1020 = vpop.permute.xlu0 %1019
  %1021 = vrot.lane.b32.xlu0 %v384, 4
  %v1022 = vpop.permute.xlu0 %1021
  %1023 = vrot.lane.b32.xlu0 %v385, 4
  %v1024 = vpop.permute.xlu0 %1023
  %1025 = vrot.lane.b32.xlu0 %v386, 4
  %v1026 = vpop.permute.xlu0 %1025
  %1027 = vrot.lane.b32.xlu0 %v387, 4
  %v1028 = vpop.permute.xlu0 %1027
  %1157 = vrot.lane.b32.xlu0 %v388, 8
  %v1158 = vpop.permute.xlu0 %1157
  %1159 = vrot.lane.b32.xlu0 %v389, 8
  %v1160 = vpop.permute.xlu0 %1159
  %1161 = vrot.lane.b32.xlu0 %v390, 8
  %v1162 = vpop.permute.xlu0 %1161
  %1163 = vrot.lane.b32.xlu0 %v391, 8
  %v1164 = vpop.permute.xlu0 %1163
  %1165 = vrot.lane.b32.xlu0 %v392, 8
  %v1166 = vpop.permute.xlu0 %1165
  %1167 = vrot.lane.b32.xlu0 %v393, 8
  %v1168 = vpop.permute.xlu0 %1167
  %1169 = vrot.lane.b32.xlu0 %v394, 8
  %v1170 = vpop.permute.xlu0 %1169
  %1171 = vrot.lane.b32.xlu0 %v395, 8
  %v1172 = vpop.permute.xlu0 %1171
  %1173 = vrot.lane.b32.xlu0 %v396, 8
  %v1174 = vpop.permute.xlu0 %1173
  %1175 = vrot.lane.b32.xlu0 %v397, 8
  %v1176 = vpop.permute.xlu0 %1175
  %1177 = vrot.lane.b32.xlu0 %v398, 8
  %v1178 = vpop.permute.xlu0 %1177
  %1179 = vrot.lane.b32.xlu0 %v399, 8
  %v1180 = vpop.permute.xlu0 %1179
  %1181 = vrot.lane.b32.xlu0 %v400, 8
  %v1182 = vpop.permute.xlu0 %1181
  %1183 = vrot.lane.b32.xlu0 %v401, 8
  %v1184 = vpop.permute.xlu0 %1183
  %1185 = vrot.lane.b32.xlu0 %v402, 8
  %v1186 = vpop.permute.xlu0 %1185
  %1187 = vrot.lane.b32.xlu0 %v403, 8
  %v1188 = vpop.permute.xlu0 %1187
  %1189 = vrot.lane.b32.xlu0 %v404, 8
  %v1190 = vpop.permute.xlu0 %1189
  %1191 = vrot.lane.b32.xlu0 %v405, 8
  %v1192 = vpop.permute.xlu0 %1191
  %1193 = vrot.lane.b32.xlu0 %v406, 8
  %v1194 = vpop.permute.xlu0 %1193
  %1195 = vrot.lane.b32.xlu0 %v407, 8
  %v1196 = vpop.permute.xlu0 %1195
  %1197 = vrot.lane.b32.xlu0 %v408, 8
  %v1198 = vpop.permute.xlu0 %1197
  %1199 = vrot.lane.b32.xlu0 %v409, 8
  %v1200 = vpop.permute.xlu0 %1199
  %1201 = vrot.lane.b32.xlu0 %v410, 8
  %v1202 = vpop.permute.xlu0 %1201
  %1203 = vrot.lane.b32.xlu0 %v411, 8
  %v1204 = vpop.permute.xlu0 %1203
  %1205 = vrot.lane.b32.xlu0 %v412, 8
  %v1206 = vpop.permute.xlu0 %1205
  %1207 = vrot.lane.b32.xlu0 %v413, 8
  %v1208 = vpop.permute.xlu0 %1207
  %1209 = vrot.lane.b32.xlu0 %v414, 8
  %v1210 = vpop.permute.xlu0 %1209
  %1211 = vrot.lane.b32.xlu0 %v415, 8
  %v1212 = vpop.permute.xlu0 %1211
  %1213 = vrot.lane.b32.xlu0 %v416, 8
  %v1214 = vpop.permute.xlu0 %1213
  %1215 = vrot.lane.b32.xlu0 %v417, 8
  %v1216 = vpop.permute.xlu0 %1215
  %1217 = vrot.lane.b32.xlu0 %v418, 8
  %v1218 = vpop.permute.xlu0 %1217
  %1219 = vrot.lane.b32.xlu0 %v419, 8
  %v1220 = vpop.permute.xlu0 %1219
  %1221 = vrot.lane.b32.xlu0 %v420, 8
  %v1222 = vpop.permute.xlu0 %1221
  %1223 = vrot.lane.b32.xlu0 %v421, 8
  %v1224 = vpop.permute.xlu0 %1223
  %1225 = vrot.lane.b32.xlu0 %v422, 8
  %v1226 = vpop.permute.xlu0 %1225
  %1227 = vrot.lane.b32.xlu0 %v423, 8
  %v1228 = vpop.permute.xlu0 %1227
  %1229 = vrot.lane.b32.xlu0 %v424, 8
  %v1230 = vpop.permute.xlu0 %1229
  %1231 = vrot.lane.b32.xlu0 %v425, 8
  %v1232 = vpop.permute.xlu0 %1231
  %1233 = vrot.lane.b32.xlu0 %v426, 8
  %v1234 = vpop.permute.xlu0 %1233
  %1235 = vrot.lane.b32.xlu0 %v427, 8
  %v1236 = vpop.permute.xlu0 %1235
  %1237 = vrot.lane.b32.xlu0 %v428, 8
  %v1238 = vpop.permute.xlu0 %1237
  %1239 = vrot.lane.b32.xlu0 %v429, 8
  %v1240 = vpop.permute.xlu0 %1239
  %1241 = vrot.lane.b32.xlu0 %v430, 8
  %v1242 = vpop.permute.xlu0 %1241
  %1243 = vrot.lane.b32.xlu0 %v431, 8
  %v1244 = vpop.permute.xlu0 %1243
  %1245 = vrot.lane.b32.xlu0 %v432, 8
  %v1246 = vpop.permute.xlu0 %1245
  %1247 = vrot.lane.b32.xlu0 %v433, 8
  %v1248 = vpop.permute.xlu0 %1247
  %1249 = vrot.lane.b32.xlu0 %v434, 8
  %v1250 = vpop.permute.xlu0 %1249
  %1251 = vrot.lane.b32.xlu0 %v435, 8
  %v1252 = vpop.permute.xlu0 %1251
  %1253 = vrot.lane.b32.xlu0 %v436, 8
  %v1254 = vpop.permute.xlu0 %1253
  %1255 = vrot.lane.b32.xlu0 %v437, 8
  %v1256 = vpop.permute.xlu0 %1255
  %1257 = vrot.lane.b32.xlu0 %v438, 8
  %v1258 = vpop.permute.xlu0 %1257
  %1259 = vrot.lane.b32.xlu0 %v439, 8
  %v1260 = vpop.permute.xlu0 %1259
  %1261 = vrot.lane.b32.xlu0 %v440, 8
  %v1262 = vpop.permute.xlu0 %1261
  %1263 = vrot.lane.b32.xlu0 %v441, 8
  %v1264 = vpop.permute.xlu0 %1263
  %1265 = vrot.lane.b32.xlu0 %v442, 8
  %v1266 = vpop.permute.xlu0 %1265
  %1267 = vrot.lane.b32.xlu0 %v443, 8
  %v1268 = vpop.permute.xlu0 %1267
  %1269 = vrot.lane.b32.xlu0 %v444, 8
  %v1270 = vpop.permute.xlu0 %1269
  %1271 = vrot.lane.b32.xlu0 %v445, 8
  %v1272 = vpop.permute.xlu0 %1271
  %1273 = vrot.lane.b32.xlu0 %v446, 8
  %v1274 = vpop.permute.xlu0 %1273
  %1275 = vrot.lane.b32.xlu0 %v447, 8
  %v1276 = vpop.permute.xlu0 %1275
  %1277 = vrot.lane.b32.xlu0 %v448, 8
  %v1278 = vpop.permute.xlu0 %1277
  %1279 = vrot.lane.b32.xlu0 %v449, 8
  %v1280 = vpop.permute.xlu0 %1279
  %1281 = vrot.lane.b32.xlu0 %v450, 8
  %v1282 = vpop.permute.xlu0 %1281
  %1283 = vrot.lane.b32.xlu0 %v451, 8
  %v1284 = vpop.permute.xlu0 %1283
  %1413 = vrot.lane.b32.xlu0 %v452, 12
  %v1414 = vpop.permute.xlu0 %1413
  %1415 = vrot.lane.b32.xlu0 %v453, 12
  %v1416 = vpop.permute.xlu0 %1415
  %1417 = vrot.lane.b32.xlu0 %v454, 12
  %v1418 = vpop.permute.xlu0 %1417
  %1419 = vrot.lane.b32.xlu0 %v455, 12
  %v1420 = vpop.permute.xlu0 %1419
  %1421 = vrot.lane.b32.xlu0 %v456, 12
  %v1422 = vpop.permute.xlu0 %1421
  %1423 = vrot.lane.b32.xlu0 %v457, 12
  %v1424 = vpop.permute.xlu0 %1423
  %1425 = vrot.lane.b32.xlu0 %v458, 12
  %v1426 = vpop.permute.xlu0 %1425
  %1427 = vrot.lane.b32.xlu0 %v459, 12
  %v1428 = vpop.permute.xlu0 %1427
  %1429 = vrot.lane.b32.xlu0 %v460, 12
  %v1430 = vpop.permute.xlu0 %1429
  %1431 = vrot.lane.b32.xlu0 %v461, 12
  %v1432 = vpop.permute.xlu0 %1431
  %1433 = vrot.lane.b32.xlu0 %v462, 12
  %v1434 = vpop.permute.xlu0 %1433
  %1435 = vrot.lane.b32.xlu0 %v463, 12
  %v1436 = vpop.permute.xlu0 %1435
  %1437 = vrot.lane.b32.xlu0 %v464, 12
  %v1438 = vpop.permute.xlu0 %1437
  %1439 = vrot.lane.b32.xlu0 %v465, 12
  %v1440 = vpop.permute.xlu0 %1439
  %1441 = vrot.lane.b32.xlu0 %v466, 12
  %v1442 = vpop.permute.xlu0 %1441
  %1443 = vrot.lane.b32.xlu0 %v467, 12
  %v1444 = vpop.permute.xlu0 %1443
  %1445 = vrot.lane.b32.xlu0 %v468, 12
  %v1446 = vpop.permute.xlu0 %1445
  %1447 = vrot.lane.b32.xlu0 %v469, 12
  %v1448 = vpop.permute.xlu0 %1447
  %1449 = vrot.lane.b32.xlu0 %v470, 12
  %v1450 = vpop.permute.xlu0 %1449
  %1451 = vrot.lane.b32.xlu0 %v471, 12
  %v1452 = vpop.permute.xlu0 %1451
  %1453 = vrot.lane.b32.xlu0 %v472, 12
  %v1454 = vpop.permute.xlu0 %1453
  %1455 = vrot.lane.b32.xlu0 %v473, 12
  %v1456 = vpop.permute.xlu0 %1455
  %1457 = vrot.lane.b32.xlu0 %v474, 12
  %v1458 = vpop.permute.xlu0 %1457
  %1459 = vrot.lane.b32.xlu0 %v475, 12
  %v1460 = vpop.permute.xlu0 %1459
  %1461 = vrot.lane.b32.xlu0 %v476, 12
  %v1462 = vpop.permute.xlu0 %1461
  %1463 = vrot.lane.b32.xlu0 %v477, 12
  %v1464 = vpop.permute.xlu0 %1463
  %1465 = vrot.lane.b32.xlu0 %v478, 12
  %v1466 = vpop.permute.xlu0 %1465
  %1467 = vrot.lane.b32.xlu0 %v479, 12
  %v1468 = vpop.permute.xlu0 %1467
  %1469 = vrot.lane.b32.xlu0 %v480, 12
  %v1470 = vpop.permute.xlu0 %1469
  %1471 = vrot.lane.b32.xlu0 %v481, 12
  %v1472 = vpop.permute.xlu0 %1471
  %1473 = vrot.lane.b32.xlu0 %v482, 12
  %v1474 = vpop.permute.xlu0 %1473
  %1475 = vrot.lane.b32.xlu0 %v483, 12
  %v1476 = vpop.permute.xlu0 %1475
  %1477 = vrot.lane.b32.xlu0 %v484, 12
  %v1478 = vpop.permute.xlu0 %1477
  %1479 = vrot.lane.b32.xlu0 %v485, 12
  %v1480 = vpop.permute.xlu0 %1479
  %1481 = vrot.lane.b32.xlu0 %v486, 12
  %v1482 = vpop.permute.xlu0 %1481
  %1483 = vrot.lane.b32.xlu0 %v487, 12
  %v1484 = vpop.permute.xlu0 %1483
  %1485 = vrot.lane.b32.xlu0 %v488, 12
  %v1486 = vpop.permute.xlu0 %1485
  %1487 = vrot.lane.b32.xlu0 %v489, 12
  %v1488 = vpop.permute.xlu0 %1487
  %1489 = vrot.lane.b32.xlu0 %v490, 12
  %v1490 = vpop.permute.xlu0 %1489
  %1491 = vrot.lane.b32.xlu0 %v491, 12
  %v1492 = vpop.permute.xlu0 %1491
  %1493 = vrot.lane.b32.xlu0 %v492, 12
  %v1494 = vpop.permute.xlu0 %1493
  %1495 = vrot.lane.b32.xlu0 %v493, 12
  %v1496 = vpop.permute.xlu0 %1495
  %1497 = vrot.lane.b32.xlu0 %v494, 12
  %v1498 = vpop.permute.xlu0 %1497
  %1499 = vrot.lane.b32.xlu0 %v495, 12
  %v1500 = vpop.permute.xlu0 %1499
  %1501 = vrot.lane.b32.xlu0 %v496, 12
  %v1502 = vpop.permute.xlu0 %1501
  %1503 = vrot.lane.b32.xlu0 %v497, 12
  %v1504 = vpop.permute.xlu0 %1503
  %1505 = vrot.lane.b32.xlu0 %v498, 12
  %v1506 = vpop.permute.xlu0 %1505
  %1507 = vrot.lane.b32.xlu0 %v499, 12
  %v1508 = vpop.permute.xlu0 %1507
  %1509 = vrot.lane.b32.xlu0 %v500, 12
  %v1510 = vpop.permute.xlu0 %1509
  %1511 = vrot.lane.b32.xlu0 %v501, 12
  %v1512 = vpop.permute.xlu0 %1511
  %1513 = vrot.lane.b32.xlu0 %v502, 12
  %v1514 = vpop.permute.xlu0 %1513
  %1515 = vrot.lane.b32.xlu0 %v503, 12
  %v1516 = vpop.permute.xlu0 %1515
  %1517 = vrot.lane.b32.xlu0 %v504, 12
  %v1518 = vpop.permute.xlu0 %1517
  %1519 = vrot.lane.b32.xlu0 %v505, 12
  %v1520 = vpop.permute.xlu0 %1519
  %1521 = vrot.lane.b32.xlu0 %v506, 12
  %v1522 = vpop.permute.xlu0 %1521
  %1523 = vrot.lane.b32.xlu0 %v507, 12
  %v1524 = vpop.permute.xlu0 %1523
  %1525 = vrot.lane.b32.xlu0 %v508, 12
  %v1526 = vpop.permute.xlu0 %1525
  %1527 = vrot.lane.b32.xlu0 %v509, 12
  %v1528 = vpop.permute.xlu0 %1527
  %1529 = vrot.lane.b32.xlu0 %v510, 12
  %v1530 = vpop.permute.xlu0 %1529
  %1531 = vrot.lane.b32.xlu0 %v511, 12
  %v1532 = vpop.permute.xlu0 %1531
  %1533 = vrot.lane.b32.xlu0 %v512, 12
  %v1534 = vpop.permute.xlu0 %1533
  %1535 = vrot.lane.b32.xlu0 %v513, 12
  %v1536 = vpop.permute.xlu0 %1535
  %1537 = vrot.lane.b32.xlu0 %v514, 12
  %v1538 = vpop.permute.xlu0 %1537
  %1539 = vrot.lane.b32.xlu0 %v515, 12
  %v1540 = vpop.permute.xlu0 %1539
  %1669 = vrot.lane.b32.xlu0 %v516, 16
  %v1670 = vpop.permute.xlu0 %1669
  %1671 = vrot.lane.b32.xlu0 %v517, 16
  %v1672 = vpop.permute.xlu0 %1671
  %1673 = vrot.lane.b32.xlu0 %v518, 16
  %v1674 = vpop.permute.xlu0 %1673
  %1675 = vrot.lane.b32.xlu0 %v519, 16
  %v1676 = vpop.permute.xlu0 %1675
  %1677 = vrot.lane.b32.xlu0 %v520, 16
  %v1678 = vpop.permute.xlu0 %1677
  %1679 = vrot.lane.b32.xlu0 %v521, 16
  %v1680 = vpop.permute.xlu0 %1679
  %1681 = vrot.lane.b32.xlu0 %v522, 16
  %v1682 = vpop.permute.xlu0 %1681
  %1683 = vrot.lane.b32.xlu0 %v523, 16
  %v1684 = vpop.permute.xlu0 %1683
  %1685 = vrot.lane.b32.xlu0 %v524, 16
  %v1686 = vpop.permute.xlu0 %1685
  %1687 = vrot.lane.b32.xlu0 %v525, 16
  %v1688 = vpop.permute.xlu0 %1687
  %1689 = vrot.lane.b32.xlu0 %v526, 16
  %v1690 = vpop.permute.xlu0 %1689
  %1691 = vrot.lane.b32.xlu0 %v527, 16
  %v1692 = vpop.permute.xlu0 %1691
  %1693 = vrot.lane.b32.xlu0 %v528, 16
  %v1694 = vpop.permute.xlu0 %1693
  %1695 = vrot.lane.b32.xlu0 %v529, 16
  %v1696 = vpop.permute.xlu0 %1695
  %1697 = vrot.lane.b32.xlu0 %v530, 16
  %v1698 = vpop.permute.xlu0 %1697
  %1699 = vrot.lane.b32.xlu0 %v531, 16
  %v1700 = vpop.permute.xlu0 %1699
  %1701 = vrot.lane.b32.xlu0 %v532, 16
  %v1702 = vpop.permute.xlu0 %1701
  %1703 = vrot.lane.b32.xlu0 %v533, 16
  %v1704 = vpop.permute.xlu0 %1703
  %1705 = vrot.lane.b32.xlu0 %v534, 16
  %v1706 = vpop.permute.xlu0 %1705
  %1707 = vrot.lane.b32.xlu0 %v535, 16
  %v1708 = vpop.permute.xlu0 %1707
  %1709 = vrot.lane.b32.xlu0 %v536, 16
  %v1710 = vpop.permute.xlu0 %1709
  %1711 = vrot.lane.b32.xlu0 %v537, 16
  %v1712 = vpop.permute.xlu0 %1711
  %1713 = vrot.lane.b32.xlu0 %v538, 16
  %v1714 = vpop.permute.xlu0 %1713
  %1715 = vrot.lane.b32.xlu0 %v539, 16
  %v1716 = vpop.permute.xlu0 %1715
  %1717 = vrot.lane.b32.xlu0 %v540, 16
  %v1718 = vpop.permute.xlu0 %1717
  %1719 = vrot.lane.b32.xlu0 %v541, 16
  %v1720 = vpop.permute.xlu0 %1719
  %1721 = vrot.lane.b32.xlu0 %v542, 16
  %v1722 = vpop.permute.xlu0 %1721
  %1723 = vrot.lane.b32.xlu0 %v543, 16
  %v1724 = vpop.permute.xlu0 %1723
  %1725 = vrot.lane.b32.xlu0 %v544, 16
  %v1726 = vpop.permute.xlu0 %1725
  %1727 = vrot.lane.b32.xlu0 %v545, 16
  %v1728 = vpop.permute.xlu0 %1727
  %1729 = vrot.lane.b32.xlu0 %v546, 16
  %v1730 = vpop.permute.xlu0 %1729
  %1731 = vrot.lane.b32.xlu0 %v547, 16
  %v1732 = vpop.permute.xlu0 %1731
  %1733 = vrot.lane.b32.xlu0 %v548, 16
  %v1734 = vpop.permute.xlu0 %1733
  %1735 = vrot.lane.b32.xlu0 %v549, 16
  %v1736 = vpop.permute.xlu0 %1735
  %1737 = vrot.lane.b32.xlu0 %v550, 16
  %v1738 = vpop.permute.xlu0 %1737
  %1739 = vrot.lane.b32.xlu0 %v551, 16
  %v1740 = vpop.permute.xlu0 %1739
  %1741 = vrot.lane.b32.xlu0 %v552, 16
  %v1742 = vpop.permute.xlu0 %1741
  %1743 = vrot.lane.b32.xlu0 %v553, 16
  %v1744 = vpop.permute.xlu0 %1743
  %1745 = vrot.lane.b32.xlu0 %v554, 16
  %v1746 = vpop.permute.xlu0 %1745
  %1747 = vrot.lane.b32.xlu0 %v555, 16
  %v1748 = vpop.permute.xlu0 %1747
  %1749 = vrot.lane.b32.xlu0 %v556, 16
  %v1750 = vpop.permute.xlu0 %1749
  %1751 = vrot.lane.b32.xlu0 %v557, 16
  %v1752 = vpop.permute.xlu0 %1751
  %1753 = vrot.lane.b32.xlu0 %v558, 16
  %v1754 = vpop.permute.xlu0 %1753
  %1755 = vrot.lane.b32.xlu0 %v559, 16
  %v1756 = vpop.permute.xlu0 %1755
  %1757 = vrot.lane.b32.xlu0 %v560, 16
  %v1758 = vpop.permute.xlu0 %1757
  %1759 = vrot.lane.b32.xlu0 %v561, 16
  %v1760 = vpop.permute.xlu0 %1759
  %1761 = vrot.lane.b32.xlu0 %v562, 16
  %v1762 = vpop.permute.xlu0 %1761
  %1763 = vrot.lane.b32.xlu0 %v563, 16
  %v1764 = vpop.permute.xlu0 %1763
  %1765 = vrot.lane.b32.xlu0 %v564, 16
  %v1766 = vpop.permute.xlu0 %1765
  %1767 = vrot.lane.b32.xlu0 %v565, 16
  %v1768 = vpop.permute.xlu0 %1767
  %1769 = vrot.lane.b32.xlu0 %v566, 16
  %v1770 = vpop.permute.xlu0 %1769
  %1771 = vrot.lane.b32.xlu0 %v567, 16
  %v1772 = vpop.permute.xlu0 %1771
  %1773 = vrot.lane.b32.xlu0 %v568, 16
  %v1774 = vpop.permute.xlu0 %1773
  %1775 = vrot.lane.b32.xlu0 %v569, 16
  %v1776 = vpop.permute.xlu0 %1775
  %1777 = vrot.lane.b32.xlu0 %v570, 16
  %v1778 = vpop.permute.xlu0 %1777
  %1779 = vrot.lane.b32.xlu0 %v571, 16
  %v1780 = vpop.permute.xlu0 %1779
  %1781 = vrot.lane.b32.xlu0 %v572, 16
  %v1782 = vpop.permute.xlu0 %1781
  %1783 = vrot.lane.b32.xlu0 %v573, 16
  %v1784 = vpop.permute.xlu0 %1783
  %1785 = vrot.lane.b32.xlu0 %v574, 16
  %v1786 = vpop.permute.xlu0 %1785
  %1787 = vrot.lane.b32.xlu0 %v575, 16
  %v1788 = vpop.permute.xlu0 %1787
  %1789 = vrot.lane.b32.xlu0 %v576, 16
  %v1790 = vpop.permute.xlu0 %1789
  %1791 = vrot.lane.b32.xlu0 %v577, 16
  %v1792 = vpop.permute.xlu0 %1791
  %1793 = vrot.lane.b32.xlu0 %v578, 16
  %v1794 = vpop.permute.xlu0 %1793
  %1795 = vrot.lane.b32.xlu0 %v579, 16
  %v1796 = vpop.permute.xlu0 %1795
  %1925 = vrot.lane.b32.xlu0 %v580, 20
  %v1926 = vpop.permute.xlu0 %1925
  %1927 = vrot.lane.b32.xlu0 %v581, 20
  %v1928 = vpop.permute.xlu0 %1927
  %1929 = vrot.lane.b32.xlu0 %v582, 20
  %v1930 = vpop.permute.xlu0 %1929
  %1931 = vrot.lane.b32.xlu0 %v583, 20
  %v1932 = vpop.permute.xlu0 %1931
  %1933 = vrot.lane.b32.xlu0 %v584, 20
  %v1934 = vpop.permute.xlu0 %1933
  %1935 = vrot.lane.b32.xlu0 %v585, 20
  %v1936 = vpop.permute.xlu0 %1935
  %1937 = vrot.lane.b32.xlu0 %v586, 20
  %v1938 = vpop.permute.xlu0 %1937
  %1939 = vrot.lane.b32.xlu0 %v587, 20
  %v1940 = vpop.permute.xlu0 %1939
  %1941 = vrot.lane.b32.xlu0 %v588, 20
  %v1942 = vpop.permute.xlu0 %1941
  %1943 = vrot.lane.b32.xlu0 %v589, 20
  %v1944 = vpop.permute.xlu0 %1943
  %1945 = vrot.lane.b32.xlu0 %v590, 20
  %v1946 = vpop.permute.xlu0 %1945
  %1947 = vrot.lane.b32.xlu0 %v591, 20
  %v1948 = vpop.permute.xlu0 %1947
  %1949 = vrot.lane.b32.xlu0 %v592, 20
  %v1950 = vpop.permute.xlu0 %1949
  %1951 = vrot.lane.b32.xlu0 %v593, 20
  %v1952 = vpop.permute.xlu0 %1951
  %1953 = vrot.lane.b32.xlu0 %v594, 20
  %v1954 = vpop.permute.xlu0 %1953
  %1955 = vrot.lane.b32.xlu0 %v595, 20
  %v1956 = vpop.permute.xlu0 %1955
  %1957 = vrot.lane.b32.xlu0 %v596, 20
  %v1958 = vpop.permute.xlu0 %1957
  %1959 = vrot.lane.b32.xlu0 %v597, 20
  %v1960 = vpop.permute.xlu0 %1959
  %1961 = vrot.lane.b32.xlu0 %v598, 20
  %v1962 = vpop.permute.xlu0 %1961
  %1963 = vrot.lane.b32.xlu0 %v599, 20
  %v1964 = vpop.permute.xlu0 %1963
  %1965 = vrot.lane.b32.xlu0 %v600, 20
  %v1966 = vpop.permute.xlu0 %1965
  %1967 = vrot.lane.b32.xlu0 %v601, 20
  %v1968 = vpop.permute.xlu0 %1967
  %1969 = vrot.lane.b32.xlu0 %v602, 20
  %v1970 = vpop.permute.xlu0 %1969
  %1971 = vrot.lane.b32.xlu0 %v603, 20
  %v1972 = vpop.permute.xlu0 %1971
  %1973 = vrot.lane.b32.xlu0 %v604, 20
  %v1974 = vpop.permute.xlu0 %1973
  %1975 = vrot.lane.b32.xlu0 %v605, 20
  %v1976 = vpop.permute.xlu0 %1975
  %1977 = vrot.lane.b32.xlu0 %v606, 20
  %v1978 = vpop.permute.xlu0 %1977
  %1979 = vrot.lane.b32.xlu0 %v607, 20
  %v1980 = vpop.permute.xlu0 %1979
  %1981 = vrot.lane.b32.xlu0 %v608, 20
  %v1982 = vpop.permute.xlu0 %1981
  %1983 = vrot.lane.b32.xlu0 %v609, 20
  %v1984 = vpop.permute.xlu0 %1983
  %1985 = vrot.lane.b32.xlu0 %v610, 20
  %v1986 = vpop.permute.xlu0 %1985
  %1987 = vrot.lane.b32.xlu0 %v611, 20
  %v1988 = vpop.permute.xlu0 %1987
  %1989 = vrot.lane.b32.xlu0 %v612, 20
  %v1990 = vpop.permute.xlu0 %1989
  %1991 = vrot.lane.b32.xlu0 %v613, 20
  %v1992 = vpop.permute.xlu0 %1991
  %1993 = vrot.lane.b32.xlu0 %v614, 20
  %v1994 = vpop.permute.xlu0 %1993
  %1995 = vrot.lane.b32.xlu0 %v615, 20
  %v1996 = vpop.permute.xlu0 %1995
  %1997 = vrot.lane.b32.xlu0 %v616, 20
  %v1998 = vpop.permute.xlu0 %1997
  %1999 = vrot.lane.b32.xlu0 %v617, 20
  %v2000 = vpop.permute.xlu0 %1999
  %2001 = vrot.lane.b32.xlu0 %v618, 20
  %v2002 = vpop.permute.xlu0 %2001
  %2003 = vrot.lane.b32.xlu0 %v619, 20
  %v2004 = vpop.permute.xlu0 %2003
  %2005 = vrot.lane.b32.xlu0 %v620, 20
  %v2006 = vpop.permute.xlu0 %2005
  %2007 = vrot.lane.b32.xlu0 %v621, 20
  %v2008 = vpop.permute.xlu0 %2007
  %2009 = vrot.lane.b32.xlu0 %v622, 20
  %v2010 = vpop.permute.xlu0 %2009
  %2011 = vrot.lane.b32.xlu0 %v623, 20
  %v2012 = vpop.permute.xlu0 %2011
  %2013 = vrot.lane.b32.xlu0 %v624, 20
  %v2014 = vpop.permute.xlu0 %2013
  %2015 = vrot.lane.b32.xlu0 %v625, 20
  %v2016 = vpop.permute.xlu0 %2015
  %2017 = vrot.lane.b32.xlu0 %v626, 20
  %v2018 = vpop.permute.xlu0 %2017
  %2019 = vrot.lane.b32.xlu0 %v627, 20
  %v2020 = vpop.permute.xlu0 %2019
  %2021 = vrot.lane.b32.xlu0 %v628, 20
  %v2022 = vpop.permute.xlu0 %2021
  %2023 = vrot.lane.b32.xlu0 %v629, 20
  %v2024 = vpop.permute.xlu0 %2023
  %2025 = vrot.lane.b32.xlu0 %v630, 20
  %v2026 = vpop.permute.xlu0 %2025
  %2027 = vrot.lane.b32.xlu0 %v631, 20
  %v2028 = vpop.permute.xlu0 %2027
  %2029 = vrot.lane.b32.xlu0 %v632, 20
  %v2030 = vpop.permute.xlu0 %2029
  %2031 = vrot.lane.b32.xlu0 %v633, 20
  %v2032 = vpop.permute.xlu0 %2031
  %2033 = vrot.lane.b32.xlu0 %v634, 20
  %v2034 = vpop.permute.xlu0 %2033
  %2035 = vrot.lane.b32.xlu0 %v635, 20
  %v2036 = vpop.permute.xlu0 %2035
  %2037 = vrot.lane.b32.xlu0 %v636, 20
  %v2038 = vpop.permute.xlu0 %2037
  %2039 = vrot.lane.b32.xlu0 %v637, 20
  %v2040 = vpop.permute.xlu0 %2039
  %2041 = vrot.lane.b32.xlu0 %v638, 20
  %v2042 = vpop.permute.xlu0 %2041
  %2043 = vrot.lane.b32.xlu0 %v639, 20
  %v2044 = vpop.permute.xlu0 %2043
  %2045 = vrot.lane.b32.xlu0 %v640, 20
  %v2046 = vpop.permute.xlu0 %2045
  %2047 = vrot.lane.b32.xlu0 %v641, 20
  %v2048 = vpop.permute.xlu0 %2047
  %2049 = vrot.lane.b32.xlu0 %v642, 20
  %v2050 = vpop.permute.xlu0 %2049
  %2051 = vrot.lane.b32.xlu0 %v643, 20
  %v2052 = vpop.permute.xlu0 %2051
  %2181 = vrot.lane.b32.xlu0 %v645, 24
  %v2182 = vpop.permute.xlu0 %2181
  %2183 = vrot.lane.b32.xlu0 %v646, 24
  %v2184 = vpop.permute.xlu0 %2183
  %2185 = vrot.lane.b32.xlu0 %v647, 24
  %v2186 = vpop.permute.xlu0 %2185
  %2187 = vrot.lane.b32.xlu0 %v648, 24
  %v2188 = vpop.permute.xlu0 %2187
  %2189 = vrot.lane.b32.xlu0 %v649, 24
  %v2190 = vpop.permute.xlu0 %2189
  %2191 = vrot.lane.b32.xlu0 %v650, 24
  %v2192 = vpop.permute.xlu0 %2191
  %2193 = vrot.lane.b32.xlu0 %v651, 24
  %v2194 = vpop.permute.xlu0 %2193
  %2195 = vrot.lane.b32.xlu0 %v652, 24
  %v2196 = vpop.permute.xlu0 %2195
  %2197 = vrot.lane.b32.xlu0 %v653, 24
  %v2198 = vpop.permute.xlu0 %2197
  %2199 = vrot.lane.b32.xlu0 %v654, 24
  %v2200 = vpop.permute.xlu0 %2199
  %2201 = vrot.lane.b32.xlu0 %v655, 24
  %v2202 = vpop.permute.xlu0 %2201
  %2203 = vrot.lane.b32.xlu0 %v656, 24
  %v2204 = vpop.permute.xlu0 %2203
  %2205 = vrot.lane.b32.xlu0 %v657, 24
  %v2206 = vpop.permute.xlu0 %2205
  %2207 = vrot.lane.b32.xlu0 %v658, 24
  %v2208 = vpop.permute.xlu0 %2207
  %2209 = vrot.lane.b32.xlu0 %v659, 24
  %v2210 = vpop.permute.xlu0 %2209
  %2211 = vrot.lane.b32.xlu0 %v660, 24
  %v2212 = vpop.permute.xlu0 %2211
  %2213 = vrot.lane.b32.xlu0 %v661, 24
  %v2214 = vpop.permute.xlu0 %2213
  %2215 = vrot.lane.b32.xlu0 %v662, 24
  %v2216 = vpop.permute.xlu0 %2215
  %2217 = vrot.lane.b32.xlu0 %v663, 24
  %v2218 = vpop.permute.xlu0 %2217
  %2219 = vrot.lane.b32.xlu0 %v664, 24
  %v2220 = vpop.permute.xlu0 %2219
  %2221 = vrot.lane.b32.xlu0 %v665, 24
  %v2222 = vpop.permute.xlu0 %2221
  %2223 = vrot.lane.b32.xlu0 %v666, 24
  %v2224 = vpop.permute.xlu0 %2223
  %2225 = vrot.lane.b32.xlu0 %v667, 24
  %v2226 = vpop.permute.xlu0 %2225
  %2227 = vrot.lane.b32.xlu0 %v668, 24
  %v2228 = vpop.permute.xlu0 %2227
  %2229 = vrot.lane.b32.xlu0 %v669, 24
  %v2230 = vpop.permute.xlu0 %2229
  %2231 = vrot.lane.b32.xlu0 %v670, 24
  %v2232 = vpop.permute.xlu0 %2231
  %2233 = vrot.lane.b32.xlu0 %v671, 24
  %v2234 = vpop.permute.xlu0 %2233
  %2235 = vrot.lane.b32.xlu0 %v672, 24
  %v2236 = vpop.permute.xlu0 %2235
  %2237 = vrot.lane.b32.xlu0 %v673, 24
  %v2238 = vpop.permute.xlu0 %2237
  %2239 = vrot.lane.b32.xlu0 %v674, 24
  %v2240 = vpop.permute.xlu0 %2239
  %2241 = vrot.lane.b32.xlu0 %v675, 24
  %v2242 = vpop.permute.xlu0 %2241
  %2243 = vrot.lane.b32.xlu0 %v676, 24
  %v2244 = vpop.permute.xlu0 %2243
  %2245 = vrot.lane.b32.xlu0 %v677, 24
  %v2246 = vpop.permute.xlu0 %2245
  %2247 = vrot.lane.b32.xlu0 %v678, 24
  %v2248 = vpop.permute.xlu0 %2247
  %2249 = vrot.lane.b32.xlu0 %v679, 24
  %v2250 = vpop.permute.xlu0 %2249
  %2251 = vrot.lane.b32.xlu0 %v680, 24
  %v2252 = vpop.permute.xlu0 %2251
  %2253 = vrot.lane.b32.xlu0 %v681, 24
  %v2254 = vpop.permute.xlu0 %2253
  %2255 = vrot.lane.b32.xlu0 %v682, 24
  %v2256 = vpop.permute.xlu0 %2255
  %2257 = vrot.lane.b32.xlu0 %v683, 24
  %v2258 = vpop.permute.xlu0 %2257
  %2259 = vrot.lane.b32.xlu0 %v684, 24
  %v2260 = vpop.permute.xlu0 %2259
  %2261 = vrot.lane.b32.xlu0 %v685, 24
  %v2262 = vpop.permute.xlu0 %2261
  %2263 = vrot.lane.b32.xlu0 %v686, 24
  %v2264 = vpop.permute.xlu0 %2263
  %2265 = vrot.lane.b32.xlu0 %v687, 24
  %v2266 = vpop.permute.xlu0 %2265
  %2267 = vrot.lane.b32.xlu0 %v688, 24
  %v2268 = vpop.permute.xlu0 %2267
  %2269 = vrot.lane.b32.xlu0 %v689, 24
  %v2270 = vpop.permute.xlu0 %2269
  %2271 = vrot.lane.b32.xlu0 %v690, 24
  %v2272 = vpop.permute.xlu0 %2271
  %2273 = vrot.lane.b32.xlu0 %v691, 24
  %v2274 = vpop.permute.xlu0 %2273
  %2275 = vrot.lane.b32.xlu0 %v692, 24
  %v2276 = vpop.permute.xlu0 %2275
  %2277 = vrot.lane.b32.xlu0 %v693, 24
  %v2278 = vpop.permute.xlu0 %2277
  %2279 = vrot.lane.b32.xlu0 %v694, 24
  %v2280 = vpop.permute.xlu0 %2279
  %2281 = vrot.lane.b32.xlu0 %v695, 24
  %v2282 = vpop.permute.xlu0 %2281
  %2283 = vrot.lane.b32.xlu0 %v696, 24
  %v2284 = vpop.permute.xlu0 %2283
  %2285 = vrot.lane.b32.xlu0 %v697, 24
  %v2286 = vpop.permute.xlu0 %2285
  %2287 = vrot.lane.b32.xlu0 %v698, 24
  %v2288 = vpop.permute.xlu0 %2287
  %2289 = vrot.lane.b32.xlu0 %v699, 24
  %v2290 = vpop.permute.xlu0 %2289
  %2291 = vrot.lane.b32.xlu0 %v700, 24
  %v2292 = vpop.permute.xlu0 %2291
  %2293 = vrot.lane.b32.xlu0 %v701, 24
  %v2294 = vpop.permute.xlu0 %2293
  %2295 = vrot.lane.b32.xlu0 %v702, 24
  %v2296 = vpop.permute.xlu0 %2295
  %2297 = vrot.lane.b32.xlu0 %v703, 24
  %v2298 = vpop.permute.xlu0 %2297
  %2299 = vrot.lane.b32.xlu0 %v704, 24
  %v2300 = vpop.permute.xlu0 %2299
  %2301 = vrot.lane.b32.xlu0 %v705, 24
  %v2302 = vpop.permute.xlu0 %2301
  %2303 = vrot.lane.b32.xlu0 %v706, 24
  %v2304 = vpop.permute.xlu0 %2303
  %2305 = vrot.lane.b32.xlu0 %v707, 24
  %v2306 = vpop.permute.xlu0 %2305
  %2307 = vrot.lane.b32.xlu0 %v708, 24
  %v2308 = vpop.permute.xlu0 %2307
  %2437 = vrot.lane.b32.xlu0 %v709, 28
  %v2438 = vpop.permute.xlu0 %2437
  %2439 = vrot.lane.b32.xlu0 %v710, 28
  %v2440 = vpop.permute.xlu0 %2439
  %2441 = vrot.lane.b32.xlu0 %v711, 28
  %v2442 = vpop.permute.xlu0 %2441
  %2443 = vrot.lane.b32.xlu0 %v712, 28
  %v2444 = vpop.permute.xlu0 %2443
  %2445 = vrot.lane.b32.xlu0 %v713, 28
  %v2446 = vpop.permute.xlu0 %2445
  %2447 = vrot.lane.b32.xlu0 %v714, 28
  %v2448 = vpop.permute.xlu0 %2447
  %2449 = vrot.lane.b32.xlu0 %v715, 28
  %v2450 = vpop.permute.xlu0 %2449
  %2451 = vrot.lane.b32.xlu0 %v716, 28
  %v2452 = vpop.permute.xlu0 %2451
  %2453 = vrot.lane.b32.xlu0 %v717, 28
  %v2454 = vpop.permute.xlu0 %2453
  %2455 = vrot.lane.b32.xlu0 %v718, 28
  %v2456 = vpop.permute.xlu0 %2455
  %2457 = vrot.lane.b32.xlu0 %v719, 28
  %v2458 = vpop.permute.xlu0 %2457
  %2459 = vrot.lane.b32.xlu0 %v720, 28
  %v2460 = vpop.permute.xlu0 %2459
  %2461 = vrot.lane.b32.xlu0 %v721, 28
  %v2462 = vpop.permute.xlu0 %2461
  %2463 = vrot.lane.b32.xlu0 %v722, 28
  %v2464 = vpop.permute.xlu0 %2463
  %2465 = vrot.lane.b32.xlu0 %v723, 28
  %v2466 = vpop.permute.xlu0 %2465
  %2467 = vrot.lane.b32.xlu0 %v724, 28
  %v2468 = vpop.permute.xlu0 %2467
  %2469 = vrot.lane.b32.xlu0 %v725, 28
  %v2470 = vpop.permute.xlu0 %2469
  %2471 = vrot.lane.b32.xlu0 %v726, 28
  %v2472 = vpop.permute.xlu0 %2471
  %2473 = vrot.lane.b32.xlu0 %v727, 28
  %v2474 = vpop.permute.xlu0 %2473
  %2475 = vrot.lane.b32.xlu0 %v728, 28
  %v2476 = vpop.permute.xlu0 %2475
  %2477 = vrot.lane.b32.xlu0 %v729, 28
  %v2478 = vpop.permute.xlu0 %2477
  %2479 = vrot.lane.b32.xlu0 %v730, 28
  %v2480 = vpop.permute.xlu0 %2479
  %2481 = vrot.lane.b32.xlu0 %v731, 28
  %v2482 = vpop.permute.xlu0 %2481
  %2483 = vrot.lane.b32.xlu0 %v732, 28
  %v2484 = vpop.permute.xlu0 %2483
  %2485 = vrot.lane.b32.xlu0 %v733, 28
  %v2486 = vpop.permute.xlu0 %2485
  %2487 = vrot.lane.b32.xlu0 %v734, 28
  %v2488 = vpop.permute.xlu0 %2487
  %2489 = vrot.lane.b32.xlu0 %v735, 28
  %v2490 = vpop.permute.xlu0 %2489
  %2491 = vrot.lane.b32.xlu0 %v736, 28
  %v2492 = vpop.permute.xlu0 %2491
  %2493 = vrot.lane.b32.xlu0 %v737, 28
  %v2494 = vpop.permute.xlu0 %2493
  %2495 = vrot.lane.b32.xlu0 %v738, 28
  %v2496 = vpop.permute.xlu0 %2495
  %2497 = vrot.lane.b32.xlu0 %v739, 28
  %v2498 = vpop.permute.xlu0 %2497
  %2499 = vrot.lane.b32.xlu0 %v740, 28
  %v2500 = vpop.permute.xlu0 %2499
  %2501 = vrot.lane.b32.xlu0 %v741, 28
  %v2502 = vpop.permute.xlu0 %2501
  %2503 = vrot.lane.b32.xlu0 %v742, 28
  %v2504 = vpop.permute.xlu0 %2503
  %2505 = vrot.lane.b32.xlu0 %v743, 28
  %v2506 = vpop.permute.xlu0 %2505
  %2507 = vrot.lane.b32.xlu0 %v744, 28
  %v2508 = vpop.permute.xlu0 %2507
  %2509 = vrot.lane.b32.xlu0 %v745, 28
  %v2510 = vpop.permute.xlu0 %2509
  %2511 = vrot.lane.b32.xlu0 %v746, 28
  %v2512 = vpop.permute.xlu0 %2511
  %2513 = vrot.lane.b32.xlu0 %v747, 28
  %v2514 = vpop.permute.xlu0 %2513
  %2515 = vrot.lane.b32.xlu0 %v748, 28
  %v2516 = vpop.permute.xlu0 %2515
  %2517 = vrot.lane.b32.xlu0 %v749, 28
  %v2518 = vpop.permute.xlu0 %2517
  %2519 = vrot.lane.b32.xlu0 %v750, 28
  %v2520 = vpop.permute.xlu0 %2519
  %2521 = vrot.lane.b32.xlu0 %v751, 28
  %v2522 = vpop.permute.xlu0 %2521
  %2523 = vrot.lane.b32.xlu0 %v752, 28
  %v2524 = vpop.permute.xlu0 %2523
  %2525 = vrot.lane.b32.xlu0 %v753, 28
  %v2526 = vpop.permute.xlu0 %2525
  %2527 = vrot.lane.b32.xlu0 %v754, 28
  %v2528 = vpop.permute.xlu0 %2527
  %2529 = vrot.lane.b32.xlu0 %v755, 28
  %v2530 = vpop.permute.xlu0 %2529
  %2531 = vrot.lane.b32.xlu0 %v756, 28
  %v2532 = vpop.permute.xlu0 %2531
  %2533 = vrot.lane.b32.xlu0 %v757, 28
  %v2534 = vpop.permute.xlu0 %2533
  %2535 = vrot.lane.b32.xlu0 %v758, 28
  %v2536 = vpop.permute.xlu0 %2535
  %2537 = vrot.lane.b32.xlu0 %v759, 28
  %v2538 = vpop.permute.xlu0 %2537
  %2539 = vrot.lane.b32.xlu0 %v760, 28
  %v2540 = vpop.permute.xlu0 %2539
  %2541 = vrot.lane.b32.xlu0 %v761, 28
  %v2542 = vpop.permute.xlu0 %2541
  %2543 = vrot.lane.b32.xlu0 %v762, 28
  %v2544 = vpop.permute.xlu0 %2543
  %2545 = vrot.lane.b32.xlu0 %v763, 28
  %v2546 = vpop.permute.xlu0 %2545
  %2547 = vrot.lane.b32.xlu0 %v764, 28
  %v2548 = vpop.permute.xlu0 %2547
  %2549 = vrot.lane.b32.xlu0 %v765, 28
  %v2550 = vpop.permute.xlu0 %2549
  %2551 = vrot.lane.b32.xlu0 %v766, 28
  %v2552 = vpop.permute.xlu0 %2551
  %2553 = vrot.lane.b32.xlu0 %v767, 28
  %v2554 = vpop.permute.xlu0 %2553
  %2555 = vrot.lane.b32.xlu0 %v768, 28
  %v2556 = vpop.permute.xlu0 %2555
  %2557 = vrot.lane.b32.xlu0 %v769, 28
  %v2558 = vpop.permute.xlu0 %2557
  %2559 = vrot.lane.b32.xlu0 %v770, 28
  %v2560 = vpop.permute.xlu0 %2559
  %2561 = vrot.lane.b32.xlu0 %v771, 28
  %v2562 = vpop.permute.xlu0 %2561
  %2563 = vrot.lane.b32.xlu0 %v772, 28
  %v2564 = vpop.permute.xlu0 %2563
  %2693 = vrot.lane.b32.xlu0 %v773, 32
  %v2694 = vpop.permute.xlu0 %2693
  %2695 = vrot.lane.b32.xlu0 %v774, 32
  %v2696 = vpop.permute.xlu0 %2695
  %2697 = vrot.lane.b32.xlu0 %v775, 32
  %v2698 = vpop.permute.xlu0 %2697
  %2699 = vrot.lane.b32.xlu0 %v776, 32
  %v2700 = vpop.permute.xlu0 %2699
  %2701 = vrot.lane.b32.xlu0 %v777, 32
  %v2702 = vpop.permute.xlu0 %2701
  %2703 = vrot.lane.b32.xlu0 %v778, 32
  %v2704 = vpop.permute.xlu0 %2703
  %2705 = vrot.lane.b32.xlu0 %v779, 32
  %v2706 = vpop.permute.xlu0 %2705
  %2707 = vrot.lane.b32.xlu0 %v780, 32
  %v2708 = vpop.permute.xlu0 %2707
  %2709 = vrot.lane.b32.xlu0 %v781, 32
  %v2710 = vpop.permute.xlu0 %2709
  %2711 = vrot.lane.b32.xlu0 %v782, 32
  %v2712 = vpop.permute.xlu0 %2711
  %2713 = vrot.lane.b32.xlu0 %v783, 32
  %v2714 = vpop.permute.xlu0 %2713
  %2715 = vrot.lane.b32.xlu0 %v784, 32
  %v2716 = vpop.permute.xlu0 %2715
  %2717 = vrot.lane.b32.xlu0 %v785, 32
  %v2718 = vpop.permute.xlu0 %2717
  %2719 = vrot.lane.b32.xlu0 %v786, 32
  %v2720 = vpop.permute.xlu0 %2719
  %2721 = vrot.lane.b32.xlu0 %v787, 32
  %v2722 = vpop.permute.xlu0 %2721
  %2723 = vrot.lane.b32.xlu0 %v788, 32
  %v2724 = vpop.permute.xlu0 %2723
  %2725 = vrot.lane.b32.xlu0 %v789, 32
  %v2726 = vpop.permute.xlu0 %2725
  %2727 = vrot.lane.b32.xlu0 %v790, 32
  %v2728 = vpop.permute.xlu0 %2727
  %2729 = vrot.lane.b32.xlu0 %v791, 32
  %v2730 = vpop.permute.xlu0 %2729
  %2731 = vrot.lane.b32.xlu0 %v792, 32
  %v2732 = vpop.permute.xlu0 %2731
  %2733 = vrot.lane.b32.xlu0 %v793, 32
  %v2734 = vpop.permute.xlu0 %2733
  %2735 = vrot.lane.b32.xlu0 %v794, 32
  %v2736 = vpop.permute.xlu0 %2735
  %2737 = vrot.lane.b32.xlu0 %v795, 32
  %v2738 = vpop.permute.xlu0 %2737
  %2739 = vrot.lane.b32.xlu0 %v796, 32
  %v2740 = vpop.permute.xlu0 %2739
  %2741 = vrot.lane.b32.xlu0 %v797, 32
  %v2742 = vpop.permute.xlu0 %2741
  %2743 = vrot.lane.b32.xlu0 %v798, 32
  %v2744 = vpop.permute.xlu0 %2743
  %2745 = vrot.lane.b32.xlu0 %v799, 32
  %v2746 = vpop.permute.xlu0 %2745
  %2747 = vrot.lane.b32.xlu0 %v800, 32
  %v2748 = vpop.permute.xlu0 %2747
  %2749 = vrot.lane.b32.xlu0 %v801, 32
  %v2750 = vpop.permute.xlu0 %2749
  %2751 = vrot.lane.b32.xlu0 %v802, 32
  %v2752 = vpop.permute.xlu0 %2751
  %2753 = vrot.lane.b32.xlu0 %v803, 32
  %v2754 = vpop.permute.xlu0 %2753
  %2755 = vrot.lane.b32.xlu0 %v804, 32
  %v2756 = vpop.permute.xlu0 %2755
  %2757 = vrot.lane.b32.xlu0 %v805, 32
  %v2758 = vpop.permute.xlu0 %2757
  %2759 = vrot.lane.b32.xlu0 %v806, 32
  %v2760 = vpop.permute.xlu0 %2759
  %2761 = vrot.lane.b32.xlu0 %v807, 32
  %v2762 = vpop.permute.xlu0 %2761
  %2763 = vrot.lane.b32.xlu0 %v808, 32
  %v2764 = vpop.permute.xlu0 %2763
  %2765 = vrot.lane.b32.xlu0 %v809, 32
  %v2766 = vpop.permute.xlu0 %2765
  %2767 = vrot.lane.b32.xlu0 %v810, 32
  %v2768 = vpop.permute.xlu0 %2767
  %2769 = vrot.lane.b32.xlu0 %v811, 32
  %v2770 = vpop.permute.xlu0 %2769
  %2771 = vrot.lane.b32.xlu0 %v812, 32
  %v2772 = vpop.permute.xlu0 %2771
  %2773 = vrot.lane.b32.xlu0 %v813, 32
  %v2774 = vpop.permute.xlu0 %2773
  %2775 = vrot.lane.b32.xlu0 %v814, 32
  %v2776 = vpop.permute.xlu0 %2775
  %2777 = vrot.lane.b32.xlu0 %v815, 32
  %v2778 = vpop.permute.xlu0 %2777
  %2779 = vrot.lane.b32.xlu0 %v816, 32
  %v2780 = vpop.permute.xlu0 %2779
  %2781 = vrot.lane.b32.xlu0 %v817, 32
  %v2782 = vpop.permute.xlu0 %2781
  %2783 = vrot.lane.b32.xlu0 %v818, 32
  %v2784 = vpop.permute.xlu0 %2783
  %2785 = vrot.lane.b32.xlu0 %v819, 32
  %v2786 = vpop.permute.xlu0 %2785
  %2787 = vrot.lane.b32.xlu0 %v820, 32
  %v2788 = vpop.permute.xlu0 %2787
  %2789 = vrot.lane.b32.xlu0 %v821, 32
  %v2790 = vpop.permute.xlu0 %2789
  %2791 = vrot.lane.b32.xlu0 %v822, 32
  %v2792 = vpop.permute.xlu0 %2791
  %2793 = vrot.lane.b32.xlu0 %v823, 32
  %v2794 = vpop.permute.xlu0 %2793
  %2795 = vrot.lane.b32.xlu0 %v824, 32
  %v2796 = vpop.permute.xlu0 %2795
  %2797 = vrot.lane.b32.xlu0 %v825, 32
  %v2798 = vpop.permute.xlu0 %2797
  %2799 = vrot.lane.b32.xlu0 %v826, 32
  %v2800 = vpop.permute.xlu0 %2799
  %2801 = vrot.lane.b32.xlu0 %v827, 32
  %v2802 = vpop.permute.xlu0 %2801
  %2803 = vrot.lane.b32.xlu0 %v828, 32
  %v2804 = vpop.permute.xlu0 %2803
  %2805 = vrot.lane.b32.xlu0 %v829, 32
  %v2806 = vpop.permute.xlu0 %2805
  %2807 = vrot.lane.b32.xlu0 %v830, 32
  %v2808 = vpop.permute.xlu0 %2807
  %2809 = vrot.lane.b32.xlu0 %v831, 32
  %v2810 = vpop.permute.xlu0 %2809
  %2811 = vrot.lane.b32.xlu0 %v832, 32
  %v2812 = vpop.permute.xlu0 %2811
  %2813 = vrot.lane.b32.xlu0 %v833, 32
  %v2814 = vpop.permute.xlu0 %2813
  %2815 = vrot.lane.b32.xlu0 %v834, 32
  %v2816 = vpop.permute.xlu0 %2815
  %2817 = vrot.lane.b32.xlu0 %v835, 32
  %v2818 = vpop.permute.xlu0 %2817
  %2819 = vrot.lane.b32.xlu0 %v836, 32
  %v2820 = vpop.permute.xlu0 %2819
  %v2885 = vsel %vm21, %v260, %v902
  %v2886 = vsel %vm21, %v261, %v904
  %v2887 = vsel %vm21, %v262, %v906
  %v2888 = vsel %vm21, %v263, %v908
  %v2889 = vsel %vm21, %v264, %v910
  %v2890 = vsel %vm21, %v265, %v912
  %v2891 = vsel %vm21, %v266, %v914
  %v2892 = vsel %vm21, %v267, %v916
  %v2893 = vsel %vm21, %v268, %v918
  %v2894 = vsel %vm21, %v269, %v920
  %v2895 = vsel %vm21, %v270, %v922
  %v2896 = vsel %vm21, %v271, %v924
  %v2897 = vsel %vm21, %v272, %v926
  %v2898 = vsel %vm21, %v273, %v928
  %v2899 = vsel %vm21, %v274, %v930
  %v2900 = vsel %vm21, %v275, %v932
  %v2901 = vsel %vm21, %v276, %v934
  %v2902 = vsel %vm21, %v277, %v936
  %v2903 = vsel %vm21, %v278, %v938
  %v2904 = vsel %vm21, %v279, %v940
  %v2905 = vsel %vm21, %v280, %v942
  %v2906 = vsel %vm21, %v281, %v944
  %v2907 = vsel %vm21, %v282, %v946
  %v2908 = vsel %vm21, %v283, %v948
  %v2909 = vsel %vm21, %v284, %v950
  %v2910 = vsel %vm21, %v285, %v952
  %v2911 = vsel %vm21, %v286, %v954
  %v2912 = vsel %vm21, %v287, %v956
  %v2913 = vsel %vm21, %v288, %v958
  %v2914 = vsel %vm21, %v289, %v960
  %v2915 = vsel %vm21, %v290, %v962
  %v2916 = vsel %vm21, %v291, %v964
  %v2917 = vsel %vm21, %v292, %v966
  %v2918 = vsel %vm21, %v293, %v968
  %v2919 = vsel %vm21, %v294, %v970
  %v2920 = vsel %vm21, %v295, %v972
  %v2921 = vsel %vm21, %v296, %v974
  %v2922 = vsel %vm21, %v297, %v976
  %v2923 = vsel %vm21, %v298, %v978
  %v2924 = vsel %vm21, %v299, %v980
  %v2925 = vsel %vm21, %v300, %v982
  %v2926 = vsel %vm21, %v301, %v984
  %v2927 = vsel %vm21, %v302, %v986
  %v2928 = vsel %vm21, %v303, %v988
  %v2929 = vsel %vm21, %v304, %v990
  %v2930 = vsel %vm21, %v305, %v992
  %v2931 = vsel %vm21, %v306, %v994
  %v2932 = vsel %vm21, %v307, %v996
  %v2933 = vsel %vm21, %v308, %v998
  %v2934 = vsel %vm21, %v309, %v1000
  %v2935 = vsel %vm21, %v310, %v1002
  %v2936 = vsel %vm21, %v311, %v1004
  %v2937 = vsel %vm21, %v312, %v1006
  %v2938 = vsel %vm21, %v313, %v1008
  %v2939 = vsel %vm21, %v314, %v1010
  %v2940 = vsel %vm21, %v315, %v1012
  %v2941 = vsel %vm21, %v316, %v1014
  %v2942 = vsel %vm21, %v317, %v1016
  %v2943 = vsel %vm21, %v318, %v1018
  %v2944 = vsel %vm21, %v319, %v1020
  %v2945 = vsel %vm21, %v320, %v1022
  %v2946 = vsel %vm21, %v321, %v1024
  %v2947 = vsel %vm21, %v322, %v1026
  %v2948 = vsel %vm21, %v323, %v1028
  %vm2949 = vcmask 64512
  %v2950 = vsel %vm2949, %v2885, %v1158
  %v2951 = vsel %vm2949, %v2886, %v1160
  %v2952 = vsel %vm2949, %v2887, %v1162
  %v2953 = vsel %vm2949, %v2888, %v1164
  %v2954 = vsel %vm2949, %v2889, %v1166
  %v2955 = vsel %vm2949, %v2890, %v1168
  %v2956 = vsel %vm2949, %v2891, %v1170
  %v2957 = vsel %vm2949, %v2892, %v1172
  %v2958 = vsel %vm2949, %v2893, %v1174
  %v2959 = vsel %vm2949, %v2894, %v1176
  %v2960 = vsel %vm2949, %v2895, %v1178
  %v2961 = vsel %vm2949, %v2896, %v1180
  %v2962 = vsel %vm2949, %v2897, %v1182
  %v2963 = vsel %vm2949, %v2898, %v1184
  %v2964 = vsel %vm2949, %v2899, %v1186
  %v2965 = vsel %vm2949, %v2900, %v1188
  %v2966 = vsel %vm2949, %v2901, %v1190
  %v2967 = vsel %vm2949, %v2902, %v1192
  %v2968 = vsel %vm2949, %v2903, %v1194
  %v2969 = vsel %vm2949, %v2904, %v1196
  %v2970 = vsel %vm2949, %v2905, %v1198
  %v2971 = vsel %vm2949, %v2906, %v1200
  %v2972 = vsel %vm2949, %v2907, %v1202
  %v2973 = vsel %vm2949, %v2908, %v1204
  %v2974 = vsel %vm2949, %v2909, %v1206
  %v2975 = vsel %vm2949, %v2910, %v1208
  %v2976 = vsel %vm2949, %v2911, %v1210
  %v2977 = vsel %vm2949, %v2912, %v1212
  %v2978 = vsel %vm2949, %v2913, %v1214
  %v2979 = vsel %vm2949, %v2914, %v1216
  %v2980 = vsel %vm2949, %v2915, %v1218
  %v2981 = vsel %vm2949, %v2916, %v1220
  %v2982 = vsel %vm2949, %v2917, %v1222
  %v2983 = vsel %vm2949, %v2918, %v1224
  %v2984 = vsel %vm2949, %v2919, %v1226
  %v2985 = vsel %vm2949, %v2920, %v1228
  %v2986 = vsel %vm2949, %v2921, %v1230
  %v2987 = vsel %vm2949, %v2922, %v1232
  %v2988 = vsel %vm2949, %v2923, %v1234
  %v2989 = vsel %vm2949, %v2924, %v1236
  %v2990 = vsel %vm2949, %v2925, %v1238
  %v2991 = vsel %vm2949, %v2926, %v1240
  %v2992 = vsel %vm2949, %v2927, %v1242
  %v2993 = vsel %vm2949, %v2928, %v1244
  %v2994 = vsel %vm2949, %v2929, %v1246
  %v2995 = vsel %vm2949, %v2930, %v1248
  %v2996 = vsel %vm2949, %v2931, %v1250
  %v2997 = vsel %vm2949, %v2932, %v1252
  %v2998 = vsel %vm2949, %v2933, %v1254
  %v2999 = vsel %vm2949, %v2934, %v1256
  %v3000 = vsel %vm2949, %v2935, %v1258
  %v3001 = vsel %vm2949, %v2936, %v1260
  %v3002 = vsel %vm2949, %v2937, %v1262
  %v3003 = vsel %vm2949, %v2938, %v1264
  %v3004 = vsel %vm2949, %v2939, %v1266
  %v3005 = vsel %vm2949, %v2940, %v1268
  %v3006 = vsel %vm2949, %v2941, %v1270
  %v3007 = vsel %vm2949, %v2942, %v1272
  %v3008 = vsel %vm2949, %v2943, %v1274
  %v3009 = vsel %vm2949, %v2944, %v1276
  %v3010 = vsel %vm2949, %v2945, %v1278
  %v3011 = vsel %vm2949, %v2946, %v1280
  %v3012 = vsel %vm2949, %v2947, %v1282
  %v3013 = vsel %vm2949, %v2948, %v1284
  %vm3014 = vcmask 97280
  %v3015 = vsel %vm3014, %v2950, %v1414
  %v3016 = vsel %vm3014, %v2951, %v1416
  %v3017 = vsel %vm3014, %v2952, %v1418
  %v3018 = vsel %vm3014, %v2953, %v1420
  %v3019 = vsel %vm3014, %v2954, %v1422
  %v3020 = vsel %vm3014, %v2955, %v1424
  %v3021 = vsel %vm3014, %v2956, %v1426
  %v3022 = vsel %vm3014, %v2957, %v1428
  %v3023 = vsel %vm3014, %v2958, %v1430
  %v3024 = vsel %vm3014, %v2959, %v1432
  %v3025 = vsel %vm3014, %v2960, %v1434
  %v3026 = vsel %vm3014, %v2961, %v1436
  %v3027 = vsel %vm3014, %v2962, %v1438
  %v3028 = vsel %vm3014, %v2963, %v1440
  %v3029 = vsel %vm3014, %v2964, %v1442
  %v3030 = vsel %vm3014, %v2965, %v1444
  %v3031 = vsel %vm3014, %v2966, %v1446
  %v3032 = vsel %vm3014, %v2967, %v1448
  %v3033 = vsel %vm3014, %v2968, %v1450
  %v3034 = vsel %vm3014, %v2969, %v1452
  %v3035 = vsel %vm3014, %v2970, %v1454
  %v3036 = vsel %vm3014, %v2971, %v1456
  %v3037 = vsel %vm3014, %v2972, %v1458
  %v3038 = vsel %vm3014, %v2973, %v1460
  %v3039 = vsel %vm3014, %v2974, %v1462
  %v3040 = vsel %vm3014, %v2975, %v1464
  %v3041 = vsel %vm3014, %v2976, %v1466
  %v3042 = vsel %vm3014, %v2977, %v1468
  %v3043 = vsel %vm3014, %v2978, %v1470
  %v3044 = vsel %vm3014, %v2979, %v1472
  %v3045 = vsel %vm3014, %v2980, %v1474
  %v3046 = vsel %vm3014, %v2981, %v1476
  %v3047 = vsel %vm3014, %v2982, %v1478
  %v3048 = vsel %vm3014, %v2983, %v1480
  %v3049 = vsel %vm3014, %v2984, %v1482
  %v3050 = vsel %vm3014, %v2985, %v1484
  %v3051 = vsel %vm3014, %v2986, %v1486
  %v3052 = vsel %vm3014, %v2987, %v1488
  %v3053 = vsel %vm3014, %v2988, %v1490
  %v3054 = vsel %vm3014, %v2989, %v1492
  %v3055 = vsel %vm3014, %v2990, %v1494
  %v3056 = vsel %vm3014, %v2991, %v1496
  %v3057 = vsel %vm3014, %v2992, %v1498
  %v3058 = vsel %vm3014, %v2993, %v1500
  %v3059 = vsel %vm3014, %v2994, %v1502
  %v3060 = vsel %vm3014, %v2995, %v1504
  %v3061 = vsel %vm3014, %v2996, %v1506
  %v3062 = vsel %vm3014, %v2997, %v1508
  %v3063 = vsel %vm3014, %v2998, %v1510
  %v3064 = vsel %vm3014, %v2999, %v1512
  %v3065 = vsel %vm3014, %v3000, %v1514
  %v3066 = vsel %vm3014, %v3001, %v1516
  %v3067 = vsel %vm3014, %v3002, %v1518
  %v3068 = vsel %vm3014, %v3003, %v1520
  %v3069 = vsel %vm3014, %v3004, %v1522
  %v3070 = vsel %vm3014, %v3005, %v1524
  %v3071 = vsel %vm3014, %v3006, %v1526
  %v3072 = vsel %vm3014, %v3007, %v1528
  %v3073 = vsel %vm3014, %v3008, %v1530
  %v3074 = vsel %vm3014, %v3009, %v1532
  %v3075 = vsel %vm3014, %v3010, %v1534
  %v3076 = vsel %vm3014, %v3011, %v1536
  %v3077 = vsel %vm3014, %v3012, %v1538
  %v3078 = vsel %vm3014, %v3013, %v1540
  %vm3079 = vcmask 130048
  %v3080 = vsel %vm3079, %v3015, %v1670
  %v3081 = vsel %vm3079, %v3016, %v1672
  %v3082 = vsel %vm3079, %v3017, %v1674
  %v3083 = vsel %vm3079, %v3018, %v1676
  %v3084 = vsel %vm3079, %v3019, %v1678
  %v3085 = vsel %vm3079, %v3020, %v1680
  %v3086 = vsel %vm3079, %v3021, %v1682
  %v3087 = vsel %vm3079, %v3022, %v1684
  %v3088 = vsel %vm3079, %v3023, %v1686
  %v3089 = vsel %vm3079, %v3024, %v1688
  %v3090 = vsel %vm3079, %v3025, %v1690
  %v3091 = vsel %vm3079, %v3026, %v1692
  %v3092 = vsel %vm3079, %v3027, %v1694
  %v3093 = vsel %vm3079, %v3028, %v1696
  %v3094 = vsel %vm3079, %v3029, %v1698
  %v3095 = vsel %vm3079, %v3030, %v1700
  %v3096 = vsel %vm3079, %v3031, %v1702
  %v3097 = vsel %vm3079, %v3032, %v1704
  %v3098 = vsel %vm3079, %v3033, %v1706
  %v3099 = vsel %vm3079, %v3034, %v1708
  %v3100 = vsel %vm3079, %v3035, %v1710
  %v3101 = vsel %vm3079, %v3036, %v1712
  %v3102 = vsel %vm3079, %v3037, %v1714
  %v3103 = vsel %vm3079, %v3038, %v1716
  %v3104 = vsel %vm3079, %v3039, %v1718
  %v3105 = vsel %vm3079, %v3040, %v1720
  %v3106 = vsel %vm3079, %v3041, %v1722
  %v3107 = vsel %vm3079, %v3042, %v1724
  %v3108 = vsel %vm3079, %v3043, %v1726
  %v3109 = vsel %vm3079, %v3044, %v1728
  %v3110 = vsel %vm3079, %v3045, %v1730
  %v3111 = vsel %vm3079, %v3046, %v1732
  %v3112 = vsel %vm3079, %v3047, %v1734
  %v3113 = vsel %vm3079, %v3048, %v1736
  %v3114 = vsel %vm3079, %v3049, %v1738
  %v3115 = vsel %vm3079, %v3050, %v1740
  %v3116 = vsel %vm3079, %v3051, %v1742
  %v3117 = vsel %vm3079, %v3052, %v1744
  %v3118 = vsel %vm3079, %v3053, %v1746
  %v3119 = vsel %vm3079, %v3054, %v1748
  %v3120 = vsel %vm3079, %v3055, %v1750
  %v3121 = vsel %vm3079, %v3056, %v1752
  %v3122 = vsel %vm3079, %v3057, %v1754
  %v3123 = vsel %vm3079, %v3058, %v1756
  %v3124 = vsel %vm3079, %v3059, %v1758
  %v3125 = vsel %vm3079, %v3060, %v1760
  %v3126 = vsel %vm3079, %v3061, %v1762
  %v3127 = vsel %vm3079, %v3062, %v1764
  %v3128 = vsel %vm3079, %v3063, %v1766
  %v3129 = vsel %vm3079, %v3064, %v1768
  %v3130 = vsel %vm3079, %v3065, %v1770
  %v3131 = vsel %vm3079, %v3066, %v1772
  %v3132 = vsel %vm3079, %v3067, %v1774
  %v3133 = vsel %vm3079, %v3068, %v1776
  %v3134 = vsel %vm3079, %v3069, %v1778
  %v3135 = vsel %vm3079, %v3070, %v1780
  %v3136 = vsel %vm3079, %v3071, %v1782
  %v3137 = vsel %vm3079, %v3072, %v1784
  %v3138 = vsel %vm3079, %v3073, %v1786
  %v3139 = vsel %vm3079, %v3074, %v1788
  %v3140 = vsel %vm3079, %v3075, %v1790
  %v3141 = vsel %vm3079, %v3076, %v1792
  %v3142 = vsel %vm3079, %v3077, %v1794
  %v3143 = vsel %vm3079, %v3078, %v1796
  %vm3144 = vcmask 162816
  %v3145 = vsel %vm3144, %v3080, %v1926
  %v3146 = vsel %vm3144, %v3081, %v1928
  %v3147 = vsel %vm3144, %v3082, %v1930
  %v3148 = vsel %vm3144, %v3083, %v1932
  %v3149 = vsel %vm3144, %v3084, %v1934
  %v3150 = vsel %vm3144, %v3085, %v1936
  %v3151 = vsel %vm3144, %v3086, %v1938
  %v3152 = vsel %vm3144, %v3087, %v1940
  %v3153 = vsel %vm3144, %v3088, %v1942
  %v3154 = vsel %vm3144, %v3089, %v1944
  %v3155 = vsel %vm3144, %v3090, %v1946
  %v3156 = vsel %vm3144, %v3091, %v1948
  %v3157 = vsel %vm3144, %v3092, %v1950
  %v3158 = vsel %vm3144, %v3093, %v1952
  %v3159 = vsel %vm3144, %v3094, %v1954
  %v3160 = vsel %vm3144, %v3095, %v1956
  %v3161 = vsel %vm3144, %v3096, %v1958
  %v3162 = vsel %vm3144, %v3097, %v1960
  %v3163 = vsel %vm3144, %v3098, %v1962
  %v3164 = vsel %vm3144, %v3099, %v1964
  %v3165 = vsel %vm3144, %v3100, %v1966
  %v3166 = vsel %vm3144, %v3101, %v1968
  %v3167 = vsel %vm3144, %v3102, %v1970
  %v3168 = vsel %vm3144, %v3103, %v1972
  %v3169 = vsel %vm3144, %v3104, %v1974
  %v3170 = vsel %vm3144, %v3105, %v1976
  %v3171 = vsel %vm3144, %v3106, %v1978
  %v3172 = vsel %vm3144, %v3107, %v1980
  %v3173 = vsel %vm3144, %v3108, %v1982
  %v3174 = vsel %vm3144, %v3109, %v1984
  %v3175 = vsel %vm3144, %v3110, %v1986
  %v3176 = vsel %vm3144, %v3111, %v1988
  %v3177 = vsel %vm3144, %v3112, %v1990
  %v3178 = vsel %vm3144, %v3113, %v1992
  %v3179 = vsel %vm3144, %v3114, %v1994
  %v3180 = vsel %vm3144, %v3115, %v1996
  %v3181 = vsel %vm3144, %v3116, %v1998
  %v3182 = vsel %vm3144, %v3117, %v2000
  %v3183 = vsel %vm3144, %v3118, %v2002
  %v3184 = vsel %vm3144, %v3119, %v2004
  %v3185 = vsel %vm3144, %v3120, %v2006
  %v3186 = vsel %vm3144, %v3121, %v2008
  %v3187 = vsel %vm3144, %v3122, %v2010
  %v3188 = vsel %vm3144, %v3123, %v2012
  %v3189 = vsel %vm3144, %v3124, %v2014
  %v3190 = vsel %vm3144, %v3125, %v2016
  %v3191 = vsel %vm3144, %v3126, %v2018
  %v3192 = vsel %vm3144, %v3127, %v2020
  %v3193 = vsel %vm3144, %v3128, %v2022
  %v3194 = vsel %vm3144, %v3129, %v2024
  %v3195 = vsel %vm3144, %v3130, %v2026
  %v3196 = vsel %vm3144, %v3131, %v2028
  %v3197 = vsel %vm3144, %v3132, %v2030
  %v3198 = vsel %vm3144, %v3133, %v2032
  %v3199 = vsel %vm3144, %v3134, %v2034
  %v3200 = vsel %vm3144, %v3135, %v2036
  %v3201 = vsel %vm3144, %v3136, %v2038
  %v3202 = vsel %vm3144, %v3137, %v2040
  %v3203 = vsel %vm3144, %v3138, %v2042
  %v3204 = vsel %vm3144, %v3139, %v2044
  %v3205 = vsel %vm3144, %v3140, %v2046
  %v3206 = vsel %vm3144, %v3141, %v2048
  %v3207 = vsel %vm3144, %v3142, %v2050
  %v3208 = vsel %vm3144, %v3143, %v2052
  %vm3209 = vcmask 195584
  %v3210 = vsel %vm3209, %v3145, %v2182
  %v3211 = vsel %vm3209, %v3146, %v2184
  %v3212 = vsel %vm3209, %v3147, %v2186
  %v3213 = vsel %vm3209, %v3148, %v2188
  %v3214 = vsel %vm3209, %v3149, %v2190
  %v3215 = vsel %vm3209, %v3150, %v2192
  %v3216 = vsel %vm3209, %v3151, %v2194
  %v3217 = vsel %vm3209, %v3152, %v2196
  %v3218 = vsel %vm3209, %v3153, %v2198
  %v3219 = vsel %vm3209, %v3154, %v2200
  %v3220 = vsel %vm3209, %v3155, %v2202
  %v3221 = vsel %vm3209, %v3156, %v2204
  %v3222 = vsel %vm3209, %v3157, %v2206
  %v3223 = vsel %vm3209, %v3158, %v2208
  %v3224 = vsel %vm3209, %v3159, %v2210
  %v3225 = vsel %vm3209, %v3160, %v2212
  %v3226 = vsel %vm3209, %v3161, %v2214
  %v3227 = vsel %vm3209, %v3162, %v2216
  %v3228 = vsel %vm3209, %v3163, %v2218
  %v3229 = vsel %vm3209, %v3164, %v2220
  %v3230 = vsel %vm3209, %v3165, %v2222
  %v3231 = vsel %vm3209, %v3166, %v2224
  %v3232 = vsel %vm3209, %v3167, %v2226
  %v3233 = vsel %vm3209, %v3168, %v2228
  %v3234 = vsel %vm3209, %v3169, %v2230
  %v3235 = vsel %vm3209, %v3170, %v2232
  %v3236 = vsel %vm3209, %v3171, %v2234
  %v3237 = vsel %vm3209, %v3172, %v2236
  %v3238 = vsel %vm3209, %v3173, %v2238
  %v3239 = vsel %vm3209, %v3174, %v2240
  %v3240 = vsel %vm3209, %v3175, %v2242
  %v3241 = vsel %vm3209, %v3176, %v2244
  %v3242 = vsel %vm3209, %v3177, %v2246
  %v3243 = vsel %vm3209, %v3178, %v2248
  %v3244 = vsel %vm3209, %v3179, %v2250
  %v3245 = vsel %vm3209, %v3180, %v2252
  %v3246 = vsel %vm3209, %v3181, %v2254
  %v3247 = vsel %vm3209, %v3182, %v2256
  %v3248 = vsel %vm3209, %v3183, %v2258
  %v3249 = vsel %vm3209, %v3184, %v2260
  %v3250 = vsel %vm3209, %v3185, %v2262
  %v3251 = vsel %vm3209, %v3186, %v2264
  %v3252 = vsel %vm3209, %v3187, %v2266
  %v3253 = vsel %vm3209, %v3188, %v2268
  %v3254 = vsel %vm3209, %v3189, %v2270
  %v3255 = vsel %vm3209, %v3190, %v2272
  %v3256 = vsel %vm3209, %v3191, %v2274
  %v3257 = vsel %vm3209, %v3192, %v2276
  %v3258 = vsel %vm3209, %v3193, %v2278
  %v3259 = vsel %vm3209, %v3194, %v2280
  %v3260 = vsel %vm3209, %v3195, %v2282
  %v3261 = vsel %vm3209, %v3196, %v2284
  %v3262 = vsel %vm3209, %v3197, %v2286
  %v3263 = vsel %vm3209, %v3198, %v2288
  %v3264 = vsel %vm3209, %v3199, %v2290
  %v3265 = vsel %vm3209, %v3200, %v2292
  %v3266 = vsel %vm3209, %v3201, %v2294
  %v3267 = vsel %vm3209, %v3202, %v2296
  %v3268 = vsel %vm3209, %v3203, %v2298
  %v3269 = vsel %vm3209, %v3204, %v2300
  %v3270 = vsel %vm3209, %v3205, %v2302
  %v3271 = vsel %vm3209, %v3206, %v2304
  %v3272 = vsel %vm3209, %v3207, %v2306
  %v3273 = vsel %vm3209, %v3208, %v2308
  %vm3274 = vcmask 228352
  %v3275 = vsel %vm3274, %v3210, %v2438
  %v3276 = vsel %vm3274, %v3211, %v2440
  %v3277 = vsel %vm3274, %v3212, %v2442
  %v3278 = vsel %vm3274, %v3213, %v2444
  %v3279 = vsel %vm3274, %v3214, %v2446
  %v3280 = vsel %vm3274, %v3215, %v2448
  %v3281 = vsel %vm3274, %v3216, %v2450
  %v3282 = vsel %vm3274, %v3217, %v2452
  %v3283 = vsel %vm3274, %v3218, %v2454
  %v3284 = vsel %vm3274, %v3219, %v2456
  %v3285 = vsel %vm3274, %v3220, %v2458
  %v3286 = vsel %vm3274, %v3221, %v2460
  %v3287 = vsel %vm3274, %v3222, %v2462
  %v3288 = vsel %vm3274, %v3223, %v2464
  %v3289 = vsel %vm3274, %v3224, %v2466
  %v3290 = vsel %vm3274, %v3225, %v2468
  %v3291 = vsel %vm3274, %v3226, %v2470
  %v3292 = vsel %vm3274, %v3227, %v2472
  %v3293 = vsel %vm3274, %v3228, %v2474
  %v3294 = vsel %vm3274, %v3229, %v2476
  %v3295 = vsel %vm3274, %v3230, %v2478
  %v3296 = vsel %vm3274, %v3231, %v2480
  %v3297 = vsel %vm3274, %v3232, %v2482
  %v3298 = vsel %vm3274, %v3233, %v2484
  %v3299 = vsel %vm3274, %v3234, %v2486
  %v3300 = vsel %vm3274, %v3235, %v2488
  %v3301 = vsel %vm3274, %v3236, %v2490
  %v3302 = vsel %vm3274, %v3237, %v2492
  %v3303 = vsel %vm3274, %v3238, %v2494
  %v3304 = vsel %vm3274, %v3239, %v2496
  %v3305 = vsel %vm3274, %v3240, %v2498
  %v3306 = vsel %vm3274, %v3241, %v2500
  %v3307 = vsel %vm3274, %v3242, %v2502
  %v3308 = vsel %vm3274, %v3243, %v2504
  %v3309 = vsel %vm3274, %v3244, %v2506
  %v3310 = vsel %vm3274, %v3245, %v2508
  %v3311 = vsel %vm3274, %v3246, %v2510
  %v3312 = vsel %vm3274, %v3247, %v2512
  %v3313 = vsel %vm3274, %v3248, %v2514
  %v3314 = vsel %vm3274, %v3249, %v2516
  %v3315 = vsel %vm3274, %v3250, %v2518
  %v3316 = vsel %vm3274, %v3251, %v2520
  %v3317 = vsel %vm3274, %v3252, %v2522
  %v3318 = vsel %vm3274, %v3253, %v2524
  %v3319 = vsel %vm3274, %v3254, %v2526
  %v3320 = vsel %vm3274, %v3255, %v2528
  %v3321 = vsel %vm3274, %v3256, %v2530
  %v3322 = vsel %vm3274, %v3257, %v2532
  %v3323 = vsel %vm3274, %v3258, %v2534
  %v3324 = vsel %vm3274, %v3259, %v2536
  %v3325 = vsel %vm3274, %v3260, %v2538
  %v3326 = vsel %vm3274, %v3261, %v2540
  %v3327 = vsel %vm3274, %v3262, %v2542
  %v3328 = vsel %vm3274, %v3263, %v2544
  %v3329 = vsel %vm3274, %v3264, %v2546
  %v3330 = vsel %vm3274, %v3265, %v2548
  %v3331 = vsel %vm3274, %v3266, %v2550
  %v3332 = vsel %vm3274, %v3267, %v2552
  %v3333 = vsel %vm3274, %v3268, %v2554
  %v3334 = vsel %vm3274, %v3269, %v2556
  %v3335 = vsel %vm3274, %v3270, %v2558
  %v3336 = vsel %vm3274, %v3271, %v2560
  %v3337 = vsel %vm3274, %v3272, %v2562
  %v3338 = vsel %vm3274, %v3273, %v2564
  %vm3339 = vcmask 261120
  %v3340 = vsel %vm3339, %v3275, %v2694
  %v3341 = vsel %vm3339, %v3276, %v2696
  %v3342 = vsel %vm3339, %v3277, %v2698
  %v3343 = vsel %vm3339, %v3278, %v2700
  %v3344 = vsel %vm3339, %v3279, %v2702
  %v3345 = vsel %vm3339, %v3280, %v2704
  %v3346 = vsel %vm3339, %v3281, %v2706
  %v3347 = vsel %vm3339, %v3282, %v2708
  %v3348 = vsel %vm3339, %v3283, %v2710
  %v3349 = vsel %vm3339, %v3284, %v2712
  %v3350 = vsel %vm3339, %v3285, %v2714
  %v3351 = vsel %vm3339, %v3286, %v2716
  %v3352 = vsel %vm3339, %v3287, %v2718
  %v3353 = vsel %vm3339, %v3288, %v2720
  %v3354 = vsel %vm3339, %v3289, %v2722
  %v3355 = vsel %vm3339, %v3290, %v2724
  %v3356 = vsel %vm3339, %v3291, %v2726
  %v3357 = vsel %vm3339, %v3292, %v2728
  %v3358 = vsel %vm3339, %v3293, %v2730
  %v3359 = vsel %vm3339, %v3294, %v2732
  %v3360 = vsel %vm3339, %v3295, %v2734
  %v3361 = vsel %vm3339, %v3296, %v2736
  %v3362 = vsel %vm3339, %v3297, %v2738
  %v3363 = vsel %vm3339, %v3298, %v2740
  %v3364 = vsel %vm3339, %v3299, %v2742
  %v3365 = vsel %vm3339, %v3300, %v2744
  %v3366 = vsel %vm3339, %v3301, %v2746
  %v3367 = vsel %vm3339, %v3302, %v2748
  %v3368 = vsel %vm3339, %v3303, %v2750
  %v3369 = vsel %vm3339, %v3304, %v2752
  %v3370 = vsel %vm3339, %v3305, %v2754
  %v3371 = vsel %vm3339, %v3306, %v2756
  %v3372 = vsel %vm3339, %v3307, %v2758
  %v3373 = vsel %vm3339, %v3308, %v2760
  %v3374 = vsel %vm3339, %v3309, %v2762
  %v3375 = vsel %vm3339, %v3310, %v2764
  %v3376 = vsel %vm3339, %v3311, %v2766
  %v3377 = vsel %vm3339, %v3312, %v2768
  %v3378 = vsel %vm3339, %v3313, %v2770
  %v3379 = vsel %vm3339, %v3314, %v2772
  %v3380 = vsel %vm3339, %v3315, %v2774
  %v3381 = vsel %vm3339, %v3316, %v2776
  %v3382 = vsel %vm3339, %v3317, %v2778
  %v3383 = vsel %vm3339, %v3318, %v2780
  %v3384 = vsel %vm3339, %v3319, %v2782
  %v3385 = vsel %vm3339, %v3320, %v2784
  %v3386 = vsel %vm3339, %v3321, %v2786
  %v3387 = vsel %vm3339, %v3322, %v2788
  %v3388 = vsel %vm3339, %v3323, %v2790
  %v3389 = vsel %vm3339, %v3324, %v2792
  %v3390 = vsel %vm3339, %v3325, %v2794
  %v3391 = vsel %vm3339, %v3326, %v2796
  %v3392 = vsel %vm3339, %v3327, %v2798
  %v3393 = vsel %vm3339, %v3328, %v2800
  %v3394 = vsel %vm3339, %v3329, %v2802
  %v3395 = vsel %vm3339, %v3330, %v2804
  %v3396 = vsel %vm3339, %v3331, %v2806
  %v3397 = vsel %vm3339, %v3332, %v2808
  %v3398 = vsel %vm3339, %v3333, %v2810
  %v3399 = vsel %vm3339, %v3334, %v2812
  %v3400 = vsel %vm3339, %v3335, %v2814
  %v3401 = vsel %vm3339, %v3336, %v2816
  %v3402 = vsel %vm3339, %v3337, %v2818
  %v3403 = vsel %vm3339, %v3338, %v2820
  %v3404 = vpack.c.bf16 %v3341, %v3340
  %v3405 = vpack.c.bf16 %v3343, %v3342
  %v3406 = vpack.c.bf16 %v3345, %v3344
  %v3407 = vpack.c.bf16 %v3347, %v3346
  %v3408 = vpack.c.bf16 %v3349, %v3348
  %v3409 = vpack.c.bf16 %v3351, %v3350
  %v3410 = vpack.c.bf16 %v3353, %v3352
  %v3411 = vpack.c.bf16 %v3355, %v3354
  %v3412 = vpack.c.bf16 %v3357, %v3356
  %v3413 = vpack.c.bf16 %v3359, %v3358
  %v3414 = vpack.c.bf16 %v3361, %v3360
  %v3415 = vpack.c.bf16 %v3363, %v3362
  %v3416 = vpack.c.bf16 %v3365, %v3364
  %v3417 = vpack.c.bf16 %v3367, %v3366
  %v3418 = vpack.c.bf16 %v3369, %v3368
  %v3419 = vpack.c.bf16 %v3371, %v3370
  %v3420 = vpack.c.bf16 %v3373, %v3372
  %v3421 = vpack.c.bf16 %v3375, %v3374
  %v3422 = vpack.c.bf16 %v3377, %v3376
  %v3423 = vpack.c.bf16 %v3379, %v3378
  %v3424 = vpack.c.bf16 %v3381, %v3380
  %v3425 = vpack.c.bf16 %v3383, %v3382
  %v3426 = vpack.c.bf16 %v3385, %v3384
  %v3427 = vpack.c.bf16 %v3387, %v3386
  %v3428 = vpack.c.bf16 %v3389, %v3388
  %v3429 = vpack.c.bf16 %v3391, %v3390
  %v3430 = vpack.c.bf16 %v3393, %v3392
  %v3431 = vpack.c.bf16 %v3395, %v3394
  %v3432 = vpack.c.bf16 %v3397, %v3396
  %v3433 = vpack.c.bf16 %v3399, %v3398
  %v3434 = vpack.c.bf16 %v3401, %v3400
  %v3435 = vpack.c.bf16 %v3403, %v3402
  %v3436 = vld [vmem:[%s1] sm:$0xf]
  %v3437 = vld [vmem:[%s1 + $0x4] sm:$0xf]
  %v3438 = vld [vmem:[%s1 + $0x8] sm:$0xf]
  %v3439 = vld [vmem:[%s1 + $0xc] sm:$0xf]
  %v3440 = vld [vmem:[%s1 + $0x10] sm:$0x3]
  %v3441 = vld [vmem:[%s2] sm:$0x1]
  %v3443 = vlaneseq
  %v3444 = vshrl.u32 %v3443, 7
  %v3445 = vsub.s32 0, %v3444
  %v3446 = vrot.slane %v3441, %v3445
  %v3453 = vunpack.c.l.b16 %v3436
  %v3454 = vunpack.c.l.b16 %v3437
  %v3455 = vunpack.c.l.b16 %v3438
  %v3456 = vunpack.c.l.b16 %v3439
  %v3457 = vunpack.c.l.b16 %v3440
  %v3458 = vpack.c.b16 %v3454, %v3453
  %v3459 = vpack.c.b16 %v3456, %v3455
  %v3460 = vpack.c.b16 %v3457, %v3457
  %vm3463 = vcmask 293888
  %v3465 = vsel %vm3463, %v3404, 0
  %v3468 = vsel %vm3463, %v3405, 0
  %v3471 = vsel %vm3463, %v3406, 0
  %v3474 = vsel %vm3463, %v3407, 0
  %v3477 = vsel %vm3463, %v3408, 0
  %v3480 = vsel %vm3463, %v3409, 0
  %v3483 = vsel %vm3463, %v3410, 0
  %v3486 = vsel %vm3463, %v3411, 0
  %v3489 = vsel %vm3463, %v3412, 0
  %v3492 = vsel %vm3463, %v3413, 0
  %v3495 = vsel %vm3463, %v3414, 0
  %v3498 = vsel %vm3463, %v3415, 0
  %v3501 = vsel %vm3463, %v3416, 0
  %v3504 = vsel %vm3463, %v3417, 0
  %v3507 = vsel %vm3463, %v3418, 0
  %v3510 = vsel %vm3463, %v3419, 0
  %v3513 = vsel %vm3463, %v3420, 0
  %v3516 = vsel %vm3463, %v3421, 0
  %v3519 = vsel %vm3463, %v3422, 0
  %v3522 = vsel %vm3463, %v3423, 0
  %v3525 = vsel %vm3463, %v3424, 0
  %v3528 = vsel %vm3463, %v3425, 0
  %v3531 = vsel %vm3463, %v3426, 0
  %v3534 = vsel %vm3463, %v3427, 0
  %v3537 = vsel %vm3463, %v3428, 0
  %v3540 = vsel %vm3463, %v3429, 0
  %v3543 = vsel %vm3463, %v3430, 0
  %v3546 = vsel %vm3463, %v3431, 0
  %v3549 = vsel %vm3463, %v3432, 0
  %v3552 = vsel %vm3463, %v3433, 0
  %v3555 = vsel %vm3463, %v3434, 0
  %v3558 = vsel %vm3463, %v3435, 0
  %vm3560 = vcmask 1041408
  %v3562 = vsel %vm3560, %v3460, 0
  %3564 = vmatprep.subr.bf16.mxu0 0
  %3565 = vmatpush1.bf16.msra.mxu0 %v3458
  %3566 = vmatprep.subr.bf16.mxu0 0
  %3567 = vmatpush1.bf16.msra.mxu0 %v3459
  %3568 = vmatprep.subr.bf16.mxu0 0
  %3569 = vmatpush1.bf16.msra.mxu0 %v3562
  %3570 = vmatprep.subr.bf16.mxu0 0
  %3571 = vmatpush1.bf16.msra.mxu0 0
  %3572 = vmatprep.subr.bf16.mxu0 0
  %3573 = vmatpush1.bf16.msra.mxu0 0
  %3574 = vmatprep.subr.bf16.mxu0 0
  %3575 = vmatpush1.bf16.msra.mxu0 0
  %3576 = vmatprep.subr.bf16.mxu0 0
  %3577 = vmatpush1.bf16.msra.mxu0 0
  %3578 = vmatprep.subr.bf16.mxu0 0
  %3579 = vmatpush1.bf16.msra.mxu0 0
  %3580 = vmatprep.subr.bf16.mxu0 0
  %3581 = vmatpush1.bf16.msra.mxu0 0
  %3582 = vmatprep.subr.bf16.mxu0 0
  %3583 = vmatpush1.bf16.msra.mxu0 0
  %3584 = vmatprep.subr.bf16.mxu0 0
  %3585 = vmatpush1.bf16.msra.mxu0 0
  %3586 = vmatprep.subr.bf16.mxu0 0
  %3587 = vmatpush1.bf16.msra.mxu0 0
  %3588 = vmatprep.subr.bf16.mxu0 0
  %3589 = vmatpush1.bf16.msra.mxu0 0
  %3590 = vmatprep.subr.bf16.mxu0 0
  %3591 = vmatpush1.bf16.msra.mxu0 0
  %3592 = vmatprep.subr.bf16.mxu0 0
  %3593 = vmatpush1.bf16.msra.mxu0 0
  %3594 = vmatprep.subr.bf16.mxu0 0
  %3595 = vmatpush1.bf16.msra.mxu0 0
  %3596 = vmatprep.mubr.bf16.mxu0 0
  %3597 = vmatmul.mubr.bf16.gmra.mrb[0].mxu0 %v3465
  %v3598 = vpop.f32.mrb[0].mxu0
  %v3599 = vadd.f32 %v3446, %v3598
  %v3600 = vpop.f32.mrb[0].mxu0
  %v3601 = vpop.f32.mrb[0].mxu0
  %v3602 = vadd.f32 %v3446, %v3601
  %v3603 = vpop.f32.mrb[0].mxu0
  %3604 = vmatprep.mubr.bf16.mxu0 0
  %3605 = vmatmul.mubr.bf16.gmra.mrb[0].mxu0 %v3468
  %v3606 = vpop.f32.mrb[0].mxu0
  %v3607 = vadd.f32 %v3446, %v3606
  %v3608 = vpop.f32.mrb[0].mxu0
  %v3609 = vpop.f32.mrb[0].mxu0
  %v3610 = vadd.f32 %v3446, %v3609
  %v3611 = vpop.f32.mrb[0].mxu0
  %3612 = vmatprep.mubr.bf16.mxu0 0
  %3613 = vmatmul.mubr.bf16.gmra.mrb[0].mxu0 %v3471
  %v3614 = vpop.f32.mrb[0].mxu0
  %v3615 = vadd.f32 %v3446, %v3614
  %v3616 = vpop.f32.mrb[0].mxu0
  %v3617 = vpop.f32.mrb[0].mxu0
  %v3618 = vadd.f32 %v3446, %v3617
  %v3619 = vpop.f32.mrb[0].mxu0
  %3620 = vmatprep.mubr.bf16.mxu0 0
  %3621 = vmatmul.mubr.bf16.gmra.mrb[0].mxu0 %v3474
  %v3622 = vpop.f32.mrb[0].mxu0
  %v3623 = vadd.f32 %v3446, %v3622
  %v3624 = vpop.f32.mrb[0].mxu0
  %v3625 = vpop.f32.mrb[0].mxu0
  %v3626 = vadd.f32 %v3446, %v3625
  %v3627 = vpop.f32.mrb[0].mxu0
  %3628 = vmatprep.mubr.bf16.mxu0 0
  %3629 = vmatmul.mubr.bf16.gmra.mrb[0].mxu0 %v3477
  %v3630 = vpop.f32.mrb[0].mxu0
  %v3631 = vadd.f32 %v3446, %v3630
  %v3632 = vpop.f32.mrb[0].mxu0
  %v3633 = vpop.f32.mrb[0].mxu0
  %v3634 = vadd.f32 %v3446, %v3633
  %v3635 = vpop.f32.mrb[0].mxu0
  %3636 = vmatprep.mubr.bf16.mxu0 0
  %3637 = vmatmul.mubr.bf16.gmra.mrb[0].mxu0 %v3480
  %v3638 = vpop.f32.mrb[0].mxu0
  %v3639 = vadd.f32 %v3446, %v3638
  %v3640 = vpop.f32.mrb[0].mxu0
  %v3641 = vpop.f32.mrb[0].mxu0
  %v3642 = vadd.f32 %v3446, %v3641
  %v3643 = vpop.f32.mrb[0].mxu0
  %3644 = vmatprep.mubr.bf16.mxu0 0
  %3645 = vmatmul.mubr.bf16.gmra.mrb[0].mxu0 %v3483
  %v3646 = vpop.f32.mrb[0].mxu0
  %v3647 = vadd.f32 %v3446, %v3646
  %v3648 = vpop.f32.mrb[0].mxu0
  %v3649 = vpop.f32.mrb[0].mxu0
  %v3650 = vadd.f32 %v3446, %v3649
  %v3651 = vpop.f32.mrb[0].mxu0
  %3652 = vmatprep.mubr.bf16.mxu0 0
  %3653 = vmatmul.mubr.bf16.gmra.mrb[0].mxu0 %v3486
  %v3654 = vpop.f32.mrb[0].mxu0
  %v3655 = vadd.f32 %v3446, %v3654
  %v3656 = vpop.f32.mrb[0].mxu0
  %v3657 = vpop.f32.mrb[0].mxu0
  %v3658 = vadd.f32 %v3446, %v3657
  %v3659 = vpop.f32.mrb[0].mxu0
  %3660 = vmatprep.mubr.bf16.mxu0 0
  %3661 = vmatmul.mubr.bf16.gmra.mrb[0].mxu0 %v3489
  %v3662 = vpop.f32.mrb[0].mxu0
  %v3663 = vadd.f32 %v3446, %v3662
  %v3664 = vpop.f32.mrb[0].mxu0
  %v3665 = vpop.f32.mrb[0].mxu0
  %v3666 = vadd.f32 %v3446, %v3665
  %v3667 = vpop.f32.mrb[0].mxu0
  %3668 = vmatprep.mubr.bf16.mxu0 0
  %3669 = vmatmul.mubr.bf16.gmra.mrb[0].mxu0 %v3492
  %v3670 = vpop.f32.mrb[0].mxu0
  %v3671 = vadd.f32 %v3446, %v3670
  %v3672 = vpop.f32.mrb[0].mxu0
  %v3673 = vpop.f32.mrb[0].mxu0
  %v3674 = vadd.f32 %v3446, %v3673
  %v3675 = vpop.f32.mrb[0].mxu0
  %3676 = vmatprep.mubr.bf16.mxu0 0
  %3677 = vmatmul.mubr.bf16.gmra.mrb[0].mxu0 %v3495
  %v3678 = vpop.f32.mrb[0].mxu0
  %v3679 = vadd.f32 %v3446, %v3678
  %v3680 = vpop.f32.mrb[0].mxu0
  %v3681 = vpop.f32.mrb[0].mxu0
  %v3682 = vadd.f32 %v3446, %v3681
  %v3683 = vpop.f32.mrb[0].mxu0
  %3684 = vmatprep.mubr.bf16.mxu0 0
  %3685 = vmatmul.mubr.bf16.gmra.mrb[0].mxu0 %v3498
  %v3686 = vpop.f32.mrb[0].mxu0
  %v3687 = vadd.f32 %v3446, %v3686
  %v3688 = vpop.f32.mrb[0].mxu0
  %v3689 = vpop.f32.mrb[0].mxu0
  %v3690 = vadd.f32 %v3446, %v3689
  %v3691 = vpop.f32.mrb[0].mxu0
  %3692 = vmatprep.mubr.bf16.mxu0 0
  %3693 = vmatmul.mubr.bf16.gmra.mrb[0].mxu0 %v3501
  %v3694 = vpop.f32.mrb[0].mxu0
  %v3695 = vadd.f32 %v3446, %v3694
  %v3696 = vpop.f32.mrb[0].mxu0
  %v3697 = vpop.f32.mrb[0].mxu0
  %v3698 = vadd.f32 %v3446, %v3697
  %v3699 = vpop.f32.mrb[0].mxu0
  %3700 = vmatprep.mubr.bf16.mxu0 0
  %3701 = vmatmul.mubr.bf16.gmra.mrb[0].mxu0 %v3504
  %v3702 = vpop.f32.mrb[0].mxu0
  %v3703 = vadd.f32 %v3446, %v3702
  %v3704 = vpop.f32.mrb[0].mxu0
  %v3705 = vpop.f32.mrb[0].mxu0
  %v3706 = vadd.f32 %v3446, %v3705
  %v3707 = vpop.f32.mrb[0].mxu0
  %3708 = vmatprep.mubr.bf16.mxu0 0
  %3709 = vmatmul.mubr.bf16.gmra.mrb[0].mxu0 %v3507
  %v3710 = vpop.f32.mrb[0].mxu0
  %v3711 = vadd.f32 %v3446, %v3710
  %v3712 = vpop.f32.mrb[0].mxu0
  %v3713 = vpop.f32.mrb[0].mxu0
  %v3714 = vadd.f32 %v3446, %v3713
  %v3715 = vpop.f32.mrb[0].mxu0
  %3716 = vmatprep.mubr.bf16.mxu0 0
  %3717 = vmatmul.mubr.bf16.gmra.mrb[0].mxu0 %v3510
  %v3718 = vpop.f32.mrb[0].mxu0
  %v3719 = vadd.f32 %v3446, %v3718
  %v3720 = vpop.f32.mrb[0].mxu0
  %v3721 = vpop.f32.mrb[0].mxu0
  %v3722 = vadd.f32 %v3446, %v3721
  %v3723 = vpop.f32.mrb[0].mxu0
  %3724 = vmatprep.mubr.bf16.mxu0 0
  %3725 = vmatmul.mubr.bf16.gmra.mrb[0].mxu0 %v3513
  %v3726 = vpop.f32.mrb[0].mxu0
  %v3727 = vadd.f32 %v3446, %v3726
  %v3728 = vpop.f32.mrb[0].mxu0
  %v3729 = vpop.f32.mrb[0].mxu0
  %v3730 = vadd.f32 %v3446, %v3729
  %v3731 = vpop.f32.mrb[0].mxu0
  %3732 = vmatprep.mubr.bf16.mxu0 0
  %3733 = vmatmul.mubr.bf16.gmra.mrb[0].mxu0 %v3516
  %v3734 = vpop.f32.mrb[0].mxu0
  %v3735 = vadd.f32 %v3446, %v3734
  %v3736 = vpop.f32.mrb[0].mxu0
  %v3737 = vpop.f32.mrb[0].mxu0
  %v3738 = vadd.f32 %v3446, %v3737
  %v3739 = vpop.f32.mrb[0].mxu0
  %3740 = vmatprep.mubr.bf16.mxu0 0
  %3741 = vmatmul.mubr.bf16.gmra.mrb[0].mxu0 %v3519
  %v3742 = vpop.f32.mrb[0].mxu0
  %v3743 = vadd.f32 %v3446, %v3742
  %v3744 = vpop.f32.mrb[0].mxu0
  %v3745 = vpop.f32.mrb[0].mxu0
  %v3746 = vadd.f32 %v3446, %v3745
  %v3747 = vpop.f32.mrb[0].mxu0
  %3748 = vmatprep.mubr.bf16.mxu0 0
  %3749 = vmatmul.mubr.bf16.gmra.mrb[0].mxu0 %v3522
  %v3750 = vpop.f32.mrb[0].mxu0
  %v3751 = vadd.f32 %v3446, %v3750
  %v3752 = vpop.f32.mrb[0].mxu0
  %v3753 = vpop.f32.mrb[0].mxu0
  %v3754 = vadd.f32 %v3446, %v3753
  %v3755 = vpop.f32.mrb[0].mxu0
  %3756 = vmatprep.mubr.bf16.mxu0 0
  %3757 = vmatmul.mubr.bf16.gmra.mrb[0].mxu0 %v3525
  %v3758 = vpop.f32.mrb[0].mxu0
  %v3759 = vadd.f32 %v3446, %v3758
  %v3760 = vpop.f32.mrb[0].mxu0
  %v3761 = vpop.f32.mrb[0].mxu0
  %v3762 = vadd.f32 %v3446, %v3761
  %v3763 = vpop.f32.mrb[0].mxu0
  %3764 = vmatprep.mubr.bf16.mxu0 0
  %3765 = vmatmul.mubr.bf16.gmra.mrb[0].mxu0 %v3528
  %v3766 = vpop.f32.mrb[0].mxu0
  %v3767 = vadd.f32 %v3446, %v3766
  %v3768 = vpop.f32.mrb[0].mxu0
  %v3769 = vpop.f32.mrb[0].mxu0
  %v3770 = vadd.f32 %v3446, %v3769
  %v3771 = vpop.f32.mrb[0].mxu0
  %3772 = vmatprep.mubr.bf16.mxu0 0
  %3773 = vmatmul.mubr.bf16.gmra.mrb[0].mxu0 %v3531
  %v3774 = vpop.f32.mrb[0].mxu0
  %v3775 = vadd.f32 %v3446, %v3774
  %v3776 = vpop.f32.mrb[0].mxu0
  %v3777 = vpop.f32.mrb[0].mxu0
  %v3778 = vadd.f32 %v3446, %v3777
  %v3779 = vpop.f32.mrb[0].mxu0
  %3780 = vmatprep.mubr.bf16.mxu0 0
  %3781 = vmatmul.mubr.bf16.gmra.mrb[0].mxu0 %v3534
  %v3782 = vpop.f32.mrb[0].mxu0
  %v3783 = vadd.f32 %v3446, %v3782
  %v3784 = vpop.f32.mrb[0].mxu0
  %v3785 = vpop.f32.mrb[0].mxu0
  %v3786 = vadd.f32 %v3446, %v3785
  %v3787 = vpop.f32.mrb[0].mxu0
  %3788 = vmatprep.mubr.bf16.mxu0 0
  %3789 = vmatmul.mubr.bf16.gmra.mrb[0].mxu0 %v3537
  %v3790 = vpop.f32.mrb[0].mxu0
  %v3791 = vadd.f32 %v3446, %v3790
  %v3792 = vpop.f32.mrb[0].mxu0
  %v3793 = vpop.f32.mrb[0].mxu0
  %v3794 = vadd.f32 %v3446, %v3793
  %v3795 = vpop.f32.mrb[0].mxu0
  %3796 = vmatprep.mubr.bf16.mxu0 0
  %3797 = vmatmul.mubr.bf16.gmra.mrb[0].mxu0 %v3540
  %v3798 = vpop.f32.mrb[0].mxu0
  %v3799 = vadd.f32 %v3446, %v3798
  %v3800 = vpop.f32.mrb[0].mxu0
  %v3801 = vpop.f32.mrb[0].mxu0
  %v3802 = vadd.f32 %v3446, %v3801
  %v3803 = vpop.f32.mrb[0].mxu0
  %3804 = vmatprep.mubr.bf16.mxu0 0
  %3805 = vmatmul.mubr.bf16.gmra.mrb[0].mxu0 %v3543
  %v3806 = vpop.f32.mrb[0].mxu0
  %v3807 = vadd.f32 %v3446, %v3806
  %v3808 = vpop.f32.mrb[0].mxu0
  %v3809 = vpop.f32.mrb[0].mxu0
  %v3810 = vadd.f32 %v3446, %v3809
  %v3811 = vpop.f32.mrb[0].mxu0
  %3812 = vmatprep.mubr.bf16.mxu0 0
  %3813 = vmatmul.mubr.bf16.gmra.mrb[0].mxu0 %v3546
  %v3814 = vpop.f32.mrb[0].mxu0
  %v3815 = vadd.f32 %v3446, %v3814
  %v3816 = vpop.f32.mrb[0].mxu0
  %v3817 = vpop.f32.mrb[0].mxu0
  %v3818 = vadd.f32 %v3446, %v3817
  %v3819 = vpop.f32.mrb[0].mxu0
  %3820 = vmatprep.mubr.bf16.mxu0 0
  %3821 = vmatmul.mubr.bf16.gmra.mrb[0].mxu0 %v3549
  %v3822 = vpop.f32.mrb[0].mxu0
  %v3823 = vadd.f32 %v3446, %v3822
  %v3824 = vpop.f32.mrb[0].mxu0
  %v3825 = vpop.f32.mrb[0].mxu0
  %v3826 = vadd.f32 %v3446, %v3825
  %v3827 = vpop.f32.mrb[0].mxu0
  %3828 = vmatprep.mubr.bf16.mxu0 0
  %3829 = vmatmul.mubr.bf16.gmra.mrb[0].mxu0 %v3552
  %v3830 = vpop.f32.mrb[0].mxu0
  %v3831 = vadd.f32 %v3446, %v3830
  %v3832 = vpop.f32.mrb[0].mxu0
  %v3833 = vpop.f32.mrb[0].mxu0
  %v3834 = vadd.f32 %v3446, %v3833
  %v3835 = vpop.f32.mrb[0].mxu0
  %3836 = vmatprep.mubr.bf16.mxu0 0
  %3837 = vmatmul.mubr.bf16.gmra.mrb[0].mxu0 %v3555
  %v3838 = vpop.f32.mrb[0].mxu0
  %v3839 = vadd.f32 %v3446, %v3838
  %v3840 = vpop.f32.mrb[0].mxu0
  %v3841 = vpop.f32.mrb[0].mxu0
  %v3842 = vadd.f32 %v3446, %v3841
  %v3843 = vpop.f32.mrb[0].mxu0
  %3844 = vmatprep.mubr.bf16.mxu0 0
  %3845 = vmatmul.mubr.bf16.gmra.mrb[0].mxu0 %v3558
  %v3846 = vpop.f32.mrb[0].mxu0
  %v3847 = vadd.f32 %v3446, %v3846
  %v3848 = vpop.f32.mrb[0].mxu0
  %v3849 = vpop.f32.mrb[0].mxu0
  %v3850 = vadd.f32 %v3446, %v3849
  %v3851 = vpop.f32.mrb[0].mxu0
  %3852 = vdwg.mxu0
  %v3853 = vmax.f32 %v3599, 0.0
  %v3854 = vmax.f32 %v3602, 0.0
  %v3855 = vmax.f32 %v3607, 0.0
  %v3856 = vmax.f32 %v3610, 0.0
  %v3857 = vmax.f32 %v3615, 0.0
  %v3858 = vmax.f32 %v3618, 0.0
  %v3859 = vmax.f32 %v3623, 0.0
  %v3860 = vmax.f32 %v3626, 0.0
  %v3861 = vmax.f32 %v3631, 0.0
  %v3862 = vmax.f32 %v3634, 0.0
  %v3863 = vmax.f32 %v3639, 0.0
  %v3864 = vmax.f32 %v3642, 0.0
  %v3865 = vmax.f32 %v3647, 0.0
  %v3866 = vmax.f32 %v3650, 0.0
  %v3867 = vmax.f32 %v3655, 0.0
  %v3868 = vmax.f32 %v3658, 0.0
  %v3869 = vmax.f32 %v3663, 0.0
  %v3870 = vmax.f32 %v3666, 0.0
  %v3871 = vmax.f32 %v3671, 0.0
  %v3872 = vmax.f32 %v3674, 0.0
  %v3873 = vmax.f32 %v3679, 0.0
  %v3874 = vmax.f32 %v3682, 0.0
  %v3875 = vmax.f32 %v3687, 0.0
  %v3876 = vmax.f32 %v3690, 0.0
  %v3877 = vmax.f32 %v3695, 0.0
  %v3878 = vmax.f32 %v3698, 0.0
  %v3879 = vmax.f32 %v3703, 0.0
  %v3880 = vmax.f32 %v3706, 0.0
  %v3881 = vmax.f32 %v3711, 0.0
  %v3882 = vmax.f32 %v3714, 0.0
  %v3883 = vmax.f32 %v3719, 0.0
  %v3884 = vmax.f32 %v3722, 0.0
  %v3885 = vmax.f32 %v3727, 0.0
  %v3886 = vmax.f32 %v3730, 0.0
  %v3887 = vmax.f32 %v3735, 0.0
  %v3888 = vmax.f32 %v3738, 0.0
  %v3889 = vmax.f32 %v3743, 0.0
  %v3890 = vmax.f32 %v3746, 0.0
  %v3891 = vmax.f32 %v3751, 0.0
  %v3892 = vmax.f32 %v3754, 0.0
  %v3893 = vmax.f32 %v3759, 0.0
  %v3894 = vmax.f32 %v3762, 0.0
  %v3895 = vmax.f32 %v3767, 0.0
  %v3896 = vmax.f32 %v3770, 0.0
  %v3897 = vmax.f32 %v3775, 0.0
  %v3898 = vmax.f32 %v3778, 0.0
  %v3899 = vmax.f32 %v3783, 0.0
  %v3900 = vmax.f32 %v3786, 0.0
  %v3901 = vmax.f32 %v3791, 0.0
  %v3902 = vmax.f32 %v3794, 0.0
  %v3903 = vmax.f32 %v3799, 0.0
  %v3904 = vmax.f32 %v3802, 0.0
  %v3905 = vmax.f32 %v3807, 0.0
  %v3906 = vmax.f32 %v3810, 0.0
  %v3907 = vmax.f32 %v3815, 0.0
  %v3908 = vmax.f32 %v3818, 0.0
  %v3909 = vmax.f32 %v3823, 0.0
  %v3910 = vmax.f32 %v3826, 0.0
  %v3911 = vmax.f32 %v3831, 0.0
  %v3912 = vmax.f32 %v3834, 0.0
  %v3913 = vmax.f32 %v3839, 0.0
  %v3914 = vmax.f32 %v3842, 0.0
  %v3915 = vmax.f32 %v3847, 0.0
  %v3916 = vmax.f32 %v3850, 0.0
  %3917 = vst.msk [vmem:[#allocation3] sm:$0xff] %vm2949, 0.0
  %3918 = vst.msk [vmem:[#allocation3 + $0x8] sm:$0xff] %vm2949, 0.0
  %vm3919 = vcmask 58368
  %3920 = vst.msk [vmem:[#allocation3 + $0x10] sm:$0x3] %vm3919, 0.0
  %3921 = vst.msk [vmem:[#allocation3 + $0x18] sm:$0xff] %vm2949, 0.0
  %3922 = vst.msk [vmem:[#allocation3 + $0x20] sm:$0xff] %vm2949, 0.0
  %3923 = vst.msk [vmem:[#allocation3 + $0x28] sm:$0x3] %vm3919, 0.0
  %3924 = vst.msk [vmem:[#allocation3 + $0x30] sm:$0xff] %vm2949, 0.0
  %3925 = vst.msk [vmem:[#allocation3 + $0x38] sm:$0xff] %vm2949, 0.0
  %3926 = vst.msk [vmem:[#allocation3 + $0x40] sm:$0x3] %vm3919, 0.0
  %3927 = vst.msk [vmem:[#allocation3 + $0x48] sm:$0xff] %vm2949, 0.0
  %3928 = vst.msk [vmem:[#allocation3 + $0x50] sm:$0xff] %vm2949, 0.0
  %3929 = vst.msk [vmem:[#allocation3 + $0x58] sm:$0x3] %vm3919, 0.0
  %3930 = vst.msk [vmem:[#allocation3 + $0x60] sm:$0xff] %vm2949, 0.0
  %3931 = vst.msk [vmem:[#allocation3 + $0x68] sm:$0xff] %vm2949, 0.0
  %3932 = vst.msk [vmem:[#allocation3 + $0x70] sm:$0x3] %vm3919, 0.0
  %3933 = vst.msk [vmem:[#allocation3 + $0x78] sm:$0xff] %vm2949, 0.0
  %3934 = vst.msk [vmem:[#allocation3 + $0x80] sm:$0xff] %vm2949, 0.0
  %3935 = vst.msk [vmem:[#allocation3 + $0x88] sm:$0x3] %vm3919, 0.0
  %3936 = vst.msk [vmem:[#allocation3 + $0x90] sm:$0xff] %vm2949, 0.0
  %3937 = vst.msk [vmem:[#allocation3 + $0x98] sm:$0xff] %vm2949, 0.0
  %3938 = vst.msk [vmem:[#allocation3 + $0xa0] sm:$0x3] %vm3919, 0.0
  %3939 = vst.msk [vmem:[#allocation3 + $0xa8] sm:$0xff] %vm2949, 0.0
  %3940 = vst.msk [vmem:[#allocation3 + $0xb0] sm:$0xff] %vm2949, 0.0
  %3941 = vst.msk [vmem:[#allocation3 + $0xb8] sm:$0x3] %vm3919, 0.0
  %3942 = vst.msk [vmem:[#allocation3 + $0xc0] sm:$0xff] %vm2949, 0.0
  %3943 = vst.msk [vmem:[#allocation3 + $0xc8] sm:$0xff] %vm2949, 0.0
  %3944 = vst.msk [vmem:[#allocation3 + $0xd0] sm:$0x3] %vm3919, 0.0
  %3945 = vst.msk [vmem:[#allocation3 + $0xd8] sm:$0xff] %vm2949, 0.0
  %3946 = vst.msk [vmem:[#allocation3 + $0xe0] sm:$0xff] %vm2949, 0.0
  %3947 = vst.msk [vmem:[#allocation3 + $0xe8] sm:$0x3] %vm3919, 0.0
  %3948 = vst.msk [vmem:[#allocation3 + $0xf0] sm:$0xff] %vm2949, 0.0
  %3949 = vst.msk [vmem:[#allocation3 + $0xf8] sm:$0xff] %vm2949, 0.0
  %3950 = vst.msk [vmem:[#allocation3 + $0x100] sm:$0x3] %vm3919, 0.0
  %3951 = vst.msk [vmem:[#allocation3 + $0x108] sm:$0xff] %vm2949, 0.0
  %3952 = vst.msk [vmem:[#allocation3 + $0x110] sm:$0xff] %vm2949, 0.0
  %3953 = vst.msk [vmem:[#allocation3 + $0x118] sm:$0x3] %vm3919, 0.0
  %3954 = vst.msk [vmem:[#allocation3 + $0x120] sm:$0xff] %vm2949, 0.0
  %3955 = vst.msk [vmem:[#allocation3 + $0x128] sm:$0xff] %vm2949, 0.0
  %3956 = vst.msk [vmem:[#allocation3 + $0x130] sm:$0x3] %vm3919, 0.0
  %3957 = vst.msk [vmem:[#allocation3 + $0x138] sm:$0xff] %vm2949, 0.0
  %3958 = vst.msk [vmem:[#allocation3 + $0x140] sm:$0xff] %vm2949, 0.0
  %3959 = vst.msk [vmem:[#allocation3 + $0x148] sm:$0x3] %vm3919, 0.0
  %3960 = vst.msk [vmem:[#allocation3 + $0x150] sm:$0xff] %vm2949, 0.0
  %3961 = vst.msk [vmem:[#allocation3 + $0x158] sm:$0xff] %vm2949, 0.0
  %3962 = vst.msk [vmem:[#allocation3 + $0x160] sm:$0x3] %vm3919, 0.0
  %3963 = vst.msk [vmem:[#allocation3 + $0x168] sm:$0xff] %vm2949, 0.0
  %3964 = vst.msk [vmem:[#allocation3 + $0x170] sm:$0xff] %vm2949, 0.0
  %3965 = vst.msk [vmem:[#allocation3 + $0x178] sm:$0x3] %vm3919, 0.0
  %3966 = vst.msk [vmem:[#allocation3 + $0x180] sm:$0xff] %vm2949, 0.0
  %3967 = vst.msk [vmem:[#allocation3 + $0x188] sm:$0xff] %vm2949, 0.0
  %3968 = vst.msk [vmem:[#allocation3 + $0x190] sm:$0x3] %vm3919, 0.0
  %3969 = vst.msk [vmem:[#allocation3 + $0x198] sm:$0xff] %vm2949, 0.0
  %3970 = vst.msk [vmem:[#allocation3 + $0x1a0] sm:$0xff] %vm2949, 0.0
  %3971 = vst.msk [vmem:[#allocation3 + $0x1a8] sm:$0x3] %vm3919, 0.0
  %3972 = vst.msk [vmem:[#allocation3 + $0x1b0] sm:$0xff] %vm2949, 0.0
  %3973 = vst.msk [vmem:[#allocation3 + $0x1b8] sm:$0xff] %vm2949, 0.0
  %3974 = vst.msk [vmem:[#allocation3 + $0x1c0] sm:$0x3] %vm3919, 0.0
  %3975 = vst.msk [vmem:[#allocation3 + $0x1c8] sm:$0xff] %vm2949, 0.0
  %3976 = vst.msk [vmem:[#allocation3 + $0x1d0] sm:$0xff] %vm2949, 0.0
  %3977 = vst.msk [vmem:[#allocation3 + $0x1d8] sm:$0x3] %vm3919, 0.0
  %3978 = vst.msk [vmem:[#allocation3 + $0x1e0] sm:$0xff] %vm2949, 0.0
  %3979 = vst.msk [vmem:[#allocation3 + $0x1e8] sm:$0xff] %vm2949, 0.0
  %3980 = vst.msk [vmem:[#allocation3 + $0x1f0] sm:$0x3] %vm3919, 0.0
  %3981 = vst.msk [vmem:[#allocation3 + $0x1f8] sm:$0xff] %vm2949, 0.0
  %3982 = vst.msk [vmem:[#allocation3 + $0x200] sm:$0xff] %vm2949, 0.0
  %3983 = vst.msk [vmem:[#allocation3 + $0x208] sm:$0x3] %vm3919, 0.0
  %3984 = vst.msk [vmem:[#allocation3 + $0x210] sm:$0xff] %vm2949, 0.0
  %3985 = vst.msk [vmem:[#allocation3 + $0x218] sm:$0xff] %vm2949, 0.0
  %3986 = vst.msk [vmem:[#allocation3 + $0x220] sm:$0x3] %vm3919, 0.0
  %3987 = vst.msk [vmem:[#allocation3 + $0x228] sm:$0xff] %vm2949, 0.0
  %3988 = vst.msk [vmem:[#allocation3 + $0x230] sm:$0xff] %vm2949, 0.0
  %3989 = vst.msk [vmem:[#allocation3 + $0x238] sm:$0x3] %vm3919, 0.0
  %3990 = vst.msk [vmem:[#allocation3 + $0x240] sm:$0xff] %vm2949, 0.0
  %3991 = vst.msk [vmem:[#allocation3 + $0x248] sm:$0xff] %vm2949, 0.0
  %3992 = vst.msk [vmem:[#allocation3 + $0x250] sm:$0x3] %vm3919, 0.0
  %3993 = vst.msk [vmem:[#allocation3 + $0x258] sm:$0xff] %vm2949, 0.0
  %3994 = vst.msk [vmem:[#allocation3 + $0x260] sm:$0xff] %vm2949, 0.0
  %3995 = vst.msk [vmem:[#allocation3 + $0x268] sm:$0x3] %vm3919, 0.0
  %3996 = vst.msk [vmem:[#allocation3 + $0x270] sm:$0xff] %vm2949, 0.0
  %3997 = vst.msk [vmem:[#allocation3 + $0x278] sm:$0xff] %vm2949, 0.0
  %3998 = vst.msk [vmem:[#allocation3 + $0x280] sm:$0x3] %vm3919, 0.0
  %3999 = vst.msk [vmem:[#allocation3 + $0x288] sm:$0xff] %vm2949, 0.0
  %4000 = vst.msk [vmem:[#allocation3 + $0x290] sm:$0xff] %vm2949, 0.0
  %4001 = vst.msk [vmem:[#allocation3 + $0x298] sm:$0x3] %vm3919, 0.0
  %4002 = vst.msk [vmem:[#allocation3 + $0x2a0] sm:$0xff] %vm2949, 0.0
  %4003 = vst.msk [vmem:[#allocation3 + $0x2a8] sm:$0xff] %vm2949, 0.0
  %4004 = vst.msk [vmem:[#allocation3 + $0x2b0] sm:$0x3] %vm3919, 0.0
  %4005 = vst.msk [vmem:[#allocation3 + $0x2b8] sm:$0xff] %vm2949, 0.0
  %4006 = vst.msk [vmem:[#allocation3 + $0x2c0] sm:$0xff] %vm2949, 0.0
  %4007 = vst.msk [vmem:[#allocation3 + $0x2c8] sm:$0x3] %vm3919, 0.0
  %4008 = vst.msk [vmem:[#allocation3 + $0x2d0] sm:$0xff] %vm2949, 0.0
  %4009 = vst.msk [vmem:[#allocation3 + $0x2d8] sm:$0xff] %vm2949, 0.0
  %4010 = vst.msk [vmem:[#allocation3 + $0x2e0] sm:$0x3] %vm3919, 0.0
  %4011 = vst.msk [vmem:[#allocation3 + $0x2e8] sm:$0xff] %vm2949, 0.0
  %4012 = vst.msk [vmem:[#allocation3 + $0x2f0] sm:$0xff] %vm2949, 0.0
  %4013 = vst.msk [vmem:[#allocation3 + $0x2f8] sm:$0x3] %vm3919, 0.0
  %4014 = vst.msk [vmem:[#allocation3 + $0x300] sm:$0xff] %vm2949, 0.0
  %4015 = vst.msk [vmem:[#allocation3 + $0x308] sm:$0xff] %vm2949, 0.0
  %4016 = vst.msk [vmem:[#allocation3 + $0x310] sm:$0x3] %vm3919, 0.0
  %4017 = vst.msk [vmem:[#allocation3 + $0x318] sm:$0xff] %vm2949, 0.0
  %4018 = vst.msk [vmem:[#allocation3 + $0x320] sm:$0xff] %vm2949, 0.0
  %4019 = vst.msk [vmem:[#allocation3 + $0x328] sm:$0x3] %vm3919, 0.0
  %4020 = vst.msk [vmem:[#allocation3 + $0x330] sm:$0xff] %vm2949, 0.0
  %4021 = vst.msk [vmem:[#allocation3 + $0x338] sm:$0xff] %vm2949, 0.0
  %4022 = vst.msk [vmem:[#allocation3 + $0x340] sm:$0x3] %vm3919, 0.0
  %4023 = vst.msk [vmem:[#allocation3 + $0x348] sm:$0xff] %vm2949, 0.0
  %4024 = vst.msk [vmem:[#allocation3 + $0x350] sm:$0xff] %vm2949, 0.0
  %4025 = vst.msk [vmem:[#allocation3 + $0x358] sm:$0x3] %vm3919, 0.0
  %s4026 = scalar_lea.vmem [#allocation3], 24
  %4027 = vst.msk [vmem:[%s4026 + $0x1] sm:$0xff] %vm2949, %v3853
  %4028 = vst.msk [vmem:[%s4026 + $0x9] sm:$0xff] %vm2949, %v3854
  %4029 = vst.msk [vmem:[%s4026 + $0x19] sm:$0xff] %vm2949, %v3855
  %4030 = vst.msk [vmem:[%s4026 + $0x21] sm:$0xff] %vm2949, %v3856
  %4031 = vst.msk [vmem:[%s4026 + $0x31] sm:$0xff] %vm2949, %v3857
  %4032 = vst.msk [vmem:[%s4026 + $0x39] sm:$0xff] %vm2949, %v3858
  %4033 = vst.msk [vmem:[%s4026 + $0x49] sm:$0xff] %vm2949, %v3859
  %4034 = vst.msk [vmem:[%s4026 + $0x51] sm:$0xff] %vm2949, %v3860
  %4035 = vst.msk [vmem:[%s4026 + $0x61] sm:$0xff] %vm2949, %v3861
  %4036 = vst.msk [vmem:[%s4026 + $0x69] sm:$0xff] %vm2949, %v3862
  %4037 = vst.msk [vmem:[%s4026 + $0x79] sm:$0xff] %vm2949, %v3863
  %4038 = vst.msk [vmem:[%s4026 + $0x81] sm:$0xff] %vm2949, %v3864
  %4039 = vst.msk [vmem:[%s4026 + $0x91] sm:$0xff] %vm2949, %v3865
  %4040 = vst.msk [vmem:[%s4026 + $0x99] sm:$0xff] %vm2949, %v3866
  %4041 = vst.msk [vmem:[%s4026 + $0xa9] sm:$0xff] %vm2949, %v3867
  %4042 = vst.msk [vmem:[%s4026 + $0xb1] sm:$0xff] %vm2949, %v3868
  %4043 = vst.msk [vmem:[%s4026 + $0xc1] sm:$0xff] %vm2949, %v3869
  %4044 = vst.msk [vmem:[%s4026 + $0xc9] sm:$0xff] %vm2949, %v3870
  %4045 = vst.msk [vmem:[%s4026 + $0xd9] sm:$0xff] %vm2949, %v3871
  %4046 = vst.msk [vmem:[%s4026 + $0xe1] sm:$0xff] %vm2949, %v3872
  %4047 = vst.msk [vmem:[%s4026 + $0xf1] sm:$0xff] %vm2949, %v3873
  %4048 = vst.msk [vmem:[%s4026 + $0xf9] sm:$0xff] %vm2949, %v3874
  %4049 = vst.msk [vmem:[%s4026 + $0x109] sm:$0xff] %vm2949, %v3875
  %4050 = vst.msk [vmem:[%s4026 + $0x111] sm:$0xff] %vm2949, %v3876
  %4051 = vst.msk [vmem:[%s4026 + $0x121] sm:$0xff] %vm2949, %v3877
  %4052 = vst.msk [vmem:[%s4026 + $0x129] sm:$0xff] %vm2949, %v3878
  %4053 = vst.msk [vmem:[%s4026 + $0x139] sm:$0xff] %vm2949, %v3879
  %4054 = vst.msk [vmem:[%s4026 + $0x141] sm:$0xff] %vm2949, %v3880
  %4055 = vst.msk [vmem:[%s4026 + $0x151] sm:$0xff] %vm2949, %v3881
  %4056 = vst.msk [vmem:[%s4026 + $0x159] sm:$0xff] %vm2949, %v3882
  %4057 = vst.msk [vmem:[%s4026 + $0x169] sm:$0xff] %vm2949, %v3883
  %4058 = vst.msk [vmem:[%s4026 + $0x171] sm:$0xff] %vm2949, %v3884
  %4059 = vst.msk [vmem:[%s4026 + $0x1b1] sm:$0xff] %vm2949, %v3885
  %4060 = vst.msk [vmem:[%s4026 + $0x1b9] sm:$0xff] %vm2949, %v3886
  %4061 = vst.msk [vmem:[%s4026 + $0x1c9] sm:$0xff] %vm2949, %v3887
  %4062 = vst.msk [vmem:[%s4026 + $0x1d1] sm:$0xff] %vm2949, %v3888
  %4063 = vst.msk [vmem:[%s4026 + $0x1e1] sm:$0xff] %vm2949, %v3889
  %4064 = vst.msk [vmem:[%s4026 + $0x1e9] sm:$0xff] %vm2949, %v3890
  %4065 = vst.msk [vmem:[%s4026 + $0x1f9] sm:$0xff] %vm2949, %v3891
  %4066 = vst.msk [vmem:[%s4026 + $0x201] sm:$0xff] %vm2949, %v3892
  %4067 = vst.msk [vmem:[%s4026 + $0x211] sm:$0xff] %vm2949, %v3893
  %4068 = vst.msk [vmem:[%s4026 + $0x219] sm:$0xff] %vm2949, %v3894
  %4069 = vst.msk [vmem:[%s4026 + $0x229] sm:$0xff] %vm2949, %v3895
  %4070 = vst.msk [vmem:[%s4026 + $0x231] sm:$0xff] %vm2949, %v3896
  %4071 = vst.msk [vmem:[%s4026 + $0x241] sm:$0xff] %vm2949, %v3897
  %4072 = vst.msk [vmem:[%s4026 + $0x249] sm:$0xff] %vm2949, %v3898
  %4073 = vst.msk [vmem:[%s4026 + $0x259] sm:$0xff] %vm2949, %v3899
  %4074 = vst.msk [vmem:[%s4026 + $0x261] sm:$0xff] %vm2949, %v3900
  %4075 = vst.msk [vmem:[%s4026 + $0x271] sm:$0xff] %vm2949, %v3901
  %4076 = vst.msk [vmem:[%s4026 + $0x279] sm:$0xff] %vm2949, %v3902
  %4077 = vst.msk [vmem:[%s4026 + $0x289] sm:$0xff] %vm2949, %v3903
  %4078 = vst.msk [vmem:[%s4026 + $0x291] sm:$0xff] %vm2949, %v3904
  %4079 = vst.msk [vmem:[%s4026 + $0x2a1] sm:$0xff] %vm2949, %v3905
  %4080 = vst.msk [vmem:[%s4026 + $0x2a9] sm:$0xff] %vm2949, %v3906
  %4081 = vst.msk [vmem:[%s4026 + $0x2b9] sm:$0xff] %vm2949, %v3907
  %4082 = vst.msk [vmem:[%s4026 + $0x2c1] sm:$0xff] %vm2949, %v3908
  %4083 = vst.msk [vmem:[%s4026 + $0x2d1] sm:$0xff] %vm2949, %v3909
  %4084 = vst.msk [vmem:[%s4026 + $0x2d9] sm:$0xff] %vm2949, %v3910
  %4085 = vst.msk [vmem:[%s4026 + $0x2e9] sm:$0xff] %vm2949, %v3911
  %4086 = vst.msk [vmem:[%s4026 + $0x2f1] sm:$0xff] %vm2949, %v3912
  %4087 = vst.msk [vmem:[%s4026 + $0x301] sm:$0xff] %vm2949, %v3913
  %4088 = vst.msk [vmem:[%s4026 + $0x309] sm:$0xff] %vm2949, %v3914
  %4089 = vst.msk [vmem:[%s4026 + $0x319] sm:$0xff] %vm2949, %v3915
  %4090 = vst.msk [vmem:[%s4026 + $0x321] sm:$0xff] %vm2949, %v3916
  %v4091 = vld [vmem:[#allocation3] sm:$0xff]
  %v4092 = vld [vmem:[#allocation3 + $0x8] sm:$0xff]
  %v4093 = vld [vmem:[#allocation3 + $0x18] sm:$0xff]
  %v4094 = vld [vmem:[#allocation3 + $0x20] sm:$0xff]
  %v4095 = vld [vmem:[#allocation3 + $0x30] sm:$0xff]
  %v4096 = vld [vmem:[#allocation3 + $0x38] sm:$0xff]
  %v4097 = vld [vmem:[#allocation3 + $0x48] sm:$0xff]
  %v4098 = vld [vmem:[#allocation3 + $0x50] sm:$0xff]
  %v4099 = vld [vmem:[#allocation3 + $0x60] sm:$0xff]
  %v4100 = vld [vmem:[#allocation3 + $0x68] sm:$0xff]
  %v4101 = vld [vmem:[#allocation3 + $0x78] sm:$0xff]
  %v4102 = vld [vmem:[#allocation3 + $0x80] sm:$0xff]
  %v4103 = vld [vmem:[#allocation3 + $0x90] sm:$0xff]
  %v4104 = vld [vmem:[#allocation3 + $0x98] sm:$0xff]
  %v4105 = vld [vmem:[#allocation3 + $0xa8] sm:$0xff]
  %v4106 = vld [vmem:[#allocation3 + $0xb0] sm:$0xff]
  %v4107 = vld [vmem:[#allocation3 + $0xc0] sm:$0xff]
  %v4108 = vld [vmem:[#allocation3 + $0xc8] sm:$0xff]
  %v4109 = vld [vmem:[#allocation3 + $0xd8] sm:$0xff]
  %v4110 = vld [vmem:[#allocation3 + $0xe0] sm:$0xff]
  %v4111 = vld [vmem:[#allocation3 + $0xf0] sm:$0xff]
  %v4112 = vld [vmem:[#allocation3 + $0xf8] sm:$0xff]
  %v4113 = vld [vmem:[#allocation3 + $0x108] sm:$0xff]
  %v4114 = vld [vmem:[#allocation3 + $0x110] sm:$0xff]
  %v4115 = vld [vmem:[#allocation3 + $0x120] sm:$0xff]
  %v4116 = vld [vmem:[#allocation3 + $0x128] sm:$0xff]
  %v4117 = vld [vmem:[#allocation3 + $0x138] sm:$0xff]
  %v4118 = vld [vmem:[#allocation3 + $0x140] sm:$0xff]
  %v4119 = vld [vmem:[#allocation3 + $0x150] sm:$0xff]
  %v4120 = vld [vmem:[#allocation3 + $0x158] sm:$0xff]
  %v4121 = vld [vmem:[#allocation3 + $0x168] sm:$0xff]
  %v4122 = vld [vmem:[#allocation3 + $0x170] sm:$0xff]
  %v4123 = vld [vmem:[#allocation3 + $0x1b0] sm:$0xff]
  %v4124 = vld [vmem:[#allocation3 + $0x1b8] sm:$0xff]
  %v4125 = vld [vmem:[#allocation3 + $0x1c8] sm:$0xff]
  %v4126 = vld [vmem:[#allocation3 + $0x1d0] sm:$0xff]
  %v4127 = vld [vmem:[#allocation3 + $0x1e0] sm:$0xff]
  %v4128 = vld [vmem:[#allocation3 + $0x1e8] sm:$0xff]
  %v4129 = vld [vmem:[#allocation3 + $0x1f8] sm:$0xff]
  %v4130 = vld [vmem:[#allocation3 + $0x200] sm:$0xff]
  %v4131 = vld [vmem:[#allocation3 + $0x210] sm:$0xff]
  %v4132 = vld [vmem:[#allocation3 + $0x218] sm:$0xff]
  %v4133 = vld [vmem:[#allocation3 + $0x228] sm:$0xff]
  %v4134 = vld [vmem:[#allocation3 + $0x230] sm:$0xff]
  %v4135 = vld [vmem:[#allocation3 + $0x240] sm:$0xff]
  %v4136 = vld [vmem:[#allocation3 + $0x248] sm:$0xff]
  %v4137 = vld [vmem:[#allocation3 + $0x258] sm:$0xff]
  %v4138 = vld [vmem:[#allocation3 + $0x260] sm:$0xff]
  %v4139 = vld [vmem:[#allocation3 + $0x270] sm:$0xff]
  %v4140 = vld [vmem:[#allocation3 + $0x278] sm:$0xff]
  %v4141 = vld [vmem:[#allocation3 + $0x288] sm:$0xff]
  %v4142 = vld [vmem:[#allocation3 + $0x290] sm:$0xff]
  %v4143 = vld [vmem:[#allocation3 + $0x2a0] sm:$0xff]
  %v4144 = vld [vmem:[#allocation3 + $0x2a8] sm:$0xff]
  %v4145 = vld [vmem:[#allocation3 + $0x2b8] sm:$0xff]
  %v4146 = vld [vmem:[#allocation3 + $0x2c0] sm:$0xff]
  %v4147 = vld [vmem:[#allocation3 + $0x2d0] sm:$0xff]
  %v4148 = vld [vmem:[#allocation3 + $0x2d8] sm:$0xff]
  %v4149 = vld [vmem:[#allocation3 + $0x2e8] sm:$0xff]
  %v4150 = vld [vmem:[#allocation3 + $0x2f0] sm:$0xff]
  %v4151 = vld [vmem:[#allocation3 + $0x300] sm:$0xff]
  %v4152 = vld [vmem:[#allocation3 + $0x308] sm:$0xff]
  %v4153 = vld [vmem:[#allocation3 + $0x318] sm:$0xff]
  %v4154 = vld [vmem:[#allocation3 + $0x320] sm:$0xff]
  %v4155 = vld [vmem:[#allocation3 + $0x1] sm:$0xff]
  %v4156 = vld [vmem:[#allocation3 + $0x9] sm:$0xff]
  %v4157 = vld [vmem:[#allocation3 + $0x19] sm:$0xff]
  %v4158 = vld [vmem:[#allocation3 + $0x21] sm:$0xff]
  %v4159 = vld [vmem:[#allocation3 + $0x31] sm:$0xff]
  %v4160 = vld [vmem:[#allocation3 + $0x39] sm:$0xff]
  %v4161 = vld [vmem:[#allocation3 + $0x49] sm:$0xff]
  %v4162 = vld [vmem:[#allocation3 + $0x51] sm:$0xff]
  %v4163 = vld [vmem:[#allocation3 + $0x61] sm:$0xff]
  %v4164 = vld [vmem:[#allocation3 + $0x69] sm:$0xff]
  %v4165 = vld [vmem:[#allocation3 + $0x79] sm:$0xff]
  %v4166 = vld [vmem:[#allocation3 + $0x81] sm:$0xff]
  %v4167 = vld [vmem:[#allocation3 + $0x91] sm:$0xff]
  %v4168 = vld [vmem:[#allocation3 + $0x99] sm:$0xff]
  %v4169 = vld [vmem:[#allocation3 + $0xa9] sm:$0xff]
  %v4170 = vld [vmem:[#allocation3 + $0xb1] sm:$0xff]
  %v4171 = vld [vmem:[#allocation3 + $0xc1] sm:$0xff]
  %v4172 = vld [vmem:[#allocation3 + $0xc9] sm:$0xff]
  %v4173 = vld [vmem:[#allocation3 + $0xd9] sm:$0xff]
  %v4174 = vld [vmem:[#allocation3 + $0xe1] sm:$0xff]
  %v4175 = vld [vmem:[#allocation3 + $0xf1] sm:$0xff]
  %v4176 = vld [vmem:[#allocation3 + $0xf9] sm:$0xff]
  %v4177 = vld [vmem:[#allocation3 + $0x109] sm:$0xff]
  %v4178 = vld [vmem:[#allocation3 + $0x111] sm:$0xff]
  %v4179 = vld [vmem:[#allocation3 + $0x121] sm:$0xff]
  %v4180 = vld [vmem:[#allocation3 + $0x129] sm:$0xff]
  %v4181 = vld [vmem:[#allocation3 + $0x139] sm:$0xff]
  %v4182 = vld [vmem:[#allocation3 + $0x141] sm:$0xff]
  %v4183 = vld [vmem:[#allocation3 + $0x151] sm:$0xff]
  %v4184 = vld [vmem:[#allocation3 + $0x159] sm:$0xff]
  %v4185 = vld [vmem:[#allocation3 + $0x169] sm:$0xff]
  %v4186 = vld [vmem:[#allocation3 + $0x171] sm:$0xff]
  %v4187 = vld [vmem:[#allocation3 + $0x1b1] sm:$0xff]
  %v4188 = vld [vmem:[#allocation3 + $0x1b9] sm:$0xff]
  %v4189 = vld [vmem:[#allocation3 + $0x1c9] sm:$0xff]
  %v4190 = vld [vmem:[#allocation3 + $0x1d1] sm:$0xff]
  %v4191 = vld [vmem:[#allocation3 + $0x1e1] sm:$0xff]
  %v4192 = vld [vmem:[#allocation3 + $0x1e9] sm:$0xff]
  %v4193 = vld [vmem:[#allocation3 + $0x1f9] sm:$0xff]
  %v4194 = vld [vmem:[#allocation3 + $0x201] sm:$0xff]
  %v4195 = vld [vmem:[#allocation3 + $0x211] sm:$0xff]
  %v4196 = vld [vmem:[#allocation3 + $0x219] sm:$0xff]
  %v4197 = vld [vmem:[#allocation3 + $0x229] sm:$0xff]
  %v4198 = vld [vmem:[#allocation3 + $0x231] sm:$0xff]
  %v4199 = vld [vmem:[#allocation3 + $0x241] sm:$0xff]
  %v4200 = vld [vmem:[#allocation3 + $0x249] sm:$0xff]
  %v4201 = vld [vmem:[#allocation3 + $0x259] sm:$0xff]
  %v4202 = vld [vmem:[#allocation3 + $0x261] sm:$0xff]
  %v4203 = vld [vmem:[#allocation3 + $0x271] sm:$0xff]
  %v4204 = vld [vmem:[#allocation3 + $0x279] sm:$0xff]
  %v4205 = vld [vmem:[#allocation3 + $0x289] sm:$0xff]
  %v4206 = vld [vmem:[#allocation3 + $0x291] sm:$0xff]
  %v4207 = vld [vmem:[#allocation3 + $0x2a1] sm:$0xff]
  %v4208 = vld [vmem:[#allocation3 + $0x2a9] sm:$0xff]
  %v4209 = vld [vmem:[#allocation3 + $0x2b9] sm:$0xff]
  %v4210 = vld [vmem:[#allocation3 + $0x2c1] sm:$0xff]
  %v4211 = vld [vmem:[#allocation3 + $0x2d1] sm:$0xff]
  %v4212 = vld [vmem:[#allocation3 + $0x2d9] sm:$0xff]
  %v4213 = vld [vmem:[#allocation3 + $0x2e9] sm:$0xff]
  %v4214 = vld [vmem:[#allocation3 + $0x2f1] sm:$0xff]
  %v4215 = vld [vmem:[#allocation3 + $0x301] sm:$0xff]
  %v4216 = vld [vmem:[#allocation3 + $0x309] sm:$0xff]
  %v4217 = vld [vmem:[#allocation3 + $0x319] sm:$0xff]
  %v4218 = vld [vmem:[#allocation3 + $0x321] sm:$0xff]
  %v4219 = vld [vmem:[#allocation3 + $0x2] sm:$0xff]
  %v4220 = vld [vmem:[#allocation3 + $0xa] sm:$0xff]
  %v4221 = vld [vmem:[#allocation3 + $0x1a] sm:$0xff]
  %v4222 = vld [vmem:[#allocation3 + $0x22] sm:$0xff]
  %v4223 = vld [vmem:[#allocation3 + $0x32] sm:$0xff]
  %v4224 = vld [vmem:[#allocation3 + $0x3a] sm:$0xff]
  %v4225 = vld [vmem:[#allocation3 + $0x4a] sm:$0xff]
  %v4226 = vld [vmem:[#allocation3 + $0x52] sm:$0xff]
  %v4227 = vld [vmem:[#allocation3 + $0x62] sm:$0xff]
  %v4228 = vld [vmem:[#allocation3 + $0x6a] sm:$0xff]
  %v4229 = vld [vmem:[#allocation3 + $0x7a] sm:$0xff]
  %v4230 = vld [vmem:[#allocation3 + $0x82] sm:$0xff]
  %v4231 = vld [vmem:[#allocation3 + $0x92] sm:$0xff]
  %v4232 = vld [vmem:[#allocation3 + $0x9a] sm:$0xff]
  %v4233 = vld [vmem:[#allocation3 + $0xaa] sm:$0xff]
  %v4234 = vld [vmem:[#allocation3 + $0xb2] sm:$0xff]
  %v4235 = vld [vmem:[#allocation3 + $0xc2] sm:$0xff]
  %v4236 = vld [vmem:[#allocation3 + $0xca] sm:$0xff]
  %v4237 = vld [vmem:[#allocation3 + $0xda] sm:$0xff]
  %v4238 = vld [vmem:[#allocation3 + $0xe2] sm:$0xff]
  %v4239 = vld [vmem:[#allocation3 + $0xf2] sm:$0xff]
  %v4240 = vld [vmem:[#allocation3 + $0xfa] sm:$0xff]
  %v4241 = vld [vmem:[#allocation3 + $0x10a] sm:$0xff]
  %v4242 = vld [vmem:[#allocation3 + $0x112] sm:$0xff]
  %v4243 = vld [vmem:[#allocation3 + $0x122] sm:$0xff]
  %v4244 = vld [vmem:[#allocation3 + $0x12a] sm:$0xff]
  %v4245 = vld [vmem:[#allocation3 + $0x13a] sm:$0xff]
  %v4246 = vld [vmem:[#allocation3 + $0x142] sm:$0xff]
  %v4247 = vld [vmem:[#allocation3 + $0x152] sm:$0xff]
  %v4248 = vld [vmem:[#allocation3 + $0x15a] sm:$0xff]
  %v4249 = vld [vmem:[#allocation3 + $0x16a] sm:$0xff]
  %v4250 = vld [vmem:[#allocation3 + $0x172] sm:$0xff]
  %v4251 = vld [vmem:[#allocation3 + $0x1b2] sm:$0xff]
  %v4252 = vld [vmem:[#allocation3 + $0x1ba] sm:$0xff]
  %v4253 = vld [vmem:[#allocation3 + $0x1ca] sm:$0xff]
  %v4254 = vld [vmem:[#allocation3 + $0x1d2] sm:$0xff]
  %v4255 = vld [vmem:[#allocation3 + $0x1e2] sm:$0xff]
  %v4256 = vld [vmem:[#allocation3 + $0x1ea] sm:$0xff]
  %v4257 = vld [vmem:[#allocation3 + $0x1fa] sm:$0xff]
  %v4258 = vld [vmem:[#allocation3 + $0x202] sm:$0xff]
  %v4259 = vld [vmem:[#allocation3 + $0x212] sm:$0xff]
  %v4260 = vld [vmem:[#allocation3 + $0x21a] sm:$0xff]
  %v4261 = vld [vmem:[#allocation3 + $0x22a] sm:$0xff]
  %v4262 = vld [vmem:[#allocation3 + $0x232] sm:$0xff]
  %v4263 = vld [vmem:[#allocation3 + $0x242] sm:$0xff]
  %v4264 = vld [vmem:[#allocation3 + $0x24a] sm:$0xff]
  %v4265 = vld [vmem:[#allocation3 + $0x25a] sm:$0xff]
  %v4266 = vld [vmem:[#allocation3 + $0x262] sm:$0xff]
  %v4267 = vld [vmem:[#allocation3 + $0x272] sm:$0xff]
  %v4268 = vld [vmem:[#allocation3 + $0x27a] sm:$0xff]
  %v4269 = vld [vmem:[#allocation3 + $0x28a] sm:$0xff]
  %v4270 = vld [vmem:[#allocation3 + $0x292] sm:$0xff]
  %v4271 = vld [vmem:[#allocation3 + $0x2a2] sm:$0xff]
  %v4272 = vld [vmem:[#allocation3 + $0x2aa] sm:$0xff]
  %v4273 = vld [vmem:[#allocation3 + $0x2ba] sm:$0xff]
  %v4274 = vld [vmem:[#allocation3 + $0x2c2] sm:$0xff]
  %v4275 = vld [vmem:[#allocation3 + $0x2d2] sm:$0xff]
  %v4276 = vld [vmem:[#allocation3 + $0x2da] sm:$0xff]
  %v4277 = vld [vmem:[#allocation3 + $0x2ea] sm:$0xff]
  %v4278 = vld [vmem:[#allocation3 + $0x2f2] sm:$0xff]
  %v4279 = vld [vmem:[#allocation3 + $0x302] sm:$0xff]
  %v4280 = vld [vmem:[#allocation3 + $0x30a] sm:$0xff]
  %v4281 = vld [vmem:[#allocation3 + $0x31a] sm:$0xff]
  %v4282 = vld [vmem:[#allocation3 + $0x322] sm:$0xff]
  %v4283 = vld [vmem:[%s4026] sm:$0xff]
  %v4284 = vld [vmem:[%s4026 + $0x8] sm:$0xff]
  %v4285 = vld [vmem:[%s4026 + $0x18] sm:$0xff]
  %v4286 = vld [vmem:[%s4026 + $0x20] sm:$0xff]
  %v4287 = vld [vmem:[%s4026 + $0x30] sm:$0xff]
  %v4288 = vld [vmem:[%s4026 + $0x38] sm:$0xff]
  %v4289 = vld [vmem:[%s4026 + $0x48] sm:$0xff]
  %v4290 = vld [vmem:[%s4026 + $0x50] sm:$0xff]
  %v4291 = vld [vmem:[%s4026 + $0x60] sm:$0xff]
  %v4292 = vld [vmem:[%s4026 + $0x68] sm:$0xff]
  %v4293 = vld [vmem:[%s4026 + $0x78] sm:$0xff]
  %v4294 = vld [vmem:[%s4026 + $0x80] sm:$0xff]
  %v4295 = vld [vmem:[%s4026 + $0x90] sm:$0xff]
  %v4296 = vld [vmem:[%s4026 + $0x98] sm:$0xff]
  %v4297 = vld [vmem:[%s4026 + $0xa8] sm:$0xff]
  %v4298 = vld [vmem:[%s4026 + $0xb0] sm:$0xff]
  %v4299 = vld [vmem:[%s4026 + $0xc0] sm:$0xff]
  %v4300 = vld [vmem:[%s4026 + $0xc8] sm:$0xff]
  %v4301 = vld [vmem:[%s4026 + $0xd8] sm:$0xff]
  %v4302 = vld [vmem:[%s4026 + $0xe0] sm:$0xff]
  %v4303 = vld [vmem:[%s4026 + $0xf0] sm:$0xff]
  %v4304 = vld [vmem:[%s4026 + $0xf8] sm:$0xff]
  %v4305 = vld [vmem:[%s4026 + $0x108] sm:$0xff]
  %v4306 = vld [vmem:[%s4026 + $0x110] sm:$0xff]
  %v4307 = vld [vmem:[%s4026 + $0x120] sm:$0xff]
  %v4308 = vld [vmem:[%s4026 + $0x128] sm:$0xff]
  %v4309 = vld [vmem:[%s4026 + $0x138] sm:$0xff]
  %v4310 = vld [vmem:[%s4026 + $0x140] sm:$0xff]
  %v4311 = vld [vmem:[%s4026 + $0x150] sm:$0xff]
  %v4312 = vld [vmem:[%s4026 + $0x158] sm:$0xff]
  %v4313 = vld [vmem:[%s4026 + $0x168] sm:$0xff]
  %v4314 = vld [vmem:[%s4026 + $0x170] sm:$0xff]
  %v4315 = vld [vmem:[%s4026 + $0x1b0] sm:$0xff]
  %v4316 = vld [vmem:[%s4026 + $0x1b8] sm:$0xff]
  %v4317 = vld [vmem:[%s4026 + $0x1c8] sm:$0xff]
  %v4318 = vld [vmem:[%s4026 + $0x1d0] sm:$0xff]
  %v4319 = vld [vmem:[%s4026 + $0x1e0] sm:$0xff]
  %v4320 = vld [vmem:[%s4026 + $0x1e8] sm:$0xff]
  %v4321 = vld [vmem:[%s4026 + $0x1f8] sm:$0xff]
  %v4322 = vld [vmem:[%s4026 + $0x200] sm:$0xff]
  %v4323 = vld [vmem:[%s4026 + $0x210] sm:$0xff]
  %v4324 = vld [vmem:[%s4026 + $0x218] sm:$0xff]
  %v4325 = vld [vmem:[%s4026 + $0x228] sm:$0xff]
  %v4326 = vld [vmem:[%s4026 + $0x230] sm:$0xff]
  %v4327 = vld [vmem:[%s4026 + $0x240] sm:$0xff]
  %v4328 = vld [vmem:[%s4026 + $0x248] sm:$0xff]
  %v4329 = vld [vmem:[%s4026 + $0x258] sm:$0xff]
  %v4330 = vld [vmem:[%s4026 + $0x260] sm:$0xff]
  %v4331 = vld [vmem:[%s4026 + $0x270] sm:$0xff]
  %v4332 = vld [vmem:[%s4026 + $0x278] sm:$0xff]
  %v4333 = vld [vmem:[%s4026 + $0x288] sm:$0xff]
  %v4334 = vld [vmem:[%s4026 + $0x290] sm:$0xff]
  %v4335 = vld [vmem:[%s4026 + $0x2a0] sm:$0xff]
  %v4336 = vld [vmem:[%s4026 + $0x2a8] sm:$0xff]
  %v4337 = vld [vmem:[%s4026 + $0x2b8] sm:$0xff]
  %v4338 = vld [vmem:[%s4026 + $0x2c0] sm:$0xff]
  %v4339 = vld [vmem:[%s4026 + $0x2d0] sm:$0xff]
  %v4340 = vld [vmem:[%s4026 + $0x2d8] sm:$0xff]
  %v4341 = vld [vmem:[%s4026 + $0x2e8] sm:$0xff]
  %v4342 = vld [vmem:[%s4026 + $0x2f0] sm:$0xff]
  %v4343 = vld [vmem:[%s4026 + $0x300] sm:$0xff]
  %v4344 = vld [vmem:[%s4026 + $0x308] sm:$0xff]
  %v4345 = vld [vmem:[%s4026 + $0x318] sm:$0xff]
  %v4346 = vld [vmem:[%s4026 + $0x320] sm:$0xff]
  %v4347 = vld [vmem:[%s4026 + $0x1] sm:$0xff]
  %v4348 = vld [vmem:[%s4026 + $0x9] sm:$0xff]
  %v4349 = vld [vmem:[%s4026 + $0x19] sm:$0xff]
  %v4350 = vld [vmem:[%s4026 + $0x21] sm:$0xff]
  %v4351 = vld [vmem:[%s4026 + $0x31] sm:$0xff]
  %v4352 = vld [vmem:[%s4026 + $0x39] sm:$0xff]
  %v4353 = vld [vmem:[%s4026 + $0x49] sm:$0xff]
  %v4354 = vld [vmem:[%s4026 + $0x51] sm:$0xff]
  %v4355 = vld [vmem:[%s4026 + $0x61] sm:$0xff]
  %v4356 = vld [vmem:[%s4026 + $0x69] sm:$0xff]
  %v4357 = vld [vmem:[%s4026 + $0x79] sm:$0xff]
  %v4358 = vld [vmem:[%s4026 + $0x81] sm:$0xff]
  %v4359 = vld [vmem:[%s4026 + $0x91] sm:$0xff]
  %v4360 = vld [vmem:[%s4026 + $0x99] sm:$0xff]
  %v4361 = vld [vmem:[%s4026 + $0xa9] sm:$0xff]
  %v4362 = vld [vmem:[%s4026 + $0xb1] sm:$0xff]
  %v4363 = vld [vmem:[%s4026 + $0xc1] sm:$0xff]
  %v4364 = vld [vmem:[%s4026 + $0xc9] sm:$0xff]
  %v4365 = vld [vmem:[%s4026 + $0xd9] sm:$0xff]
  %v4366 = vld [vmem:[%s4026 + $0xe1] sm:$0xff]
  %v4367 = vld [vmem:[%s4026 + $0xf1] sm:$0xff]
  %v4368 = vld [vmem:[%s4026 + $0xf9] sm:$0xff]
  %v4369 = vld [vmem:[%s4026 + $0x109] sm:$0xff]
  %v4370 = vld [vmem:[%s4026 + $0x111] sm:$0xff]
  %v4371 = vld [vmem:[%s4026 + $0x121] sm:$0xff]
  %v4372 = vld [vmem:[%s4026 + $0x129] sm:$0xff]
  %v4373 = vld [vmem:[%s4026 + $0x139] sm:$0xff]
  %v4374 = vld [vmem:[%s4026 + $0x141] sm:$0xff]
  %v4375 = vld [vmem:[%s4026 + $0x151] sm:$0xff]
  %v4376 = vld [vmem:[%s4026 + $0x159] sm:$0xff]
  %v4377 = vld [vmem:[%s4026 + $0x169] sm:$0xff]
  %v4378 = vld [vmem:[%s4026 + $0x171] sm:$0xff]
  %v4379 = vld [vmem:[%s4026 + $0x1b1] sm:$0xff]
  %v4380 = vld [vmem:[%s4026 + $0x1b9] sm:$0xff]
  %v4381 = vld [vmem:[%s4026 + $0x1c9] sm:$0xff]
  %v4382 = vld [vmem:[%s4026 + $0x1d1] sm:$0xff]
  %v4383 = vld [vmem:[%s4026 + $0x1e1] sm:$0xff]
  %v4384 = vld [vmem:[%s4026 + $0x1e9] sm:$0xff]
  %v4385 = vld [vmem:[%s4026 + $0x1f9] sm:$0xff]
  %v4386 = vld [vmem:[%s4026 + $0x201] sm:$0xff]
  %v4387 = vld [vmem:[%s4026 + $0x211] sm:$0xff]
  %v4388 = vld [vmem:[%s4026 + $0x219] sm:$0xff]
  %v4389 = vld [vmem:[%s4026 + $0x229] sm:$0xff]
  %v4390 = vld [vmem:[%s4026 + $0x231] sm:$0xff]
  %v4391 = vld [vmem:[%s4026 + $0x241] sm:$0xff]
  %v4392 = vld [vmem:[%s4026 + $0x249] sm:$0xff]
  %v4393 = vld [vmem:[%s4026 + $0x259] sm:$0xff]
  %v4394 = vld [vmem:[%s4026 + $0x261] sm:$0xff]
  %v4395 = vld [vmem:[%s4026 + $0x271] sm:$0xff]
  %v4396 = vld [vmem:[%s4026 + $0x279] sm:$0xff]
  %v4397 = vld [vmem:[%s4026 + $0x289] sm:$0xff]
  %v4398 = vld [vmem:[%s4026 + $0x291] sm:$0xff]
  %v4399 = vld [vmem:[%s4026 + $0x2a1] sm:$0xff]
  %v4400 = vld [vmem:[%s4026 + $0x2a9] sm:$0xff]
  %v4401 = vld [vmem:[%s4026 + $0x2b9] sm:$0xff]
  %v4402 = vld [vmem:[%s4026 + $0x2c1] sm:$0xff]
  %v4403 = vld [vmem:[%s4026 + $0x2d1] sm:$0xff]
  %v4404 = vld [vmem:[%s4026 + $0x2d9] sm:$0xff]
  %v4405 = vld [vmem:[%s4026 + $0x2e9] sm:$0xff]
  %v4406 = vld [vmem:[%s4026 + $0x2f1] sm:$0xff]
  %v4407 = vld [vmem:[%s4026 + $0x301] sm:$0xff]
  %v4408 = vld [vmem:[%s4026 + $0x309] sm:$0xff]
  %v4409 = vld [vmem:[%s4026 + $0x319] sm:$0xff]
  %v4410 = vld [vmem:[%s4026 + $0x321] sm:$0xff]
  %v4411 = vld [vmem:[%s4026 + $0x2] sm:$0xff]
  %v4412 = vld [vmem:[%s4026 + $0xa] sm:$0xff]
  %v4413 = vld [vmem:[%s4026 + $0x1a] sm:$0xff]
  %v4414 = vld [vmem:[%s4026 + $0x22] sm:$0xff]
  %v4415 = vld [vmem:[%s4026 + $0x32] sm:$0xff]
  %v4416 = vld [vmem:[%s4026 + $0x3a] sm:$0xff]
  %v4417 = vld [vmem:[%s4026 + $0x4a] sm:$0xff]
  %v4418 = vld [vmem:[%s4026 + $0x52] sm:$0xff]
  %v4419 = vld [vmem:[%s4026 + $0x62] sm:$0xff]
  %v4420 = vld [vmem:[%s4026 + $0x6a] sm:$0xff]
  %v4421 = vld [vmem:[%s4026 + $0x7a] sm:$0xff]
  %v4422 = vld [vmem:[%s4026 + $0x82] sm:$0xff]
  %v4423 = vld [vmem:[%s4026 + $0x92] sm:$0xff]
  %v4424 = vld [vmem:[%s4026 + $0x9a] sm:$0xff]
  %v4425 = vld [vmem:[%s4026 + $0xaa] sm:$0xff]
  %v4426 = vld [vmem:[%s4026 + $0xb2] sm:$0xff]
  %v4427 = vld [vmem:[%s4026 + $0xc2] sm:$0xff]
  %v4428 = vld [vmem:[%s4026 + $0xca] sm:$0xff]
  %v4429 = vld [vmem:[%s4026 + $0xda] sm:$0xff]
  %v4430 = vld [vmem:[%s4026 + $0xe2] sm:$0xff]
  %v4431 = vld [vmem:[%s4026 + $0xf2] sm:$0xff]
  %v4432 = vld [vmem:[%s4026 + $0xfa] sm:$0xff]
  %v4433 = vld [vmem:[%s4026 + $0x10a] sm:$0xff]
  %v4434 = vld [vmem:[%s4026 + $0x112] sm:$0xff]
  %v4435 = vld [vmem:[%s4026 + $0x122] sm:$0xff]
  %v4436 = vld [vmem:[%s4026 + $0x12a] sm:$0xff]
  %v4437 = vld [vmem:[%s4026 + $0x13a] sm:$0xff]
  %v4438 = vld [vmem:[%s4026 + $0x142] sm:$0xff]
  %v4439 = vld [vmem:[%s4026 + $0x152] sm:$0xff]
  %v4440 = vld [vmem:[%s4026 + $0x15a] sm:$0xff]
  %v4441 = vld [vmem:[%s4026 + $0x16a] sm:$0xff]
  %v4442 = vld [vmem:[%s4026 + $0x172] sm:$0xff]
  %v4443 = vld [vmem:[%s4026 + $0x1b2] sm:$0xff]
  %v4444 = vld [vmem:[%s4026 + $0x1ba] sm:$0xff]
  %v4445 = vld [vmem:[%s4026 + $0x1ca] sm:$0xff]
  %v4446 = vld [vmem:[%s4026 + $0x1d2] sm:$0xff]
  %v4447 = vld [vmem:[%s4026 + $0x1e2] sm:$0xff]
  %v4448 = vld [vmem:[%s4026 + $0x1ea] sm:$0xff]
  %v4449 = vld [vmem:[%s4026 + $0x1fa] sm:$0xff]
  %v4450 = vld [vmem:[%s4026 + $0x202] sm:$0xff]
  %v4451 = vld [vmem:[%s4026 + $0x212] sm:$0xff]
  %v4452 = vld [vmem:[%s4026 + $0x21a] sm:$0xff]
  %v4453 = vld [vmem:[%s4026 + $0x22a] sm:$0xff]
  %v4454 = vld [vmem:[%s4026 + $0x232] sm:$0xff]
  %v4455 = vld [vmem:[%s4026 + $0x242] sm:$0xff]
  %v4456 = vld [vmem:[%s4026 + $0x24a] sm:$0xff]
  %v4457 = vld [vmem:[%s4026 + $0x25a] sm:$0xff]
  %v4458 = vld [vmem:[%s4026 + $0x262] sm:$0xff]
  %v4459 = vld [vmem:[%s4026 + $0x272] sm:$0xff]
  %v4460 = vld [vmem:[%s4026 + $0x27a] sm:$0xff]
  %v4461 = vld [vmem:[%s4026 + $0x28a] sm:$0xff]
  %v4462 = vld [vmem:[%s4026 + $0x292] sm:$0xff]
  %v4463 = vld [vmem:[%s4026 + $0x2a2] sm:$0xff]
  %v4464 = vld [vmem:[%s4026 + $0x2aa] sm:$0xff]
  %v4465 = vld [vmem:[%s4026 + $0x2ba] sm:$0xff]
  %v4466 = vld [vmem:[%s4026 + $0x2c2] sm:$0xff]
  %v4467 = vld [vmem:[%s4026 + $0x2d2] sm:$0xff]
  %v4468 = vld [vmem:[%s4026 + $0x2da] sm:$0xff]
  %v4469 = vld [vmem:[%s4026 + $0x2ea] sm:$0xff]
  %v4470 = vld [vmem:[%s4026 + $0x2f2] sm:$0xff]
  %v4471 = vld [vmem:[%s4026 + $0x302] sm:$0xff]
  %v4472 = vld [vmem:[%s4026 + $0x30a] sm:$0xff]
  %v4473 = vld [vmem:[%s4026 + $0x31a] sm:$0xff]
  %v4474 = vld [vmem:[%s4026 + $0x322] sm:$0xff]
  %s4475 = scalar_lea.vmem [#allocation3], 48
  %v4476 = vld [vmem:[%s4475] sm:$0xff]
  %v4477 = vld [vmem:[%s4475 + $0x8] sm:$0xff]
  %v4478 = vld [vmem:[%s4475 + $0x18] sm:$0xff]
  %v4479 = vld [vmem:[%s4475 + $0x20] sm:$0xff]
  %v4480 = vld [vmem:[%s4475 + $0x30] sm:$0xff]
  %v4481 = vld [vmem:[%s4475 + $0x38] sm:$0xff]
  %v4482 = vld [vmem:[%s4475 + $0x48] sm:$0xff]
  %v4483 = vld [vmem:[%s4475 + $0x50] sm:$0xff]
  %v4484 = vld [vmem:[%s4475 + $0x60] sm:$0xff]
  %v4485 = vld [vmem:[%s4475 + $0x68] sm:$0xff]
  %v4486 = vld [vmem:[%s4475 + $0x78] sm:$0xff]
  %v4487 = vld [vmem:[%s4475 + $0x80] sm:$0xff]
  %v4488 = vld [vmem:[%s4475 + $0x90] sm:$0xff]
  %v4489 = vld [vmem:[%s4475 + $0x98] sm:$0xff]
  %v4490 = vld [vmem:[%s4475 + $0xa8] sm:$0xff]
  %v4491 = vld [vmem:[%s4475 + $0xb0] sm:$0xff]
  %v4492 = vld [vmem:[%s4475 + $0xc0] sm:$0xff]
  %v4493 = vld [vmem:[%s4475 + $0xc8] sm:$0xff]
  %v4494 = vld [vmem:[%s4475 + $0xd8] sm:$0xff]
  %v4495 = vld [vmem:[%s4475 + $0xe0] sm:$0xff]
  %v4496 = vld [vmem:[%s4475 + $0xf0] sm:$0xff]
  %v4497 = vld [vmem:[%s4475 + $0xf8] sm:$0xff]
  %v4498 = vld [vmem:[%s4475 + $0x108] sm:$0xff]
  %v4499 = vld [vmem:[%s4475 + $0x110] sm:$0xff]
  %v4500 = vld [vmem:[%s4475 + $0x120] sm:$0xff]
  %v4501 = vld [vmem:[%s4475 + $0x128] sm:$0xff]
  %v4502 = vld [vmem:[%s4475 + $0x138] sm:$0xff]
  %v4503 = vld [vmem:[%s4475 + $0x140] sm:$0xff]
  %v4504 = vld [vmem:[%s4475 + $0x150] sm:$0xff]
  %v4505 = vld [vmem:[%s4475 + $0x158] sm:$0xff]
  %v4506 = vld [vmem:[%s4475 + $0x168] sm:$0xff]
  %v4507 = vld [vmem:[%s4475 + $0x170] sm:$0xff]
  %v4508 = vld [vmem:[%s4475 + $0x1b0] sm:$0xff]
  %v4509 = vld [vmem:[%s4475 + $0x1b8] sm:$0xff]
  %v4510 = vld [vmem:[%s4475 + $0x1c8] sm:$0xff]
  %v4511 = vld [vmem:[%s4475 + $0x1d0] sm:$0xff]
  %v4512 = vld [vmem:[%s4475 + $0x1e0] sm:$0xff]
  %v4513 = vld [vmem:[%s4475 + $0x1e8] sm:$0xff]
  %v4514 = vld [vmem:[%s4475 + $0x1f8] sm:$0xff]
  %v4515 = vld [vmem:[%s4475 + $0x200] sm:$0xff]
  %v4516 = vld [vmem:[%s4475 + $0x210] sm:$0xff]
  %v4517 = vld [vmem:[%s4475 + $0x218] sm:$0xff]
  %v4518 = vld [vmem:[%s4475 + $0x228] sm:$0xff]
  %v4519 = vld [vmem:[%s4475 + $0x230] sm:$0xff]
  %v4520 = vld [vmem:[%s4475 + $0x240] sm:$0xff]
  %v4521 = vld [vmem:[%s4475 + $0x248] sm:$0xff]
  %v4522 = vld [vmem:[%s4475 + $0x258] sm:$0xff]
  %v4523 = vld [vmem:[%s4475 + $0x260] sm:$0xff]
  %v4524 = vld [vmem:[%s4475 + $0x270] sm:$0xff]
  %v4525 = vld [vmem:[%s4475 + $0x278] sm:$0xff]
  %v4526 = vld [vmem:[%s4475 + $0x288] sm:$0xff]
  %v4527 = vld [vmem:[%s4475 + $0x290] sm:$0xff]
  %v4528 = vld [vmem:[%s4475 + $0x2a0] sm:$0xff]
  %v4529 = vld [vmem:[%s4475 + $0x2a8] sm:$0xff]
  %v4530 = vld [vmem:[%s4475 + $0x2b8] sm:$0xff]
  %v4531 = vld [vmem:[%s4475 + $0x2c0] sm:$0xff]
  %v4532 = vld [vmem:[%s4475 + $0x2d0] sm:$0xff]
  %v4533 = vld [vmem:[%s4475 + $0x2d8] sm:$0xff]
  %v4534 = vld [vmem:[%s4475 + $0x2e8] sm:$0xff]
  %v4535 = vld [vmem:[%s4475 + $0x2f0] sm:$0xff]
  %v4536 = vld [vmem:[%s4475 + $0x300] sm:$0xff]
  %v4537 = vld [vmem:[%s4475 + $0x308] sm:$0xff]
  %v4538 = vld [vmem:[%s4475 + $0x318] sm:$0xff]
  %v4539 = vld [vmem:[%s4475 + $0x320] sm:$0xff]
  %v4540 = vld [vmem:[%s4475 + $0x1] sm:$0xff]
  %v4541 = vld [vmem:[%s4475 + $0x9] sm:$0xff]
  %v4542 = vld [vmem:[%s4475 + $0x19] sm:$0xff]
  %v4543 = vld [vmem:[%s4475 + $0x21] sm:$0xff]
  %v4544 = vld [vmem:[%s4475 + $0x31] sm:$0xff]
  %v4545 = vld [vmem:[%s4475 + $0x39] sm:$0xff]
  %v4546 = vld [vmem:[%s4475 + $0x49] sm:$0xff]
  %v4547 = vld [vmem:[%s4475 + $0x51] sm:$0xff]
  %v4548 = vld [vmem:[%s4475 + $0x61] sm:$0xff]
  %v4549 = vld [vmem:[%s4475 + $0x69] sm:$0xff]
  %v4550 = vld [vmem:[%s4475 + $0x79] sm:$0xff]
  %v4551 = vld [vmem:[%s4475 + $0x81] sm:$0xff]
  %v4552 = vld [vmem:[%s4475 + $0x91] sm:$0xff]
  %v4553 = vld [vmem:[%s4475 + $0x99] sm:$0xff]
  %v4554 = vld [vmem:[%s4475 + $0xa9] sm:$0xff]
  %v4555 = vld [vmem:[%s4475 + $0xb1] sm:$0xff]
  %v4556 = vld [vmem:[%s4475 + $0xc1] sm:$0xff]
  %v4557 = vld [vmem:[%s4475 + $0xc9] sm:$0xff]
  %v4558 = vld [vmem:[%s4475 + $0xd9] sm:$0xff]
  %v4559 = vld [vmem:[%s4475 + $0xe1] sm:$0xff]
  %v4560 = vld [vmem:[%s4475 + $0xf1] sm:$0xff]
  %v4561 = vld [vmem:[%s4475 + $0xf9] sm:$0xff]
  %v4562 = vld [vmem:[%s4475 + $0x109] sm:$0xff]
  %v4563 = vld [vmem:[%s4475 + $0x111] sm:$0xff]
  %v4564 = vld [vmem:[%s4475 + $0x121] sm:$0xff]
  %v4565 = vld [vmem:[%s4475 + $0x129] sm:$0xff]
  %v4566 = vld [vmem:[%s4475 + $0x139] sm:$0xff]
  %v4567 = vld [vmem:[%s4475 + $0x141] sm:$0xff]
  %v4568 = vld [vmem:[%s4475 + $0x151] sm:$0xff]
  %v4569 = vld [vmem:[%s4475 + $0x159] sm:$0xff]
  %v4570 = vld [vmem:[%s4475 + $0x169] sm:$0xff]
  %v4571 = vld [vmem:[%s4475 + $0x171] sm:$0xff]
  %v4572 = vld [vmem:[%s4475 + $0x1b1] sm:$0xff]
  %v4573 = vld [vmem:[%s4475 + $0x1b9] sm:$0xff]
  %v4574 = vld [vmem:[%s4475 + $0x1c9] sm:$0xff]
  %v4575 = vld [vmem:[%s4475 + $0x1d1] sm:$0xff]
  %v4576 = vld [vmem:[%s4475 + $0x1e1] sm:$0xff]
  %v4577 = vld [vmem:[%s4475 + $0x1e9] sm:$0xff]
  %v4578 = vld [vmem:[%s4475 + $0x1f9] sm:$0xff]
  %v4579 = vld [vmem:[%s4475 + $0x201] sm:$0xff]
  %v4580 = vld [vmem:[%s4475 + $0x211] sm:$0xff]
  %v4581 = vld [vmem:[%s4475 + $0x219] sm:$0xff]
  %v4582 = vld [vmem:[%s4475 + $0x229] sm:$0xff]
  %v4583 = vld [vmem:[%s4475 + $0x231] sm:$0xff]
  %v4584 = vld [vmem:[%s4475 + $0x241] sm:$0xff]
  %v4585 = vld [vmem:[%s4475 + $0x249] sm:$0xff]
  %v4586 = vld [vmem:[%s4475 + $0x259] sm:$0xff]
  %v4587 = vld [vmem:[%s4475 + $0x261] sm:$0xff]
  %v4588 = vld [vmem:[%s4475 + $0x271] sm:$0xff]
  %v4589 = vld [vmem:[%s4475 + $0x279] sm:$0xff]
  %v4590 = vld [vmem:[%s4475 + $0x289] sm:$0xff]
  %v4591 = vld [vmem:[%s4475 + $0x291] sm:$0xff]
  %v4592 = vld [vmem:[%s4475 + $0x2a1] sm:$0xff]
  %v4593 = vld [vmem:[%s4475 + $0x2a9] sm:$0xff]
  %v4594 = vld [vmem:[%s4475 + $0x2b9] sm:$0xff]
  %v4595 = vld [vmem:[%s4475 + $0x2c1] sm:$0xff]
  %v4596 = vld [vmem:[%s4475 + $0x2d1] sm:$0xff]
  %v4597 = vld [vmem:[%s4475 + $0x2d9] sm:$0xff]
  %v4598 = vld [vmem:[%s4475 + $0x2e9] sm:$0xff]
  %v4599 = vld [vmem:[%s4475 + $0x2f1] sm:$0xff]
  %v4600 = vld [vmem:[%s4475 + $0x301] sm:$0xff]
  %v4601 = vld [vmem:[%s4475 + $0x309] sm:$0xff]
  %v4602 = vld [vmem:[%s4475 + $0x319] sm:$0xff]
  %v4603 = vld [vmem:[%s4475 + $0x321] sm:$0xff]
  %v4604 = vld [vmem:[%s4475 + $0x2] sm:$0xff]
  %v4605 = vld [vmem:[%s4475 + $0xa] sm:$0xff]
  %v4606 = vld [vmem:[%s4475 + $0x1a] sm:$0xff]
  %v4607 = vld [vmem:[%s4475 + $0x22] sm:$0xff]
  %v4608 = vld [vmem:[%s4475 + $0x32] sm:$0xff]
  %v4609 = vld [vmem:[%s4475 + $0x3a] sm:$0xff]
  %v4610 = vld [vmem:[%s4475 + $0x4a] sm:$0xff]
  %v4611 = vld [vmem:[%s4475 + $0x52] sm:$0xff]
  %v4612 = vld [vmem:[%s4475 + $0x62] sm:$0xff]
  %v4613 = vld [vmem:[%s4475 + $0x6a] sm:$0xff]
  %v4614 = vld [vmem:[%s4475 + $0x7a] sm:$0xff]
  %v4615 = vld [vmem:[%s4475 + $0x82] sm:$0xff]
  %v4616 = vld [vmem:[%s4475 + $0x92] sm:$0xff]
  %v4617 = vld [vmem:[%s4475 + $0x9a] sm:$0xff]
  %v4618 = vld [vmem:[%s4475 + $0xaa] sm:$0xff]
  %v4619 = vld [vmem:[%s4475 + $0xb2] sm:$0xff]
  %v4620 = vld [vmem:[%s4475 + $0xc2] sm:$0xff]
  %v4621 = vld [vmem:[%s4475 + $0xca] sm:$0xff]
  %v4622 = vld [vmem:[%s4475 + $0xda] sm:$0xff]
  %v4623 = vld [vmem:[%s4475 + $0xe2] sm:$0xff]
  %v4624 = vld [vmem:[%s4475 + $0xf2] sm:$0xff]
  %v4625 = vld [vmem:[%s4475 + $0xfa] sm:$0xff]
  %v4626 = vld [vmem:[%s4475 + $0x10a] sm:$0xff]
  %v4627 = vld [vmem:[%s4475 + $0x112] sm:$0xff]
  %v4628 = vld [vmem:[%s4475 + $0x122] sm:$0xff]
  %v4629 = vld [vmem:[%s4475 + $0x12a] sm:$0xff]
  %v4630 = vld [vmem:[%s4475 + $0x13a] sm:$0xff]
  %v4631 = vld [vmem:[%s4475 + $0x142] sm:$0xff]
  %v4632 = vld [vmem:[%s4475 + $0x152] sm:$0xff]
  %v4633 = vld [vmem:[%s4475 + $0x15a] sm:$0xff]
  %v4634 = vld [vmem:[%s4475 + $0x16a] sm:$0xff]
  %v4635 = vld [vmem:[%s4475 + $0x172] sm:$0xff]
  %v4636 = vld [vmem:[%s4475 + $0x1b2] sm:$0xff]
  %v4637 = vld [vmem:[%s4475 + $0x1ba] sm:$0xff]
  %v4638 = vld [vmem:[%s4475 + $0x1ca] sm:$0xff]
  %v4639 = vld [vmem:[%s4475 + $0x1d2] sm:$0xff]
  %v4640 = vld [vmem:[%s4475 + $0x1e2] sm:$0xff]
  %v4641 = vld [vmem:[%s4475 + $0x1ea] sm:$0xff]
  %v4642 = vld [vmem:[%s4475 + $0x1fa] sm:$0xff]
  %v4643 = vld [vmem:[%s4475 + $0x202] sm:$0xff]
  %v4644 = vld [vmem:[%s4475 + $0x212] sm:$0xff]
  %v4645 = vld [vmem:[%s4475 + $0x21a] sm:$0xff]
  %v4646 = vld [vmem:[%s4475 + $0x22a] sm:$0xff]
  %v4647 = vld [vmem:[%s4475 + $0x232] sm:$0xff]
  %v4648 = vld [vmem:[%s4475 + $0x242] sm:$0xff]
  %v4649 = vld [vmem:[%s4475 + $0x24a] sm:$0xff]
  %v4650 = vld [vmem:[%s4475 + $0x25a] sm:$0xff]
  %v4651 = vld [vmem:[%s4475 + $0x262] sm:$0xff]
  %v4652 = vld [vmem:[%s4475 + $0x272] sm:$0xff]
  %v4653 = vld [vmem:[%s4475 + $0x27a] sm:$0xff]
  %v4654 = vld [vmem:[%s4475 + $0x28a] sm:$0xff]
  %v4655 = vld [vmem:[%s4475 + $0x292] sm:$0xff]
  %v4656 = vld [vmem:[%s4475 + $0x2a2] sm:$0xff]
  %v4657 = vld [vmem:[%s4475 + $0x2aa] sm:$0xff]
  %v4658 = vld [vmem:[%s4475 + $0x2ba] sm:$0xff]
  %v4659 = vld [vmem:[%s4475 + $0x2c2] sm:$0xff]
  %v4660 = vld [vmem:[%s4475 + $0x2d2] sm:$0xff]
  %v4661 = vld [vmem:[%s4475 + $0x2da] sm:$0xff]
  %v4662 = vld [vmem:[%s4475 + $0x2ea] sm:$0xff]
  %v4663 = vld [vmem:[%s4475 + $0x2f2] sm:$0xff]
  %v4664 = vld [vmem:[%s4475 + $0x302] sm:$0xff]
  %v4665 = vld [vmem:[%s4475 + $0x30a] sm:$0xff]
  %v4666 = vld [vmem:[%s4475 + $0x31a] sm:$0xff]
  %v4667 = vld [vmem:[%s4475 + $0x322] sm:$0xff]
  %4732 = vrot.lane.b32.xlu0 %v4155, 8
  %v4733 = vpop.permute.xlu0 %4732
  %4734 = vrot.lane.b32.xlu0 %v4156, 8
  %v4735 = vpop.permute.xlu0 %4734
  %4736 = vrot.lane.b32.xlu0 %v4157, 8
  %v4737 = vpop.permute.xlu0 %4736
  %4738 = vrot.lane.b32.xlu0 %v4158, 8
  %v4739 = vpop.permute.xlu0 %4738
  %4740 = vrot.lane.b32.xlu0 %v4159, 8
  %v4741 = vpop.permute.xlu0 %4740
  %4742 = vrot.lane.b32.xlu0 %v4160, 8
  %v4743 = vpop.permute.xlu0 %4742
  %4744 = vrot.lane.b32.xlu0 %v4161, 8
  %v4745 = vpop.permute.xlu0 %4744
  %4746 = vrot.lane.b32.xlu0 %v4162, 8
  %v4747 = vpop.permute.xlu0 %4746
  %4748 = vrot.lane.b32.xlu0 %v4163, 8
  %v4749 = vpop.permute.xlu0 %4748
  %4750 = vrot.lane.b32.xlu0 %v4164, 8
  %v4751 = vpop.permute.xlu0 %4750
  %4752 = vrot.lane.b32.xlu0 %v4165, 8
  %v4753 = vpop.permute.xlu0 %4752
  %4754 = vrot.lane.b32.xlu0 %v4166, 8
  %v4755 = vpop.permute.xlu0 %4754
  %4756 = vrot.lane.b32.xlu0 %v4167, 8
  %v4757 = vpop.permute.xlu0 %4756
  %4758 = vrot.lane.b32.xlu0 %v4168, 8
  %v4759 = vpop.permute.xlu0 %4758
  %4760 = vrot.lane.b32.xlu0 %v4169, 8
  %v4761 = vpop.permute.xlu0 %4760
  %4762 = vrot.lane.b32.xlu0 %v4170, 8
  %v4763 = vpop.permute.xlu0 %4762
  %4764 = vrot.lane.b32.xlu0 %v4171, 8
  %v4765 = vpop.permute.xlu0 %4764
  %4766 = vrot.lane.b32.xlu0 %v4172, 8
  %v4767 = vpop.permute.xlu0 %4766
  %4768 = vrot.lane.b32.xlu0 %v4173, 8
  %v4769 = vpop.permute.xlu0 %4768
  %4770 = vrot.lane.b32.xlu0 %v4174, 8
  %v4771 = vpop.permute.xlu0 %4770
  %4772 = vrot.lane.b32.xlu0 %v4175, 8
  %v4773 = vpop.permute.xlu0 %4772
  %4774 = vrot.lane.b32.xlu0 %v4176, 8
  %v4775 = vpop.permute.xlu0 %4774
  %4776 = vrot.lane.b32.xlu0 %v4177, 8
  %v4777 = vpop.permute.xlu0 %4776
  %4778 = vrot.lane.b32.xlu0 %v4178, 8
  %v4779 = vpop.permute.xlu0 %4778
  %4780 = vrot.lane.b32.xlu0 %v4179, 8
  %v4781 = vpop.permute.xlu0 %4780
  %4782 = vrot.lane.b32.xlu0 %v4180, 8
  %v4783 = vpop.permute.xlu0 %4782
  %4784 = vrot.lane.b32.xlu0 %v4181, 8
  %v4785 = vpop.permute.xlu0 %4784
  %4786 = vrot.lane.b32.xlu0 %v4182, 8
  %v4787 = vpop.permute.xlu0 %4786
  %4788 = vrot.lane.b32.xlu0 %v4183, 8
  %v4789 = vpop.permute.xlu0 %4788
  %4790 = vrot.lane.b32.xlu0 %v4184, 8
  %v4791 = vpop.permute.xlu0 %4790
  %4792 = vrot.lane.b32.xlu0 %v4185, 8
  %v4793 = vpop.permute.xlu0 %4792
  %4794 = vrot.lane.b32.xlu0 %v4186, 8
  %v4795 = vpop.permute.xlu0 %4794
  %4796 = vrot.lane.b32.xlu0 %v4187, 8
  %v4797 = vpop.permute.xlu0 %4796
  %4798 = vrot.lane.b32.xlu0 %v4188, 8
  %v4799 = vpop.permute.xlu0 %4798
  %4800 = vrot.lane.b32.xlu0 %v4189, 8
  %v4801 = vpop.permute.xlu0 %4800
  %4802 = vrot.lane.b32.xlu0 %v4190, 8
  %v4803 = vpop.permute.xlu0 %4802
  %4804 = vrot.lane.b32.xlu0 %v4191, 8
  %v4805 = vpop.permute.xlu0 %4804
  %4806 = vrot.lane.b32.xlu0 %v4192, 8
  %v4807 = vpop.permute.xlu0 %4806
  %4808 = vrot.lane.b32.xlu0 %v4193, 8
  %v4809 = vpop.permute.xlu0 %4808
  %4810 = vrot.lane.b32.xlu0 %v4194, 8
  %v4811 = vpop.permute.xlu0 %4810
  %4812 = vrot.lane.b32.xlu0 %v4195, 8
  %v4813 = vpop.permute.xlu0 %4812
  %4814 = vrot.lane.b32.xlu0 %v4196, 8
  %v4815 = vpop.permute.xlu0 %4814
  %4816 = vrot.lane.b32.xlu0 %v4197, 8
  %v4817 = vpop.permute.xlu0 %4816
  %4818 = vrot.lane.b32.xlu0 %v4198, 8
  %v4819 = vpop.permute.xlu0 %4818
  %4820 = vrot.lane.b32.xlu0 %v4199, 8
  %v4821 = vpop.permute.xlu0 %4820
  %4822 = vrot.lane.b32.xlu0 %v4200, 8
  %v4823 = vpop.permute.xlu0 %4822
  %4824 = vrot.lane.b32.xlu0 %v4201, 8
  %v4825 = vpop.permute.xlu0 %4824
  %4826 = vrot.lane.b32.xlu0 %v4202, 8
  %v4827 = vpop.permute.xlu0 %4826
  %4828 = vrot.lane.b32.xlu0 %v4203, 8
  %v4829 = vpop.permute.xlu0 %4828
  %4830 = vrot.lane.b32.xlu0 %v4204, 8
  %v4831 = vpop.permute.xlu0 %4830
  %4832 = vrot.lane.b32.xlu0 %v4205, 8
  %v4833 = vpop.permute.xlu0 %4832
  %4834 = vrot.lane.b32.xlu0 %v4206, 8
  %v4835 = vpop.permute.xlu0 %4834
  %4836 = vrot.lane.b32.xlu0 %v4207, 8
  %v4837 = vpop.permute.xlu0 %4836
  %4838 = vrot.lane.b32.xlu0 %v4208, 8
  %v4839 = vpop.permute.xlu0 %4838
  %4840 = vrot.lane.b32.xlu0 %v4209, 8
  %v4841 = vpop.permute.xlu0 %4840
  %4842 = vrot.lane.b32.xlu0 %v4210, 8
  %v4843 = vpop.permute.xlu0 %4842
  %4844 = vrot.lane.b32.xlu0 %v4211, 8
  %v4845 = vpop.permute.xlu0 %4844
  %4846 = vrot.lane.b32.xlu0 %v4212, 8
  %v4847 = vpop.permute.xlu0 %4846
  %4848 = vrot.lane.b32.xlu0 %v4213, 8
  %v4849 = vpop.permute.xlu0 %4848
  %4850 = vrot.lane.b32.xlu0 %v4214, 8
  %v4851 = vpop.permute.xlu0 %4850
  %4852 = vrot.lane.b32.xlu0 %v4215, 8
  %v4853 = vpop.permute.xlu0 %4852
  %4854 = vrot.lane.b32.xlu0 %v4216, 8
  %v4855 = vpop.permute.xlu0 %4854
  %4856 = vrot.lane.b32.xlu0 %v4217, 8
  %v4857 = vpop.permute.xlu0 %4856
  %4858 = vrot.lane.b32.xlu0 %v4218, 8
  %v4859 = vpop.permute.xlu0 %4858
  %4988 = vrot.lane.b32.xlu0 %v4219, 16
  %v4989 = vpop.permute.xlu0 %4988
  %4990 = vrot.lane.b32.xlu0 %v4220, 16
  %v4991 = vpop.permute.xlu0 %4990
  %4992 = vrot.lane.b32.xlu0 %v4221, 16
  %v4993 = vpop.permute.xlu0 %4992
  %4994 = vrot.lane.b32.xlu0 %v4222, 16
  %v4995 = vpop.permute.xlu0 %4994
  %4996 = vrot.lane.b32.xlu0 %v4223, 16
  %v4997 = vpop.permute.xlu0 %4996
  %4998 = vrot.lane.b32.xlu0 %v4224, 16
  %v4999 = vpop.permute.xlu0 %4998
  %5000 = vrot.lane.b32.xlu0 %v4225, 16
  %v5001 = vpop.permute.xlu0 %5000
  %5002 = vrot.lane.b32.xlu0 %v4226, 16
  %v5003 = vpop.permute.xlu0 %5002
  %5004 = vrot.lane.b32.xlu0 %v4227, 16
  %v5005 = vpop.permute.xlu0 %5004
  %5006 = vrot.lane.b32.xlu0 %v4228, 16
  %v5007 = vpop.permute.xlu0 %5006
  %5008 = vrot.lane.b32.xlu0 %v4229, 16
  %v5009 = vpop.permute.xlu0 %5008
  %5010 = vrot.lane.b32.xlu0 %v4230, 16
  %v5011 = vpop.permute.xlu0 %5010
  %5012 = vrot.lane.b32.xlu0 %v4231, 16
  %v5013 = vpop.permute.xlu0 %5012
  %5014 = vrot.lane.b32.xlu0 %v4232, 16
  %v5015 = vpop.permute.xlu0 %5014
  %5016 = vrot.lane.b32.xlu0 %v4233, 16
  %v5017 = vpop.permute.xlu0 %5016
  %5018 = vrot.lane.b32.xlu0 %v4234, 16
  %v5019 = vpop.permute.xlu0 %5018
  %5020 = vrot.lane.b32.xlu0 %v4235, 16
  %v5021 = vpop.permute.xlu0 %5020
  %5022 = vrot.lane.b32.xlu0 %v4236, 16
  %v5023 = vpop.permute.xlu0 %5022
  %5024 = vrot.lane.b32.xlu0 %v4237, 16
  %v5025 = vpop.permute.xlu0 %5024
  %5026 = vrot.lane.b32.xlu0 %v4238, 16
  %v5027 = vpop.permute.xlu0 %5026
  %5028 = vrot.lane.b32.xlu0 %v4239, 16
  %v5029 = vpop.permute.xlu0 %5028
  %5030 = vrot.lane.b32.xlu0 %v4240, 16
  %v5031 = vpop.permute.xlu0 %5030
  %5032 = vrot.lane.b32.xlu0 %v4241, 16
  %v5033 = vpop.permute.xlu0 %5032
  %5034 = vrot.lane.b32.xlu0 %v4242, 16
  %v5035 = vpop.permute.xlu0 %5034
  %5036 = vrot.lane.b32.xlu0 %v4243, 16
  %v5037 = vpop.permute.xlu0 %5036
  %5038 = vrot.lane.b32.xlu0 %v4244, 16
  %v5039 = vpop.permute.xlu0 %5038
  %5040 = vrot.lane.b32.xlu0 %v4245, 16
  %v5041 = vpop.permute.xlu0 %5040
  %5042 = vrot.lane.b32.xlu0 %v4246, 16
  %v5043 = vpop.permute.xlu0 %5042
  %5044 = vrot.lane.b32.xlu0 %v4247, 16
  %v5045 = vpop.permute.xlu0 %5044
  %5046 = vrot.lane.b32.xlu0 %v4248, 16
  %v5047 = vpop.permute.xlu0 %5046
  %5048 = vrot.lane.b32.xlu0 %v4249, 16
  %v5049 = vpop.permute.xlu0 %5048
  %5050 = vrot.lane.b32.xlu0 %v4250, 16
  %v5051 = vpop.permute.xlu0 %5050
  %5052 = vrot.lane.b32.xlu0 %v4251, 16
  %v5053 = vpop.permute.xlu0 %5052
  %5054 = vrot.lane.b32.xlu0 %v4252, 16
  %v5055 = vpop.permute.xlu0 %5054
  %5056 = vrot.lane.b32.xlu0 %v4253, 16
  %v5057 = vpop.permute.xlu0 %5056
  %5058 = vrot.lane.b32.xlu0 %v4254, 16
  %v5059 = vpop.permute.xlu0 %5058
  %5060 = vrot.lane.b32.xlu0 %v4255, 16
  %v5061 = vpop.permute.xlu0 %5060
  %5062 = vrot.lane.b32.xlu0 %v4256, 16
  %v5063 = vpop.permute.xlu0 %5062
  %5064 = vrot.lane.b32.xlu0 %v4257, 16
  %v5065 = vpop.permute.xlu0 %5064
  %5066 = vrot.lane.b32.xlu0 %v4258, 16
  %v5067 = vpop.permute.xlu0 %5066
  %5068 = vrot.lane.b32.xlu0 %v4259, 16
  %v5069 = vpop.permute.xlu0 %5068
  %5070 = vrot.lane.b32.xlu0 %v4260, 16
  %v5071 = vpop.permute.xlu0 %5070
  %5072 = vrot.lane.b32.xlu0 %v4261, 16
  %v5073 = vpop.permute.xlu0 %5072
  %5074 = vrot.lane.b32.xlu0 %v4262, 16
  %v5075 = vpop.permute.xlu0 %5074
  %5076 = vrot.lane.b32.xlu0 %v4263, 16
  %v5077 = vpop.permute.xlu0 %5076
  %5078 = vrot.lane.b32.xlu0 %v4264, 16
  %v5079 = vpop.permute.xlu0 %5078
  %5080 = vrot.lane.b32.xlu0 %v4265, 16
  %v5081 = vpop.permute.xlu0 %5080
  %5082 = vrot.lane.b32.xlu0 %v4266, 16
  %v5083 = vpop.permute.xlu0 %5082
  %5084 = vrot.lane.b32.xlu0 %v4267, 16
  %v5085 = vpop.permute.xlu0 %5084
  %5086 = vrot.lane.b32.xlu0 %v4268, 16
  %v5087 = vpop.permute.xlu0 %5086
  %5088 = vrot.lane.b32.xlu0 %v4269, 16
  %v5089 = vpop.permute.xlu0 %5088
  %5090 = vrot.lane.b32.xlu0 %v4270, 16
  %v5091 = vpop.permute.xlu0 %5090
  %5092 = vrot.lane.b32.xlu0 %v4271, 16
  %v5093 = vpop.permute.xlu0 %5092
  %5094 = vrot.lane.b32.xlu0 %v4272, 16
  %v5095 = vpop.permute.xlu0 %5094
  %5096 = vrot.lane.b32.xlu0 %v4273, 16
  %v5097 = vpop.permute.xlu0 %5096
  %5098 = vrot.lane.b32.xlu0 %v4274, 16
  %v5099 = vpop.permute.xlu0 %5098
  %5100 = vrot.lane.b32.xlu0 %v4275, 16
  %v5101 = vpop.permute.xlu0 %5100
  %5102 = vrot.lane.b32.xlu0 %v4276, 16
  %v5103 = vpop.permute.xlu0 %5102
  %5104 = vrot.lane.b32.xlu0 %v4277, 16
  %v5105 = vpop.permute.xlu0 %5104
  %5106 = vrot.lane.b32.xlu0 %v4278, 16
  %v5107 = vpop.permute.xlu0 %5106
  %5108 = vrot.lane.b32.xlu0 %v4279, 16
  %v5109 = vpop.permute.xlu0 %5108
  %5110 = vrot.lane.b32.xlu0 %v4280, 16
  %v5111 = vpop.permute.xlu0 %5110
  %5112 = vrot.lane.b32.xlu0 %v4281, 16
  %v5113 = vpop.permute.xlu0 %5112
  %5114 = vrot.lane.b32.xlu0 %v4282, 16
  %v5115 = vpop.permute.xlu0 %5114
  %5244 = vrot.lane.b32.xlu0 %v4283, 24
  %v5245 = vpop.permute.xlu0 %5244
  %5246 = vrot.lane.b32.xlu0 %v4284, 24
  %v5247 = vpop.permute.xlu0 %5246
  %5248 = vrot.lane.b32.xlu0 %v4285, 24
  %v5249 = vpop.permute.xlu0 %5248
  %5250 = vrot.lane.b32.xlu0 %v4286, 24
  %v5251 = vpop.permute.xlu0 %5250
  %5252 = vrot.lane.b32.xlu0 %v4287, 24
  %v5253 = vpop.permute.xlu0 %5252
  %5254 = vrot.lane.b32.xlu0 %v4288, 24
  %v5255 = vpop.permute.xlu0 %5254
  %5256 = vrot.lane.b32.xlu0 %v4289, 24
  %v5257 = vpop.permute.xlu0 %5256
  %5258 = vrot.lane.b32.xlu0 %v4290, 24
  %v5259 = vpop.permute.xlu0 %5258
  %5260 = vrot.lane.b32.xlu0 %v4291, 24
  %v5261 = vpop.permute.xlu0 %5260
  %5262 = vrot.lane.b32.xlu0 %v4292, 24
  %v5263 = vpop.permute.xlu0 %5262
  %5264 = vrot.lane.b32.xlu0 %v4293, 24
  %v5265 = vpop.permute.xlu0 %5264
  %5266 = vrot.lane.b32.xlu0 %v4294, 24
  %v5267 = vpop.permute.xlu0 %5266
  %5268 = vrot.lane.b32.xlu0 %v4295, 24
  %v5269 = vpop.permute.xlu0 %5268
  %5270 = vrot.lane.b32.xlu0 %v4296, 24
  %v5271 = vpop.permute.xlu0 %5270
  %5272 = vrot.lane.b32.xlu0 %v4297, 24
  %v5273 = vpop.permute.xlu0 %5272
  %5274 = vrot.lane.b32.xlu0 %v4298, 24
  %v5275 = vpop.permute.xlu0 %5274
  %5276 = vrot.lane.b32.xlu0 %v4299, 24
  %v5277 = vpop.permute.xlu0 %5276
  %5278 = vrot.lane.b32.xlu0 %v4300, 24
  %v5279 = vpop.permute.xlu0 %5278
  %5280 = vrot.lane.b32.xlu0 %v4301, 24
  %v5281 = vpop.permute.xlu0 %5280
  %5282 = vrot.lane.b32.xlu0 %v4302, 24
  %v5283 = vpop.permute.xlu0 %5282
  %5284 = vrot.lane.b32.xlu0 %v4303, 24
  %v5285 = vpop.permute.xlu0 %5284
  %5286 = vrot.lane.b32.xlu0 %v4304, 24
  %v5287 = vpop.permute.xlu0 %5286
  %5288 = vrot.lane.b32.xlu0 %v4305, 24
  %v5289 = vpop.permute.xlu0 %5288
  %5290 = vrot.lane.b32.xlu0 %v4306, 24
  %v5291 = vpop.permute.xlu0 %5290
  %5292 = vrot.lane.b32.xlu0 %v4307, 24
  %v5293 = vpop.permute.xlu0 %5292
  %5294 = vrot.lane.b32.xlu0 %v4308, 24
  %v5295 = vpop.permute.xlu0 %5294
  %5296 = vrot.lane.b32.xlu0 %v4309, 24
  %v5297 = vpop.permute.xlu0 %5296
  %5298 = vrot.lane.b32.xlu0 %v4310, 24
  %v5299 = vpop.permute.xlu0 %5298
  %5300 = vrot.lane.b32.xlu0 %v4311, 24
  %v5301 = vpop.permute.xlu0 %5300
  %5302 = vrot.lane.b32.xlu0 %v4312, 24
  %v5303 = vpop.permute.xlu0 %5302
  %5304 = vrot.lane.b32.xlu0 %v4313, 24
  %v5305 = vpop.permute.xlu0 %5304
  %5306 = vrot.lane.b32.xlu0 %v4314, 24
  %v5307 = vpop.permute.xlu0 %5306
  %5308 = vrot.lane.b32.xlu0 %v4315, 24
  %v5309 = vpop.permute.xlu0 %5308
  %5310 = vrot.lane.b32.xlu0 %v4316, 24
  %v5311 = vpop.permute.xlu0 %5310
  %5312 = vrot.lane.b32.xlu0 %v4317, 24
  %v5313 = vpop.permute.xlu0 %5312
  %5314 = vrot.lane.b32.xlu0 %v4318, 24
  %v5315 = vpop.permute.xlu0 %5314
  %5316 = vrot.lane.b32.xlu0 %v4319, 24
  %v5317 = vpop.permute.xlu0 %5316
  %5318 = vrot.lane.b32.xlu0 %v4320, 24
  %v5319 = vpop.permute.xlu0 %5318
  %5320 = vrot.lane.b32.xlu0 %v4321, 24
  %v5321 = vpop.permute.xlu0 %5320
  %5322 = vrot.lane.b32.xlu0 %v4322, 24
  %v5323 = vpop.permute.xlu0 %5322
  %5324 = vrot.lane.b32.xlu0 %v4323, 24
  %v5325 = vpop.permute.xlu0 %5324
  %5326 = vrot.lane.b32.xlu0 %v4324, 24
  %v5327 = vpop.permute.xlu0 %5326
  %5328 = vrot.lane.b32.xlu0 %v4325, 24
  %v5329 = vpop.permute.xlu0 %5328
  %5330 = vrot.lane.b32.xlu0 %v4326, 24
  %v5331 = vpop.permute.xlu0 %5330
  %5332 = vrot.lane.b32.xlu0 %v4327, 24
  %v5333 = vpop.permute.xlu0 %5332
  %5334 = vrot.lane.b32.xlu0 %v4328, 24
  %v5335 = vpop.permute.xlu0 %5334
  %5336 = vrot.lane.b32.xlu0 %v4329, 24
  %v5337 = vpop.permute.xlu0 %5336
  %5338 = vrot.lane.b32.xlu0 %v4330, 24
  %v5339 = vpop.permute.xlu0 %5338
  %5340 = vrot.lane.b32.xlu0 %v4331, 24
  %v5341 = vpop.permute.xlu0 %5340
  %5342 = vrot.lane.b32.xlu0 %v4332, 24
  %v5343 = vpop.permute.xlu0 %5342
  %5344 = vrot.lane.b32.xlu0 %v4333, 24
  %v5345 = vpop.permute.xlu0 %5344
  %5346 = vrot.lane.b32.xlu0 %v4334, 24
  %v5347 = vpop.permute.xlu0 %5346
  %5348 = vrot.lane.b32.xlu0 %v4335, 24
  %v5349 = vpop.permute.xlu0 %5348
  %5350 = vrot.lane.b32.xlu0 %v4336, 24
  %v5351 = vpop.permute.xlu0 %5350
  %5352 = vrot.lane.b32.xlu0 %v4337, 24
  %v5353 = vpop.permute.xlu0 %5352
  %5354 = vrot.lane.b32.xlu0 %v4338, 24
  %v5355 = vpop.permute.xlu0 %5354
  %5356 = vrot.lane.b32.xlu0 %v4339, 24
  %v5357 = vpop.permute.xlu0 %5356
  %5358 = vrot.lane.b32.xlu0 %v4340, 24
  %v5359 = vpop.permute.xlu0 %5358
  %5360 = vrot.lane.b32.xlu0 %v4341, 24
  %v5361 = vpop.permute.xlu0 %5360
  %5362 = vrot.lane.b32.xlu0 %v4342, 24
  %v5363 = vpop.permute.xlu0 %5362
  %5364 = vrot.lane.b32.xlu0 %v4343, 24
  %v5365 = vpop.permute.xlu0 %5364
  %5366 = vrot.lane.b32.xlu0 %v4344, 24
  %v5367 = vpop.permute.xlu0 %5366
  %5368 = vrot.lane.b32.xlu0 %v4345, 24
  %v5369 = vpop.permute.xlu0 %5368
  %5370 = vrot.lane.b32.xlu0 %v4346, 24
  %v5371 = vpop.permute.xlu0 %5370
  %5500 = vrot.lane.b32.xlu0 %v4347, 32
  %v5501 = vpop.permute.xlu0 %5500
  %5502 = vrot.lane.b32.xlu0 %v4348, 32
  %v5503 = vpop.permute.xlu0 %5502
  %5504 = vrot.lane.b32.xlu0 %v4349, 32
  %v5505 = vpop.permute.xlu0 %5504
  %5506 = vrot.lane.b32.xlu0 %v4350, 32
  %v5507 = vpop.permute.xlu0 %5506
  %5508 = vrot.lane.b32.xlu0 %v4351, 32
  %v5509 = vpop.permute.xlu0 %5508
  %5510 = vrot.lane.b32.xlu0 %v4352, 32
  %v5511 = vpop.permute.xlu0 %5510
  %5512 = vrot.lane.b32.xlu0 %v4353, 32
  %v5513 = vpop.permute.xlu0 %5512
  %5514 = vrot.lane.b32.xlu0 %v4354, 32
  %v5515 = vpop.permute.xlu0 %5514
  %5516 = vrot.lane.b32.xlu0 %v4355, 32
  %v5517 = vpop.permute.xlu0 %5516
  %5518 = vrot.lane.b32.xlu0 %v4356, 32
  %v5519 = vpop.permute.xlu0 %5518
  %5520 = vrot.lane.b32.xlu0 %v4357, 32
  %v5521 = vpop.permute.xlu0 %5520
  %5522 = vrot.lane.b32.xlu0 %v4358, 32
  %v5523 = vpop.permute.xlu0 %5522
  %5524 = vrot.lane.b32.xlu0 %v4359, 32
  %v5525 = vpop.permute.xlu0 %5524
  %5526 = vrot.lane.b32.xlu0 %v4360, 32
  %v5527 = vpop.permute.xlu0 %5526
  %5528 = vrot.lane.b32.xlu0 %v4361, 32
  %v5529 = vpop.permute.xlu0 %5528
  %5530 = vrot.lane.b32.xlu0 %v4362, 32
  %v5531 = vpop.permute.xlu0 %5530
  %5532 = vrot.lane.b32.xlu0 %v4363, 32
  %v5533 = vpop.permute.xlu0 %5532
  %5534 = vrot.lane.b32.xlu0 %v4364, 32
  %v5535 = vpop.permute.xlu0 %5534
  %5536 = vrot.lane.b32.xlu0 %v4365, 32
  %v5537 = vpop.permute.xlu0 %5536
  %5538 = vrot.lane.b32.xlu0 %v4366, 32
  %v5539 = vpop.permute.xlu0 %5538
  %5540 = vrot.lane.b32.xlu0 %v4367, 32
  %v5541 = vpop.permute.xlu0 %5540
  %5542 = vrot.lane.b32.xlu0 %v4368, 32
  %v5543 = vpop.permute.xlu0 %5542
  %5544 = vrot.lane.b32.xlu0 %v4369, 32
  %v5545 = vpop.permute.xlu0 %5544
  %5546 = vrot.lane.b32.xlu0 %v4370, 32
  %v5547 = vpop.permute.xlu0 %5546
  %5548 = vrot.lane.b32.xlu0 %v4371, 32
  %v5549 = vpop.permute.xlu0 %5548
  %5550 = vrot.lane.b32.xlu0 %v4372, 32
  %v5551 = vpop.permute.xlu0 %5550
  %5552 = vrot.lane.b32.xlu0 %v4373, 32
  %v5553 = vpop.permute.xlu0 %5552
  %5554 = vrot.lane.b32.xlu0 %v4374, 32
  %v5555 = vpop.permute.xlu0 %5554
  %5556 = vrot.lane.b32.xlu0 %v4375, 32
  %v5557 = vpop.permute.xlu0 %5556
  %5558 = vrot.lane.b32.xlu0 %v4376, 32
  %v5559 = vpop.permute.xlu0 %5558
  %5560 = vrot.lane.b32.xlu0 %v4377, 32
  %v5561 = vpop.permute.xlu0 %5560
  %5562 = vrot.lane.b32.xlu0 %v4378, 32
  %v5563 = vpop.permute.xlu0 %5562
  %5564 = vrot.lane.b32.xlu0 %v4379, 32
  %v5565 = vpop.permute.xlu0 %5564
  %5566 = vrot.lane.b32.xlu0 %v4380, 32
  %v5567 = vpop.permute.xlu0 %5566
  %5568 = vrot.lane.b32.xlu0 %v4381, 32
  %v5569 = vpop.permute.xlu0 %5568
  %5570 = vrot.lane.b32.xlu0 %v4382, 32
  %v5571 = vpop.permute.xlu0 %5570
  %5572 = vrot.lane.b32.xlu0 %v4383, 32
  %v5573 = vpop.permute.xlu0 %5572
  %5574 = vrot.lane.b32.xlu0 %v4384, 32
  %v5575 = vpop.permute.xlu0 %5574
  %5576 = vrot.lane.b32.xlu0 %v4385, 32
  %v5577 = vpop.permute.xlu0 %5576
  %5578 = vrot.lane.b32.xlu0 %v4386, 32
  %v5579 = vpop.permute.xlu0 %5578
  %5580 = vrot.lane.b32.xlu0 %v4387, 32
  %v5581 = vpop.permute.xlu0 %5580
  %5582 = vrot.lane.b32.xlu0 %v4388, 32
  %v5583 = vpop.permute.xlu0 %5582
  %5584 = vrot.lane.b32.xlu0 %v4389, 32
  %v5585 = vpop.permute.xlu0 %5584
  %5586 = vrot.lane.b32.xlu0 %v4390, 32
  %v5587 = vpop.permute.xlu0 %5586
  %5588 = vrot.lane.b32.xlu0 %v4391, 32
  %v5589 = vpop.permute.xlu0 %5588
  %5590 = vrot.lane.b32.xlu0 %v4392, 32
  %v5591 = vpop.permute.xlu0 %5590
  %5592 = vrot.lane.b32.xlu0 %v4393, 32
  %v5593 = vpop.permute.xlu0 %5592
  %5594 = vrot.lane.b32.xlu0 %v4394, 32
  %v5595 = vpop.permute.xlu0 %5594
  %5596 = vrot.lane.b32.xlu0 %v4395, 32
  %v5597 = vpop.permute.xlu0 %5596
  %5598 = vrot.lane.b32.xlu0 %v4396, 32
  %v5599 = vpop.permute.xlu0 %5598
  %5600 = vrot.lane.b32.xlu0 %v4397, 32
  %v5601 = vpop.permute.xlu0 %5600
  %5602 = vrot.lane.b32.xlu0 %v4398, 32
  %v5603 = vpop.permute.xlu0 %5602
  %5604 = vrot.lane.b32.xlu0 %v4399, 32
  %v5605 = vpop.permute.xlu0 %5604
  %5606 = vrot.lane.b32.xlu0 %v4400, 32
  %v5607 = vpop.permute.xlu0 %5606
  %5608 = vrot.lane.b32.xlu0 %v4401, 32
  %v5609 = vpop.permute.xlu0 %5608
  %5610 = vrot.lane.b32.xlu0 %v4402, 32
  %v5611 = vpop.permute.xlu0 %5610
  %5612 = vrot.lane.b32.xlu0 %v4403, 32
  %v5613 = vpop.permute.xlu0 %5612
  %5614 = vrot.lane.b32.xlu0 %v4404, 32
  %v5615 = vpop.permute.xlu0 %5614
  %5616 = vrot.lane.b32.xlu0 %v4405, 32
  %v5617 = vpop.permute.xlu0 %5616
  %5618 = vrot.lane.b32.xlu0 %v4406, 32
  %v5619 = vpop.permute.xlu0 %5618
  %5620 = vrot.lane.b32.xlu0 %v4407, 32
  %v5621 = vpop.permute.xlu0 %5620
  %5622 = vrot.lane.b32.xlu0 %v4408, 32
  %v5623 = vpop.permute.xlu0 %5622
  %5624 = vrot.lane.b32.xlu0 %v4409, 32
  %v5625 = vpop.permute.xlu0 %5624
  %5626 = vrot.lane.b32.xlu0 %v4410, 32
  %v5627 = vpop.permute.xlu0 %5626
  %5756 = vrot.lane.b32.xlu0 %v4411, 40
  %v5757 = vpop.permute.xlu0 %5756
  %5758 = vrot.lane.b32.xlu0 %v4412, 40
  %v5759 = vpop.permute.xlu0 %5758
  %5760 = vrot.lane.b32.xlu0 %v4413, 40
  %v5761 = vpop.permute.xlu0 %5760
  %5762 = vrot.lane.b32.xlu0 %v4414, 40
  %v5763 = vpop.permute.xlu0 %5762
  %5764 = vrot.lane.b32.xlu0 %v4415, 40
  %v5765 = vpop.permute.xlu0 %5764
  %5766 = vrot.lane.b32.xlu0 %v4416, 40
  %v5767 = vpop.permute.xlu0 %5766
  %5768 = vrot.lane.b32.xlu0 %v4417, 40
  %v5769 = vpop.permute.xlu0 %5768
  %5770 = vrot.lane.b32.xlu0 %v4418, 40
  %v5771 = vpop.permute.xlu0 %5770
  %5772 = vrot.lane.b32.xlu0 %v4419, 40
  %v5773 = vpop.permute.xlu0 %5772
  %5774 = vrot.lane.b32.xlu0 %v4420, 40
  %v5775 = vpop.permute.xlu0 %5774
  %5776 = vrot.lane.b32.xlu0 %v4421, 40
  %v5777 = vpop.permute.xlu0 %5776
  %5778 = vrot.lane.b32.xlu0 %v4422, 40
  %v5779 = vpop.permute.xlu0 %5778
  %5780 = vrot.lane.b32.xlu0 %v4423, 40
  %v5781 = vpop.permute.xlu0 %5780
  %5782 = vrot.lane.b32.xlu0 %v4424, 40
  %v5783 = vpop.permute.xlu0 %5782
  %5784 = vrot.lane.b32.xlu0 %v4425, 40
  %v5785 = vpop.permute.xlu0 %5784
  %5786 = vrot.lane.b32.xlu0 %v4426, 40
  %v5787 = vpop.permute.xlu0 %5786
  %5788 = vrot.lane.b32.xlu0 %v4427, 40
  %v5789 = vpop.permute.xlu0 %5788
  %5790 = vrot.lane.b32.xlu0 %v4428, 40
  %v5791 = vpop.permute.xlu0 %5790
  %5792 = vrot.lane.b32.xlu0 %v4429, 40
  %v5793 = vpop.permute.xlu0 %5792
  %5794 = vrot.lane.b32.xlu0 %v4430, 40
  %v5795 = vpop.permute.xlu0 %5794
  %5796 = vrot.lane.b32.xlu0 %v4431, 40
  %v5797 = vpop.permute.xlu0 %5796
  %5798 = vrot.lane.b32.xlu0 %v4432, 40
  %v5799 = vpop.permute.xlu0 %5798
  %5800 = vrot.lane.b32.xlu0 %v4433, 40
  %v5801 = vpop.permute.xlu0 %5800
  %5802 = vrot.lane.b32.xlu0 %v4434, 40
  %v5803 = vpop.permute.xlu0 %5802
  %5804 = vrot.lane.b32.xlu0 %v4435, 40
  %v5805 = vpop.permute.xlu0 %5804
  %5806 = vrot.lane.b32.xlu0 %v4436, 40
  %v5807 = vpop.permute.xlu0 %5806
  %5808 = vrot.lane.b32.xlu0 %v4437, 40
  %v5809 = vpop.permute.xlu0 %5808
  %5810 = vrot.lane.b32.xlu0 %v4438, 40
  %v5811 = vpop.permute.xlu0 %5810
  %5812 = vrot.lane.b32.xlu0 %v4439, 40
  %v5813 = vpop.permute.xlu0 %5812
  %5814 = vrot.lane.b32.xlu0 %v4440, 40
  %v5815 = vpop.permute.xlu0 %5814
  %5816 = vrot.lane.b32.xlu0 %v4441, 40
  %v5817 = vpop.permute.xlu0 %5816
  %5818 = vrot.lane.b32.xlu0 %v4442, 40
  %v5819 = vpop.permute.xlu0 %5818
  %5820 = vrot.lane.b32.xlu0 %v4443, 40
  %v5821 = vpop.permute.xlu0 %5820
  %5822 = vrot.lane.b32.xlu0 %v4444, 40
  %v5823 = vpop.permute.xlu0 %5822
  %5824 = vrot.lane.b32.xlu0 %v4445, 40
  %v5825 = vpop.permute.xlu0 %5824
  %5826 = vrot.lane.b32.xlu0 %v4446, 40
  %v5827 = vpop.permute.xlu0 %5826
  %5828 = vrot.lane.b32.xlu0 %v4447, 40
  %v5829 = vpop.permute.xlu0 %5828
  %5830 = vrot.lane.b32.xlu0 %v4448, 40
  %v5831 = vpop.permute.xlu0 %5830
  %5832 = vrot.lane.b32.xlu0 %v4449, 40
  %v5833 = vpop.permute.xlu0 %5832
  %5834 = vrot.lane.b32.xlu0 %v4450, 40
  %v5835 = vpop.permute.xlu0 %5834
  %5836 = vrot.lane.b32.xlu0 %v4451, 40
  %v5837 = vpop.permute.xlu0 %5836
  %5838 = vrot.lane.b32.xlu0 %v4452, 40
  %v5839 = vpop.permute.xlu0 %5838
  %5840 = vrot.lane.b32.xlu0 %v4453, 40
  %v5841 = vpop.permute.xlu0 %5840
  %5842 = vrot.lane.b32.xlu0 %v4454, 40
  %v5843 = vpop.permute.xlu0 %5842
  %5844 = vrot.lane.b32.xlu0 %v4455, 40
  %v5845 = vpop.permute.xlu0 %5844
  %5846 = vrot.lane.b32.xlu0 %v4456, 40
  %v5847 = vpop.permute.xlu0 %5846
  %5848 = vrot.lane.b32.xlu0 %v4457, 40
  %v5849 = vpop.permute.xlu0 %5848
  %5850 = vrot.lane.b32.xlu0 %v4458, 40
  %v5851 = vpop.permute.xlu0 %5850
  %5852 = vrot.lane.b32.xlu0 %v4459, 40
  %v5853 = vpop.permute.xlu0 %5852
  %5854 = vrot.lane.b32.xlu0 %v4460, 40
  %v5855 = vpop.permute.xlu0 %5854
  %5856 = vrot.lane.b32.xlu0 %v4461, 40
  %v5857 = vpop.permute.xlu0 %5856
  %5858 = vrot.lane.b32.xlu0 %v4462, 40
  %v5859 = vpop.permute.xlu0 %5858
  %5860 = vrot.lane.b32.xlu0 %v4463, 40
  %v5861 = vpop.permute.xlu0 %5860
  %5862 = vrot.lane.b32.xlu0 %v4464, 40
  %v5863 = vpop.permute.xlu0 %5862
  %5864 = vrot.lane.b32.xlu0 %v4465, 40
  %v5865 = vpop.permute.xlu0 %5864
  %5866 = vrot.lane.b32.xlu0 %v4466, 40
  %v5867 = vpop.permute.xlu0 %5866
  %5868 = vrot.lane.b32.xlu0 %v4467, 40
  %v5869 = vpop.permute.xlu0 %5868
  %5870 = vrot.lane.b32.xlu0 %v4468, 40
  %v5871 = vpop.permute.xlu0 %5870
  %5872 = vrot.lane.b32.xlu0 %v4469, 40
  %v5873 = vpop.permute.xlu0 %5872
  %5874 = vrot.lane.b32.xlu0 %v4470, 40
  %v5875 = vpop.permute.xlu0 %5874
  %5876 = vrot.lane.b32.xlu0 %v4471, 40
  %v5877 = vpop.permute.xlu0 %5876
  %5878 = vrot.lane.b32.xlu0 %v4472, 40
  %v5879 = vpop.permute.xlu0 %5878
  %5880 = vrot.lane.b32.xlu0 %v4473, 40
  %v5881 = vpop.permute.xlu0 %5880
  %5882 = vrot.lane.b32.xlu0 %v4474, 40
  %v5883 = vpop.permute.xlu0 %5882
  %6012 = vrot.lane.b32.xlu0 %v4476, 48
  %v6013 = vpop.permute.xlu0 %6012
  %6014 = vrot.lane.b32.xlu0 %v4477, 48
  %v6015 = vpop.permute.xlu0 %6014
  %6016 = vrot.lane.b32.xlu0 %v4478, 48
  %v6017 = vpop.permute.xlu0 %6016
  %6018 = vrot.lane.b32.xlu0 %v4479, 48
  %v6019 = vpop.permute.xlu0 %6018
  %6020 = vrot.lane.b32.xlu0 %v4480, 48
  %v6021 = vpop.permute.xlu0 %6020
  %6022 = vrot.lane.b32.xlu0 %v4481, 48
  %v6023 = vpop.permute.xlu0 %6022
  %6024 = vrot.lane.b32.xlu0 %v4482, 48
  %v6025 = vpop.permute.xlu0 %6024
  %6026 = vrot.lane.b32.xlu0 %v4483, 48
  %v6027 = vpop.permute.xlu0 %6026
  %6028 = vrot.lane.b32.xlu0 %v4484, 48
  %v6029 = vpop.permute.xlu0 %6028
  %6030 = vrot.lane.b32.xlu0 %v4485, 48
  %v6031 = vpop.permute.xlu0 %6030
  %6032 = vrot.lane.b32.xlu0 %v4486, 48
  %v6033 = vpop.permute.xlu0 %6032
  %6034 = vrot.lane.b32.xlu0 %v4487, 48
  %v6035 = vpop.permute.xlu0 %6034
  %6036 = vrot.lane.b32.xlu0 %v4488, 48
  %v6037 = vpop.permute.xlu0 %6036
  %6038 = vrot.lane.b32.xlu0 %v4489, 48
  %v6039 = vpop.permute.xlu0 %6038
  %6040 = vrot.lane.b32.xlu0 %v4490, 48
  %v6041 = vpop.permute.xlu0 %6040
  %6042 = vrot.lane.b32.xlu0 %v4491, 48
  %v6043 = vpop.permute.xlu0 %6042
  %6044 = vrot.lane.b32.xlu0 %v4492, 48
  %v6045 = vpop.permute.xlu0 %6044
  %6046 = vrot.lane.b32.xlu0 %v4493, 48
  %v6047 = vpop.permute.xlu0 %6046
  %6048 = vrot.lane.b32.xlu0 %v4494, 48
  %v6049 = vpop.permute.xlu0 %6048
  %6050 = vrot.lane.b32.xlu0 %v4495, 48
  %v6051 = vpop.permute.xlu0 %6050
  %6052 = vrot.lane.b32.xlu0 %v4496, 48
  %v6053 = vpop.permute.xlu0 %6052
  %6054 = vrot.lane.b32.xlu0 %v4497, 48
  %v6055 = vpop.permute.xlu0 %6054
  %6056 = vrot.lane.b32.xlu0 %v4498, 48
  %v6057 = vpop.permute.xlu0 %6056
  %6058 = vrot.lane.b32.xlu0 %v4499, 48
  %v6059 = vpop.permute.xlu0 %6058
  %6060 = vrot.lane.b32.xlu0 %v4500, 48
  %v6061 = vpop.permute.xlu0 %6060
  %6062 = vrot.lane.b32.xlu0 %v4501, 48
  %v6063 = vpop.permute.xlu0 %6062
  %6064 = vrot.lane.b32.xlu0 %v4502, 48
  %v6065 = vpop.permute.xlu0 %6064
  %6066 = vrot.lane.b32.xlu0 %v4503, 48
  %v6067 = vpop.permute.xlu0 %6066
  %6068 = vrot.lane.b32.xlu0 %v4504, 48
  %v6069 = vpop.permute.xlu0 %6068
  %6070 = vrot.lane.b32.xlu0 %v4505, 48
  %v6071 = vpop.permute.xlu0 %6070
  %6072 = vrot.lane.b32.xlu0 %v4506, 48
  %v6073 = vpop.permute.xlu0 %6072
  %6074 = vrot.lane.b32.xlu0 %v4507, 48
  %v6075 = vpop.permute.xlu0 %6074
  %6076 = vrot.lane.b32.xlu0 %v4508, 48
  %v6077 = vpop.permute.xlu0 %6076
  %6078 = vrot.lane.b32.xlu0 %v4509, 48
  %v6079 = vpop.permute.xlu0 %6078
  %6080 = vrot.lane.b32.xlu0 %v4510, 48
  %v6081 = vpop.permute.xlu0 %6080
  %6082 = vrot.lane.b32.xlu0 %v4511, 48
  %v6083 = vpop.permute.xlu0 %6082
  %6084 = vrot.lane.b32.xlu0 %v4512, 48
  %v6085 = vpop.permute.xlu0 %6084
  %6086 = vrot.lane.b32.xlu0 %v4513, 48
  %v6087 = vpop.permute.xlu0 %6086
  %6088 = vrot.lane.b32.xlu0 %v4514, 48
  %v6089 = vpop.permute.xlu0 %6088
  %6090 = vrot.lane.b32.xlu0 %v4515, 48
  %v6091 = vpop.permute.xlu0 %6090
  %6092 = vrot.lane.b32.xlu0 %v4516, 48
  %v6093 = vpop.permute.xlu0 %6092
  %6094 = vrot.lane.b32.xlu0 %v4517, 48
  %v6095 = vpop.permute.xlu0 %6094
  %6096 = vrot.lane.b32.xlu0 %v4518, 48
  %v6097 = vpop.permute.xlu0 %6096
  %6098 = vrot.lane.b32.xlu0 %v4519, 48
  %v6099 = vpop.permute.xlu0 %6098
  %6100 = vrot.lane.b32.xlu0 %v4520, 48
  %v6101 = vpop.permute.xlu0 %6100
  %6102 = vrot.lane.b32.xlu0 %v4521, 48
  %v6103 = vpop.permute.xlu0 %6102
  %6104 = vrot.lane.b32.xlu0 %v4522, 48
  %v6105 = vpop.permute.xlu0 %6104
  %6106 = vrot.lane.b32.xlu0 %v4523, 48
  %v6107 = vpop.permute.xlu0 %6106
  %6108 = vrot.lane.b32.xlu0 %v4524, 48
  %v6109 = vpop.permute.xlu0 %6108
  %6110 = vrot.lane.b32.xlu0 %v4525, 48
  %v6111 = vpop.permute.xlu0 %6110
  %6112 = vrot.lane.b32.xlu0 %v4526, 48
  %v6113 = vpop.permute.xlu0 %6112
  %6114 = vrot.lane.b32.xlu0 %v4527, 48
  %v6115 = vpop.permute.xlu0 %6114
  %6116 = vrot.lane.b32.xlu0 %v4528, 48
  %v6117 = vpop.permute.xlu0 %6116
  %6118 = vrot.lane.b32.xlu0 %v4529, 48
  %v6119 = vpop.permute.xlu0 %6118
  %6120 = vrot.lane.b32.xlu0 %v4530, 48
  %v6121 = vpop.permute.xlu0 %6120
  %6122 = vrot.lane.b32.xlu0 %v4531, 48
  %v6123 = vpop.permute.xlu0 %6122
  %6124 = vrot.lane.b32.xlu0 %v4532, 48
  %v6125 = vpop.permute.xlu0 %6124
  %6126 = vrot.lane.b32.xlu0 %v4533, 48
  %v6127 = vpop.permute.xlu0 %6126
  %6128 = vrot.lane.b32.xlu0 %v4534, 48
  %v6129 = vpop.permute.xlu0 %6128
  %6130 = vrot.lane.b32.xlu0 %v4535, 48
  %v6131 = vpop.permute.xlu0 %6130
  %6132 = vrot.lane.b32.xlu0 %v4536, 48
  %v6133 = vpop.permute.xlu0 %6132
  %6134 = vrot.lane.b32.xlu0 %v4537, 48
  %v6135 = vpop.permute.xlu0 %6134
  %6136 = vrot.lane.b32.xlu0 %v4538, 48
  %v6137 = vpop.permute.xlu0 %6136
  %6138 = vrot.lane.b32.xlu0 %v4539, 48
  %v6139 = vpop.permute.xlu0 %6138
  %6268 = vrot.lane.b32.xlu0 %v4540, 56
  %v6269 = vpop.permute.xlu0 %6268
  %6270 = vrot.lane.b32.xlu0 %v4541, 56
  %v6271 = vpop.permute.xlu0 %6270
  %6272 = vrot.lane.b32.xlu0 %v4542, 56
  %v6273 = vpop.permute.xlu0 %6272
  %6274 = vrot.lane.b32.xlu0 %v4543, 56
  %v6275 = vpop.permute.xlu0 %6274
  %6276 = vrot.lane.b32.xlu0 %v4544, 56
  %v6277 = vpop.permute.xlu0 %6276
  %6278 = vrot.lane.b32.xlu0 %v4545, 56
  %v6279 = vpop.permute.xlu0 %6278
  %6280 = vrot.lane.b32.xlu0 %v4546, 56
  %v6281 = vpop.permute.xlu0 %6280
  %6282 = vrot.lane.b32.xlu0 %v4547, 56
  %v6283 = vpop.permute.xlu0 %6282
  %6284 = vrot.lane.b32.xlu0 %v4548, 56
  %v6285 = vpop.permute.xlu0 %6284
  %6286 = vrot.lane.b32.xlu0 %v4549, 56
  %v6287 = vpop.permute.xlu0 %6286
  %6288 = vrot.lane.b32.xlu0 %v4550, 56
  %v6289 = vpop.permute.xlu0 %6288
  %6290 = vrot.lane.b32.xlu0 %v4551, 56
  %v6291 = vpop.permute.xlu0 %6290
  %6292 = vrot.lane.b32.xlu0 %v4552, 56
  %v6293 = vpop.permute.xlu0 %6292
  %6294 = vrot.lane.b32.xlu0 %v4553, 56
  %v6295 = vpop.permute.xlu0 %6294
  %6296 = vrot.lane.b32.xlu0 %v4554, 56
  %v6297 = vpop.permute.xlu0 %6296
  %6298 = vrot.lane.b32.xlu0 %v4555, 56
  %v6299 = vpop.permute.xlu0 %6298
  %6300 = vrot.lane.b32.xlu0 %v4556, 56
  %v6301 = vpop.permute.xlu0 %6300
  %6302 = vrot.lane.b32.xlu0 %v4557, 56
  %v6303 = vpop.permute.xlu0 %6302
  %6304 = vrot.lane.b32.xlu0 %v4558, 56
  %v6305 = vpop.permute.xlu0 %6304
  %6306 = vrot.lane.b32.xlu0 %v4559, 56
  %v6307 = vpop.permute.xlu0 %6306
  %6308 = vrot.lane.b32.xlu0 %v4560, 56
  %v6309 = vpop.permute.xlu0 %6308
  %6310 = vrot.lane.b32.xlu0 %v4561, 56
  %v6311 = vpop.permute.xlu0 %6310
  %6312 = vrot.lane.b32.xlu0 %v4562, 56
  %v6313 = vpop.permute.xlu0 %6312
  %6314 = vrot.lane.b32.xlu0 %v4563, 56
  %v6315 = vpop.permute.xlu0 %6314
  %6316 = vrot.lane.b32.xlu0 %v4564, 56
  %v6317 = vpop.permute.xlu0 %6316
  %6318 = vrot.lane.b32.xlu0 %v4565, 56
  %v6319 = vpop.permute.xlu0 %6318
  %6320 = vrot.lane.b32.xlu0 %v4566, 56
  %v6321 = vpop.permute.xlu0 %6320
  %6322 = vrot.lane.b32.xlu0 %v4567, 56
  %v6323 = vpop.permute.xlu0 %6322
  %6324 = vrot.lane.b32.xlu0 %v4568, 56
  %v6325 = vpop.permute.xlu0 %6324
  %6326 = vrot.lane.b32.xlu0 %v4569, 56
  %v6327 = vpop.permute.xlu0 %6326
  %6328 = vrot.lane.b32.xlu0 %v4570, 56
  %v6329 = vpop.permute.xlu0 %6328
  %6330 = vrot.lane.b32.xlu0 %v4571, 56
  %v6331 = vpop.permute.xlu0 %6330
  %6332 = vrot.lane.b32.xlu0 %v4572, 56
  %v6333 = vpop.permute.xlu0 %6332
  %6334 = vrot.lane.b32.xlu0 %v4573, 56
  %v6335 = vpop.permute.xlu0 %6334
  %6336 = vrot.lane.b32.xlu0 %v4574, 56
  %v6337 = vpop.permute.xlu0 %6336
  %6338 = vrot.lane.b32.xlu0 %v4575, 56
  %v6339 = vpop.permute.xlu0 %6338
  %6340 = vrot.lane.b32.xlu0 %v4576, 56
  %v6341 = vpop.permute.xlu0 %6340
  %6342 = vrot.lane.b32.xlu0 %v4577, 56
  %v6343 = vpop.permute.xlu0 %6342
  %6344 = vrot.lane.b32.xlu0 %v4578, 56
  %v6345 = vpop.permute.xlu0 %6344
  %6346 = vrot.lane.b32.xlu0 %v4579, 56
  %v6347 = vpop.permute.xlu0 %6346
  %6348 = vrot.lane.b32.xlu0 %v4580, 56
  %v6349 = vpop.permute.xlu0 %6348
  %6350 = vrot.lane.b32.xlu0 %v4581, 56
  %v6351 = vpop.permute.xlu0 %6350
  %6352 = vrot.lane.b32.xlu0 %v4582, 56
  %v6353 = vpop.permute.xlu0 %6352
  %6354 = vrot.lane.b32.xlu0 %v4583, 56
  %v6355 = vpop.permute.xlu0 %6354
  %6356 = vrot.lane.b32.xlu0 %v4584, 56
  %v6357 = vpop.permute.xlu0 %6356
  %6358 = vrot.lane.b32.xlu0 %v4585, 56
  %v6359 = vpop.permute.xlu0 %6358
  %6360 = vrot.lane.b32.xlu0 %v4586, 56
  %v6361 = vpop.permute.xlu0 %6360
  %6362 = vrot.lane.b32.xlu0 %v4587, 56
  %v6363 = vpop.permute.xlu0 %6362
  %6364 = vrot.lane.b32.xlu0 %v4588, 56
  %v6365 = vpop.permute.xlu0 %6364
  %6366 = vrot.lane.b32.xlu0 %v4589, 56
  %v6367 = vpop.permute.xlu0 %6366
  %6368 = vrot.lane.b32.xlu0 %v4590, 56
  %v6369 = vpop.permute.xlu0 %6368
  %6370 = vrot.lane.b32.xlu0 %v4591, 56
  %v6371 = vpop.permute.xlu0 %6370
  %6372 = vrot.lane.b32.xlu0 %v4592, 56
  %v6373 = vpop.permute.xlu0 %6372
  %6374 = vrot.lane.b32.xlu0 %v4593, 56
  %v6375 = vpop.permute.xlu0 %6374
  %6376 = vrot.lane.b32.xlu0 %v4594, 56
  %v6377 = vpop.permute.xlu0 %6376
  %6378 = vrot.lane.b32.xlu0 %v4595, 56
  %v6379 = vpop.permute.xlu0 %6378
  %6380 = vrot.lane.b32.xlu0 %v4596, 56
  %v6381 = vpop.permute.xlu0 %6380
  %6382 = vrot.lane.b32.xlu0 %v4597, 56
  %v6383 = vpop.permute.xlu0 %6382
  %6384 = vrot.lane.b32.xlu0 %v4598, 56
  %v6385 = vpop.permute.xlu0 %6384
  %6386 = vrot.lane.b32.xlu0 %v4599, 56
  %v6387 = vpop.permute.xlu0 %6386
  %6388 = vrot.lane.b32.xlu0 %v4600, 56
  %v6389 = vpop.permute.xlu0 %6388
  %6390 = vrot.lane.b32.xlu0 %v4601, 56
  %v6391 = vpop.permute.xlu0 %6390
  %6392 = vrot.lane.b32.xlu0 %v4602, 56
  %v6393 = vpop.permute.xlu0 %6392
  %6394 = vrot.lane.b32.xlu0 %v4603, 56
  %v6395 = vpop.permute.xlu0 %6394
  %6524 = vrot.lane.b32.xlu0 %v4604, 64
  %v6525 = vpop.permute.xlu0 %6524
  %6526 = vrot.lane.b32.xlu0 %v4605, 64
  %v6527 = vpop.permute.xlu0 %6526
  %6528 = vrot.lane.b32.xlu0 %v4606, 64
  %v6529 = vpop.permute.xlu0 %6528
  %6530 = vrot.lane.b32.xlu0 %v4607, 64
  %v6531 = vpop.permute.xlu0 %6530
  %6532 = vrot.lane.b32.xlu0 %v4608, 64
  %v6533 = vpop.permute.xlu0 %6532
  %6534 = vrot.lane.b32.xlu0 %v4609, 64
  %v6535 = vpop.permute.xlu0 %6534
  %6536 = vrot.lane.b32.xlu0 %v4610, 64
  %v6537 = vpop.permute.xlu0 %6536
  %6538 = vrot.lane.b32.xlu0 %v4611, 64
  %v6539 = vpop.permute.xlu0 %6538
  %6540 = vrot.lane.b32.xlu0 %v4612, 64
  %v6541 = vpop.permute.xlu0 %6540
  %6542 = vrot.lane.b32.xlu0 %v4613, 64
  %v6543 = vpop.permute.xlu0 %6542
  %6544 = vrot.lane.b32.xlu0 %v4614, 64
  %v6545 = vpop.permute.xlu0 %6544
  %6546 = vrot.lane.b32.xlu0 %v4615, 64
  %v6547 = vpop.permute.xlu0 %6546
  %6548 = vrot.lane.b32.xlu0 %v4616, 64
  %v6549 = vpop.permute.xlu0 %6548
  %6550 = vrot.lane.b32.xlu0 %v4617, 64
  %v6551 = vpop.permute.xlu0 %6550
  %6552 = vrot.lane.b32.xlu0 %v4618, 64
  %v6553 = vpop.permute.xlu0 %6552
  %6554 = vrot.lane.b32.xlu0 %v4619, 64
  %v6555 = vpop.permute.xlu0 %6554
  %6556 = vrot.lane.b32.xlu0 %v4620, 64
  %v6557 = vpop.permute.xlu0 %6556
  %6558 = vrot.lane.b32.xlu0 %v4621, 64
  %v6559 = vpop.permute.xlu0 %6558
  %6560 = vrot.lane.b32.xlu0 %v4622, 64
  %v6561 = vpop.permute.xlu0 %6560
  %6562 = vrot.lane.b32.xlu0 %v4623, 64
  %v6563 = vpop.permute.xlu0 %6562
  %6564 = vrot.lane.b32.xlu0 %v4624, 64
  %v6565 = vpop.permute.xlu0 %6564
  %6566 = vrot.lane.b32.xlu0 %v4625, 64
  %v6567 = vpop.permute.xlu0 %6566
  %6568 = vrot.lane.b32.xlu0 %v4626, 64
  %v6569 = vpop.permute.xlu0 %6568
  %6570 = vrot.lane.b32.xlu0 %v4627, 64
  %v6571 = vpop.permute.xlu0 %6570
  %6572 = vrot.lane.b32.xlu0 %v4628, 64
  %v6573 = vpop.permute.xlu0 %6572
  %6574 = vrot.lane.b32.xlu0 %v4629, 64
  %v6575 = vpop.permute.xlu0 %6574
  %6576 = vrot.lane.b32.xlu0 %v4630, 64
  %v6577 = vpop.permute.xlu0 %6576
  %6578 = vrot.lane.b32.xlu0 %v4631, 64
  %v6579 = vpop.permute.xlu0 %6578
  %6580 = vrot.lane.b32.xlu0 %v4632, 64
  %v6581 = vpop.permute.xlu0 %6580
  %6582 = vrot.lane.b32.xlu0 %v4633, 64
  %v6583 = vpop.permute.xlu0 %6582
  %6584 = vrot.lane.b32.xlu0 %v4634, 64
  %v6585 = vpop.permute.xlu0 %6584
  %6586 = vrot.lane.b32.xlu0 %v4635, 64
  %v6587 = vpop.permute.xlu0 %6586
  %6588 = vrot.lane.b32.xlu0 %v4636, 64
  %v6589 = vpop.permute.xlu0 %6588
  %6590 = vrot.lane.b32.xlu0 %v4637, 64
  %v6591 = vpop.permute.xlu0 %6590
  %6592 = vrot.lane.b32.xlu0 %v4638, 64
  %v6593 = vpop.permute.xlu0 %6592
  %6594 = vrot.lane.b32.xlu0 %v4639, 64
  %v6595 = vpop.permute.xlu0 %6594
  %6596 = vrot.lane.b32.xlu0 %v4640, 64
  %v6597 = vpop.permute.xlu0 %6596
  %6598 = vrot.lane.b32.xlu0 %v4641, 64
  %v6599 = vpop.permute.xlu0 %6598
  %6600 = vrot.lane.b32.xlu0 %v4642, 64
  %v6601 = vpop.permute.xlu0 %6600
  %6602 = vrot.lane.b32.xlu0 %v4643, 64
  %v6603 = vpop.permute.xlu0 %6602
  %6604 = vrot.lane.b32.xlu0 %v4644, 64
  %v6605 = vpop.permute.xlu0 %6604
  %6606 = vrot.lane.b32.xlu0 %v4645, 64
  %v6607 = vpop.permute.xlu0 %6606
  %6608 = vrot.lane.b32.xlu0 %v4646, 64
  %v6609 = vpop.permute.xlu0 %6608
  %6610 = vrot.lane.b32.xlu0 %v4647, 64
  %v6611 = vpop.permute.xlu0 %6610
  %6612 = vrot.lane.b32.xlu0 %v4648, 64
  %v6613 = vpop.permute.xlu0 %6612
  %6614 = vrot.lane.b32.xlu0 %v4649, 64
  %v6615 = vpop.permute.xlu0 %6614
  %6616 = vrot.lane.b32.xlu0 %v4650, 64
  %v6617 = vpop.permute.xlu0 %6616
  %6618 = vrot.lane.b32.xlu0 %v4651, 64
  %v6619 = vpop.permute.xlu0 %6618
  %6620 = vrot.lane.b32.xlu0 %v4652, 64
  %v6621 = vpop.permute.xlu0 %6620
  %6622 = vrot.lane.b32.xlu0 %v4653, 64
  %v6623 = vpop.permute.xlu0 %6622
  %6624 = vrot.lane.b32.xlu0 %v4654, 64
  %v6625 = vpop.permute.xlu0 %6624
  %6626 = vrot.lane.b32.xlu0 %v4655, 64
  %v6627 = vpop.permute.xlu0 %6626
  %6628 = vrot.lane.b32.xlu0 %v4656, 64
  %v6629 = vpop.permute.xlu0 %6628
  %6630 = vrot.lane.b32.xlu0 %v4657, 64
  %v6631 = vpop.permute.xlu0 %6630
  %6632 = vrot.lane.b32.xlu0 %v4658, 64
  %v6633 = vpop.permute.xlu0 %6632
  %6634 = vrot.lane.b32.xlu0 %v4659, 64
  %v6635 = vpop.permute.xlu0 %6634
  %6636 = vrot.lane.b32.xlu0 %v4660, 64
  %v6637 = vpop.permute.xlu0 %6636
  %6638 = vrot.lane.b32.xlu0 %v4661, 64
  %v6639 = vpop.permute.xlu0 %6638
  %6640 = vrot.lane.b32.xlu0 %v4662, 64
  %v6641 = vpop.permute.xlu0 %6640
  %6642 = vrot.lane.b32.xlu0 %v4663, 64
  %v6643 = vpop.permute.xlu0 %6642
  %6644 = vrot.lane.b32.xlu0 %v4664, 64
  %v6645 = vpop.permute.xlu0 %6644
  %6646 = vrot.lane.b32.xlu0 %v4665, 64
  %v6647 = vpop.permute.xlu0 %6646
  %6648 = vrot.lane.b32.xlu0 %v4666, 64
  %v6649 = vpop.permute.xlu0 %6648
  %6650 = vrot.lane.b32.xlu0 %v4667, 64
  %v6651 = vpop.permute.xlu0 %6650
  %v6716 = vsel %vm2949, %v4091, %v4733
  %v6717 = vsel %vm2949, %v4092, %v4735
  %v6718 = vsel %vm2949, %v4093, %v4737
  %v6719 = vsel %vm2949, %v4094, %v4739
  %v6720 = vsel %vm2949, %v4095, %v4741
  %v6721 = vsel %vm2949, %v4096, %v4743
  %v6722 = vsel %vm2949, %v4097, %v4745
  %v6723 = vsel %vm2949, %v4098, %v4747
  %v6724 = vsel %vm2949, %v4099, %v4749
  %v6725 = vsel %vm2949, %v4100, %v4751
  %v6726 = vsel %vm2949, %v4101, %v4753
  %v6727 = vsel %vm2949, %v4102, %v4755
  %v6728 = vsel %vm2949, %v4103, %v4757
  %v6729 = vsel %vm2949, %v4104, %v4759
  %v6730 = vsel %vm2949, %v4105, %v4761
  %v6731 = vsel %vm2949, %v4106, %v4763
  %v6732 = vsel %vm2949, %v4107, %v4765
  %v6733 = vsel %vm2949, %v4108, %v4767
  %v6734 = vsel %vm2949, %v4109, %v4769
  %v6735 = vsel %vm2949, %v4110, %v4771
  %v6736 = vsel %vm2949, %v4111, %v4773
  %v6737 = vsel %vm2949, %v4112, %v4775
  %v6738 = vsel %vm2949, %v4113, %v4777
  %v6739 = vsel %vm2949, %v4114, %v4779
  %v6740 = vsel %vm2949, %v4115, %v4781
  %v6741 = vsel %vm2949, %v4116, %v4783
  %v6742 = vsel %vm2949, %v4117, %v4785
  %v6743 = vsel %vm2949, %v4118, %v4787
  %v6744 = vsel %vm2949, %v4119, %v4789
  %v6745 = vsel %vm2949, %v4120, %v4791
  %v6746 = vsel %vm2949, %v4121, %v4793
  %v6747 = vsel %vm2949, %v4122, %v4795
  %v6748 = vsel %vm2949, %v4123, %v4797
  %v6749 = vsel %vm2949, %v4124, %v4799
  %v6750 = vsel %vm2949, %v4125, %v4801
  %v6751 = vsel %vm2949, %v4126, %v4803
  %v6752 = vsel %vm2949, %v4127, %v4805
  %v6753 = vsel %vm2949, %v4128, %v4807
  %v6754 = vsel %vm2949, %v4129, %v4809
  %v6755 = vsel %vm2949, %v4130, %v4811
  %v6756 = vsel %vm2949, %v4131, %v4813
  %v6757 = vsel %vm2949, %v4132, %v4815
  %v6758 = vsel %vm2949, %v4133, %v4817
  %v6759 = vsel %vm2949, %v4134, %v4819
  %v6760 = vsel %vm2949, %v4135, %v4821
  %v6761 = vsel %vm2949, %v4136, %v4823
  %v6762 = vsel %vm2949, %v4137, %v4825
  %v6763 = vsel %vm2949, %v4138, %v4827
  %v6764 = vsel %vm2949, %v4139, %v4829
  %v6765 = vsel %vm2949, %v4140, %v4831
  %v6766 = vsel %vm2949, %v4141, %v4833
  %v6767 = vsel %vm2949, %v4142, %v4835
  %v6768 = vsel %vm2949, %v4143, %v4837
  %v6769 = vsel %vm2949, %v4144, %v4839
  %v6770 = vsel %vm2949, %v4145, %v4841
  %v6771 = vsel %vm2949, %v4146, %v4843
  %v6772 = vsel %vm2949, %v4147, %v4845
  %v6773 = vsel %vm2949, %v4148, %v4847
  %v6774 = vsel %vm2949, %v4149, %v4849
  %v6775 = vsel %vm2949, %v4150, %v4851
  %v6776 = vsel %vm2949, %v4151, %v4853
  %v6777 = vsel %vm2949, %v4152, %v4855
  %v6778 = vsel %vm2949, %v4153, %v4857
  %v6779 = vsel %vm2949, %v4154, %v4859
  %v6780 = vsel %vm3079, %v6716, %v4989
  %v6781 = vsel %vm3079, %v6717, %v4991
  %v6782 = vsel %vm3079, %v6718, %v4993
  %v6783 = vsel %vm3079, %v6719, %v4995
  %v6784 = vsel %vm3079, %v6720, %v4997
  %v6785 = vsel %vm3079, %v6721, %v4999
  %v6786 = vsel %vm3079, %v6722, %v5001
  %v6787 = vsel %vm3079, %v6723, %v5003
  %v6788 = vsel %vm3079, %v6724, %v5005
  %v6789 = vsel %vm3079, %v6725, %v5007
  %v6790 = vsel %vm3079, %v6726, %v5009
  %v6791 = vsel %vm3079, %v6727, %v5011
  %v6792 = vsel %vm3079, %v6728, %v5013
  %v6793 = vsel %vm3079, %v6729, %v5015
  %v6794 = vsel %vm3079, %v6730, %v5017
  %v6795 = vsel %vm3079, %v6731, %v5019
  %v6796 = vsel %vm3079, %v6732, %v5021
  %v6797 = vsel %vm3079, %v6733, %v5023
  %v6798 = vsel %vm3079, %v6734, %v5025
  %v6799 = vsel %vm3079, %v6735, %v5027
  %v6800 = vsel %vm3079, %v6736, %v5029
  %v6801 = vsel %vm3079, %v6737, %v5031
  %v6802 = vsel %vm3079, %v6738, %v5033
  %v6803 = vsel %vm3079, %v6739, %v5035
  %v6804 = vsel %vm3079, %v6740, %v5037
  %v6805 = vsel %vm3079, %v6741, %v5039
  %v6806 = vsel %vm3079, %v6742, %v5041
  %v6807 = vsel %vm3079, %v6743, %v5043
  %v6808 = vsel %vm3079, %v6744, %v5045
  %v6809 = vsel %vm3079, %v6745, %v5047
  %v6810 = vsel %vm3079, %v6746, %v5049
  %v6811 = vsel %vm3079, %v6747, %v5051
  %v6812 = vsel %vm3079, %v6748, %v5053
  %v6813 = vsel %vm3079, %v6749, %v5055
  %v6814 = vsel %vm3079, %v6750, %v5057
  %v6815 = vsel %vm3079, %v6751, %v5059
  %v6816 = vsel %vm3079, %v6752, %v5061
  %v6817 = vsel %vm3079, %v6753, %v5063
  %v6818 = vsel %vm3079, %v6754, %v5065
  %v6819 = vsel %vm3079, %v6755, %v5067
  %v6820 = vsel %vm3079, %v6756, %v5069
  %v6821 = vsel %vm3079, %v6757, %v5071
  %v6822 = vsel %vm3079, %v6758, %v5073
  %v6823 = vsel %vm3079, %v6759, %v5075
  %v6824 = vsel %vm3079, %v6760, %v5077
  %v6825 = vsel %vm3079, %v6761, %v5079
  %v6826 = vsel %vm3079, %v6762, %v5081
  %v6827 = vsel %vm3079, %v6763, %v5083
  %v6828 = vsel %vm3079, %v6764, %v5085
  %v6829 = vsel %vm3079, %v6765, %v5087
  %v6830 = vsel %vm3079, %v6766, %v5089
  %v6831 = vsel %vm3079, %v6767, %v5091
  %v6832 = vsel %vm3079, %v6768, %v5093
  %v6833 = vsel %vm3079, %v6769, %v5095
  %v6834 = vsel %vm3079, %v6770, %v5097
  %v6835 = vsel %vm3079, %v6771, %v5099
  %v6836 = vsel %vm3079, %v6772, %v5101
  %v6837 = vsel %vm3079, %v6773, %v5103
  %v6838 = vsel %vm3079, %v6774, %v5105
  %v6839 = vsel %vm3079, %v6775, %v5107
  %v6840 = vsel %vm3079, %v6776, %v5109
  %v6841 = vsel %vm3079, %v6777, %v5111
  %v6842 = vsel %vm3079, %v6778, %v5113
  %v6843 = vsel %vm3079, %v6779, %v5115
  %v6844 = vsel %vm3209, %v6780, %v5245
  %v6845 = vsel %vm3209, %v6781, %v5247
  %v6846 = vsel %vm3209, %v6782, %v5249
  %v6847 = vsel %vm3209, %v6783, %v5251
  %v6848 = vsel %vm3209, %v6784, %v5253
  %v6849 = vsel %vm3209, %v6785, %v5255
  %v6850 = vsel %vm3209, %v6786, %v5257
  %v6851 = vsel %vm3209, %v6787, %v5259
  %v6852 = vsel %vm3209, %v6788, %v5261
  %v6853 = vsel %vm3209, %v6789, %v5263
  %v6854 = vsel %vm3209, %v6790, %v5265
  %v6855 = vsel %vm3209, %v6791, %v5267
  %v6856 = vsel %vm3209, %v6792, %v5269
  %v6857 = vsel %vm3209, %v6793, %v5271
  %v6858 = vsel %vm3209, %v6794, %v5273
  %v6859 = vsel %vm3209, %v6795, %v5275
  %v6860 = vsel %vm3209, %v6796, %v5277
  %v6861 = vsel %vm3209, %v6797, %v5279
  %v6862 = vsel %vm3209, %v6798, %v5281
  %v6863 = vsel %vm3209, %v6799, %v5283
  %v6864 = vsel %vm3209, %v6800, %v5285
  %v6865 = vsel %vm3209, %v6801, %v5287
  %v6866 = vsel %vm3209, %v6802, %v5289
  %v6867 = vsel %vm3209, %v6803, %v5291
  %v6868 = vsel %vm3209, %v6804, %v5293
  %v6869 = vsel %vm3209, %v6805, %v5295
  %v6870 = vsel %vm3209, %v6806, %v5297
  %v6871 = vsel %vm3209, %v6807, %v5299
  %v6872 = vsel %vm3209, %v6808, %v5301
  %v6873 = vsel %vm3209, %v6809, %v5303
  %v6874 = vsel %vm3209, %v6810, %v5305
  %v6875 = vsel %vm3209, %v6811, %v5307
  %v6876 = vsel %vm3209, %v6812, %v5309
  %v6877 = vsel %vm3209, %v6813, %v5311
  %v6878 = vsel %vm3209, %v6814, %v5313
  %v6879 = vsel %vm3209, %v6815, %v5315
  %v6880 = vsel %vm3209, %v6816, %v5317
  %v6881 = vsel %vm3209, %v6817, %v5319
  %v6882 = vsel %vm3209, %v6818, %v5321
  %v6883 = vsel %vm3209, %v6819, %v5323
  %v6884 = vsel %vm3209, %v6820, %v5325
  %v6885 = vsel %vm3209, %v6821, %v5327
  %v6886 = vsel %vm3209, %v6822, %v5329
  %v6887 = vsel %vm3209, %v6823, %v5331
  %v6888 = vsel %vm3209, %v6824, %v5333
  %v6889 = vsel %vm3209, %v6825, %v5335
  %v6890 = vsel %vm3209, %v6826, %v5337
  %v6891 = vsel %vm3209, %v6827, %v5339
  %v6892 = vsel %vm3209, %v6828, %v5341
  %v6893 = vsel %vm3209, %v6829, %v5343
  %v6894 = vsel %vm3209, %v6830, %v5345
  %v6895 = vsel %vm3209, %v6831, %v5347
  %v6896 = vsel %vm3209, %v6832, %v5349
  %v6897 = vsel %vm3209, %v6833, %v5351
  %v6898 = vsel %vm3209, %v6834, %v5353
  %v6899 = vsel %vm3209, %v6835, %v5355
  %v6900 = vsel %vm3209, %v6836, %v5357
  %v6901 = vsel %vm3209, %v6837, %v5359
  %v6902 = vsel %vm3209, %v6838, %v5361
  %v6903 = vsel %vm3209, %v6839, %v5363
  %v6904 = vsel %vm3209, %v6840, %v5365
  %v6905 = vsel %vm3209, %v6841, %v5367
  %v6906 = vsel %vm3209, %v6842, %v5369
  %v6907 = vsel %vm3209, %v6843, %v5371
  %v6908 = vsel %vm3339, %v6844, %v5501
  %v6909 = vsel %vm3339, %v6845, %v5503
  %v6910 = vsel %vm3339, %v6846, %v5505
  %v6911 = vsel %vm3339, %v6847, %v5507
  %v6912 = vsel %vm3339, %v6848, %v5509
  %v6913 = vsel %vm3339, %v6849, %v5511
  %v6914 = vsel %vm3339, %v6850, %v5513
  %v6915 = vsel %vm3339, %v6851, %v5515
  %v6916 = vsel %vm3339, %v6852, %v5517
  %v6917 = vsel %vm3339, %v6853, %v5519
  %v6918 = vsel %vm3339, %v6854, %v5521
  %v6919 = vsel %vm3339, %v6855, %v5523
  %v6920 = vsel %vm3339, %v6856, %v5525
  %v6921 = vsel %vm3339, %v6857, %v5527
  %v6922 = vsel %vm3339, %v6858, %v5529
  %v6923 = vsel %vm3339, %v6859, %v5531
  %v6924 = vsel %vm3339, %v6860, %v5533
  %v6925 = vsel %vm3339, %v6861, %v5535
  %v6926 = vsel %vm3339, %v6862, %v5537
  %v6927 = vsel %vm3339, %v6863, %v5539
  %v6928 = vsel %vm3339, %v6864, %v5541
  %v6929 = vsel %vm3339, %v6865, %v5543
  %v6930 = vsel %vm3339, %v6866, %v5545
  %v6931 = vsel %vm3339, %v6867, %v5547
  %v6932 = vsel %vm3339, %v6868, %v5549
  %v6933 = vsel %vm3339, %v6869, %v5551
  %v6934 = vsel %vm3339, %v6870, %v5553
  %v6935 = vsel %vm3339, %v6871, %v5555
  %v6936 = vsel %vm3339, %v6872, %v5557
  %v6937 = vsel %vm3339, %v6873, %v5559
  %v6938 = vsel %vm3339, %v6874, %v5561
  %v6939 = vsel %vm3339, %v6875, %v5563
  %v6940 = vsel %vm3339, %v6876, %v5565
  %v6941 = vsel %vm3339, %v6877, %v5567
  %v6942 = vsel %vm3339, %v6878, %v5569
  %v6943 = vsel %vm3339, %v6879, %v5571
  %v6944 = vsel %vm3339, %v6880, %v5573
  %v6945 = vsel %vm3339, %v6881, %v5575
  %v6946 = vsel %vm3339, %v6882, %v5577
  %v6947 = vsel %vm3339, %v6883, %v5579
  %v6948 = vsel %vm3339, %v6884, %v5581
  %v6949 = vsel %vm3339, %v6885, %v5583
  %v6950 = vsel %vm3339, %v6886, %v5585
  %v6951 = vsel %vm3339, %v6887, %v5587
  %v6952 = vsel %vm3339, %v6888, %v5589
  %v6953 = vsel %vm3339, %v6889, %v5591
  %v6954 = vsel %vm3339, %v6890, %v5593
  %v6955 = vsel %vm3339, %v6891, %v5595
  %v6956 = vsel %vm3339, %v6892, %v5597
  %v6957 = vsel %vm3339, %v6893, %v5599
  %v6958 = vsel %vm3339, %v6894, %v5601
  %v6959 = vsel %vm3339, %v6895, %v5603
  %v6960 = vsel %vm3339, %v6896, %v5605
  %v6961 = vsel %vm3339, %v6897, %v5607
  %v6962 = vsel %vm3339, %v6898, %v5609
  %v6963 = vsel %vm3339, %v6899, %v5611
  %v6964 = vsel %vm3339, %v6900, %v5613
  %v6965 = vsel %vm3339, %v6901, %v5615
  %v6966 = vsel %vm3339, %v6902, %v5617
  %v6967 = vsel %vm3339, %v6903, %v5619
  %v6968 = vsel %vm3339, %v6904, %v5621
  %v6969 = vsel %vm3339, %v6905, %v5623
  %v6970 = vsel %vm3339, %v6906, %v5625
  %v6971 = vsel %vm3339, %v6907, %v5627
  %vm6972 = vcmask 326656
  %v6973 = vsel %vm6972, %v6908, %v5757
  %v6974 = vsel %vm6972, %v6909, %v5759
  %v6975 = vsel %vm6972, %v6910, %v5761
  %v6976 = vsel %vm6972, %v6911, %v5763
  %v6977 = vsel %vm6972, %v6912, %v5765
  %v6978 = vsel %vm6972, %v6913, %v5767
  %v6979 = vsel %vm6972, %v6914, %v5769
  %v6980 = vsel %vm6972, %v6915, %v5771
  %v6981 = vsel %vm6972, %v6916, %v5773
  %v6982 = vsel %vm6972, %v6917, %v5775
  %v6983 = vsel %vm6972, %v6918, %v5777
  %v6984 = vsel %vm6972, %v6919, %v5779
  %v6985 = vsel %vm6972, %v6920, %v5781
  %v6986 = vsel %vm6972, %v6921, %v5783
  %v6987 = vsel %vm6972, %v6922, %v5785
  %v6988 = vsel %vm6972, %v6923, %v5787
  %v6989 = vsel %vm6972, %v6924, %v5789
  %v6990 = vsel %vm6972, %v6925, %v5791
  %v6991 = vsel %vm6972, %v6926, %v5793
  %v6992 = vsel %vm6972, %v6927, %v5795
  %v6993 = vsel %vm6972, %v6928, %v5797
  %v6994 = vsel %vm6972, %v6929, %v5799
  %v6995 = vsel %vm6972, %v6930, %v5801
  %v6996 = vsel %vm6972, %v6931, %v5803
  %v6997 = vsel %vm6972, %v6932, %v5805
  %v6998 = vsel %vm6972, %v6933, %v5807
  %v6999 = vsel %vm6972, %v6934, %v5809
  %v7000 = vsel %vm6972, %v6935, %v5811
  %v7001 = vsel %vm6972, %v6936, %v5813
  %v7002 = vsel %vm6972, %v6937, %v5815
  %v7003 = vsel %vm6972, %v6938, %v5817
  %v7004 = vsel %vm6972, %v6939, %v5819
  %v7005 = vsel %vm6972, %v6940, %v5821
  %v7006 = vsel %vm6972, %v6941, %v5823
  %v7007 = vsel %vm6972, %v6942, %v5825
  %v7008 = vsel %vm6972, %v6943, %v5827
  %v7009 = vsel %vm6972, %v6944, %v5829
  %v7010 = vsel %vm6972, %v6945, %v5831
  %v7011 = vsel %vm6972, %v6946, %v5833
  %v7012 = vsel %vm6972, %v6947, %v5835
  %v7013 = vsel %vm6972, %v6948, %v5837
  %v7014 = vsel %vm6972, %v6949, %v5839
  %v7015 = vsel %vm6972, %v6950, %v5841
  %v7016 = vsel %vm6972, %v6951, %v5843
  %v7017 = vsel %vm6972, %v6952, %v5845
  %v7018 = vsel %vm6972, %v6953, %v5847
  %v7019 = vsel %vm6972, %v6954, %v5849
  %v7020 = vsel %vm6972, %v6955, %v5851
  %v7021 = vsel %vm6972, %v6956, %v5853
  %v7022 = vsel %vm6972, %v6957, %v5855
  %v7023 = vsel %vm6972, %v6958, %v5857
  %v7024 = vsel %vm6972, %v6959, %v5859
  %v7025 = vsel %vm6972, %v6960, %v5861
  %v7026 = vsel %vm6972, %v6961, %v5863
  %v7027 = vsel %vm6972, %v6962, %v5865
  %v7028 = vsel %vm6972, %v6963, %v5867
  %v7029 = vsel %vm6972, %v6964, %v5869
  %v7030 = vsel %vm6972, %v6965, %v5871
  %v7031 = vsel %vm6972, %v6966, %v5873
  %v7032 = vsel %vm6972, %v6967, %v5875
  %v7033 = vsel %vm6972, %v6968, %v5877
  %v7034 = vsel %vm6972, %v6969, %v5879
  %v7035 = vsel %vm6972, %v6970, %v5881
  %v7036 = vsel %vm6972, %v6971, %v5883
  %vm7037 = vcmask 392192
  %v7038 = vsel %vm7037, %v6973, %v6013
  %v7039 = vsel %vm7037, %v6974, %v6015
  %v7040 = vsel %vm7037, %v6975, %v6017
  %v7041 = vsel %vm7037, %v6976, %v6019
  %v7042 = vsel %vm7037, %v6977, %v6021
  %v7043 = vsel %vm7037, %v6978, %v6023
  %v7044 = vsel %vm7037, %v6979, %v6025
  %v7045 = vsel %vm7037, %v6980, %v6027
  %v7046 = vsel %vm7037, %v6981, %v6029
  %v7047 = vsel %vm7037, %v6982, %v6031
  %v7048 = vsel %vm7037, %v6983, %v6033
  %v7049 = vsel %vm7037, %v6984, %v6035
  %v7050 = vsel %vm7037, %v6985, %v6037
  %v7051 = vsel %vm7037, %v6986, %v6039
  %v7052 = vsel %vm7037, %v6987, %v6041
  %v7053 = vsel %vm7037, %v6988, %v6043
  %v7054 = vsel %vm7037, %v6989, %v6045
  %v7055 = vsel %vm7037, %v6990, %v6047
  %v7056 = vsel %vm7037, %v6991, %v6049
  %v7057 = vsel %vm7037, %v6992, %v6051
  %v7058 = vsel %vm7037, %v6993, %v6053
  %v7059 = vsel %vm7037, %v6994, %v6055
  %v7060 = vsel %vm7037, %v6995, %v6057
  %v7061 = vsel %vm7037, %v6996, %v6059
  %v7062 = vsel %vm7037, %v6997, %v6061
  %v7063 = vsel %vm7037, %v6998, %v6063
  %v7064 = vsel %vm7037, %v6999, %v6065
  %v7065 = vsel %vm7037, %v7000, %v6067
  %v7066 = vsel %vm7037, %v7001, %v6069
  %v7067 = vsel %vm7037, %v7002, %v6071
  %v7068 = vsel %vm7037, %v7003, %v6073
  %v7069 = vsel %vm7037, %v7004, %v6075
  %v7070 = vsel %vm7037, %v7005, %v6077
  %v7071 = vsel %vm7037, %v7006, %v6079
  %v7072 = vsel %vm7037, %v7007, %v6081
  %v7073 = vsel %vm7037, %v7008, %v6083
  %v7074 = vsel %vm7037, %v7009, %v6085
  %v7075 = vsel %vm7037, %v7010, %v6087
  %v7076 = vsel %vm7037, %v7011, %v6089
  %v7077 = vsel %vm7037, %v7012, %v6091
  %v7078 = vsel %vm7037, %v7013, %v6093
  %v7079 = vsel %vm7037, %v7014, %v6095
  %v7080 = vsel %vm7037, %v7015, %v6097
  %v7081 = vsel %vm7037, %v7016, %v6099
  %v7082 = vsel %vm7037, %v7017, %v6101
  %v7083 = vsel %vm7037, %v7018, %v6103
  %v7084 = vsel %vm7037, %v7019, %v6105
  %v7085 = vsel %vm7037, %v7020, %v6107
  %v7086 = vsel %vm7037, %v7021, %v6109
  %v7087 = vsel %vm7037, %v7022, %v6111
  %v7088 = vsel %vm7037, %v7023, %v6113
  %v7089 = vsel %vm7037, %v7024, %v6115
  %v7090 = vsel %vm7037, %v7025, %v6117
  %v7091 = vsel %vm7037, %v7026, %v6119
  %v7092 = vsel %vm7037, %v7027, %v6121
  %v7093 = vsel %vm7037, %v7028, %v6123
  %v7094 = vsel %vm7037, %v7029, %v6125
  %v7095 = vsel %vm7037, %v7030, %v6127
  %v7096 = vsel %vm7037, %v7031, %v6129
  %v7097 = vsel %vm7037, %v7032, %v6131
  %v7098 = vsel %vm7037, %v7033, %v6133
  %v7099 = vsel %vm7037, %v7034, %v6135
  %v7100 = vsel %vm7037, %v7035, %v6137
  %v7101 = vsel %vm7037, %v7036, %v6139
  %vm7102 = vcmask 457728
  %v7103 = vsel %vm7102, %v7038, %v6269
  %v7104 = vsel %vm7102, %v7039, %v6271
  %v7105 = vsel %vm7102, %v7040, %v6273
  %v7106 = vsel %vm7102, %v7041, %v6275
  %v7107 = vsel %vm7102, %v7042, %v6277
  %v7108 = vsel %vm7102, %v7043, %v6279
  %v7109 = vsel %vm7102, %v7044, %v6281
  %v7110 = vsel %vm7102, %v7045, %v6283
  %v7111 = vsel %vm7102, %v7046, %v6285
  %v7112 = vsel %vm7102, %v7047, %v6287
  %v7113 = vsel %vm7102, %v7048, %v6289
  %v7114 = vsel %vm7102, %v7049, %v6291
  %v7115 = vsel %vm7102, %v7050, %v6293
  %v7116 = vsel %vm7102, %v7051, %v6295
  %v7117 = vsel %vm7102, %v7052, %v6297
  %v7118 = vsel %vm7102, %v7053, %v6299
  %v7119 = vsel %vm7102, %v7054, %v6301
  %v7120 = vsel %vm7102, %v7055, %v6303
  %v7121 = vsel %vm7102, %v7056, %v6305
  %v7122 = vsel %vm7102, %v7057, %v6307
  %v7123 = vsel %vm7102, %v7058, %v6309
  %v7124 = vsel %vm7102, %v7059, %v6311
  %v7125 = vsel %vm7102, %v7060, %v6313
  %v7126 = vsel %vm7102, %v7061, %v6315
  %v7127 = vsel %vm7102, %v7062, %v6317
  %v7128 = vsel %vm7102, %v7063, %v6319
  %v7129 = vsel %vm7102, %v7064, %v6321
  %v7130 = vsel %vm7102, %v7065, %v6323
  %v7131 = vsel %vm7102, %v7066, %v6325
  %v7132 = vsel %vm7102, %v7067, %v6327
  %v7133 = vsel %vm7102, %v7068, %v6329
  %v7134 = vsel %vm7102, %v7069, %v6331
  %v7135 = vsel %vm7102, %v7070, %v6333
  %v7136 = vsel %vm7102, %v7071, %v6335
  %v7137 = vsel %vm7102, %v7072, %v6337
  %v7138 = vsel %vm7102, %v7073, %v6339
  %v7139 = vsel %vm7102, %v7074, %v6341
  %v7140 = vsel %vm7102, %v7075, %v6343
  %v7141 = vsel %vm7102, %v7076, %v6345
  %v7142 = vsel %vm7102, %v7077, %v6347
  %v7143 = vsel %vm7102, %v7078, %v6349
  %v7144 = vsel %vm7102, %v7079, %v6351
  %v7145 = vsel %vm7102, %v7080, %v6353
  %v7146 = vsel %vm7102, %v7081, %v6355
  %v7147 = vsel %vm7102, %v7082, %v6357
  %v7148 = vsel %vm7102, %v7083, %v6359
  %v7149 = vsel %vm7102, %v7084, %v6361
  %v7150 = vsel %vm7102, %v7085, %v6363
  %v7151 = vsel %vm7102, %v7086, %v6365
  %v7152 = vsel %vm7102, %v7087, %v6367
  %v7153 = vsel %vm7102, %v7088, %v6369
  %v7154 = vsel %vm7102, %v7089, %v6371
  %v7155 = vsel %vm7102, %v7090, %v6373
  %v7156 = vsel %vm7102, %v7091, %v6375
  %v7157 = vsel %vm7102, %v7092, %v6377
  %v7158 = vsel %vm7102, %v7093, %v6379
  %v7159 = vsel %vm7102, %v7094, %v6381
  %v7160 = vsel %vm7102, %v7095, %v6383
  %v7161 = vsel %vm7102, %v7096, %v6385
  %v7162 = vsel %vm7102, %v7097, %v6387
  %v7163 = vsel %vm7102, %v7098, %v6389
  %v7164 = vsel %vm7102, %v7099, %v6391
  %v7165 = vsel %vm7102, %v7100, %v6393
  %v7166 = vsel %vm7102, %v7101, %v6395
  %vm7167 = vcmask 523264
  %v7168 = vsel %vm7167, %v7103, %v6525
  %v7169 = vsel %vm7167, %v7104, %v6527
  %v7170 = vsel %vm7167, %v7105, %v6529
  %v7171 = vsel %vm7167, %v7106, %v6531
  %v7172 = vsel %vm7167, %v7107, %v6533
  %v7173 = vsel %vm7167, %v7108, %v6535
  %v7174 = vsel %vm7167, %v7109, %v6537
  %v7175 = vsel %vm7167, %v7110, %v6539
  %v7176 = vsel %vm7167, %v7111, %v6541
  %v7177 = vsel %vm7167, %v7112, %v6543
  %v7178 = vsel %vm7167, %v7113, %v6545
  %v7179 = vsel %vm7167, %v7114, %v6547
  %v7180 = vsel %vm7167, %v7115, %v6549
  %v7181 = vsel %vm7167, %v7116, %v6551
  %v7182 = vsel %vm7167, %v7117, %v6553
  %v7183 = vsel %vm7167, %v7118, %v6555
  %v7184 = vsel %vm7167, %v7119, %v6557
  %v7185 = vsel %vm7167, %v7120, %v6559
  %v7186 = vsel %vm7167, %v7121, %v6561
  %v7187 = vsel %vm7167, %v7122, %v6563
  %v7188 = vsel %vm7167, %v7123, %v6565
  %v7189 = vsel %vm7167, %v7124, %v6567
  %v7190 = vsel %vm7167, %v7125, %v6569
  %v7191 = vsel %vm7167, %v7126, %v6571
  %v7192 = vsel %vm7167, %v7127, %v6573
  %v7193 = vsel %vm7167, %v7128, %v6575
  %v7194 = vsel %vm7167, %v7129, %v6577
  %v7195 = vsel %vm7167, %v7130, %v6579
  %v7196 = vsel %vm7167, %v7131, %v6581
  %v7197 = vsel %vm7167, %v7132, %v6583
  %v7198 = vsel %vm7167, %v7133, %v6585
  %v7199 = vsel %vm7167, %v7134, %v6587
  %v7200 = vsel %vm7167, %v7135, %v6589
  %v7201 = vsel %vm7167, %v7136, %v6591
  %v7202 = vsel %vm7167, %v7137, %v6593
  %v7203 = vsel %vm7167, %v7138, %v6595
  %v7204 = vsel %vm7167, %v7139, %v6597
  %v7205 = vsel %vm7167, %v7140, %v6599
  %v7206 = vsel %vm7167, %v7141, %v6601
  %v7207 = vsel %vm7167, %v7142, %v6603
  %v7208 = vsel %vm7167, %v7143, %v6605
  %v7209 = vsel %vm7167, %v7144, %v6607
  %v7210 = vsel %vm7167, %v7145, %v6609
  %v7211 = vsel %vm7167, %v7146, %v6611
  %v7212 = vsel %vm7167, %v7147, %v6613
  %v7213 = vsel %vm7167, %v7148, %v6615
  %v7214 = vsel %vm7167, %v7149, %v6617
  %v7215 = vsel %vm7167, %v7150, %v6619
  %v7216 = vsel %vm7167, %v7151, %v6621
  %v7217 = vsel %vm7167, %v7152, %v6623
  %v7218 = vsel %vm7167, %v7153, %v6625
  %v7219 = vsel %vm7167, %v7154, %v6627
  %v7220 = vsel %vm7167, %v7155, %v6629
  %v7221 = vsel %vm7167, %v7156, %v6631
  %v7222 = vsel %vm7167, %v7157, %v6633
  %v7223 = vsel %vm7167, %v7158, %v6635
  %v7224 = vsel %vm7167, %v7159, %v6637
  %v7225 = vsel %vm7167, %v7160, %v6639
  %v7226 = vsel %vm7167, %v7161, %v6641
  %v7227 = vsel %vm7167, %v7162, %v6643
  %v7228 = vsel %vm7167, %v7163, %v6645
  %v7229 = vsel %vm7167, %v7164, %v6647
  %v7230 = vsel %vm7167, %v7165, %v6649
  %v7231 = vsel %vm7167, %v7166, %v6651
  %v7232 = vpack.c.bf16 %v7169, %v7168
  %v7233 = vpack.c.bf16 %v7171, %v7170
  %v7234 = vpack.c.bf16 %v7173, %v7172
  %v7235 = vpack.c.bf16 %v7175, %v7174
  %v7236 = vpack.c.bf16 %v7177, %v7176
  %v7237 = vpack.c.bf16 %v7179, %v7178
  %v7238 = vpack.c.bf16 %v7181, %v7180
  %v7239 = vpack.c.bf16 %v7183, %v7182
  %v7240 = vpack.c.bf16 %v7185, %v7184
  %v7241 = vpack.c.bf16 %v7187, %v7186
  %v7242 = vpack.c.bf16 %v7189, %v7188
  %v7243 = vpack.c.bf16 %v7191, %v7190
  %v7244 = vpack.c.bf16 %v7193, %v7192
  %v7245 = vpack.c.bf16 %v7195, %v7194
  %v7246 = vpack.c.bf16 %v7197, %v7196
  %v7247 = vpack.c.bf16 %v7199, %v7198
  %v7248 = vpack.c.bf16 %v7201, %v7200
  %v7249 = vpack.c.bf16 %v7203, %v7202
  %v7250 = vpack.c.bf16 %v7205, %v7204
  %v7251 = vpack.c.bf16 %v7207, %v7206
  %v7252 = vpack.c.bf16 %v7209, %v7208
  %v7253 = vpack.c.bf16 %v7211, %v7210
  %v7254 = vpack.c.bf16 %v7213, %v7212
  %v7255 = vpack.c.bf16 %v7215, %v7214
  %v7256 = vpack.c.bf16 %v7217, %v7216
  %v7257 = vpack.c.bf16 %v7219, %v7218
  %v7258 = vpack.c.bf16 %v7221, %v7220
  %v7259 = vpack.c.bf16 %v7223, %v7222
  %v7260 = vpack.c.bf16 %v7225, %v7224
  %v7261 = vpack.c.bf16 %v7227, %v7226
  %v7262 = vpack.c.bf16 %v7229, %v7228
  %v7263 = vpack.c.bf16 %v7231, %v7230
  %v7264 = vld [vmem:[%s3] sm:$0xf]
  %v7265 = vld [vmem:[%s3 + $0x4] sm:$0xf]
  %v7266 = vld [vmem:[%s3 + $0x8] sm:$0xf]
  %v7267 = vld [vmem:[%s3 + $0xc] sm:$0xf]
  %v7268 = vld [vmem:[%s3 + $0x10] sm:$0xf]
  %v7269 = vld [vmem:[%s3 + $0x14] sm:$0xf]
  %v7270 = vld [vmem:[%s3 + $0x18] sm:$0xf]
  %v7271 = vld [vmem:[%s3 + $0x1c] sm:$0xf]
  %v7272 = vld [vmem:[%s3 + $0x20] sm:$0xf]
  %v7273 = vld [vmem:[%s4] sm:$0x1]
  %v7275 = vlaneseq
  %v7276 = vshrl.u32 %v7275, 7
  %v7277 = vsub.s32 0, %v7276
  %v7278 = vrot.slane %v7273, %v7277
  %v7289 = vunpack.c.l.b16 %v7264
  %v7290 = vunpack.c.l.b16 %v7265
  %v7291 = vunpack.c.l.b16 %v7266
  %v7292 = vunpack.c.l.b16 %v7267
  %v7293 = vunpack.c.l.b16 %v7268
  %v7294 = vunpack.c.l.b16 %v7269
  %v7295 = vunpack.c.l.b16 %v7270
  %v7296 = vunpack.c.l.b16 %v7271
  %v7297 = vunpack.c.l.b16 %v7272
  %v7298 = vpack.c.b16 %v7290, %v7289
  %v7299 = vpack.c.b16 %v7292, %v7291
  %v7300 = vpack.c.b16 %v7294, %v7293
  %v7301 = vpack.c.b16 %v7296, %v7295
  %v7302 = vpack.c.b16 %v7297, %v7297
  %vm7307 = vcmask 588800
  %v7309 = vsel %vm7307, %v7232, 0
  %v7312 = vsel %vm7307, %v7233, 0
  %v7315 = vsel %vm7307, %v7234, 0
  %v7318 = vsel %vm7307, %v7235, 0
  %v7321 = vsel %vm7307, %v7236, 0
  %v7324 = vsel %vm7307, %v7237, 0
  %v7327 = vsel %vm7307, %v7238, 0
  %v7330 = vsel %vm7307, %v7239, 0
  %v7333 = vsel %vm7307, %v7240, 0
  %v7336 = vsel %vm7307, %v7241, 0
  %v7339 = vsel %vm7307, %v7242, 0
  %v7342 = vsel %vm7307, %v7243, 0
  %v7345 = vsel %vm7307, %v7244, 0
  %v7348 = vsel %vm7307, %v7245, 0
  %v7351 = vsel %vm7307, %v7246, 0
  %v7354 = vsel %vm7307, %v7247, 0
  %v7357 = vsel %vm7307, %v7248, 0
  %v7360 = vsel %vm7307, %v7249, 0
  %v7363 = vsel %vm7307, %v7250, 0
  %v7366 = vsel %vm7307, %v7251, 0
  %v7369 = vsel %vm7307, %v7252, 0
  %v7372 = vsel %vm7307, %v7253, 0
  %v7375 = vsel %vm7307, %v7254, 0
  %v7378 = vsel %vm7307, %v7255, 0
  %v7381 = vsel %vm7307, %v7256, 0
  %v7384 = vsel %vm7307, %v7257, 0
  %v7387 = vsel %vm7307, %v7258, 0
  %v7390 = vsel %vm7307, %v7259, 0
  %v7393 = vsel %vm7307, %v7260, 0
  %v7396 = vsel %vm7307, %v7261, 0
  %v7399 = vsel %vm7307, %v7262, 0
  %v7402 = vsel %vm7307, %v7263, 0
  %vm7404 = vcmask 1043456
  %v7406 = vsel %vm7404, %v7302, 0
  %7408 = vmatprep.subr.bf16.mxu0 0
  %7409 = vmatpush1.bf16.msra.mxu0 %v7298
  %7410 = vmatprep.subr.bf16.mxu0 0
  %7411 = vmatpush1.bf16.msra.mxu0 %v7299
  %7412 = vmatprep.subr.bf16.mxu0 0
  %7413 = vmatpush1.bf16.msra.mxu0 %v7300
  %7414 = vmatprep.subr.bf16.mxu0 0
  %7415 = vmatpush1.bf16.msra.mxu0 %v7301
  %7416 = vmatprep.subr.bf16.mxu0 0
  %7417 = vmatpush1.bf16.msra.mxu0 %v7406
  %7418 = vmatprep.subr.bf16.mxu0 0
  %7419 = vmatpush1.bf16.msra.mxu0 0
  %7420 = vmatprep.subr.bf16.mxu0 0
  %7421 = vmatpush1.bf16.msra.mxu0 0
  %7422 = vmatprep.subr.bf16.mxu0 0
  %7423 = vmatpush1.bf16.msra.mxu0 0
  %7424 = vmatprep.subr.bf16.mxu0 0
  %7425 = vmatpush1.bf16.msra.mxu0 0
  %7426 = vmatprep.subr.bf16.mxu0 0
  %7427 = vmatpush1.bf16.msra.mxu0 0
  %7428 = vmatprep.subr.bf16.mxu0 0
  %7429 = vmatpush1.bf16.msra.mxu0 0
  %7430 = vmatprep.subr.bf16.mxu0 0
  %7431 = vmatpush1.bf16.msra.mxu0 0
  %7432 = vmatprep.subr.bf16.mxu0 0
  %7433 = vmatpush1.bf16.msra.mxu0 0
  %7434 = vmatprep.subr.bf16.mxu0 0
  %7435 = vmatpush1.bf16.msra.mxu0 0
  %7436 = vmatprep.subr.bf16.mxu0 0
  %7437 = vmatpush1.bf16.msra.mxu0 0
  %7438 = vmatprep.subr.bf16.mxu0 0
  %7439 = vmatpush1.bf16.msra.mxu0 0
  %7440 = vmatprep.mubr.bf16.mxu0 0
  %7441 = vmatmul.mubr.bf16.gmra.mrb[0].mxu0 %v7309
  %v7442 = vpop.f32.mrb[0].mxu0
  %v7443 = vadd.f32 %v7278, %v7442
  %v7444 = vpop.f32.mrb[0].mxu0
  %v7445 = vpop.f32.mrb[0].mxu0
  %v7446 = vadd.f32 %v7278, %v7445
  %v7447 = vpop.f32.mrb[0].mxu0
  %7448 = vmatprep.mubr.bf16.mxu0 0
  %7449 = vmatmul.mubr.bf16.gmra.mrb[0].mxu0 %v7312
  %v7450 = vpop.f32.mrb[0].mxu0
  %v7451 = vadd.f32 %v7278, %v7450
  %v7452 = vpop.f32.mrb[0].mxu0
  %v7453 = vpop.f32.mrb[0].mxu0
  %v7454 = vadd.f32 %v7278, %v7453
  %v7455 = vpop.f32.mrb[0].mxu0
  %7456 = vmatprep.mubr.bf16.mxu0 0
  %7457 = vmatmul.mubr.bf16.gmra.mrb[0].mxu0 %v7315
  %v7458 = vpop.f32.mrb[0].mxu0
  %v7459 = vadd.f32 %v7278, %v7458
  %v7460 = vpop.f32.mrb[0].mxu0
  %v7461 = vpop.f32.mrb[0].mxu0
  %v7462 = vadd.f32 %v7278, %v7461
  %v7463 = vpop.f32.mrb[0].mxu0
  %7464 = vmatprep.mubr.bf16.mxu0 0
  %7465 = vmatmul.mubr.bf16.gmra.mrb[0].mxu0 %v7318
  %v7466 = vpop.f32.mrb[0].mxu0
  %v7467 = vadd.f32 %v7278, %v7466
  %v7468 = vpop.f32.mrb[0].mxu0
  %v7469 = vpop.f32.mrb[0].mxu0
  %v7470 = vadd.f32 %v7278, %v7469
  %v7471 = vpop.f32.mrb[0].mxu0
  %7472 = vmatprep.mubr.bf16.mxu0 0
  %7473 = vmatmul.mubr.bf16.gmra.mrb[0].mxu0 %v7321
  %v7474 = vpop.f32.mrb[0].mxu0
  %v7475 = vadd.f32 %v7278, %v7474
  %v7476 = vpop.f32.mrb[0].mxu0
  %v7477 = vpop.f32.mrb[0].mxu0
  %v7478 = vadd.f32 %v7278, %v7477
  %v7479 = vpop.f32.mrb[0].mxu0
  %7480 = vmatprep.mubr.bf16.mxu0 0
  %7481 = vmatmul.mubr.bf16.gmra.mrb[0].mxu0 %v7324
  %v7482 = vpop.f32.mrb[0].mxu0
  %v7483 = vadd.f32 %v7278, %v7482
  %v7484 = vpop.f32.mrb[0].mxu0
  %v7485 = vpop.f32.mrb[0].mxu0
  %v7486 = vadd.f32 %v7278, %v7485
  %v7487 = vpop.f32.mrb[0].mxu0
  %7488 = vmatprep.mubr.bf16.mxu0 0
  %7489 = vmatmul.mubr.bf16.gmra.mrb[0].mxu0 %v7327
  %v7490 = vpop.f32.mrb[0].mxu0
  %v7491 = vadd.f32 %v7278, %v7490
  %v7492 = vpop.f32.mrb[0].mxu0
  %v7493 = vpop.f32.mrb[0].mxu0
  %v7494 = vadd.f32 %v7278, %v7493
  %v7495 = vpop.f32.mrb[0].mxu0
  %7496 = vmatprep.mubr.bf16.mxu0 0
  %7497 = vmatmul.mubr.bf16.gmra.mrb[0].mxu0 %v7330
  %v7498 = vpop.f32.mrb[0].mxu0
  %v7499 = vadd.f32 %v7278, %v7498
  %v7500 = vpop.f32.mrb[0].mxu0
  %v7501 = vpop.f32.mrb[0].mxu0
  %v7502 = vadd.f32 %v7278, %v7501
  %v7503 = vpop.f32.mrb[0].mxu0
  %7504 = vmatprep.mubr.bf16.mxu0 0
  %7505 = vmatmul.mubr.bf16.gmra.mrb[0].mxu0 %v7333
  %v7506 = vpop.f32.mrb[0].mxu0
  %v7507 = vadd.f32 %v7278, %v7506
  %v7508 = vpop.f32.mrb[0].mxu0
  %v7509 = vpop.f32.mrb[0].mxu0
  %v7510 = vadd.f32 %v7278, %v7509
  %v7511 = vpop.f32.mrb[0].mxu0
  %7512 = vmatprep.mubr.bf16.mxu0 0
  %7513 = vmatmul.mubr.bf16.gmra.mrb[0].mxu0 %v7336
  %v7514 = vpop.f32.mrb[0].mxu0
  %v7515 = vadd.f32 %v7278, %v7514
  %v7516 = vpop.f32.mrb[0].mxu0
  %v7517 = vpop.f32.mrb[0].mxu0
  %v7518 = vadd.f32 %v7278, %v7517
  %v7519 = vpop.f32.mrb[0].mxu0
  %7520 = vmatprep.mubr.bf16.mxu0 0
  %7521 = vmatmul.mubr.bf16.gmra.mrb[0].mxu0 %v7339
  %v7522 = vpop.f32.mrb[0].mxu0
  %v7523 = vadd.f32 %v7278, %v7522
  %v7524 = vpop.f32.mrb[0].mxu0
  %v7525 = vpop.f32.mrb[0].mxu0
  %v7526 = vadd.f32 %v7278, %v7525
  %v7527 = vpop.f32.mrb[0].mxu0
  %7528 = vmatprep.mubr.bf16.mxu0 0
  %7529 = vmatmul.mubr.bf16.gmra.mrb[0].mxu0 %v7342
  %v7530 = vpop.f32.mrb[0].mxu0
  %v7531 = vadd.f32 %v7278, %v7530
  %v7532 = vpop.f32.mrb[0].mxu0
  %v7533 = vpop.f32.mrb[0].mxu0
  %v7534 = vadd.f32 %v7278, %v7533
  %v7535 = vpop.f32.mrb[0].mxu0
  %7536 = vmatprep.mubr.bf16.mxu0 0
  %7537 = vmatmul.mubr.bf16.gmra.mrb[0].mxu0 %v7345
  %v7538 = vpop.f32.mrb[0].mxu0
  %v7539 = vadd.f32 %v7278, %v7538
  %v7540 = vpop.f32.mrb[0].mxu0
  %v7541 = vpop.f32.mrb[0].mxu0
  %v7542 = vadd.f32 %v7278, %v7541
  %v7543 = vpop.f32.mrb[0].mxu0
  %7544 = vmatprep.mubr.bf16.mxu0 0
  %7545 = vmatmul.mubr.bf16.gmra.mrb[0].mxu0 %v7348
  %v7546 = vpop.f32.mrb[0].mxu0
  %v7547 = vadd.f32 %v7278, %v7546
  %v7548 = vpop.f32.mrb[0].mxu0
  %v7549 = vpop.f32.mrb[0].mxu0
  %v7550 = vadd.f32 %v7278, %v7549
  %v7551 = vpop.f32.mrb[0].mxu0
  %7552 = vmatprep.mubr.bf16.mxu0 0
  %7553 = vmatmul.mubr.bf16.gmra.mrb[0].mxu0 %v7351
  %v7554 = vpop.f32.mrb[0].mxu0
  %v7555 = vadd.f32 %v7278, %v7554
  %v7556 = vpop.f32.mrb[0].mxu0
  %v7557 = vpop.f32.mrb[0].mxu0
  %v7558 = vadd.f32 %v7278, %v7557
  %v7559 = vpop.f32.mrb[0].mxu0
  %7560 = vmatprep.mubr.bf16.mxu0 0
  %7561 = vmatmul.mubr.bf16.gmra.mrb[0].mxu0 %v7354
  %v7562 = vpop.f32.mrb[0].mxu0
  %v7563 = vadd.f32 %v7278, %v7562
  %v7564 = vpop.f32.mrb[0].mxu0
  %v7565 = vpop.f32.mrb[0].mxu0
  %v7566 = vadd.f32 %v7278, %v7565
  %v7567 = vpop.f32.mrb[0].mxu0
  %7568 = vmatprep.mubr.bf16.mxu0 0
  %7569 = vmatmul.mubr.bf16.gmra.mrb[0].mxu0 %v7357
  %v7570 = vpop.f32.mrb[0].mxu0
  %v7571 = vadd.f32 %v7278, %v7570
  %v7572 = vpop.f32.mrb[0].mxu0
  %v7573 = vpop.f32.mrb[0].mxu0
  %v7574 = vadd.f32 %v7278, %v7573
  %v7575 = vpop.f32.mrb[0].mxu0
  %7576 = vmatprep.mubr.bf16.mxu0 0
  %7577 = vmatmul.mubr.bf16.gmra.mrb[0].mxu0 %v7360
  %v7578 = vpop.f32.mrb[0].mxu0
  %v7579 = vadd.f32 %v7278, %v7578
  %v7580 = vpop.f32.mrb[0].mxu0
  %v7581 = vpop.f32.mrb[0].mxu0
  %v7582 = vadd.f32 %v7278, %v7581
  %v7583 = vpop.f32.mrb[0].mxu0
  %7584 = vmatprep.mubr.bf16.mxu0 0
  %7585 = vmatmul.mubr.bf16.gmra.mrb[0].mxu0 %v7363
  %v7586 = vpop.f32.mrb[0].mxu0
  %v7587 = vadd.f32 %v7278, %v7586
  %v7588 = vpop.f32.mrb[0].mxu0
  %v7589 = vpop.f32.mrb[0].mxu0
  %v7590 = vadd.f32 %v7278, %v7589
  %v7591 = vpop.f32.mrb[0].mxu0
  %7592 = vmatprep.mubr.bf16.mxu0 0
  %7593 = vmatmul.mubr.bf16.gmra.mrb[0].mxu0 %v7366
  %v7594 = vpop.f32.mrb[0].mxu0
  %v7595 = vadd.f32 %v7278, %v7594
  %v7596 = vpop.f32.mrb[0].mxu0
  %v7597 = vpop.f32.mrb[0].mxu0
  %v7598 = vadd.f32 %v7278, %v7597
  %v7599 = vpop.f32.mrb[0].mxu0
  %7600 = vmatprep.mubr.bf16.mxu0 0
  %7601 = vmatmul.mubr.bf16.gmra.mrb[0].mxu0 %v7369
  %v7602 = vpop.f32.mrb[0].mxu0
  %v7603 = vadd.f32 %v7278, %v7602
  %v7604 = vpop.f32.mrb[0].mxu0
  %v7605 = vpop.f32.mrb[0].mxu0
  %v7606 = vadd.f32 %v7278, %v7605
  %v7607 = vpop.f32.mrb[0].mxu0
  %7608 = vmatprep.mubr.bf16.mxu0 0
  %7609 = vmatmul.mubr.bf16.gmra.mrb[0].mxu0 %v7372
  %v7610 = vpop.f32.mrb[0].mxu0
  %v7611 = vadd.f32 %v7278, %v7610
  %v7612 = vpop.f32.mrb[0].mxu0
  %v7613 = vpop.f32.mrb[0].mxu0
  %v7614 = vadd.f32 %v7278, %v7613
  %v7615 = vpop.f32.mrb[0].mxu0
  %7616 = vmatprep.mubr.bf16.mxu0 0
  %7617 = vmatmul.mubr.bf16.gmra.mrb[0].mxu0 %v7375
  %v7618 = vpop.f32.mrb[0].mxu0
  %v7619 = vadd.f32 %v7278, %v7618
  %v7620 = vpop.f32.mrb[0].mxu0
  %v7621 = vpop.f32.mrb[0].mxu0
  %v7622 = vadd.f32 %v7278, %v7621
  %v7623 = vpop.f32.mrb[0].mxu0
  %7624 = vmatprep.mubr.bf16.mxu0 0
  %7625 = vmatmul.mubr.bf16.gmra.mrb[0].mxu0 %v7378
  %v7626 = vpop.f32.mrb[0].mxu0
  %v7627 = vadd.f32 %v7278, %v7626
  %v7628 = vpop.f32.mrb[0].mxu0
  %v7629 = vpop.f32.mrb[0].mxu0
  %v7630 = vadd.f32 %v7278, %v7629
  %v7631 = vpop.f32.mrb[0].mxu0
  %7632 = vmatprep.mubr.bf16.mxu0 0
  %7633 = vmatmul.mubr.bf16.gmra.mrb[0].mxu0 %v7381
  %v7634 = vpop.f32.mrb[0].mxu0
  %v7635 = vadd.f32 %v7278, %v7634
  %v7636 = vpop.f32.mrb[0].mxu0
  %v7637 = vpop.f32.mrb[0].mxu0
  %v7638 = vadd.f32 %v7278, %v7637
  %v7639 = vpop.f32.mrb[0].mxu0
  %7640 = vmatprep.mubr.bf16.mxu0 0
  %7641 = vmatmul.mubr.bf16.gmra.mrb[0].mxu0 %v7384
  %v7642 = vpop.f32.mrb[0].mxu0
  %v7643 = vadd.f32 %v7278, %v7642
  %v7644 = vpop.f32.mrb[0].mxu0
  %v7645 = vpop.f32.mrb[0].mxu0
  %v7646 = vadd.f32 %v7278, %v7645
  %v7647 = vpop.f32.mrb[0].mxu0
  %7648 = vmatprep.mubr.bf16.mxu0 0
  %7649 = vmatmul.mubr.bf16.gmra.mrb[0].mxu0 %v7387
  %v7650 = vpop.f32.mrb[0].mxu0
  %v7651 = vadd.f32 %v7278, %v7650
  %v7652 = vpop.f32.mrb[0].mxu0
  %v7653 = vpop.f32.mrb[0].mxu0
  %v7654 = vadd.f32 %v7278, %v7653
  %v7655 = vpop.f32.mrb[0].mxu0
  %7656 = vmatprep.mubr.bf16.mxu0 0
  %7657 = vmatmul.mubr.bf16.gmra.mrb[0].mxu0 %v7390
  %v7658 = vpop.f32.mrb[0].mxu0
  %v7659 = vadd.f32 %v7278, %v7658
  %v7660 = vpop.f32.mrb[0].mxu0
  %v7661 = vpop.f32.mrb[0].mxu0
  %v7662 = vadd.f32 %v7278, %v7661
  %v7663 = vpop.f32.mrb[0].mxu0
  %7664 = vmatprep.mubr.bf16.mxu0 0
  %7665 = vmatmul.mubr.bf16.gmra.mrb[0].mxu0 %v7393
  %v7666 = vpop.f32.mrb[0].mxu0
  %v7667 = vadd.f32 %v7278, %v7666
  %v7668 = vpop.f32.mrb[0].mxu0
  %v7669 = vpop.f32.mrb[0].mxu0
  %v7670 = vadd.f32 %v7278, %v7669
  %v7671 = vpop.f32.mrb[0].mxu0
  %7672 = vmatprep.mubr.bf16.mxu0 0
  %7673 = vmatmul.mubr.bf16.gmra.mrb[0].mxu0 %v7396
  %v7674 = vpop.f32.mrb[0].mxu0
  %v7675 = vadd.f32 %v7278, %v7674
  %v7676 = vpop.f32.mrb[0].mxu0
  %v7677 = vpop.f32.mrb[0].mxu0
  %v7678 = vadd.f32 %v7278, %v7677
  %v7679 = vpop.f32.mrb[0].mxu0
  %7680 = vmatprep.mubr.bf16.mxu0 0
  %7681 = vmatmul.mubr.bf16.gmra.mrb[0].mxu0 %v7399
  %v7682 = vpop.f32.mrb[0].mxu0
  %v7683 = vadd.f32 %v7278, %v7682
  %v7684 = vpop.f32.mrb[0].mxu0
  %v7685 = vpop.f32.mrb[0].mxu0
  %v7686 = vadd.f32 %v7278, %v7685
  %v7687 = vpop.f32.mrb[0].mxu0
  %7688 = vmatprep.mubr.bf16.mxu0 0
  %7689 = vmatmul.mubr.bf16.gmra.mrb[0].mxu0 %v7402
  %v7690 = vpop.f32.mrb[0].mxu0
  %v7691 = vadd.f32 %v7278, %v7690
  %v7692 = vpop.f32.mrb[0].mxu0
  %v7693 = vpop.f32.mrb[0].mxu0
  %v7694 = vadd.f32 %v7278, %v7693
  %v7695 = vpop.f32.mrb[0].mxu0
  %7696 = vdwg.mxu0
  %v7697 = vmax.f32 %v7443, 0.0
  %v7698 = vmax.f32 %v7446, 0.0
  %v7699 = vmax.f32 %v7451, 0.0
  %v7700 = vmax.f32 %v7454, 0.0
  %v7701 = vmax.f32 %v7459, 0.0
  %v7702 = vmax.f32 %v7462, 0.0
  %v7703 = vmax.f32 %v7467, 0.0
  %v7704 = vmax.f32 %v7470, 0.0
  %v7705 = vmax.f32 %v7475, 0.0
  %v7706 = vmax.f32 %v7478, 0.0
  %v7707 = vmax.f32 %v7483, 0.0
  %v7708 = vmax.f32 %v7486, 0.0
  %v7709 = vmax.f32 %v7491, 0.0
  %v7710 = vmax.f32 %v7494, 0.0
  %v7711 = vmax.f32 %v7499, 0.0
  %v7712 = vmax.f32 %v7502, 0.0
  %v7713 = vmax.f32 %v7507, 0.0
  %v7714 = vmax.f32 %v7510, 0.0
  %v7715 = vmax.f32 %v7515, 0.0
  %v7716 = vmax.f32 %v7518, 0.0
  %v7717 = vmax.f32 %v7523, 0.0
  %v7718 = vmax.f32 %v7526, 0.0
  %v7719 = vmax.f32 %v7531, 0.0
  %v7720 = vmax.f32 %v7534, 0.0
  %v7721 = vmax.f32 %v7539, 0.0
  %v7722 = vmax.f32 %v7542, 0.0
  %v7723 = vmax.f32 %v7547, 0.0
  %v7724 = vmax.f32 %v7550, 0.0
  %v7725 = vmax.f32 %v7555, 0.0
  %v7726 = vmax.f32 %v7558, 0.0
  %v7727 = vmax.f32 %v7563, 0.0
  %v7728 = vmax.f32 %v7566, 0.0
  %v7729 = vmax.f32 %v7571, 0.0
  %v7730 = vmax.f32 %v7574, 0.0
  %v7731 = vmax.f32 %v7579, 0.0
  %v7732 = vmax.f32 %v7582, 0.0
  %v7733 = vmax.f32 %v7587, 0.0
  %v7734 = vmax.f32 %v7590, 0.0
  %v7735 = vmax.f32 %v7595, 0.0
  %v7736 = vmax.f32 %v7598, 0.0
  %v7737 = vmax.f32 %v7603, 0.0
  %v7738 = vmax.f32 %v7606, 0.0
  %v7739 = vmax.f32 %v7611, 0.0
  %v7740 = vmax.f32 %v7614, 0.0
  %v7741 = vmax.f32 %v7619, 0.0
  %v7742 = vmax.f32 %v7622, 0.0
  %v7743 = vmax.f32 %v7627, 0.0
  %v7744 = vmax.f32 %v7630, 0.0
  %v7745 = vmax.f32 %v7635, 0.0
  %v7746 = vmax.f32 %v7638, 0.0
  %v7747 = vmax.f32 %v7643, 0.0
  %v7748 = vmax.f32 %v7646, 0.0
  %v7749 = vmax.f32 %v7651, 0.0
  %v7750 = vmax.f32 %v7654, 0.0
  %v7751 = vmax.f32 %v7659, 0.0
  %v7752 = vmax.f32 %v7662, 0.0
  %v7753 = vmax.f32 %v7667, 0.0
  %v7754 = vmax.f32 %v7670, 0.0
  %v7755 = vmax.f32 %v7675, 0.0
  %v7756 = vmax.f32 %v7678, 0.0
  %v7757 = vmax.f32 %v7683, 0.0
  %v7758 = vmax.f32 %v7686, 0.0
  %v7759 = vmax.f32 %v7691, 0.0
  %v7760 = vmax.f32 %v7694, 0.0
  %7761 = vst [vmem:[%s5] sm:$0xff] %v7697
  %7762 = vst [vmem:[%s5 + $0x8] sm:$0xff] %v7698
  %7763 = vst [vmem:[%s5 + $0x10] sm:$0xff] %v7699
  %7764 = vst [vmem:[%s5 + $0x18] sm:$0xff] %v7700
  %7765 = vst [vmem:[%s5 + $0x20] sm:$0xff] %v7701
  %7766 = vst [vmem:[%s5 + $0x28] sm:$0xff] %v7702
  %7767 = vst [vmem:[%s5 + $0x30] sm:$0xff] %v7703
  %7768 = vst [vmem:[%s5 + $0x38] sm:$0xff] %v7704
  %7769 = vst [vmem:[%s5 + $0x40] sm:$0xff] %v7705
  %7770 = vst [vmem:[%s5 + $0x48] sm:$0xff] %v7706
  %7771 = vst [vmem:[%s5 + $0x50] sm:$0xff] %v7707
  %7772 = vst [vmem:[%s5 + $0x58] sm:$0xff] %v7708
  %7773 = vst [vmem:[%s5 + $0x60] sm:$0xff] %v7709
  %7774 = vst [vmem:[%s5 + $0x68] sm:$0xff] %v7710
  %7775 = vst [vmem:[%s5 + $0x70] sm:$0xff] %v7711
  %7776 = vst [vmem:[%s5 + $0x78] sm:$0xff] %v7712
  %7777 = vst [vmem:[%s5 + $0x80] sm:$0xff] %v7713
  %7778 = vst [vmem:[%s5 + $0x88] sm:$0xff] %v7714
  %7779 = vst [vmem:[%s5 + $0x90] sm:$0xff] %v7715
  %7780 = vst [vmem:[%s5 + $0x98] sm:$0xff] %v7716
  %7781 = vst [vmem:[%s5 + $0xa0] sm:$0xff] %v7717
  %7782 = vst [vmem:[%s5 + $0xa8] sm:$0xff] %v7718
  %7783 = vst [vmem:[%s5 + $0xb0] sm:$0xff] %v7719
  %7784 = vst [vmem:[%s5 + $0xb8] sm:$0xff] %v7720
  %7785 = vst [vmem:[%s5 + $0xc0] sm:$0xff] %v7721
  %7786 = vst [vmem:[%s5 + $0xc8] sm:$0xff] %v7722
  %7787 = vst [vmem:[%s5 + $0xd0] sm:$0xff] %v7723
  %7788 = vst [vmem:[%s5 + $0xd8] sm:$0xff] %v7724
  %7789 = vst [vmem:[%s5 + $0xe0] sm:$0xff] %v7725
  %7790 = vst [vmem:[%s5 + $0xe8] sm:$0xff] %v7726
  %7791 = vst [vmem:[%s5 + $0xf0] sm:$0xff] %v7727
  %7792 = vst [vmem:[%s5 + $0xf8] sm:$0xff] %v7728
  %7793 = vst [vmem:[%s5 + $0x100] sm:$0xff] %v7729
  %7794 = vst [vmem:[%s5 + $0x108] sm:$0xff] %v7730
  %7795 = vst [vmem:[%s5 + $0x110] sm:$0xff] %v7731
  %7796 = vst [vmem:[%s5 + $0x118] sm:$0xff] %v7732
  %7797 = vst [vmem:[%s5 + $0x120] sm:$0xff] %v7733
  %7798 = vst [vmem:[%s5 + $0x128] sm:$0xff] %v7734
  %7799 = vst [vmem:[%s5 + $0x130] sm:$0xff] %v7735
  %7800 = vst [vmem:[%s5 + $0x138] sm:$0xff] %v7736
  %7801 = vst [vmem:[%s5 + $0x140] sm:$0xff] %v7737
  %7802 = vst [vmem:[%s5 + $0x148] sm:$0xff] %v7738
  %7803 = vst [vmem:[%s5 + $0x150] sm:$0xff] %v7739
  %7804 = vst [vmem:[%s5 + $0x158] sm:$0xff] %v7740
  %7805 = vst [vmem:[%s5 + $0x160] sm:$0xff] %v7741
  %7806 = vst [vmem:[%s5 + $0x168] sm:$0xff] %v7742
  %7807 = vst [vmem:[%s5 + $0x170] sm:$0xff] %v7743
  %7808 = vst [vmem:[%s5 + $0x178] sm:$0xff] %v7744
  %7809 = vst [vmem:[%s5 + $0x180] sm:$0xff] %v7745
  %7810 = vst [vmem:[%s5 + $0x188] sm:$0xff] %v7746
  %7811 = vst [vmem:[%s5 + $0x190] sm:$0xff] %v7747
  %7812 = vst [vmem:[%s5 + $0x198] sm:$0xff] %v7748
  %7813 = vst [vmem:[%s5 + $0x1a0] sm:$0xff] %v7749
  %7814 = vst [vmem:[%s5 + $0x1a8] sm:$0xff] %v7750
  %7815 = vst [vmem:[%s5 + $0x1b0] sm:$0xff] %v7751
  %7816 = vst [vmem:[%s5 + $0x1b8] sm:$0xff] %v7752
  %7817 = vst [vmem:[%s5 + $0x1c0] sm:$0xff] %v7753
  %7818 = vst [vmem:[%s5 + $0x1c8] sm:$0xff] %v7754
  %7819 = vst [vmem:[%s5 + $0x1d0] sm:$0xff] %v7755
  %7820 = vst [vmem:[%s5 + $0x1d8] sm:$0xff] %v7756
  %7821 = vst [vmem:[%s5 + $0x1e0] sm:$0xff] %v7757
  %7822 = vst [vmem:[%s5 + $0x1e8] sm:$0xff] %v7758
  %7823 = vst [vmem:[%s5 + $0x1f0] sm:$0xff] %v7759
  %7824 = vst [vmem:[%s5 + $0x1f8] sm:$0xff] %v7760
  // Predicated region
  $region22: #{feature_extractor.1} parent=0 // pred_check
    _
  $region23: #{feature_extractor.1} parent=0 // pred_check_branch
    %7826 = sbr.rel (0) target = $region25
  $region24: #{feature_extractor.1} parent=0 // pred_region
    _
  $region25: #{feature_extractor.1} parent=0 // pred_fallthru
    _
  // Predicated region
  $region26: #{feature_extractor.1} parent=0 // pred_check
    _
  $region27: #{feature_extractor.1} parent=0 // pred_check_branch
    %7828 = sbr.rel (0) target = $region29
  $region28: #{feature_extractor.1} parent=0 // pred_region
    _
  $region29: #{feature_extractor.1} parent=0 // pred_fallthru
    _

</llo_original>
